<compile_context>
chip_gen: v7x
topology: tpu7x:2x2x1
jax: 0.10.0
libtpu: 0.0.40
codegen_flags: <defaults>
</compile_context>

<pallas_src>
import math

import jax
import jax.numpy as jnp
from jax.experimental import pallas as pl
from jax.experimental.pallas import tpu as pltpu

# ---------------- model config ----------------
VOCAB = 16
D_MODEL = 32
N_HEADS = 4
D_HEAD = D_MODEL // N_HEADS
D_FF = 64
N_LAYERS = 2
MAX_POS = 64
EPS = 1e-6
NEG_INF = -1e9
SQRT_D = math.sqrt(D_MODEL)

MM_DTYPE = jnp.bfloat16        # MXU operand dtype; elementwise math stays f32

# ---------------- packed-slab layout (shared by init_params and the kernel) --
# wd column layout, encoder layer l (base = l*ENC_COL_STRIDE):
#   [qkv (3D) | out-proj (D) | ff1 (D_FF)]
# wd column layout, decoder layer l (base = DEC_COL_BASE + l*DEC_COL_STRIDE):
#   [qkv (3D) | self-out (D) | cross-q (D) | cross-kv (2D) | cross-out (D) | ff1 (D_FF)]
ENC_COL_STRIDE = 3 * D_MODEL + D_MODEL + D_FF
DEC_COL_STRIDE = 3 * D_MODEL + D_MODEL + D_MODEL + 2 * D_MODEL + D_MODEL + D_FF
DEC_COL_BASE = N_LAYERS * ENC_COL_STRIDE
WD_COLS = DEC_COL_BASE + N_LAYERS * DEC_COL_STRIDE                  # 1024

# ps row layout:
#   enc layer l (base 8l)     : ln1g ln1b qkvb ob  ln2g ln2b b1 b2
#   dec layer l (base 16+13l) : ln1g ln1b qkvb sob ln2g ln2b cqb ckvb cob ln3g ln3b b1 b2
#   finals (base 42)          : enc_final_g enc_final_b dec_final_g dec_final_b
ENC_ROW_STRIDE = 8
DEC_ROW_STRIDE = 13
DEC_ROW_BASE = N_LAYERS * ENC_ROW_STRIDE
FINAL_ROW_BASE = DEC_ROW_BASE + N_LAYERS * DEC_ROW_STRIDE           # 42
PS_ROWS = FINAL_ROW_BASE + 4
PS_ROWS_PAD = ((PS_ROWS + 7) // 8) * 8                              # 48


# ---------------- the single fused kernel (one batch element / grid step) ----
def _encdec_kernel(src_ref, tgt_ref, smask_ref, wd_ref, wf_ref, ps_ref, et_ref,
                   out_ref):
    LS = src_ref.shape[1]
    LT = tgt_ref.shape[1]
    scale = 1.0 / math.sqrt(D_HEAD)

    # ---- helpers (all offsets are static Python ints) ----
    def ln(x, grow, brow):
        # Annotated-Transformer LayerNorm: unbiased std (d-1), eps added to std.
        g = ps_ref[grow:grow + 1, :D_MODEL]
        b = ps_ref[brow:brow + 1, :D_MODEL]
        mean = jnp.mean(x, axis=-1, keepdims=True)
        xc = x - mean
        var = jnp.sum(xc * xc, axis=-1, keepdims=True) * (1.0 / (D_MODEL - 1))
        return g * xc / (jnp.sqrt(var) + EPS) + b

    def lin(x, wref, col, width, brow):
        w = wref[:, col:col + width]                     # bf16 slab slice
        b = ps_ref[brow:brow + 1, :width]                # f32 bias row
        return jnp.dot(x.astype(MM_DTYPE), w,
                       preferred_element_type=jnp.float32) + b

    def attn(q, k, v, bias, wo, bo):
        # q:(Lq,D) k,v:(Lk,D) f32; bias broadcastable to (H,Lq,Lk);
        # wo:(D,D) bf16, bo:(1,D) f32.  Heads batched: 1 softmax per attention.
        def heads(t):
            return jnp.stack([t[:, h * D_HEAD:(h + 1) * D_HEAD]
                              for h in range(N_HEADS)], axis=0).astype(MM_DTYPE)
        qh, kh, vh = heads(q), heads(k), heads(v)        # (H, L, Dh)
        s = jnp.einsum('hqd,hkd->hqk', qh, kh,
                       preferred_element_type=jnp.float32) * scale
        s = s + bias
        # a fully-masked query row yields a uniform softmax (not NaN)
        s = s - jnp.max(s, axis=-1, keepdims=True)
        p = jnp.exp(s)
        p = p * pl.reciprocal(jnp.sum(p, axis=-1, keepdims=True), approx=True)
        o = jnp.einsum('hqk,hkd->hqd', p.astype(MM_DTYPE), vh,
                       preferred_element_type=jnp.float32)          # (H, Lq, Dh)
        o = jnp.concatenate([o[h] for h in range(N_HEADS)], axis=-1)  # (Lq, D)
        return jnp.dot(o.astype(MM_DTYPE), wo,
                       preferred_element_type=jnp.float32) + bo

    # ---- fused embeddings: one-hot @ table (exact gather), *sqrt(D), +PE ----
    src_tok = src_ref[0]                                 # (LS, 1) int32
    tgt_tok = tgt_ref[0]                                 # (LT, 1) int32
    oh_s = (jax.lax.broadcasted_iota(jnp.int32, (LS, VOCAB), 1)
            == src_tok).astype(jnp.float32)
    oh_t = (jax.lax.broadcasted_iota(jnp.int32, (LT, VOCAB), 1)
            == tgt_tok).astype(jnp.float32)
    xs = (jnp.dot(oh_s, et_ref[0:VOCAB, :], preferred_element_type=jnp.float32)
          * SQRT_D + et_ref[2 * VOCAB:2 * VOCAB + LS, :])
    xt = (jnp.dot(oh_t, et_ref[VOCAB:2 * VOCAB, :], preferred_element_type=jnp.float32)
          * SQRT_D + et_ref[2 * VOCAB:2 * VOCAB + LT, :])

    # ---- masks -> additive biases, built in-kernel ----
    smask = smask_ref[0]                                 # (1, LS) f32 (1 keep / 0 mask)
    src_bias = ((1.0 - smask) * NEG_INF).reshape(1, 1, LS)
    rows = jax.lax.broadcasted_iota(jnp.int32, (LT, LT), 0)
    cols = jax.lax.broadcasted_iota(jnp.int32, (LT, LT), 1)
    tgt_bias = jnp.where(rows >= cols, 0.0, NEG_INF).reshape(1, LT, LT)

    # ---------------- encoder (pre-norm, residual) ----------------
    x = xs
    for l in range(N_LAYERS):
        c = l * ENC_COL_STRIDE
        r = l * ENC_ROW_STRIDE
        xn = ln(x, r + 0, r + 1)
        qkv = lin(xn, wd_ref, c, 3 * D_MODEL, r + 2)     # (LS, 3D)
        x = x + attn(qkv[:, 0:D_MODEL],
                     qkv[:, D_MODEL:2 * D_MODEL],
                     qkv[:, 2 * D_MODEL:3 * D_MODEL],
                     src_bias,
                     wd_ref[:, c + 3 * D_MODEL:c + 4 * D_MODEL],
                     ps_ref[r + 3:r + 4, :D_MODEL])
        xn = ln(x, r + 4, r + 5)
        h = jnp.maximum(lin(xn, wd_ref, c + 4 * D_MODEL, D_FF, r + 6), 0.0)
        w2 = wf_ref[:, l * D_MODEL:(l + 1) * D_MODEL]
        x = x + (jnp.dot(h.astype(MM_DTYPE), w2,
                         preferred_element_type=jnp.float32)
                 + ps_ref[r + 7:r + 8, :D_MODEL])
    mem = ln(x, FINAL_ROW_BASE, FINAL_ROW_BASE + 1)      # encoder memory (LS, D)

    # ---------------- decoder (pre-norm, residual) ----------------
    x = xt
    for l in range(N_LAYERS):
        c = DEC_COL_BASE + l * DEC_COL_STRIDE
        r = DEC_ROW_BASE + l * DEC_ROW_STRIDE
        # masked self-attention
        xn = ln(x, r + 0, r + 1)
        qkv = lin(xn, wd_ref, c, 3 * D_MODEL, r + 2)
        x = x + attn(qkv[:, 0:D_MODEL],
                     qkv[:, D_MODEL:2 * D_MODEL],
                     qkv[:, 2 * D_MODEL:3 * D_MODEL],
                     tgt_bias,
                     wd_ref[:, c + 3 * D_MODEL:c + 4 * D_MODEL],
                     ps_ref[r + 3:r + 4, :D_MODEL])
        # cross-attention over encoder memory
        xn = ln(x, r + 4, r + 5)
        q = lin(xn, wd_ref, c + 4 * D_MODEL, D_MODEL, r + 6)
        kv = lin(mem, wd_ref, c + 5 * D_MODEL, 2 * D_MODEL, r + 7)
        x = x + attn(q,
                     kv[:, 0:D_MODEL],
                     kv[:, D_MODEL:2 * D_MODEL],
                     src_bias,
                     wd_ref[:, c + 7 * D_MODEL:c + 8 * D_MODEL],
                     ps_ref[r + 8:r + 9, :D_MODEL])
        # feed-forward
        xn = ln(x, r + 9, r + 10)
        h = jnp.maximum(lin(xn, wd_ref, c + 8 * D_MODEL, D_FF, r + 11), 0.0)
        w2 = wf_ref[:, (N_LAYERS + l) * D_MODEL:(N_LAYERS + l + 1) * D_MODEL]
        x = x + (jnp.dot(h.astype(MM_DTYPE), w2,
                         preferred_element_type=jnp.float32)
                 + ps_ref[r + 12:r + 13, :D_MODEL])

    out_ref[0] = ln(x, FINAL_ROW_BASE + 2, FINAL_ROW_BASE + 3)


# ---------------- parameter init (deterministic, synthetic) ----------------
def _init_linear(key, d_in, d_out):
    kw, kb = jax.random.split(key)
    bound = 1.0 / math.sqrt(d_in)
    w = jax.random.uniform(kw, (d_in, d_out), jnp.float32, -bound, bound)
    b = jax.random.uniform(kb, (1, d_out), jnp.float32, -bound, bound)
    return w, b


def _init_attn(key):
    kq, kk, kv, ko = jax.random.split(key, 4)
    wq, bq = _init_linear(kq, D_MODEL, D_MODEL)
    wk, bk = _init_linear(kk, D_MODEL, D_MODEL)
    wv, bv = _init_linear(kv, D_MODEL, D_MODEL)
    wo, bo = _init_linear(ko, D_MODEL, D_MODEL)
    return wq, bq, wk, bk, wv, bv, wo, bo


def positional_encoding(max_len, d_model):
    pos = jnp.arange(max_len, dtype=jnp.float32)[:, None]
    div = jnp.exp(jnp.arange(0, d_model, 2, dtype=jnp.float32)
                  * (-math.log(10000.0) / d_model))
    pe = jnp.zeros((max_len, d_model), jnp.float32)
    pe = pe.at[:, 0::2].set(jnp.sin(pos * div))
    pe = pe.at[:, 1::2].set(jnp.cos(pos * div))
    return pe


def init_params(key):
    keys = jax.random.split(key, 2 * N_LAYERS + 3)
    src_emb = jax.random.normal(keys[0], (VOCAB, D_MODEL), jnp.float32)
    tgt_emb = jax.random.normal(keys[1], (VOCAB, D_MODEL), jnp.float32)

    ones_row = jnp.ones((1, D_MODEL), jnp.float32)
    zeros_row = jnp.zeros((1, D_MODEL), jnp.float32)

    wd_cols, w2_enc, w2_dec, ps_rows = [], [], [], []

    def add_row(v):
        ps_rows.append(jnp.pad(v, ((0, 0), (0, 128 - v.shape[1]))))

    # encoder layers (column / row order MUST match the kernel's static offsets)
    for i in range(N_LAYERS):
        k1, k2, k3 = jax.random.split(keys[2 + i], 3)
        wq, bq, wk, bk, wv, bv, wo, bo = _init_attn(k1)
        w1, b1 = _init_linear(k2, D_MODEL, D_FF)
        w2, b2 = _init_linear(k3, D_FF, D_MODEL)
        wd_cols += [jnp.concatenate([wq, wk, wv], axis=1), wo, w1]
        w2_enc.append(w2)
        for v in (ones_row, zeros_row, jnp.concatenate([bq, bk, bv], axis=1), bo,
                  ones_row, zeros_row, b1, b2):
            add_row(v)

    # decoder layers
    for i in range(N_LAYERS):
        k1, k2, k3, k4 = jax.random.split(keys[2 + N_LAYERS + i], 4)
        swq, sbq, swk, sbk, swv, sbv, swo, sbo = _init_attn(k1)
        cwq, cbq, cwk, cbk, cwv, cbv, cwo, cbo = _init_attn(k2)
        w1, b1 = _init_linear(k3, D_MODEL, D_FF)
        w2, b2 = _init_linear(k4, D_FF, D_MODEL)
        wd_cols += [jnp.concatenate([swq, swk, swv], axis=1), swo,
                    cwq, jnp.concatenate([cwk, cwv], axis=1), cwo, w1]
        w2_dec.append(w2)
        for v in (ones_row, zeros_row, jnp.concatenate([sbq, sbk, sbv], axis=1), sbo,
                  ones_row, zeros_row, cbq, jnp.concatenate([cbk, cbv], axis=1), cbo,
                  ones_row, zeros_row, b1, b2):
            add_row(v)

    # final LayerNorms (encoder, decoder) + pad rows to a multiple of 8
    for v in (ones_row, zeros_row, ones_row, zeros_row):
        add_row(v)
    while len(ps_rows) < PS_ROWS_PAD:
        add_row(zeros_row)

    wd = jnp.concatenate(wd_cols, axis=1).astype(MM_DTYPE)            # (D, 1024)
    wf = jnp.concatenate(w2_enc + w2_dec, axis=1).astype(MM_DTYPE)    # (D_FF, 128)
    ps = jnp.concatenate(ps_rows, axis=0)                             # (48, 128)
    et = jnp.concatenate([src_emb, tgt_emb,
                          positional_encoding(MAX_POS, D_MODEL)], axis=0)

    assert wd.shape == (D_MODEL, WD_COLS)
    assert wf.shape == (D_FF, 2 * N_LAYERS * D_MODEL)
    assert ps.shape == (PS_ROWS_PAD, 128)

    # generator parameters exist in the module but forward() does not apply them
    gen_w, gen_b = _init_linear(keys[2 + 2 * N_LAYERS], D_MODEL, VOCAB)
    return {'wd': wd, 'wf': wf, 'ps': ps, 'et': et,
            'gen_w': gen_w, 'gen_b': gen_b}


# ---------------- wrapper: ONE pallas_call, grid over the batch --------------
def encoder_decoder_forward(params, src, tgt, src_mask, tgt_mask):
    """EncoderDecoder.forward(src, tgt, src_mask, tgt_mask) -> decoder output."""
    # TODO(synk): tgt_mask is assumed to be the standard causal (subsequent)
    # mask; it is rebuilt in-kernel with iota, so arbitrary target padding
    # masks are not threaded through the kernel.
    del tgt_mask
    B, LS = src.shape
    _, LT = tgt.shape

    src3 = src.astype(jnp.int32).reshape(B, LS, 1)
    tgt3 = tgt.astype(jnp.int32).reshape(B, LT, 1)
    sm = src_mask.astype(jnp.float32).reshape(B, 1, LS)

    wd, wf, ps, et = params['wd'], params['wf'], params['ps'], params['et']

    def const2d(shape):
        return pl.BlockSpec(shape, lambda b: (0, 0))

    return pl.pallas_call(
        _encdec_kernel,
        out_shape=jax.ShapeDtypeStruct((B, LT, D_MODEL), jnp.float32),
        grid_spec=pltpu.PrefetchScalarGridSpec(
            num_scalar_prefetch=0,
            grid=(B,),
            in_specs=[
                pl.BlockSpec((1, LS, 1), lambda b: (b, 0, 0)),   # src tokens
                pl.BlockSpec((1, LT, 1), lambda b: (b, 0, 0)),   # tgt tokens
                pl.BlockSpec((1, 1, LS), lambda b: (b, 0, 0)),   # src mask
                const2d(wd.shape),                               # weight slab (D rows)
                const2d(wf.shape),                               # weight slab (D_FF rows)
                const2d(ps.shape),                               # scale/bias slab
                const2d(et.shape),                               # embeddings + PE
            ],
            out_specs=pl.BlockSpec((1, LT, D_MODEL), lambda b: (b, 0, 0)),
        ),
        compiler_params=pltpu.CompilerParams(
            dimension_semantics=("parallel",)),                  # 2 TCs on v7x
    )(src3, tgt3, sm, wd, wf, ps, et)


# ---------------- main ----------------
if __name__ == "__main__":
    key = jax.random.PRNGKey(0)
    kp, ks, kt = jax.random.split(key, 3)
    params = init_params(kp)

    B, LS, LT = 2, 8, 8
    src = jax.random.randint(ks, (B, LS), 0, VOCAB, dtype=jnp.int32)
    tgt = jax.random.randint(kt, (B, LT), 0, VOCAB, dtype=jnp.int32)
    src_mask = jnp.ones((B, 1, LS), jnp.float32)                      # (B,1,Ls)
    tgt_mask = jnp.broadcast_to(
        jnp.tril(jnp.ones((LT, LT), jnp.float32))[None, :, :], (B, LT, LT))

    fwd = jax.jit(lambda s, t, sm, tm:
                  encoder_decoder_forward(params, s, t, sm, tm))
    out = fwd(src, tgt, src_mask, tgt_mask)
    jax.block_until_ready(out)

    assert out.shape == (B, LT, D_MODEL)
    assert bool(jnp.all(jnp.isfinite(out)))
    print("KERNEL_OK")
</pallas_src>

<mosaic_0001>
module attributes {stable_mosaic.version = 11 : i64} {
  func.func @_encdec_kernel(%arg0: i32, %arg1: memref<1x8x1xi32, #tpu.memory_space<vmem>>, %arg2: memref<1x8x1xi32, #tpu.memory_space<vmem>>, %arg3: memref<1x1x8xf32, #tpu.memory_space<vmem>>, %arg4: memref<32x1024xbf16, #tpu.memory_space<vmem>>, %arg5: memref<64x128xbf16, #tpu.memory_space<vmem>>, %arg6: memref<48x128xf32, #tpu.memory_space<vmem>>, %arg7: memref<96x32xf32, #tpu.memory_space<vmem>>, %arg8: memref<1x8x32xf32, #tpu.memory_space<vmem>>) attributes {dimension_semantics = [#tpu.dimension_semantics<parallel>], iteration_bounds = array<i64: 2>, scalar_prefetch = 0 : i64, scratch_operands = 0 : i64, tpu.core_type = #tpu.core_type<tc>, window_params = [{transform_indices = @transform_0, window_bounds = array<i64: 1, 8, 1>}, {transform_indices = @transform_1, window_bounds = array<i64: 1, 8, 1>}, {transform_indices = @transform_2, window_bounds = array<i64: 1, 1, 8>}, {pipeline_mode = #tpu.pipeline_mode<synchronous>, transform_indices = @transform_3, window_bounds = array<i64: 32, 1024>}, {pipeline_mode = #tpu.pipeline_mode<synchronous>, transform_indices = @transform_4, window_bounds = array<i64: 64, 128>}, {pipeline_mode = #tpu.pipeline_mode<synchronous>, transform_indices = @transform_5, window_bounds = array<i64: 48, 128>}, {pipeline_mode = #tpu.pipeline_mode<synchronous>, transform_indices = @transform_6, window_bounds = array<i64: 96, 32>}, {transform_indices = @transform_7, window_bounds = array<i64: 1, 8, 32>}]} {
    %c0 = arith.constant 0 : index
    %c0_0 = arith.constant 0 : index
    %c0_1 = arith.constant 0 : index
    %0 = vector.load %arg1[%c0, %c0_0, %c0_1] : memref<1x8x1xi32, #tpu.memory_space<vmem>>, vector<1x8x1xi32>
    %1 = vector.shape_cast %0 : vector<1x8x1xi32> to vector<8x1xi32>
    %c0_2 = arith.constant 0 : index
    %c0_3 = arith.constant 0 : index
    %c0_4 = arith.constant 0 : index
    %2 = vector.load %arg2[%c0_2, %c0_3, %c0_4] : memref<1x8x1xi32, #tpu.memory_space<vmem>>, vector<1x8x1xi32>
    %3 = vector.shape_cast %2 : vector<1x8x1xi32> to vector<8x1xi32>
    %4 = tpu.iota {dimensions = array<i32: 1>} : vector<8x16xi32>
    %5 = vector.broadcast %1 : vector<8x1xi32> to vector<8x16xi32>
    %6 = arith.cmpi eq, %4, %5 : vector<8x16xi32>
    %7 = arith.extui %6 : vector<8x16xi1> to vector<8x16xi32>
    %8 = arith.sitofp %7 : vector<8x16xi32> to vector<8x16xf32>
    %9 = tpu.iota {dimensions = array<i32: 1>} : vector<8x16xi32>
    %10 = vector.broadcast %3 : vector<8x1xi32> to vector<8x16xi32>
    %11 = arith.cmpi eq, %9, %10 : vector<8x16xi32>
    %12 = arith.extui %11 : vector<8x16xi1> to vector<8x16xi32>
    %13 = arith.sitofp %12 : vector<8x16xi32> to vector<8x16xf32>
    %c0_5 = arith.constant 0 : index
    %c0_6 = arith.constant 0 : index
    %14 = vector.load %arg7[%c0_5, %c0_6] : memref<96x32xf32, #tpu.memory_space<vmem>>, vector<16x32xf32>
    %cst = arith.constant dense<0.000000e+00> : vector<8x32xf32>
    %15 = tpu.matmul %8, %14, %cst {dimension_numbers = #tpu.dot_dimension_numbers<[1], [0], [0], [1], [0, 0, 1, 1], [], []>} : vector<8x16xf32>, vector<16x32xf32>, vector<8x32xf32> -> vector<8x32xf32>
    %cst_7 = arith.constant 5.65685415 : f32
    %16 = vector.broadcast %cst_7 : f32 to vector<8x32xf32>
    %17 = arith.mulf %15, %16 : vector<8x32xf32>
    %c32 = arith.constant 32 : index
    %c0_8 = arith.constant 0 : index
    %18 = vector.load %arg7[%c32, %c0_8] : memref<96x32xf32, #tpu.memory_space<vmem>>, vector<8x32xf32>
    %19 = arith.addf %17, %18 : vector<8x32xf32>
    %c16 = arith.constant 16 : index
    %c0_9 = arith.constant 0 : index
    %20 = vector.load %arg7[%c16, %c0_9] : memref<96x32xf32, #tpu.memory_space<vmem>>, vector<16x32xf32>
    %cst_10 = arith.constant dense<0.000000e+00> : vector<8x32xf32>
    %21 = tpu.matmul %13, %20, %cst_10 {dimension_numbers = #tpu.dot_dimension_numbers<[1], [0], [0], [1], [0, 0, 1, 1], [], []>} : vector<8x16xf32>, vector<16x32xf32>, vector<8x32xf32> -> vector<8x32xf32>
    %cst_11 = arith.constant 5.65685415 : f32
    %22 = vector.broadcast %cst_11 : f32 to vector<8x32xf32>
    %23 = arith.mulf %21, %22 : vector<8x32xf32>
    %c32_12 = arith.constant 32 : index
    %c0_13 = arith.constant 0 : index
    %24 = vector.load %arg7[%c32_12, %c0_13] : memref<96x32xf32, #tpu.memory_space<vmem>>, vector<8x32xf32>
    %25 = arith.addf %23, %24 : vector<8x32xf32>
    %c0_14 = arith.constant 0 : index
    %c0_15 = arith.constant 0 : index
    %c0_16 = arith.constant 0 : index
    %26 = vector.load %arg3[%c0_14, %c0_15, %c0_16] : memref<1x1x8xf32, #tpu.memory_space<vmem>>, vector<1x1x8xf32>
    %27 = vector.shape_cast %26 : vector<1x1x8xf32> to vector<1x8xf32>
    %cst_17 = arith.constant 1.000000e+00 : f32
    %28 = vector.broadcast %cst_17 : f32 to vector<1x8xf32>
    %29 = arith.subf %28, %27 : vector<1x8xf32>
    %cst_18 = arith.constant -1.000000e+09 : f32
    %30 = vector.broadcast %cst_18 : f32 to vector<1x8xf32>
    %31 = arith.mulf %29, %30 : vector<1x8xf32>
    %32 = vector.shape_cast %31 : vector<1x8xf32> to vector<1x1x8xf32>
    %33 = tpu.iota {dimensions = array<i32: 0>} : vector<8x8xi32>
    %34 = tpu.iota {dimensions = array<i32: 1>} : vector<8x8xi32>
    %35 = arith.cmpi sge, %33, %34 : vector<8x8xi32>
    %cst_19 = arith.constant 0.000000e+00 : f32
    %cst_20 = arith.constant -1.000000e+09 : f32
    %36 = vector.broadcast %cst_19 : f32 to vector<8x8xf32>
    %37 = vector.broadcast %cst_20 : f32 to vector<8x8xf32>
    %38 = arith.select %35, %36, %37 : vector<8x8xi1>, vector<8x8xf32>
    %39 = vector.shape_cast %38 : vector<8x8xf32> to vector<1x8x8xf32>
    %c0_21 = arith.constant 0 : index
    %c0_22 = arith.constant 0 : index
    %40 = vector.load %arg6[%c0_21, %c0_22] : memref<48x128xf32, #tpu.memory_space<vmem>>, vector<1x32xf32>
    %c1 = arith.constant 1 : index
    %c0_23 = arith.constant 0 : index
    %41 = vector.load %arg6[%c1, %c0_23] : memref<48x128xf32, #tpu.memory_space<vmem>>, vector<1x32xf32>
    %cst_24 = arith.constant dense<0.000000e+00> : vector<8xf32>
    %42 = vector.multi_reduction <add>, %19, %cst_24 [1] : vector<8x32xf32> to vector<8xf32>
    %43 = vector.shape_cast %42 : vector<8xf32> to vector<8x1xf32>
    %cst_25 = arith.constant 3.200000e+01 : f32
    %44 = vector.broadcast %cst_25 : f32 to vector<8x1xf32>
    %45 = arith.divf %43, %44 : vector<8x1xf32>
    %46 = vector.broadcast %45 : vector<8x1xf32> to vector<8x32xf32>
    %47 = arith.subf %19, %46 : vector<8x32xf32>
    %48 = arith.mulf %47, %47 : vector<8x32xf32>
    %cst_26 = arith.constant dense<0.000000e+00> : vector<8xf32>
    %49 = vector.multi_reduction <add>, %48, %cst_26 [1] : vector<8x32xf32> to vector<8xf32>
    %50 = vector.shape_cast %49 : vector<8xf32> to vector<8x1xf32>
    %cst_27 = arith.constant 0.0322580636 : f32
    %51 = vector.broadcast %cst_27 : f32 to vector<8x1xf32>
    %52 = arith.mulf %50, %51 : vector<8x1xf32>
    %53 = vector.broadcast %40 : vector<1x32xf32> to vector<8x32xf32>
    %54 = arith.mulf %53, %47 : vector<8x32xf32>
    %55 = math.sqrt %52 : vector<8x1xf32>
    %cst_28 = arith.constant 9.99999997E-7 : f32
    %56 = vector.broadcast %cst_28 : f32 to vector<8x1xf32>
    %57 = arith.addf %55, %56 : vector<8x1xf32>
    %58 = vector.broadcast %57 : vector<8x1xf32> to vector<8x32xf32>
    %59 = arith.divf %54, %58 : vector<8x32xf32>
    %60 = vector.broadcast %41 : vector<1x32xf32> to vector<8x32xf32>
    %61 = arith.addf %59, %60 : vector<8x32xf32>
    %c0_29 = arith.constant 0 : index
    %c0_30 = arith.constant 0 : index
    %62 = vector.load %arg4[%c0_29, %c0_30] : memref<32x1024xbf16, #tpu.memory_space<vmem>>, vector<32x96xbf16>
    %c2 = arith.constant 2 : index
    %c0_31 = arith.constant 0 : index
    %63 = vector.load %arg6[%c2, %c0_31] : memref<48x128xf32, #tpu.memory_space<vmem>>, vector<1x96xf32>
    %64 = arith.truncf %61 : vector<8x32xf32> to vector<8x32xbf16>
    %cst_32 = arith.constant dense<0.000000e+00> : vector<8x96xf32>
    %65 = tpu.matmul %64, %62, %cst_32 {dimension_numbers = #tpu.dot_dimension_numbers<[1], [0], [0], [1], [0, 0, 1, 1], [], []>} : vector<8x32xbf16>, vector<32x96xbf16>, vector<8x96xf32> -> vector<8x96xf32>
    %66 = vector.broadcast %63 : vector<1x96xf32> to vector<8x96xf32>
    %67 = arith.addf %65, %66 : vector<8x96xf32>
    %68 = vector.extract_strided_slice %67 {offsets = [0, 0], sizes = [8, 32], strides = [1, 1]} : vector<8x96xf32> to vector<8x32xf32>
    %69 = vector.extract_strided_slice %67 {offsets = [0, 32], sizes = [8, 32], strides = [1, 1]} : vector<8x96xf32> to vector<8x32xf32>
    %70 = vector.extract_strided_slice %67 {offsets = [0, 64], sizes = [8, 32], strides = [1, 1]} : vector<8x96xf32> to vector<8x32xf32>
    %c0_33 = arith.constant 0 : index
    %c96 = arith.constant 96 : index
    %71 = vector.load %arg4[%c0_33, %c96] : memref<32x1024xbf16, #tpu.memory_space<vmem>>, vector<32x32xbf16>
    %c3 = arith.constant 3 : index
    %c0_34 = arith.constant 0 : index
    %72 = vector.load %arg6[%c3, %c0_34] : memref<48x128xf32, #tpu.memory_space<vmem>>, vector<1x32xf32>
    %73 = vector.extract_strided_slice %68 {offsets = [0, 0], sizes = [8, 8], strides = [1, 1]} : vector<8x32xf32> to vector<8x8xf32>
    %74 = vector.extract_strided_slice %68 {offsets = [0, 8], sizes = [8, 8], strides = [1, 1]} : vector<8x32xf32> to vector<8x8xf32>
    %75 = vector.extract_strided_slice %68 {offsets = [0, 16], sizes = [8, 8], strides = [1, 1]} : vector<8x32xf32> to vector<8x8xf32>
    %76 = vector.extract_strided_slice %68 {offsets = [0, 24], sizes = [8, 8], strides = [1, 1]} : vector<8x32xf32> to vector<8x8xf32>
    %77 = vector.shape_cast %73 : vector<8x8xf32> to vector<1x8x8xf32>
    %78 = vector.shape_cast %74 : vector<8x8xf32> to vector<1x8x8xf32>
    %79 = vector.shape_cast %75 : vector<8x8xf32> to vector<1x8x8xf32>
    %80 = vector.shape_cast %76 : vector<8x8xf32> to vector<1x8x8xf32>
    %81 = tpu.concatenate %77, %78, %79, %80 in 0 : vector<1x8x8xf32>, vector<1x8x8xf32>, vector<1x8x8xf32>, vector<1x8x8xf32> -> vector<4x8x8xf32>
    %82 = arith.truncf %81 : vector<4x8x8xf32> to vector<4x8x8xbf16>
    %83 = vector.extract_strided_slice %69 {offsets = [0, 0], sizes = [8, 8], strides = [1, 1]} : vector<8x32xf32> to vector<8x8xf32>
    %84 = vector.extract_strided_slice %69 {offsets = [0, 8], sizes = [8, 8], strides = [1, 1]} : vector<8x32xf32> to vector<8x8xf32>
    %85 = vector.extract_strided_slice %69 {offsets = [0, 16], sizes = [8, 8], strides = [1, 1]} : vector<8x32xf32> to vector<8x8xf32>
    %86 = vector.extract_strided_slice %69 {offsets = [0, 24], sizes = [8, 8], strides = [1, 1]} : vector<8x32xf32> to vector<8x8xf32>
    %87 = vector.shape_cast %83 : vector<8x8xf32> to vector<1x8x8xf32>
    %88 = vector.shape_cast %84 : vector<8x8xf32> to vector<1x8x8xf32>
    %89 = vector.shape_cast %85 : vector<8x8xf32> to vector<1x8x8xf32>
    %90 = vector.shape_cast %86 : vector<8x8xf32> to vector<1x8x8xf32>
    %91 = tpu.concatenate %87, %88, %89, %90 in 0 : vector<1x8x8xf32>, vector<1x8x8xf32>, vector<1x8x8xf32>, vector<1x8x8xf32> -> vector<4x8x8xf32>
    %92 = arith.truncf %91 : vector<4x8x8xf32> to vector<4x8x8xbf16>
    %93 = vector.extract_strided_slice %70 {offsets = [0, 0], sizes = [8, 8], strides = [1, 1]} : vector<8x32xf32> to vector<8x8xf32>
    %94 = vector.extract_strided_slice %70 {offsets = [0, 8], sizes = [8, 8], strides = [1, 1]} : vector<8x32xf32> to vector<8x8xf32>
    %95 = vector.extract_strided_slice %70 {offsets = [0, 16], sizes = [8, 8], strides = [1, 1]} : vector<8x32xf32> to vector<8x8xf32>
    %96 = vector.extract_strided_slice %70 {offsets = [0, 24], sizes = [8, 8], strides = [1, 1]} : vector<8x32xf32> to vector<8x8xf32>
    %97 = vector.shape_cast %93 : vector<8x8xf32> to vector<1x8x8xf32>
    %98 = vector.shape_cast %94 : vector<8x8xf32> to vector<1x8x8xf32>
    %99 = vector.shape_cast %95 : vector<8x8xf32> to vector<1x8x8xf32>
    %100 = vector.shape_cast %96 : vector<8x8xf32> to vector<1x8x8xf32>
    %101 = tpu.concatenate %97, %98, %99, %100 in 0 : vector<1x8x8xf32>, vector<1x8x8xf32>, vector<1x8x8xf32>, vector<1x8x8xf32> -> vector<4x8x8xf32>
    %102 = arith.truncf %101 : vector<4x8x8xf32> to vector<4x8x8xbf16>
    "tpu.trace_start"() <{level = 10 : i32, message = "hqd,hkd->hqk"}> : () -> ()
    %cst_35 = arith.constant dense<0.000000e+00> : vector<4x8x8xf32>
    %103 = tpu.matmul %82, %92, %cst_35 {dimension_numbers = #tpu.dot_dimension_numbers<[2], [2], [1], [1], [0, 0, 0, 1, 1, 1], [0], [0]>} : vector<4x8x8xbf16>, vector<4x8x8xbf16>, vector<4x8x8xf32> -> vector<4x8x8xf32>
    "tpu.trace_stop"() : () -> ()
    %cst_36 = arith.constant 0.353553385 : f32
    %104 = vector.broadcast %cst_36 : f32 to vector<4x8x8xf32>
    %105 = arith.mulf %103, %104 : vector<4x8x8xf32>
    %106 = vector.broadcast %32 : vector<1x1x8xf32> to vector<4x8x8xf32>
    %107 = arith.addf %105, %106 : vector<4x8x8xf32>
    %cst_37 = arith.constant dense<0xFF800000> : vector<4x8xf32>
    %108 = vector.multi_reduction <maximumf>, %107, %cst_37 [2] : vector<4x8x8xf32> to vector<4x8xf32>
    %109 = vector.shape_cast %108 : vector<4x8xf32> to vector<4x8x1xf32>
    %110 = vector.broadcast %109 : vector<4x8x1xf32> to vector<4x8x8xf32>
    %111 = arith.subf %107, %110 : vector<4x8x8xf32>
    %112 = math.exp %111 : vector<4x8x8xf32>
    %cst_38 = arith.constant dense<0.000000e+00> : vector<4x8xf32>
    %113 = vector.multi_reduction <add>, %112, %cst_38 [2] : vector<4x8x8xf32> to vector<4x8xf32>
    %114 = vector.shape_cast %113 : vector<4x8xf32> to vector<4x8x1xf32>
    %115 = tpu.reciprocal %114 {approx = true} : vector<4x8x1xf32> -> vector<4x8x1xf32>
    %116 = vector.broadcast %115 : vector<4x8x1xf32> to vector<4x8x8xf32>
    %117 = arith.mulf %112, %116 : vector<4x8x8xf32>
    %118 = arith.truncf %117 : vector<4x8x8xf32> to vector<4x8x8xbf16>
    "tpu.trace_start"() <{level = 10 : i32, message = "hqk,hkd->hqd"}> : () -> ()
    %cst_39 = arith.constant dense<0.000000e+00> : vector<4x8x8xf32>
    %119 = tpu.matmul %118, %102, %cst_39 {dimension_numbers = #tpu.dot_dimension_numbers<[2], [1], [1], [2], [0, 0, 0, 1, 1, 2], [0], [0]>} : vector<4x8x8xbf16>, vector<4x8x8xbf16>, vector<4x8x8xf32> -> vector<4x8x8xf32>
    "tpu.trace_stop"() : () -> ()
    %120 = vector.extract_strided_slice %119 {offsets = [0, 0, 0], sizes = [1, 8, 8], strides = [1, 1, 1]} : vector<4x8x8xf32> to vector<1x8x8xf32>
    %121 = vector.shape_cast %120 : vector<1x8x8xf32> to vector<8x8xf32>
    %122 = vector.extract_strided_slice %119 {offsets = [1, 0, 0], sizes = [1, 8, 8], strides = [1, 1, 1]} : vector<4x8x8xf32> to vector<1x8x8xf32>
    %123 = vector.shape_cast %122 : vector<1x8x8xf32> to vector<8x8xf32>
    %124 = vector.extract_strided_slice %119 {offsets = [2, 0, 0], sizes = [1, 8, 8], strides = [1, 1, 1]} : vector<4x8x8xf32> to vector<1x8x8xf32>
    %125 = vector.shape_cast %124 : vector<1x8x8xf32> to vector<8x8xf32>
    %126 = vector.extract_strided_slice %119 {offsets = [3, 0, 0], sizes = [1, 8, 8], strides = [1, 1, 1]} : vector<4x8x8xf32> to vector<1x8x8xf32>
    %127 = vector.shape_cast %126 : vector<1x8x8xf32> to vector<8x8xf32>
    %128 = tpu.concatenate %121, %123, %125, %127 in 1 : vector<8x8xf32>, vector<8x8xf32>, vector<8x8xf32>, vector<8x8xf32> -> vector<8x32xf32>
    %129 = arith.truncf %128 : vector<8x32xf32> to vector<8x32xbf16>
    %cst_40 = arith.constant dense<0.000000e+00> : vector<8x32xf32>
    %130 = tpu.matmul %129, %71, %cst_40 {dimension_numbers = #tpu.dot_dimension_numbers<[1], [0], [0], [1], [0, 0, 1, 1], [], []>} : vector<8x32xbf16>, vector<32x32xbf16>, vector<8x32xf32> -> vector<8x32xf32>
    %131 = vector.broadcast %72 : vector<1x32xf32> to vector<8x32xf32>
    %132 = arith.addf %130, %131 : vector<8x32xf32>
    %133 = arith.addf %19, %132 : vector<8x32xf32>
    %c4 = arith.constant 4 : index
    %c0_41 = arith.constant 0 : index
    %134 = vector.load %arg6[%c4, %c0_41] : memref<48x128xf32, #tpu.memory_space<vmem>>, vector<1x32xf32>
    %c5 = arith.constant 5 : index
    %c0_42 = arith.constant 0 : index
    %135 = vector.load %arg6[%c5, %c0_42] : memref<48x128xf32, #tpu.memory_space<vmem>>, vector<1x32xf32>
    %cst_43 = arith.constant dense<0.000000e+00> : vector<8xf32>
    %136 = vector.multi_reduction <add>, %133, %cst_43 [1] : vector<8x32xf32> to vector<8xf32>
    %137 = vector.shape_cast %136 : vector<8xf32> to vector<8x1xf32>
    %cst_44 = arith.constant 3.200000e+01 : f32
    %138 = vector.broadcast %cst_44 : f32 to vector<8x1xf32>
    %139 = arith.divf %137, %138 : vector<8x1xf32>
    %140 = vector.broadcast %139 : vector<8x1xf32> to vector<8x32xf32>
    %141 = arith.subf %133, %140 : vector<8x32xf32>
    %142 = arith.mulf %141, %141 : vector<8x32xf32>
    %cst_45 = arith.constant dense<0.000000e+00> : vector<8xf32>
    %143 = vector.multi_reduction <add>, %142, %cst_45 [1] : vector<8x32xf32> to vector<8xf32>
    %144 = vector.shape_cast %143 : vector<8xf32> to vector<8x1xf32>
    %cst_46 = arith.constant 0.0322580636 : f32
    %145 = vector.broadcast %cst_46 : f32 to vector<8x1xf32>
    %146 = arith.mulf %144, %145 : vector<8x1xf32>
    %147 = vector.broadcast %134 : vector<1x32xf32> to vector<8x32xf32>
    %148 = arith.mulf %147, %141 : vector<8x32xf32>
    %149 = math.sqrt %146 : vector<8x1xf32>
    %cst_47 = arith.constant 9.99999997E-7 : f32
    %150 = vector.broadcast %cst_47 : f32 to vector<8x1xf32>
    %151 = arith.addf %149, %150 : vector<8x1xf32>
    %152 = vector.broadcast %151 : vector<8x1xf32> to vector<8x32xf32>
    %153 = arith.divf %148, %152 : vector<8x32xf32>
    %154 = vector.broadcast %135 : vector<1x32xf32> to vector<8x32xf32>
    %155 = arith.addf %153, %154 : vector<8x32xf32>
    %c0_48 = arith.constant 0 : index
    %c128 = arith.constant 128 : index
    %156 = vector.load %arg4[%c0_48, %c128] : memref<32x1024xbf16, #tpu.memory_space<vmem>>, vector<32x64xbf16>
    %c6 = arith.constant 6 : index
    %c0_49 = arith.constant 0 : index
    %157 = vector.load %arg6[%c6, %c0_49] : memref<48x128xf32, #tpu.memory_space<vmem>>, vector<1x64xf32>
    %158 = arith.truncf %155 : vector<8x32xf32> to vector<8x32xbf16>
    %cst_50 = arith.constant dense<0.000000e+00> : vector<8x64xf32>
    %159 = tpu.matmul %158, %156, %cst_50 {dimension_numbers = #tpu.dot_dimension_numbers<[1], [0], [0], [1], [0, 0, 1, 1], [], []>} : vector<8x32xbf16>, vector<32x64xbf16>, vector<8x64xf32> -> vector<8x64xf32>
    %160 = vector.broadcast %157 : vector<1x64xf32> to vector<8x64xf32>
    %161 = arith.addf %159, %160 : vector<8x64xf32>
    %cst_51 = arith.constant 0.000000e+00 : f32
    %162 = vector.broadcast %cst_51 : f32 to vector<8x64xf32>
    %163 = arith.maximumf %161, %162 : vector<8x64xf32>
    %c0_52 = arith.constant 0 : index
    %c0_53 = arith.constant 0 : index
    %164 = vector.load %arg5[%c0_52, %c0_53] : memref<64x128xbf16, #tpu.memory_space<vmem>>, vector<64x32xbf16>
    %165 = arith.truncf %163 : vector<8x64xf32> to vector<8x64xbf16>
    %cst_54 = arith.constant dense<0.000000e+00> : vector<8x32xf32>
    %166 = tpu.matmul %165, %164, %cst_54 {dimension_numbers = #tpu.dot_dimension_numbers<[1], [0], [0], [1], [0, 0, 1, 1], [], []>} : vector<8x64xbf16>, vector<64x32xbf16>, vector<8x32xf32> -> vector<8x32xf32>
    %c7 = arith.constant 7 : index
    %c0_55 = arith.constant 0 : index
    %167 = vector.load %arg6[%c7, %c0_55] : memref<48x128xf32, #tpu.memory_space<vmem>>, vector<1x32xf32>
    %168 = vector.broadcast %167 : vector<1x32xf32> to vector<8x32xf32>
    %169 = arith.addf %166, %168 : vector<8x32xf32>
    %170 = arith.addf %133, %169 : vector<8x32xf32>
    %c8 = arith.constant 8 : index
    %c0_56 = arith.constant 0 : index
    %171 = vector.load %arg6[%c8, %c0_56] : memref<48x128xf32, #tpu.memory_space<vmem>>, vector<1x32xf32>
    %c9 = arith.constant 9 : index
    %c0_57 = arith.constant 0 : index
    %172 = vector.load %arg6[%c9, %c0_57] : memref<48x128xf32, #tpu.memory_space<vmem>>, vector<1x32xf32>
    %cst_58 = arith.constant dense<0.000000e+00> : vector<8xf32>
    %173 = vector.multi_reduction <add>, %170, %cst_58 [1] : vector<8x32xf32> to vector<8xf32>
    %174 = vector.shape_cast %173 : vector<8xf32> to vector<8x1xf32>
    %cst_59 = arith.constant 3.200000e+01 : f32
    %175 = vector.broadcast %cst_59 : f32 to vector<8x1xf32>
    %176 = arith.divf %174, %175 : vector<8x1xf32>
    %177 = vector.broadcast %176 : vector<8x1xf32> to vector<8x32xf32>
    %178 = arith.subf %170, %177 : vector<8x32xf32>
    %179 = arith.mulf %178, %178 : vector<8x32xf32>
    %cst_60 = arith.constant dense<0.000000e+00> : vector<8xf32>
    %180 = vector.multi_reduction <add>, %179, %cst_60 [1] : vector<8x32xf32> to vector<8xf32>
    %181 = vector.shape_cast %180 : vector<8xf32> to vector<8x1xf32>
    %cst_61 = arith.constant 0.0322580636 : f32
    %182 = vector.broadcast %cst_61 : f32 to vector<8x1xf32>
    %183 = arith.mulf %181, %182 : vector<8x1xf32>
    %184 = vector.broadcast %171 : vector<1x32xf32> to vector<8x32xf32>
    %185 = arith.mulf %184, %178 : vector<8x32xf32>
    %186 = math.sqrt %183 : vector<8x1xf32>
    %cst_62 = arith.constant 9.99999997E-7 : f32
    %187 = vector.broadcast %cst_62 : f32 to vector<8x1xf32>
    %188 = arith.addf %186, %187 : vector<8x1xf32>
    %189 = vector.broadcast %188 : vector<8x1xf32> to vector<8x32xf32>
    %190 = arith.divf %185, %189 : vector<8x32xf32>
    %191 = vector.broadcast %172 : vector<1x32xf32> to vector<8x32xf32>
    %192 = arith.addf %190, %191 : vector<8x32xf32>
    %c0_63 = arith.constant 0 : index
    %c192 = arith.constant 192 : index
    %193 = vector.load %arg4[%c0_63, %c192] : memref<32x1024xbf16, #tpu.memory_space<vmem>>, vector<32x96xbf16>
    %c10 = arith.constant 10 : index
    %c0_64 = arith.constant 0 : index
    %194 = vector.load %arg6[%c10, %c0_64] : memref<48x128xf32, #tpu.memory_space<vmem>>, vector<1x96xf32>
    %195 = arith.truncf %192 : vector<8x32xf32> to vector<8x32xbf16>
    %cst_65 = arith.constant dense<0.000000e+00> : vector<8x96xf32>
    %196 = tpu.matmul %195, %193, %cst_65 {dimension_numbers = #tpu.dot_dimension_numbers<[1], [0], [0], [1], [0, 0, 1, 1], [], []>} : vector<8x32xbf16>, vector<32x96xbf16>, vector<8x96xf32> -> vector<8x96xf32>
    %197 = vector.broadcast %194 : vector<1x96xf32> to vector<8x96xf32>
    %198 = arith.addf %196, %197 : vector<8x96xf32>
    %199 = vector.extract_strided_slice %198 {offsets = [0, 0], sizes = [8, 32], strides = [1, 1]} : vector<8x96xf32> to vector<8x32xf32>
    %200 = vector.extract_strided_slice %198 {offsets = [0, 32], sizes = [8, 32], strides = [1, 1]} : vector<8x96xf32> to vector<8x32xf32>
    %201 = vector.extract_strided_slice %198 {offsets = [0, 64], sizes = [8, 32], strides = [1, 1]} : vector<8x96xf32> to vector<8x32xf32>
    %c0_66 = arith.constant 0 : index
    %c288 = arith.constant 288 : index
    %202 = vector.load %arg4[%c0_66, %c288] : memref<32x1024xbf16, #tpu.memory_space<vmem>>, vector<32x32xbf16>
    %c11 = arith.constant 11 : index
    %c0_67 = arith.constant 0 : index
    %203 = vector.load %arg6[%c11, %c0_67] : memref<48x128xf32, #tpu.memory_space<vmem>>, vector<1x32xf32>
    %204 = vector.extract_strided_slice %199 {offsets = [0, 0], sizes = [8, 8], strides = [1, 1]} : vector<8x32xf32> to vector<8x8xf32>
    %205 = vector.extract_strided_slice %199 {offsets = [0, 8], sizes = [8, 8], strides = [1, 1]} : vector<8x32xf32> to vector<8x8xf32>
    %206 = vector.extract_strided_slice %199 {offsets = [0, 16], sizes = [8, 8], strides = [1, 1]} : vector<8x32xf32> to vector<8x8xf32>
    %207 = vector.extract_strided_slice %199 {offsets = [0, 24], sizes = [8, 8], strides = [1, 1]} : vector<8x32xf32> to vector<8x8xf32>
    %208 = vector.shape_cast %204 : vector<8x8xf32> to vector<1x8x8xf32>
    %209 = vector.shape_cast %205 : vector<8x8xf32> to vector<1x8x8xf32>
    %210 = vector.shape_cast %206 : vector<8x8xf32> to vector<1x8x8xf32>
    %211 = vector.shape_cast %207 : vector<8x8xf32> to vector<1x8x8xf32>
    %212 = tpu.concatenate %208, %209, %210, %211 in 0 : vector<1x8x8xf32>, vector<1x8x8xf32>, vector<1x8x8xf32>, vector<1x8x8xf32> -> vector<4x8x8xf32>
    %213 = arith.truncf %212 : vector<4x8x8xf32> to vector<4x8x8xbf16>
    %214 = vector.extract_strided_slice %200 {offsets = [0, 0], sizes = [8, 8], strides = [1, 1]} : vector<8x32xf32> to vector<8x8xf32>
    %215 = vector.extract_strided_slice %200 {offsets = [0, 8], sizes = [8, 8], strides = [1, 1]} : vector<8x32xf32> to vector<8x8xf32>
    %216 = vector.extract_strided_slice %200 {offsets = [0, 16], sizes = [8, 8], strides = [1, 1]} : vector<8x32xf32> to vector<8x8xf32>
    %217 = vector.extract_strided_slice %200 {offsets = [0, 24], sizes = [8, 8], strides = [1, 1]} : vector<8x32xf32> to vector<8x8xf32>
    %218 = vector.shape_cast %214 : vector<8x8xf32> to vector<1x8x8xf32>
    %219 = vector.shape_cast %215 : vector<8x8xf32> to vector<1x8x8xf32>
    %220 = vector.shape_cast %216 : vector<8x8xf32> to vector<1x8x8xf32>
    %221 = vector.shape_cast %217 : vector<8x8xf32> to vector<1x8x8xf32>
    %222 = tpu.concatenate %218, %219, %220, %221 in 0 : vector<1x8x8xf32>, vector<1x8x8xf32>, vector<1x8x8xf32>, vector<1x8x8xf32> -> vector<4x8x8xf32>
    %223 = arith.truncf %222 : vector<4x8x8xf32> to vector<4x8x8xbf16>
    %224 = vector.extract_strided_slice %201 {offsets = [0, 0], sizes = [8, 8], strides = [1, 1]} : vector<8x32xf32> to vector<8x8xf32>
    %225 = vector.extract_strided_slice %201 {offsets = [0, 8], sizes = [8, 8], strides = [1, 1]} : vector<8x32xf32> to vector<8x8xf32>
    %226 = vector.extract_strided_slice %201 {offsets = [0, 16], sizes = [8, 8], strides = [1, 1]} : vector<8x32xf32> to vector<8x8xf32>
    %227 = vector.extract_strided_slice %201 {offsets = [0, 24], sizes = [8, 8], strides = [1, 1]} : vector<8x32xf32> to vector<8x8xf32>
    %228 = vector.shape_cast %224 : vector<8x8xf32> to vector<1x8x8xf32>
    %229 = vector.shape_cast %225 : vector<8x8xf32> to vector<1x8x8xf32>
    %230 = vector.shape_cast %226 : vector<8x8xf32> to vector<1x8x8xf32>
    %231 = vector.shape_cast %227 : vector<8x8xf32> to vector<1x8x8xf32>
    %232 = tpu.concatenate %228, %229, %230, %231 in 0 : vector<1x8x8xf32>, vector<1x8x8xf32>, vector<1x8x8xf32>, vector<1x8x8xf32> -> vector<4x8x8xf32>
    %233 = arith.truncf %232 : vector<4x8x8xf32> to vector<4x8x8xbf16>
    "tpu.trace_start"() <{level = 10 : i32, message = "hqd,hkd->hqk"}> : () -> ()
    %cst_68 = arith.constant dense<0.000000e+00> : vector<4x8x8xf32>
    %234 = tpu.matmul %213, %223, %cst_68 {dimension_numbers = #tpu.dot_dimension_numbers<[2], [2], [1], [1], [0, 0, 0, 1, 1, 1], [0], [0]>} : vector<4x8x8xbf16>, vector<4x8x8xbf16>, vector<4x8x8xf32> -> vector<4x8x8xf32>
    "tpu.trace_stop"() : () -> ()
    %cst_69 = arith.constant 0.353553385 : f32
    %235 = vector.broadcast %cst_69 : f32 to vector<4x8x8xf32>
    %236 = arith.mulf %234, %235 : vector<4x8x8xf32>
    %237 = vector.broadcast %32 : vector<1x1x8xf32> to vector<4x8x8xf32>
    %238 = arith.addf %236, %237 : vector<4x8x8xf32>
    %cst_70 = arith.constant dense<0xFF800000> : vector<4x8xf32>
    %239 = vector.multi_reduction <maximumf>, %238, %cst_70 [2] : vector<4x8x8xf32> to vector<4x8xf32>
    %240 = vector.shape_cast %239 : vector<4x8xf32> to vector<4x8x1xf32>
    %241 = vector.broadcast %240 : vector<4x8x1xf32> to vector<4x8x8xf32>
    %242 = arith.subf %238, %241 : vector<4x8x8xf32>
    %243 = math.exp %242 : vector<4x8x8xf32>
    %cst_71 = arith.constant dense<0.000000e+00> : vector<4x8xf32>
    %244 = vector.multi_reduction <add>, %243, %cst_71 [2] : vector<4x8x8xf32> to vector<4x8xf32>
    %245 = vector.shape_cast %244 : vector<4x8xf32> to vector<4x8x1xf32>
    %246 = tpu.reciprocal %245 {approx = true} : vector<4x8x1xf32> -> vector<4x8x1xf32>
    %247 = vector.broadcast %246 : vector<4x8x1xf32> to vector<4x8x8xf32>
    %248 = arith.mulf %243, %247 : vector<4x8x8xf32>
    %249 = arith.truncf %248 : vector<4x8x8xf32> to vector<4x8x8xbf16>
    "tpu.trace_start"() <{level = 10 : i32, message = "hqk,hkd->hqd"}> : () -> ()
    %cst_72 = arith.constant dense<0.000000e+00> : vector<4x8x8xf32>
    %250 = tpu.matmul %249, %233, %cst_72 {dimension_numbers = #tpu.dot_dimension_numbers<[2], [1], [1], [2], [0, 0, 0, 1, 1, 2], [0], [0]>} : vector<4x8x8xbf16>, vector<4x8x8xbf16>, vector<4x8x8xf32> -> vector<4x8x8xf32>
    "tpu.trace_stop"() : () -> ()
    %251 = vector.extract_strided_slice %250 {offsets = [0, 0, 0], sizes = [1, 8, 8], strides = [1, 1, 1]} : vector<4x8x8xf32> to vector<1x8x8xf32>
    %252 = vector.shape_cast %251 : vector<1x8x8xf32> to vector<8x8xf32>
    %253 = vector.extract_strided_slice %250 {offsets = [1, 0, 0], sizes = [1, 8, 8], strides = [1, 1, 1]} : vector<4x8x8xf32> to vector<1x8x8xf32>
    %254 = vector.shape_cast %253 : vector<1x8x8xf32> to vector<8x8xf32>
    %255 = vector.extract_strided_slice %250 {offsets = [2, 0, 0], sizes = [1, 8, 8], strides = [1, 1, 1]} : vector<4x8x8xf32> to vector<1x8x8xf32>
    %256 = vector.shape_cast %255 : vector<1x8x8xf32> to vector<8x8xf32>
    %257 = vector.extract_strided_slice %250 {offsets = [3, 0, 0], sizes = [1, 8, 8], strides = [1, 1, 1]} : vector<4x8x8xf32> to vector<1x8x8xf32>
    %258 = vector.shape_cast %257 : vector<1x8x8xf32> to vector<8x8xf32>
    %259 = tpu.concatenate %252, %254, %256, %258 in 1 : vector<8x8xf32>, vector<8x8xf32>, vector<8x8xf32>, vector<8x8xf32> -> vector<8x32xf32>
    %260 = arith.truncf %259 : vector<8x32xf32> to vector<8x32xbf16>
    %cst_73 = arith.constant dense<0.000000e+00> : vector<8x32xf32>
    %261 = tpu.matmul %260, %202, %cst_73 {dimension_numbers = #tpu.dot_dimension_numbers<[1], [0], [0], [1], [0, 0, 1, 1], [], []>} : vector<8x32xbf16>, vector<32x32xbf16>, vector<8x32xf32> -> vector<8x32xf32>
    %262 = vector.broadcast %203 : vector<1x32xf32> to vector<8x32xf32>
    %263 = arith.addf %261, %262 : vector<8x32xf32>
    %264 = arith.addf %170, %263 : vector<8x32xf32>
    %c12 = arith.constant 12 : index
    %c0_74 = arith.constant 0 : index
    %265 = vector.load %arg6[%c12, %c0_74] : memref<48x128xf32, #tpu.memory_space<vmem>>, vector<1x32xf32>
    %c13 = arith.constant 13 : index
    %c0_75 = arith.constant 0 : index
    %266 = vector.load %arg6[%c13, %c0_75] : memref<48x128xf32, #tpu.memory_space<vmem>>, vector<1x32xf32>
    %cst_76 = arith.constant dense<0.000000e+00> : vector<8xf32>
    %267 = vector.multi_reduction <add>, %264, %cst_76 [1] : vector<8x32xf32> to vector<8xf32>
    %268 = vector.shape_cast %267 : vector<8xf32> to vector<8x1xf32>
    %cst_77 = arith.constant 3.200000e+01 : f32
    %269 = vector.broadcast %cst_77 : f32 to vector<8x1xf32>
    %270 = arith.divf %268, %269 : vector<8x1xf32>
    %271 = vector.broadcast %270 : vector<8x1xf32> to vector<8x32xf32>
    %272 = arith.subf %264, %271 : vector<8x32xf32>
    %273 = arith.mulf %272, %272 : vector<8x32xf32>
    %cst_78 = arith.constant dense<0.000000e+00> : vector<8xf32>
    %274 = vector.multi_reduction <add>, %273, %cst_78 [1] : vector<8x32xf32> to vector<8xf32>
    %275 = vector.shape_cast %274 : vector<8xf32> to vector<8x1xf32>
    %cst_79 = arith.constant 0.0322580636 : f32
    %276 = vector.broadcast %cst_79 : f32 to vector<8x1xf32>
    %277 = arith.mulf %275, %276 : vector<8x1xf32>
    %278 = vector.broadcast %265 : vector<1x32xf32> to vector<8x32xf32>
    %279 = arith.mulf %278, %272 : vector<8x32xf32>
    %280 = math.sqrt %277 : vector<8x1xf32>
    %cst_80 = arith.constant 9.99999997E-7 : f32
    %281 = vector.broadcast %cst_80 : f32 to vector<8x1xf32>
    %282 = arith.addf %280, %281 : vector<8x1xf32>
    %283 = vector.broadcast %282 : vector<8x1xf32> to vector<8x32xf32>
    %284 = arith.divf %279, %283 : vector<8x32xf32>
    %285 = vector.broadcast %266 : vector<1x32xf32> to vector<8x32xf32>
    %286 = arith.addf %284, %285 : vector<8x32xf32>
    %c0_81 = arith.constant 0 : index
    %c320 = arith.constant 320 : index
    %287 = vector.load %arg4[%c0_81, %c320] : memref<32x1024xbf16, #tpu.memory_space<vmem>>, vector<32x64xbf16>
    %c14 = arith.constant 14 : index
    %c0_82 = arith.constant 0 : index
    %288 = vector.load %arg6[%c14, %c0_82] : memref<48x128xf32, #tpu.memory_space<vmem>>, vector<1x64xf32>
    %289 = arith.truncf %286 : vector<8x32xf32> to vector<8x32xbf16>
    %cst_83 = arith.constant dense<0.000000e+00> : vector<8x64xf32>
    %290 = tpu.matmul %289, %287, %cst_83 {dimension_numbers = #tpu.dot_dimension_numbers<[1], [0], [0], [1], [0, 0, 1, 1], [], []>} : vector<8x32xbf16>, vector<32x64xbf16>, vector<8x64xf32> -> vector<8x64xf32>
    %291 = vector.broadcast %288 : vector<1x64xf32> to vector<8x64xf32>
    %292 = arith.addf %290, %291 : vector<8x64xf32>
    %cst_84 = arith.constant 0.000000e+00 : f32
    %293 = vector.broadcast %cst_84 : f32 to vector<8x64xf32>
    %294 = arith.maximumf %292, %293 : vector<8x64xf32>
    %c0_85 = arith.constant 0 : index
    %c32_86 = arith.constant 32 : index
    %295 = vector.load %arg5[%c0_85, %c32_86] : memref<64x128xbf16, #tpu.memory_space<vmem>>, vector<64x32xbf16>
    %296 = arith.truncf %294 : vector<8x64xf32> to vector<8x64xbf16>
    %cst_87 = arith.constant dense<0.000000e+00> : vector<8x32xf32>
    %297 = tpu.matmul %296, %295, %cst_87 {dimension_numbers = #tpu.dot_dimension_numbers<[1], [0], [0], [1], [0, 0, 1, 1], [], []>} : vector<8x64xbf16>, vector<64x32xbf16>, vector<8x32xf32> -> vector<8x32xf32>
    %c15 = arith.constant 15 : index
    %c0_88 = arith.constant 0 : index
    %298 = vector.load %arg6[%c15, %c0_88] : memref<48x128xf32, #tpu.memory_space<vmem>>, vector<1x32xf32>
    %299 = vector.broadcast %298 : vector<1x32xf32> to vector<8x32xf32>
    %300 = arith.addf %297, %299 : vector<8x32xf32>
    %301 = arith.addf %264, %300 : vector<8x32xf32>
    %c42 = arith.constant 42 : index
    %c0_89 = arith.constant 0 : index
    %302 = vector.load %arg6[%c42, %c0_89] : memref<48x128xf32, #tpu.memory_space<vmem>>, vector<1x32xf32>
    %c43 = arith.constant 43 : index
    %c0_90 = arith.constant 0 : index
    %303 = vector.load %arg6[%c43, %c0_90] : memref<48x128xf32, #tpu.memory_space<vmem>>, vector<1x32xf32>
    %cst_91 = arith.constant dense<0.000000e+00> : vector<8xf32>
    %304 = vector.multi_reduction <add>, %301, %cst_91 [1] : vector<8x32xf32> to vector<8xf32>
    %305 = vector.shape_cast %304 : vector<8xf32> to vector<8x1xf32>
    %cst_92 = arith.constant 3.200000e+01 : f32
    %306 = vector.broadcast %cst_92 : f32 to vector<8x1xf32>
    %307 = arith.divf %305, %306 : vector<8x1xf32>
    %308 = vector.broadcast %307 : vector<8x1xf32> to vector<8x32xf32>
    %309 = arith.subf %301, %308 : vector<8x32xf32>
    %310 = arith.mulf %309, %309 : vector<8x32xf32>
    %cst_93 = arith.constant dense<0.000000e+00> : vector<8xf32>
    %311 = vector.multi_reduction <add>, %310, %cst_93 [1] : vector<8x32xf32> to vector<8xf32>
    %312 = vector.shape_cast %311 : vector<8xf32> to vector<8x1xf32>
    %cst_94 = arith.constant 0.0322580636 : f32
    %313 = vector.broadcast %cst_94 : f32 to vector<8x1xf32>
    %314 = arith.mulf %312, %313 : vector<8x1xf32>
    %315 = vector.broadcast %302 : vector<1x32xf32> to vector<8x32xf32>
    %316 = arith.mulf %315, %309 : vector<8x32xf32>
    %317 = math.sqrt %314 : vector<8x1xf32>
    %cst_95 = arith.constant 9.99999997E-7 : f32
    %318 = vector.broadcast %cst_95 : f32 to vector<8x1xf32>
    %319 = arith.addf %317, %318 : vector<8x1xf32>
    %320 = vector.broadcast %319 : vector<8x1xf32> to vector<8x32xf32>
    %321 = arith.divf %316, %320 : vector<8x32xf32>
    %322 = vector.broadcast %303 : vector<1x32xf32> to vector<8x32xf32>
    %323 = arith.addf %321, %322 : vector<8x32xf32>
    %c16_96 = arith.constant 16 : index
    %c0_97 = arith.constant 0 : index
    %324 = vector.load %arg6[%c16_96, %c0_97] : memref<48x128xf32, #tpu.memory_space<vmem>>, vector<1x32xf32>
    %c17 = arith.constant 17 : index
    %c0_98 = arith.constant 0 : index
    %325 = vector.load %arg6[%c17, %c0_98] : memref<48x128xf32, #tpu.memory_space<vmem>>, vector<1x32xf32>
    %cst_99 = arith.constant dense<0.000000e+00> : vector<8xf32>
    %326 = vector.multi_reduction <add>, %25, %cst_99 [1] : vector<8x32xf32> to vector<8xf32>
    %327 = vector.shape_cast %326 : vector<8xf32> to vector<8x1xf32>
    %cst_100 = arith.constant 3.200000e+01 : f32
    %328 = vector.broadcast %cst_100 : f32 to vector<8x1xf32>
    %329 = arith.divf %327, %328 : vector<8x1xf32>
    %330 = vector.broadcast %329 : vector<8x1xf32> to vector<8x32xf32>
    %331 = arith.subf %25, %330 : vector<8x32xf32>
    %332 = arith.mulf %331, %331 : vector<8x32xf32>
    %cst_101 = arith.constant dense<0.000000e+00> : vector<8xf32>
    %333 = vector.multi_reduction <add>, %332, %cst_101 [1] : vector<8x32xf32> to vector<8xf32>
    %334 = vector.shape_cast %333 : vector<8xf32> to vector<8x1xf32>
    %cst_102 = arith.constant 0.0322580636 : f32
    %335 = vector.broadcast %cst_102 : f32 to vector<8x1xf32>
    %336 = arith.mulf %334, %335 : vector<8x1xf32>
    %337 = vector.broadcast %324 : vector<1x32xf32> to vector<8x32xf32>
    %338 = arith.mulf %337, %331 : vector<8x32xf32>
    %339 = math.sqrt %336 : vector<8x1xf32>
    %cst_103 = arith.constant 9.99999997E-7 : f32
    %340 = vector.broadcast %cst_103 : f32 to vector<8x1xf32>
    %341 = arith.addf %339, %340 : vector<8x1xf32>
    %342 = vector.broadcast %341 : vector<8x1xf32> to vector<8x32xf32>
    %343 = arith.divf %338, %342 : vector<8x32xf32>
    %344 = vector.broadcast %325 : vector<1x32xf32> to vector<8x32xf32>
    %345 = arith.addf %343, %344 : vector<8x32xf32>
    %c0_104 = arith.constant 0 : index
    %c384 = arith.constant 384 : index
    %346 = vector.load %arg4[%c0_104, %c384] : memref<32x1024xbf16, #tpu.memory_space<vmem>>, vector<32x96xbf16>
    %c18 = arith.constant 18 : index
    %c0_105 = arith.constant 0 : index
    %347 = vector.load %arg6[%c18, %c0_105] : memref<48x128xf32, #tpu.memory_space<vmem>>, vector<1x96xf32>
    %348 = arith.truncf %345 : vector<8x32xf32> to vector<8x32xbf16>
    %cst_106 = arith.constant dense<0.000000e+00> : vector<8x96xf32>
    %349 = tpu.matmul %348, %346, %cst_106 {dimension_numbers = #tpu.dot_dimension_numbers<[1], [0], [0], [1], [0, 0, 1, 1], [], []>} : vector<8x32xbf16>, vector<32x96xbf16>, vector<8x96xf32> -> vector<8x96xf32>
    %350 = vector.broadcast %347 : vector<1x96xf32> to vector<8x96xf32>
    %351 = arith.addf %349, %350 : vector<8x96xf32>
    %352 = vector.extract_strided_slice %351 {offsets = [0, 0], sizes = [8, 32], strides = [1, 1]} : vector<8x96xf32> to vector<8x32xf32>
    %353 = vector.extract_strided_slice %351 {offsets = [0, 32], sizes = [8, 32], strides = [1, 1]} : vector<8x96xf32> to vector<8x32xf32>
    %354 = vector.extract_strided_slice %351 {offsets = [0, 64], sizes = [8, 32], strides = [1, 1]} : vector<8x96xf32> to vector<8x32xf32>
    %c0_107 = arith.constant 0 : index
    %c480 = arith.constant 480 : index
    %355 = vector.load %arg4[%c0_107, %c480] : memref<32x1024xbf16, #tpu.memory_space<vmem>>, vector<32x32xbf16>
    %c19 = arith.constant 19 : index
    %c0_108 = arith.constant 0 : index
    %356 = vector.load %arg6[%c19, %c0_108] : memref<48x128xf32, #tpu.memory_space<vmem>>, vector<1x32xf32>
    %357 = vector.extract_strided_slice %352 {offsets = [0, 0], sizes = [8, 8], strides = [1, 1]} : vector<8x32xf32> to vector<8x8xf32>
    %358 = vector.extract_strided_slice %352 {offsets = [0, 8], sizes = [8, 8], strides = [1, 1]} : vector<8x32xf32> to vector<8x8xf32>
    %359 = vector.extract_strided_slice %352 {offsets = [0, 16], sizes = [8, 8], strides = [1, 1]} : vector<8x32xf32> to vector<8x8xf32>
    %360 = vector.extract_strided_slice %352 {offsets = [0, 24], sizes = [8, 8], strides = [1, 1]} : vector<8x32xf32> to vector<8x8xf32>
    %361 = vector.shape_cast %357 : vector<8x8xf32> to vector<1x8x8xf32>
    %362 = vector.shape_cast %358 : vector<8x8xf32> to vector<1x8x8xf32>
    %363 = vector.shape_cast %359 : vector<8x8xf32> to vector<1x8x8xf32>
    %364 = vector.shape_cast %360 : vector<8x8xf32> to vector<1x8x8xf32>
    %365 = tpu.concatenate %361, %362, %363, %364 in 0 : vector<1x8x8xf32>, vector<1x8x8xf32>, vector<1x8x8xf32>, vector<1x8x8xf32> -> vector<4x8x8xf32>
    %366 = arith.truncf %365 : vector<4x8x8xf32> to vector<4x8x8xbf16>
    %367 = vector.extract_strided_slice %353 {offsets = [0, 0], sizes = [8, 8], strides = [1, 1]} : vector<8x32xf32> to vector<8x8xf32>
    %368 = vector.extract_strided_slice %353 {offsets = [0, 8], sizes = [8, 8], strides = [1, 1]} : vector<8x32xf32> to vector<8x8xf32>
    %369 = vector.extract_strided_slice %353 {offsets = [0, 16], sizes = [8, 8], strides = [1, 1]} : vector<8x32xf32> to vector<8x8xf32>
    %370 = vector.extract_strided_slice %353 {offsets = [0, 24], sizes = [8, 8], strides = [1, 1]} : vector<8x32xf32> to vector<8x8xf32>
    %371 = vector.shape_cast %367 : vector<8x8xf32> to vector<1x8x8xf32>
    %372 = vector.shape_cast %368 : vector<8x8xf32> to vector<1x8x8xf32>
    %373 = vector.shape_cast %369 : vector<8x8xf32> to vector<1x8x8xf32>
    %374 = vector.shape_cast %370 : vector<8x8xf32> to vector<1x8x8xf32>
    %375 = tpu.concatenate %371, %372, %373, %374 in 0 : vector<1x8x8xf32>, vector<1x8x8xf32>, vector<1x8x8xf32>, vector<1x8x8xf32> -> vector<4x8x8xf32>
    %376 = arith.truncf %375 : vector<4x8x8xf32> to vector<4x8x8xbf16>
    %377 = vector.extract_strided_slice %354 {offsets = [0, 0], sizes = [8, 8], strides = [1, 1]} : vector<8x32xf32> to vector<8x8xf32>
    %378 = vector.extract_strided_slice %354 {offsets = [0, 8], sizes = [8, 8], strides = [1, 1]} : vector<8x32xf32> to vector<8x8xf32>
    %379 = vector.extract_strided_slice %354 {offsets = [0, 16], sizes = [8, 8], strides = [1, 1]} : vector<8x32xf32> to vector<8x8xf32>
    %380 = vector.extract_strided_slice %354 {offsets = [0, 24], sizes = [8, 8], strides = [1, 1]} : vector<8x32xf32> to vector<8x8xf32>
    %381 = vector.shape_cast %377 : vector<8x8xf32> to vector<1x8x8xf32>
    %382 = vector.shape_cast %378 : vector<8x8xf32> to vector<1x8x8xf32>
    %383 = vector.shape_cast %379 : vector<8x8xf32> to vector<1x8x8xf32>
    %384 = vector.shape_cast %380 : vector<8x8xf32> to vector<1x8x8xf32>
    %385 = tpu.concatenate %381, %382, %383, %384 in 0 : vector<1x8x8xf32>, vector<1x8x8xf32>, vector<1x8x8xf32>, vector<1x8x8xf32> -> vector<4x8x8xf32>
    %386 = arith.truncf %385 : vector<4x8x8xf32> to vector<4x8x8xbf16>
    "tpu.trace_start"() <{level = 10 : i32, message = "hqd,hkd->hqk"}> : () -> ()
    %cst_109 = arith.constant dense<0.000000e+00> : vector<4x8x8xf32>
    %387 = tpu.matmul %366, %376, %cst_109 {dimension_numbers = #tpu.dot_dimension_numbers<[2], [2], [1], [1], [0, 0, 0, 1, 1, 1], [0], [0]>} : vector<4x8x8xbf16>, vector<4x8x8xbf16>, vector<4x8x8xf32> -> vector<4x8x8xf32>
    "tpu.trace_stop"() : () -> ()
    %cst_110 = arith.constant 0.353553385 : f32
    %388 = vector.broadcast %cst_110 : f32 to vector<4x8x8xf32>
    %389 = arith.mulf %387, %388 : vector<4x8x8xf32>
    %390 = vector.broadcast %39 : vector<1x8x8xf32> to vector<4x8x8xf32>
    %391 = arith.addf %389, %390 : vector<4x8x8xf32>
    %cst_111 = arith.constant dense<0xFF800000> : vector<4x8xf32>
    %392 = vector.multi_reduction <maximumf>, %391, %cst_111 [2] : vector<4x8x8xf32> to vector<4x8xf32>
    %393 = vector.shape_cast %392 : vector<4x8xf32> to vector<4x8x1xf32>
    %394 = vector.broadcast %393 : vector<4x8x1xf32> to vector<4x8x8xf32>
    %395 = arith.subf %391, %394 : vector<4x8x8xf32>
    %396 = math.exp %395 : vector<4x8x8xf32>
    %cst_112 = arith.constant dense<0.000000e+00> : vector<4x8xf32>
    %397 = vector.multi_reduction <add>, %396, %cst_112 [2] : vector<4x8x8xf32> to vector<4x8xf32>
    %398 = vector.shape_cast %397 : vector<4x8xf32> to vector<4x8x1xf32>
    %399 = tpu.reciprocal %398 {approx = true} : vector<4x8x1xf32> -> vector<4x8x1xf32>
    %400 = vector.broadcast %399 : vector<4x8x1xf32> to vector<4x8x8xf32>
    %401 = arith.mulf %396, %400 : vector<4x8x8xf32>
    %402 = arith.truncf %401 : vector<4x8x8xf32> to vector<4x8x8xbf16>
    "tpu.trace_start"() <{level = 10 : i32, message = "hqk,hkd->hqd"}> : () -> ()
    %cst_113 = arith.constant dense<0.000000e+00> : vector<4x8x8xf32>
    %403 = tpu.matmul %402, %386, %cst_113 {dimension_numbers = #tpu.dot_dimension_numbers<[2], [1], [1], [2], [0, 0, 0, 1, 1, 2], [0], [0]>} : vector<4x8x8xbf16>, vector<4x8x8xbf16>, vector<4x8x8xf32> -> vector<4x8x8xf32>
    "tpu.trace_stop"() : () -> ()
    %404 = vector.extract_strided_slice %403 {offsets = [0, 0, 0], sizes = [1, 8, 8], strides = [1, 1, 1]} : vector<4x8x8xf32> to vector<1x8x8xf32>
    %405 = vector.shape_cast %404 : vector<1x8x8xf32> to vector<8x8xf32>
    %406 = vector.extract_strided_slice %403 {offsets = [1, 0, 0], sizes = [1, 8, 8], strides = [1, 1, 1]} : vector<4x8x8xf32> to vector<1x8x8xf32>
    %407 = vector.shape_cast %406 : vector<1x8x8xf32> to vector<8x8xf32>
    %408 = vector.extract_strided_slice %403 {offsets = [2, 0, 0], sizes = [1, 8, 8], strides = [1, 1, 1]} : vector<4x8x8xf32> to vector<1x8x8xf32>
    %409 = vector.shape_cast %408 : vector<1x8x8xf32> to vector<8x8xf32>
    %410 = vector.extract_strided_slice %403 {offsets = [3, 0, 0], sizes = [1, 8, 8], strides = [1, 1, 1]} : vector<4x8x8xf32> to vector<1x8x8xf32>
    %411 = vector.shape_cast %410 : vector<1x8x8xf32> to vector<8x8xf32>
    %412 = tpu.concatenate %405, %407, %409, %411 in 1 : vector<8x8xf32>, vector<8x8xf32>, vector<8x8xf32>, vector<8x8xf32> -> vector<8x32xf32>
    %413 = arith.truncf %412 : vector<8x32xf32> to vector<8x32xbf16>
    %cst_114 = arith.constant dense<0.000000e+00> : vector<8x32xf32>
    %414 = tpu.matmul %413, %355, %cst_114 {dimension_numbers = #tpu.dot_dimension_numbers<[1], [0], [0], [1], [0, 0, 1, 1], [], []>} : vector<8x32xbf16>, vector<32x32xbf16>, vector<8x32xf32> -> vector<8x32xf32>
    %415 = vector.broadcast %356 : vector<1x32xf32> to vector<8x32xf32>
    %416 = arith.addf %414, %415 : vector<8x32xf32>
    %417 = arith.addf %25, %416 : vector<8x32xf32>
    %c20 = arith.constant 20 : index
    %c0_115 = arith.constant 0 : index
    %418 = vector.load %arg6[%c20, %c0_115] : memref<48x128xf32, #tpu.memory_space<vmem>>, vector<1x32xf32>
    %c21 = arith.constant 21 : index
    %c0_116 = arith.constant 0 : index
    %419 = vector.load %arg6[%c21, %c0_116] : memref<48x128xf32, #tpu.memory_space<vmem>>, vector<1x32xf32>
    %cst_117 = arith.constant dense<0.000000e+00> : vector<8xf32>
    %420 = vector.multi_reduction <add>, %417, %cst_117 [1] : vector<8x32xf32> to vector<8xf32>
    %421 = vector.shape_cast %420 : vector<8xf32> to vector<8x1xf32>
    %cst_118 = arith.constant 3.200000e+01 : f32
    %422 = vector.broadcast %cst_118 : f32 to vector<8x1xf32>
    %423 = arith.divf %421, %422 : vector<8x1xf32>
    %424 = vector.broadcast %423 : vector<8x1xf32> to vector<8x32xf32>
    %425 = arith.subf %417, %424 : vector<8x32xf32>
    %426 = arith.mulf %425, %425 : vector<8x32xf32>
    %cst_119 = arith.constant dense<0.000000e+00> : vector<8xf32>
    %427 = vector.multi_reduction <add>, %426, %cst_119 [1] : vector<8x32xf32> to vector<8xf32>
    %428 = vector.shape_cast %427 : vector<8xf32> to vector<8x1xf32>
    %cst_120 = arith.constant 0.0322580636 : f32
    %429 = vector.broadcast %cst_120 : f32 to vector<8x1xf32>
    %430 = arith.mulf %428, %429 : vector<8x1xf32>
    %431 = vector.broadcast %418 : vector<1x32xf32> to vector<8x32xf32>
    %432 = arith.mulf %431, %425 : vector<8x32xf32>
    %433 = math.sqrt %430 : vector<8x1xf32>
    %cst_121 = arith.constant 9.99999997E-7 : f32
    %434 = vector.broadcast %cst_121 : f32 to vector<8x1xf32>
    %435 = arith.addf %433, %434 : vector<8x1xf32>
    %436 = vector.broadcast %435 : vector<8x1xf32> to vector<8x32xf32>
    %437 = arith.divf %432, %436 : vector<8x32xf32>
    %438 = vector.broadcast %419 : vector<1x32xf32> to vector<8x32xf32>
    %439 = arith.addf %437, %438 : vector<8x32xf32>
    %c0_122 = arith.constant 0 : index
    %c512 = arith.constant 512 : index
    %440 = vector.load %arg4[%c0_122, %c512] : memref<32x1024xbf16, #tpu.memory_space<vmem>>, vector<32x32xbf16>
    %c22 = arith.constant 22 : index
    %c0_123 = arith.constant 0 : index
    %441 = vector.load %arg6[%c22, %c0_123] : memref<48x128xf32, #tpu.memory_space<vmem>>, vector<1x32xf32>
    %442 = arith.truncf %439 : vector<8x32xf32> to vector<8x32xbf16>
    %cst_124 = arith.constant dense<0.000000e+00> : vector<8x32xf32>
    %443 = tpu.matmul %442, %440, %cst_124 {dimension_numbers = #tpu.dot_dimension_numbers<[1], [0], [0], [1], [0, 0, 1, 1], [], []>} : vector<8x32xbf16>, vector<32x32xbf16>, vector<8x32xf32> -> vector<8x32xf32>
    %444 = vector.broadcast %441 : vector<1x32xf32> to vector<8x32xf32>
    %445 = arith.addf %443, %444 : vector<8x32xf32>
    %c0_125 = arith.constant 0 : index
    %c544 = arith.constant 544 : index
    %446 = vector.load %arg4[%c0_125, %c544] : memref<32x1024xbf16, #tpu.memory_space<vmem>>, vector<32x64xbf16>
    %c23 = arith.constant 23 : index
    %c0_126 = arith.constant 0 : index
    %447 = vector.load %arg6[%c23, %c0_126] : memref<48x128xf32, #tpu.memory_space<vmem>>, vector<1x64xf32>
    %448 = arith.truncf %323 : vector<8x32xf32> to vector<8x32xbf16>
    %cst_127 = arith.constant dense<0.000000e+00> : vector<8x64xf32>
    %449 = tpu.matmul %448, %446, %cst_127 {dimension_numbers = #tpu.dot_dimension_numbers<[1], [0], [0], [1], [0, 0, 1, 1], [], []>} : vector<8x32xbf16>, vector<32x64xbf16>, vector<8x64xf32> -> vector<8x64xf32>
    %450 = vector.broadcast %447 : vector<1x64xf32> to vector<8x64xf32>
    %451 = arith.addf %449, %450 : vector<8x64xf32>
    %452 = vector.extract_strided_slice %451 {offsets = [0, 0], sizes = [8, 32], strides = [1, 1]} : vector<8x64xf32> to vector<8x32xf32>
    %453 = vector.extract_strided_slice %451 {offsets = [0, 32], sizes = [8, 32], strides = [1, 1]} : vector<8x64xf32> to vector<8x32xf32>
    %c0_128 = arith.constant 0 : index
    %c608 = arith.constant 608 : index
    %454 = vector.load %arg4[%c0_128, %c608] : memref<32x1024xbf16, #tpu.memory_space<vmem>>, vector<32x32xbf16>
    %c24 = arith.constant 24 : index
    %c0_129 = arith.constant 0 : index
    %455 = vector.load %arg6[%c24, %c0_129] : memref<48x128xf32, #tpu.memory_space<vmem>>, vector<1x32xf32>
    %456 = vector.extract_strided_slice %445 {offsets = [0, 0], sizes = [8, 8], strides = [1, 1]} : vector<8x32xf32> to vector<8x8xf32>
    %457 = vector.extract_strided_slice %445 {offsets = [0, 8], sizes = [8, 8], strides = [1, 1]} : vector<8x32xf32> to vector<8x8xf32>
    %458 = vector.extract_strided_slice %445 {offsets = [0, 16], sizes = [8, 8], strides = [1, 1]} : vector<8x32xf32> to vector<8x8xf32>
    %459 = vector.extract_strided_slice %445 {offsets = [0, 24], sizes = [8, 8], strides = [1, 1]} : vector<8x32xf32> to vector<8x8xf32>
    %460 = vector.shape_cast %456 : vector<8x8xf32> to vector<1x8x8xf32>
    %461 = vector.shape_cast %457 : vector<8x8xf32> to vector<1x8x8xf32>
    %462 = vector.shape_cast %458 : vector<8x8xf32> to vector<1x8x8xf32>
    %463 = vector.shape_cast %459 : vector<8x8xf32> to vector<1x8x8xf32>
    %464 = tpu.concatenate %460, %461, %462, %463 in 0 : vector<1x8x8xf32>, vector<1x8x8xf32>, vector<1x8x8xf32>, vector<1x8x8xf32> -> vector<4x8x8xf32>
    %465 = arith.truncf %464 : vector<4x8x8xf32> to vector<4x8x8xbf16>
    %466 = vector.extract_strided_slice %452 {offsets = [0, 0], sizes = [8, 8], strides = [1, 1]} : vector<8x32xf32> to vector<8x8xf32>
    %467 = vector.extract_strided_slice %452 {offsets = [0, 8], sizes = [8, 8], strides = [1, 1]} : vector<8x32xf32> to vector<8x8xf32>
    %468 = vector.extract_strided_slice %452 {offsets = [0, 16], sizes = [8, 8], strides = [1, 1]} : vector<8x32xf32> to vector<8x8xf32>
    %469 = vector.extract_strided_slice %452 {offsets = [0, 24], sizes = [8, 8], strides = [1, 1]} : vector<8x32xf32> to vector<8x8xf32>
    %470 = vector.shape_cast %466 : vector<8x8xf32> to vector<1x8x8xf32>
    %471 = vector.shape_cast %467 : vector<8x8xf32> to vector<1x8x8xf32>
    %472 = vector.shape_cast %468 : vector<8x8xf32> to vector<1x8x8xf32>
    %473 = vector.shape_cast %469 : vector<8x8xf32> to vector<1x8x8xf32>
    %474 = tpu.concatenate %470, %471, %472, %473 in 0 : vector<1x8x8xf32>, vector<1x8x8xf32>, vector<1x8x8xf32>, vector<1x8x8xf32> -> vector<4x8x8xf32>
    %475 = arith.truncf %474 : vector<4x8x8xf32> to vector<4x8x8xbf16>
    %476 = vector.extract_strided_slice %453 {offsets = [0, 0], sizes = [8, 8], strides = [1, 1]} : vector<8x32xf32> to vector<8x8xf32>
    %477 = vector.extract_strided_slice %453 {offsets = [0, 8], sizes = [8, 8], strides = [1, 1]} : vector<8x32xf32> to vector<8x8xf32>
    %478 = vector.extract_strided_slice %453 {offsets = [0, 16], sizes = [8, 8], strides = [1, 1]} : vector<8x32xf32> to vector<8x8xf32>
    %479 = vector.extract_strided_slice %453 {offsets = [0, 24], sizes = [8, 8], strides = [1, 1]} : vector<8x32xf32> to vector<8x8xf32>
    %480 = vector.shape_cast %476 : vector<8x8xf32> to vector<1x8x8xf32>
    %481 = vector.shape_cast %477 : vector<8x8xf32> to vector<1x8x8xf32>
    %482 = vector.shape_cast %478 : vector<8x8xf32> to vector<1x8x8xf32>
    %483 = vector.shape_cast %479 : vector<8x8xf32> to vector<1x8x8xf32>
    %484 = tpu.concatenate %480, %481, %482, %483 in 0 : vector<1x8x8xf32>, vector<1x8x8xf32>, vector<1x8x8xf32>, vector<1x8x8xf32> -> vector<4x8x8xf32>
    %485 = arith.truncf %484 : vector<4x8x8xf32> to vector<4x8x8xbf16>
    "tpu.trace_start"() <{level = 10 : i32, message = "hqd,hkd->hqk"}> : () -> ()
    %cst_130 = arith.constant dense<0.000000e+00> : vector<4x8x8xf32>
    %486 = tpu.matmul %465, %475, %cst_130 {dimension_numbers = #tpu.dot_dimension_numbers<[2], [2], [1], [1], [0, 0, 0, 1, 1, 1], [0], [0]>} : vector<4x8x8xbf16>, vector<4x8x8xbf16>, vector<4x8x8xf32> -> vector<4x8x8xf32>
    "tpu.trace_stop"() : () -> ()
    %cst_131 = arith.constant 0.353553385 : f32
    %487 = vector.broadcast %cst_131 : f32 to vector<4x8x8xf32>
    %488 = arith.mulf %486, %487 : vector<4x8x8xf32>
    %489 = vector.broadcast %32 : vector<1x1x8xf32> to vector<4x8x8xf32>
    %490 = arith.addf %488, %489 : vector<4x8x8xf32>
    %cst_132 = arith.constant dense<0xFF800000> : vector<4x8xf32>
    %491 = vector.multi_reduction <maximumf>, %490, %cst_132 [2] : vector<4x8x8xf32> to vector<4x8xf32>
    %492 = vector.shape_cast %491 : vector<4x8xf32> to vector<4x8x1xf32>
    %493 = vector.broadcast %492 : vector<4x8x1xf32> to vector<4x8x8xf32>
    %494 = arith.subf %490, %493 : vector<4x8x8xf32>
    %495 = math.exp %494 : vector<4x8x8xf32>
    %cst_133 = arith.constant dense<0.000000e+00> : vector<4x8xf32>
    %496 = vector.multi_reduction <add>, %495, %cst_133 [2] : vector<4x8x8xf32> to vector<4x8xf32>
    %497 = vector.shape_cast %496 : vector<4x8xf32> to vector<4x8x1xf32>
    %498 = tpu.reciprocal %497 {approx = true} : vector<4x8x1xf32> -> vector<4x8x1xf32>
    %499 = vector.broadcast %498 : vector<4x8x1xf32> to vector<4x8x8xf32>
    %500 = arith.mulf %495, %499 : vector<4x8x8xf32>
    %501 = arith.truncf %500 : vector<4x8x8xf32> to vector<4x8x8xbf16>
    "tpu.trace_start"() <{level = 10 : i32, message = "hqk,hkd->hqd"}> : () -> ()
    %cst_134 = arith.constant dense<0.000000e+00> : vector<4x8x8xf32>
    %502 = tpu.matmul %501, %485, %cst_134 {dimension_numbers = #tpu.dot_dimension_numbers<[2], [1], [1], [2], [0, 0, 0, 1, 1, 2], [0], [0]>} : vector<4x8x8xbf16>, vector<4x8x8xbf16>, vector<4x8x8xf32> -> vector<4x8x8xf32>
    "tpu.trace_stop"() : () -> ()
    %503 = vector.extract_strided_slice %502 {offsets = [0, 0, 0], sizes = [1, 8, 8], strides = [1, 1, 1]} : vector<4x8x8xf32> to vector<1x8x8xf32>
    %504 = vector.shape_cast %503 : vector<1x8x8xf32> to vector<8x8xf32>
    %505 = vector.extract_strided_slice %502 {offsets = [1, 0, 0], sizes = [1, 8, 8], strides = [1, 1, 1]} : vector<4x8x8xf32> to vector<1x8x8xf32>
    %506 = vector.shape_cast %505 : vector<1x8x8xf32> to vector<8x8xf32>
    %507 = vector.extract_strided_slice %502 {offsets = [2, 0, 0], sizes = [1, 8, 8], strides = [1, 1, 1]} : vector<4x8x8xf32> to vector<1x8x8xf32>
    %508 = vector.shape_cast %507 : vector<1x8x8xf32> to vector<8x8xf32>
    %509 = vector.extract_strided_slice %502 {offsets = [3, 0, 0], sizes = [1, 8, 8], strides = [1, 1, 1]} : vector<4x8x8xf32> to vector<1x8x8xf32>
    %510 = vector.shape_cast %509 : vector<1x8x8xf32> to vector<8x8xf32>
    %511 = tpu.concatenate %504, %506, %508, %510 in 1 : vector<8x8xf32>, vector<8x8xf32>, vector<8x8xf32>, vector<8x8xf32> -> vector<8x32xf32>
    %512 = arith.truncf %511 : vector<8x32xf32> to vector<8x32xbf16>
    %cst_135 = arith.constant dense<0.000000e+00> : vector<8x32xf32>
    %513 = tpu.matmul %512, %454, %cst_135 {dimension_numbers = #tpu.dot_dimension_numbers<[1], [0], [0], [1], [0, 0, 1, 1], [], []>} : vector<8x32xbf16>, vector<32x32xbf16>, vector<8x32xf32> -> vector<8x32xf32>
    %514 = vector.broadcast %455 : vector<1x32xf32> to vector<8x32xf32>
    %515 = arith.addf %513, %514 : vector<8x32xf32>
    %516 = arith.addf %417, %515 : vector<8x32xf32>
    %c25 = arith.constant 25 : index
    %c0_136 = arith.constant 0 : index
    %517 = vector.load %arg6[%c25, %c0_136] : memref<48x128xf32, #tpu.memory_space<vmem>>, vector<1x32xf32>
    %c26 = arith.constant 26 : index
    %c0_137 = arith.constant 0 : index
    %518 = vector.load %arg6[%c26, %c0_137] : memref<48x128xf32, #tpu.memory_space<vmem>>, vector<1x32xf32>
    %cst_138 = arith.constant dense<0.000000e+00> : vector<8xf32>
    %519 = vector.multi_reduction <add>, %516, %cst_138 [1] : vector<8x32xf32> to vector<8xf32>
    %520 = vector.shape_cast %519 : vector<8xf32> to vector<8x1xf32>
    %cst_139 = arith.constant 3.200000e+01 : f32
    %521 = vector.broadcast %cst_139 : f32 to vector<8x1xf32>
    %522 = arith.divf %520, %521 : vector<8x1xf32>
    %523 = vector.broadcast %522 : vector<8x1xf32> to vector<8x32xf32>
    %524 = arith.subf %516, %523 : vector<8x32xf32>
    %525 = arith.mulf %524, %524 : vector<8x32xf32>
    %cst_140 = arith.constant dense<0.000000e+00> : vector<8xf32>
    %526 = vector.multi_reduction <add>, %525, %cst_140 [1] : vector<8x32xf32> to vector<8xf32>
    %527 = vector.shape_cast %526 : vector<8xf32> to vector<8x1xf32>
    %cst_141 = arith.constant 0.0322580636 : f32
    %528 = vector.broadcast %cst_141 : f32 to vector<8x1xf32>
    %529 = arith.mulf %527, %528 : vector<8x1xf32>
    %530 = vector.broadcast %517 : vector<1x32xf32> to vector<8x32xf32>
    %531 = arith.mulf %530, %524 : vector<8x32xf32>
    %532 = math.sqrt %529 : vector<8x1xf32>
    %cst_142 = arith.constant 9.99999997E-7 : f32
    %533 = vector.broadcast %cst_142 : f32 to vector<8x1xf32>
    %534 = arith.addf %532, %533 : vector<8x1xf32>
    %535 = vector.broadcast %534 : vector<8x1xf32> to vector<8x32xf32>
    %536 = arith.divf %531, %535 : vector<8x32xf32>
    %537 = vector.broadcast %518 : vector<1x32xf32> to vector<8x32xf32>
    %538 = arith.addf %536, %537 : vector<8x32xf32>
    %c0_143 = arith.constant 0 : index
    %c640 = arith.constant 640 : index
    %539 = vector.load %arg4[%c0_143, %c640] : memref<32x1024xbf16, #tpu.memory_space<vmem>>, vector<32x64xbf16>
    %c27 = arith.constant 27 : index
    %c0_144 = arith.constant 0 : index
    %540 = vector.load %arg6[%c27, %c0_144] : memref<48x128xf32, #tpu.memory_space<vmem>>, vector<1x64xf32>
    %541 = arith.truncf %538 : vector<8x32xf32> to vector<8x32xbf16>
    %cst_145 = arith.constant dense<0.000000e+00> : vector<8x64xf32>
    %542 = tpu.matmul %541, %539, %cst_145 {dimension_numbers = #tpu.dot_dimension_numbers<[1], [0], [0], [1], [0, 0, 1, 1], [], []>} : vector<8x32xbf16>, vector<32x64xbf16>, vector<8x64xf32> -> vector<8x64xf32>
    %543 = vector.broadcast %540 : vector<1x64xf32> to vector<8x64xf32>
    %544 = arith.addf %542, %543 : vector<8x64xf32>
    %cst_146 = arith.constant 0.000000e+00 : f32
    %545 = vector.broadcast %cst_146 : f32 to vector<8x64xf32>
    %546 = arith.maximumf %544, %545 : vector<8x64xf32>
    %c0_147 = arith.constant 0 : index
    %c64 = arith.constant 64 : index
    %547 = vector.load %arg5[%c0_147, %c64] : memref<64x128xbf16, #tpu.memory_space<vmem>>, vector<64x32xbf16>
    %548 = arith.truncf %546 : vector<8x64xf32> to vector<8x64xbf16>
    %cst_148 = arith.constant dense<0.000000e+00> : vector<8x32xf32>
    %549 = tpu.matmul %548, %547, %cst_148 {dimension_numbers = #tpu.dot_dimension_numbers<[1], [0], [0], [1], [0, 0, 1, 1], [], []>} : vector<8x64xbf16>, vector<64x32xbf16>, vector<8x32xf32> -> vector<8x32xf32>
    %c28 = arith.constant 28 : index
    %c0_149 = arith.constant 0 : index
    %550 = vector.load %arg6[%c28, %c0_149] : memref<48x128xf32, #tpu.memory_space<vmem>>, vector<1x32xf32>
    %551 = vector.broadcast %550 : vector<1x32xf32> to vector<8x32xf32>
    %552 = arith.addf %549, %551 : vector<8x32xf32>
    %553 = arith.addf %516, %552 : vector<8x32xf32>
    %c29 = arith.constant 29 : index
    %c0_150 = arith.constant 0 : index
    %554 = vector.load %arg6[%c29, %c0_150] : memref<48x128xf32, #tpu.memory_space<vmem>>, vector<1x32xf32>
    %c30 = arith.constant 30 : index
    %c0_151 = arith.constant 0 : index
    %555 = vector.load %arg6[%c30, %c0_151] : memref<48x128xf32, #tpu.memory_space<vmem>>, vector<1x32xf32>
    %cst_152 = arith.constant dense<0.000000e+00> : vector<8xf32>
    %556 = vector.multi_reduction <add>, %553, %cst_152 [1] : vector<8x32xf32> to vector<8xf32>
    %557 = vector.shape_cast %556 : vector<8xf32> to vector<8x1xf32>
    %cst_153 = arith.constant 3.200000e+01 : f32
    %558 = vector.broadcast %cst_153 : f32 to vector<8x1xf32>
    %559 = arith.divf %557, %558 : vector<8x1xf32>
    %560 = vector.broadcast %559 : vector<8x1xf32> to vector<8x32xf32>
    %561 = arith.subf %553, %560 : vector<8x32xf32>
    %562 = arith.mulf %561, %561 : vector<8x32xf32>
    %cst_154 = arith.constant dense<0.000000e+00> : vector<8xf32>
    %563 = vector.multi_reduction <add>, %562, %cst_154 [1] : vector<8x32xf32> to vector<8xf32>
    %564 = vector.shape_cast %563 : vector<8xf32> to vector<8x1xf32>
    %cst_155 = arith.constant 0.0322580636 : f32
    %565 = vector.broadcast %cst_155 : f32 to vector<8x1xf32>
    %566 = arith.mulf %564, %565 : vector<8x1xf32>
    %567 = vector.broadcast %554 : vector<1x32xf32> to vector<8x32xf32>
    %568 = arith.mulf %567, %561 : vector<8x32xf32>
    %569 = math.sqrt %566 : vector<8x1xf32>
    %cst_156 = arith.constant 9.99999997E-7 : f32
    %570 = vector.broadcast %cst_156 : f32 to vector<8x1xf32>
    %571 = arith.addf %569, %570 : vector<8x1xf32>
    %572 = vector.broadcast %571 : vector<8x1xf32> to vector<8x32xf32>
    %573 = arith.divf %568, %572 : vector<8x32xf32>
    %574 = vector.broadcast %555 : vector<1x32xf32> to vector<8x32xf32>
    %575 = arith.addf %573, %574 : vector<8x32xf32>
    %c0_157 = arith.constant 0 : index
    %c704 = arith.constant 704 : index
    %576 = vector.load %arg4[%c0_157, %c704] : memref<32x1024xbf16, #tpu.memory_space<vmem>>, vector<32x96xbf16>
    %c31 = arith.constant 31 : index
    %c0_158 = arith.constant 0 : index
    %577 = vector.load %arg6[%c31, %c0_158] : memref<48x128xf32, #tpu.memory_space<vmem>>, vector<1x96xf32>
    %578 = arith.truncf %575 : vector<8x32xf32> to vector<8x32xbf16>
    %cst_159 = arith.constant dense<0.000000e+00> : vector<8x96xf32>
    %579 = tpu.matmul %578, %576, %cst_159 {dimension_numbers = #tpu.dot_dimension_numbers<[1], [0], [0], [1], [0, 0, 1, 1], [], []>} : vector<8x32xbf16>, vector<32x96xbf16>, vector<8x96xf32> -> vector<8x96xf32>
    %580 = vector.broadcast %577 : vector<1x96xf32> to vector<8x96xf32>
    %581 = arith.addf %579, %580 : vector<8x96xf32>
    %582 = vector.extract_strided_slice %581 {offsets = [0, 0], sizes = [8, 32], strides = [1, 1]} : vector<8x96xf32> to vector<8x32xf32>
    %583 = vector.extract_strided_slice %581 {offsets = [0, 32], sizes = [8, 32], strides = [1, 1]} : vector<8x96xf32> to vector<8x32xf32>
    %584 = vector.extract_strided_slice %581 {offsets = [0, 64], sizes = [8, 32], strides = [1, 1]} : vector<8x96xf32> to vector<8x32xf32>
    %c0_160 = arith.constant 0 : index
    %c800 = arith.constant 800 : index
    %585 = vector.load %arg4[%c0_160, %c800] : memref<32x1024xbf16, #tpu.memory_space<vmem>>, vector<32x32xbf16>
    %c32_161 = arith.constant 32 : index
    %c0_162 = arith.constant 0 : index
    %586 = vector.load %arg6[%c32_161, %c0_162] : memref<48x128xf32, #tpu.memory_space<vmem>>, vector<1x32xf32>
    %587 = vector.extract_strided_slice %582 {offsets = [0, 0], sizes = [8, 8], strides = [1, 1]} : vector<8x32xf32> to vector<8x8xf32>
    %588 = vector.extract_strided_slice %582 {offsets = [0, 8], sizes = [8, 8], strides = [1, 1]} : vector<8x32xf32> to vector<8x8xf32>
    %589 = vector.extract_strided_slice %582 {offsets = [0, 16], sizes = [8, 8], strides = [1, 1]} : vector<8x32xf32> to vector<8x8xf32>
    %590 = vector.extract_strided_slice %582 {offsets = [0, 24], sizes = [8, 8], strides = [1, 1]} : vector<8x32xf32> to vector<8x8xf32>
    %591 = vector.shape_cast %587 : vector<8x8xf32> to vector<1x8x8xf32>
    %592 = vector.shape_cast %588 : vector<8x8xf32> to vector<1x8x8xf32>
    %593 = vector.shape_cast %589 : vector<8x8xf32> to vector<1x8x8xf32>
    %594 = vector.shape_cast %590 : vector<8x8xf32> to vector<1x8x8xf32>
    %595 = tpu.concatenate %591, %592, %593, %594 in 0 : vector<1x8x8xf32>, vector<1x8x8xf32>, vector<1x8x8xf32>, vector<1x8x8xf32> -> vector<4x8x8xf32>
    %596 = arith.truncf %595 : vector<4x8x8xf32> to vector<4x8x8xbf16>
    %597 = vector.extract_strided_slice %583 {offsets = [0, 0], sizes = [8, 8], strides = [1, 1]} : vector<8x32xf32> to vector<8x8xf32>
    %598 = vector.extract_strided_slice %583 {offsets = [0, 8], sizes = [8, 8], strides = [1, 1]} : vector<8x32xf32> to vector<8x8xf32>
    %599 = vector.extract_strided_slice %583 {offsets = [0, 16], sizes = [8, 8], strides = [1, 1]} : vector<8x32xf32> to vector<8x8xf32>
    %600 = vector.extract_strided_slice %583 {offsets = [0, 24], sizes = [8, 8], strides = [1, 1]} : vector<8x32xf32> to vector<8x8xf32>
    %601 = vector.shape_cast %597 : vector<8x8xf32> to vector<1x8x8xf32>
    %602 = vector.shape_cast %598 : vector<8x8xf32> to vector<1x8x8xf32>
    %603 = vector.shape_cast %599 : vector<8x8xf32> to vector<1x8x8xf32>
    %604 = vector.shape_cast %600 : vector<8x8xf32> to vector<1x8x8xf32>
    %605 = tpu.concatenate %601, %602, %603, %604 in 0 : vector<1x8x8xf32>, vector<1x8x8xf32>, vector<1x8x8xf32>, vector<1x8x8xf32> -> vector<4x8x8xf32>
    %606 = arith.truncf %605 : vector<4x8x8xf32> to vector<4x8x8xbf16>
    %607 = vector.extract_strided_slice %584 {offsets = [0, 0], sizes = [8, 8], strides = [1, 1]} : vector<8x32xf32> to vector<8x8xf32>
    %608 = vector.extract_strided_slice %584 {offsets = [0, 8], sizes = [8, 8], strides = [1, 1]} : vector<8x32xf32> to vector<8x8xf32>
    %609 = vector.extract_strided_slice %584 {offsets = [0, 16], sizes = [8, 8], strides = [1, 1]} : vector<8x32xf32> to vector<8x8xf32>
    %610 = vector.extract_strided_slice %584 {offsets = [0, 24], sizes = [8, 8], strides = [1, 1]} : vector<8x32xf32> to vector<8x8xf32>
    %611 = vector.shape_cast %607 : vector<8x8xf32> to vector<1x8x8xf32>
    %612 = vector.shape_cast %608 : vector<8x8xf32> to vector<1x8x8xf32>
    %613 = vector.shape_cast %609 : vector<8x8xf32> to vector<1x8x8xf32>
    %614 = vector.shape_cast %610 : vector<8x8xf32> to vector<1x8x8xf32>
    %615 = tpu.concatenate %611, %612, %613, %614 in 0 : vector<1x8x8xf32>, vector<1x8x8xf32>, vector<1x8x8xf32>, vector<1x8x8xf32> -> vector<4x8x8xf32>
    %616 = arith.truncf %615 : vector<4x8x8xf32> to vector<4x8x8xbf16>
    "tpu.trace_start"() <{level = 10 : i32, message = "hqd,hkd->hqk"}> : () -> ()
    %cst_163 = arith.constant dense<0.000000e+00> : vector<4x8x8xf32>
    %617 = tpu.matmul %596, %606, %cst_163 {dimension_numbers = #tpu.dot_dimension_numbers<[2], [2], [1], [1], [0, 0, 0, 1, 1, 1], [0], [0]>} : vector<4x8x8xbf16>, vector<4x8x8xbf16>, vector<4x8x8xf32> -> vector<4x8x8xf32>
    "tpu.trace_stop"() : () -> ()
    %cst_164 = arith.constant 0.353553385 : f32
    %618 = vector.broadcast %cst_164 : f32 to vector<4x8x8xf32>
    %619 = arith.mulf %617, %618 : vector<4x8x8xf32>
    %620 = vector.broadcast %39 : vector<1x8x8xf32> to vector<4x8x8xf32>
    %621 = arith.addf %619, %620 : vector<4x8x8xf32>
    %cst_165 = arith.constant dense<0xFF800000> : vector<4x8xf32>
    %622 = vector.multi_reduction <maximumf>, %621, %cst_165 [2] : vector<4x8x8xf32> to vector<4x8xf32>
    %623 = vector.shape_cast %622 : vector<4x8xf32> to vector<4x8x1xf32>
    %624 = vector.broadcast %623 : vector<4x8x1xf32> to vector<4x8x8xf32>
    %625 = arith.subf %621, %624 : vector<4x8x8xf32>
    %626 = math.exp %625 : vector<4x8x8xf32>
    %cst_166 = arith.constant dense<0.000000e+00> : vector<4x8xf32>
    %627 = vector.multi_reduction <add>, %626, %cst_166 [2] : vector<4x8x8xf32> to vector<4x8xf32>
    %628 = vector.shape_cast %627 : vector<4x8xf32> to vector<4x8x1xf32>
    %629 = tpu.reciprocal %628 {approx = true} : vector<4x8x1xf32> -> vector<4x8x1xf32>
    %630 = vector.broadcast %629 : vector<4x8x1xf32> to vector<4x8x8xf32>
    %631 = arith.mulf %626, %630 : vector<4x8x8xf32>
    %632 = arith.truncf %631 : vector<4x8x8xf32> to vector<4x8x8xbf16>
    "tpu.trace_start"() <{level = 10 : i32, message = "hqk,hkd->hqd"}> : () -> ()
    %cst_167 = arith.constant dense<0.000000e+00> : vector<4x8x8xf32>
    %633 = tpu.matmul %632, %616, %cst_167 {dimension_numbers = #tpu.dot_dimension_numbers<[2], [1], [1], [2], [0, 0, 0, 1, 1, 2], [0], [0]>} : vector<4x8x8xbf16>, vector<4x8x8xbf16>, vector<4x8x8xf32> -> vector<4x8x8xf32>
    "tpu.trace_stop"() : () -> ()
    %634 = vector.extract_strided_slice %633 {offsets = [0, 0, 0], sizes = [1, 8, 8], strides = [1, 1, 1]} : vector<4x8x8xf32> to vector<1x8x8xf32>
    %635 = vector.shape_cast %634 : vector<1x8x8xf32> to vector<8x8xf32>
    %636 = vector.extract_strided_slice %633 {offsets = [1, 0, 0], sizes = [1, 8, 8], strides = [1, 1, 1]} : vector<4x8x8xf32> to vector<1x8x8xf32>
    %637 = vector.shape_cast %636 : vector<1x8x8xf32> to vector<8x8xf32>
    %638 = vector.extract_strided_slice %633 {offsets = [2, 0, 0], sizes = [1, 8, 8], strides = [1, 1, 1]} : vector<4x8x8xf32> to vector<1x8x8xf32>
    %639 = vector.shape_cast %638 : vector<1x8x8xf32> to vector<8x8xf32>
    %640 = vector.extract_strided_slice %633 {offsets = [3, 0, 0], sizes = [1, 8, 8], strides = [1, 1, 1]} : vector<4x8x8xf32> to vector<1x8x8xf32>
    %641 = vector.shape_cast %640 : vector<1x8x8xf32> to vector<8x8xf32>
    %642 = tpu.concatenate %635, %637, %639, %641 in 1 : vector<8x8xf32>, vector<8x8xf32>, vector<8x8xf32>, vector<8x8xf32> -> vector<8x32xf32>
    %643 = arith.truncf %642 : vector<8x32xf32> to vector<8x32xbf16>
    %cst_168 = arith.constant dense<0.000000e+00> : vector<8x32xf32>
    %644 = tpu.matmul %643, %585, %cst_168 {dimension_numbers = #tpu.dot_dimension_numbers<[1], [0], [0], [1], [0, 0, 1, 1], [], []>} : vector<8x32xbf16>, vector<32x32xbf16>, vector<8x32xf32> -> vector<8x32xf32>
    %645 = vector.broadcast %586 : vector<1x32xf32> to vector<8x32xf32>
    %646 = arith.addf %644, %645 : vector<8x32xf32>
    %647 = arith.addf %553, %646 : vector<8x32xf32>
    %c33 = arith.constant 33 : index
    %c0_169 = arith.constant 0 : index
    %648 = vector.load %arg6[%c33, %c0_169] : memref<48x128xf32, #tpu.memory_space<vmem>>, vector<1x32xf32>
    %c34 = arith.constant 34 : index
    %c0_170 = arith.constant 0 : index
    %649 = vector.load %arg6[%c34, %c0_170] : memref<48x128xf32, #tpu.memory_space<vmem>>, vector<1x32xf32>
    %cst_171 = arith.constant dense<0.000000e+00> : vector<8xf32>
    %650 = vector.multi_reduction <add>, %647, %cst_171 [1] : vector<8x32xf32> to vector<8xf32>
    %651 = vector.shape_cast %650 : vector<8xf32> to vector<8x1xf32>
    %cst_172 = arith.constant 3.200000e+01 : f32
    %652 = vector.broadcast %cst_172 : f32 to vector<8x1xf32>
    %653 = arith.divf %651, %652 : vector<8x1xf32>
    %654 = vector.broadcast %653 : vector<8x1xf32> to vector<8x32xf32>
    %655 = arith.subf %647, %654 : vector<8x32xf32>
    %656 = arith.mulf %655, %655 : vector<8x32xf32>
    %cst_173 = arith.constant dense<0.000000e+00> : vector<8xf32>
    %657 = vector.multi_reduction <add>, %656, %cst_173 [1] : vector<8x32xf32> to vector<8xf32>
    %658 = vector.shape_cast %657 : vector<8xf32> to vector<8x1xf32>
    %cst_174 = arith.constant 0.0322580636 : f32
    %659 = vector.broadcast %cst_174 : f32 to vector<8x1xf32>
    %660 = arith.mulf %658, %659 : vector<8x1xf32>
    %661 = vector.broadcast %648 : vector<1x32xf32> to vector<8x32xf32>
    %662 = arith.mulf %661, %655 : vector<8x32xf32>
    %663 = math.sqrt %660 : vector<8x1xf32>
    %cst_175 = arith.constant 9.99999997E-7 : f32
    %664 = vector.broadcast %cst_175 : f32 to vector<8x1xf32>
    %665 = arith.addf %663, %664 : vector<8x1xf32>
    %666 = vector.broadcast %665 : vector<8x1xf32> to vector<8x32xf32>
    %667 = arith.divf %662, %666 : vector<8x32xf32>
    %668 = vector.broadcast %649 : vector<1x32xf32> to vector<8x32xf32>
    %669 = arith.addf %667, %668 : vector<8x32xf32>
    %c0_176 = arith.constant 0 : index
    %c832 = arith.constant 832 : index
    %670 = vector.load %arg4[%c0_176, %c832] : memref<32x1024xbf16, #tpu.memory_space<vmem>>, vector<32x32xbf16>
    %c35 = arith.constant 35 : index
    %c0_177 = arith.constant 0 : index
    %671 = vector.load %arg6[%c35, %c0_177] : memref<48x128xf32, #tpu.memory_space<vmem>>, vector<1x32xf32>
    %672 = arith.truncf %669 : vector<8x32xf32> to vector<8x32xbf16>
    %cst_178 = arith.constant dense<0.000000e+00> : vector<8x32xf32>
    %673 = tpu.matmul %672, %670, %cst_178 {dimension_numbers = #tpu.dot_dimension_numbers<[1], [0], [0], [1], [0, 0, 1, 1], [], []>} : vector<8x32xbf16>, vector<32x32xbf16>, vector<8x32xf32> -> vector<8x32xf32>
    %674 = vector.broadcast %671 : vector<1x32xf32> to vector<8x32xf32>
    %675 = arith.addf %673, %674 : vector<8x32xf32>
    %c0_179 = arith.constant 0 : index
    %c864 = arith.constant 864 : index
    %676 = vector.load %arg4[%c0_179, %c864] : memref<32x1024xbf16, #tpu.memory_space<vmem>>, vector<32x64xbf16>
    %c36 = arith.constant 36 : index
    %c0_180 = arith.constant 0 : index
    %677 = vector.load %arg6[%c36, %c0_180] : memref<48x128xf32, #tpu.memory_space<vmem>>, vector<1x64xf32>
    %678 = arith.truncf %323 : vector<8x32xf32> to vector<8x32xbf16>
    %cst_181 = arith.constant dense<0.000000e+00> : vector<8x64xf32>
    %679 = tpu.matmul %678, %676, %cst_181 {dimension_numbers = #tpu.dot_dimension_numbers<[1], [0], [0], [1], [0, 0, 1, 1], [], []>} : vector<8x32xbf16>, vector<32x64xbf16>, vector<8x64xf32> -> vector<8x64xf32>
    %680 = vector.broadcast %677 : vector<1x64xf32> to vector<8x64xf32>
    %681 = arith.addf %679, %680 : vector<8x64xf32>
    %682 = vector.extract_strided_slice %681 {offsets = [0, 0], sizes = [8, 32], strides = [1, 1]} : vector<8x64xf32> to vector<8x32xf32>
    %683 = vector.extract_strided_slice %681 {offsets = [0, 32], sizes = [8, 32], strides = [1, 1]} : vector<8x64xf32> to vector<8x32xf32>
    %c0_182 = arith.constant 0 : index
    %c928 = arith.constant 928 : index
    %684 = vector.load %arg4[%c0_182, %c928] : memref<32x1024xbf16, #tpu.memory_space<vmem>>, vector<32x32xbf16>
    %c37 = arith.constant 37 : index
    %c0_183 = arith.constant 0 : index
    %685 = vector.load %arg6[%c37, %c0_183] : memref<48x128xf32, #tpu.memory_space<vmem>>, vector<1x32xf32>
    %686 = vector.extract_strided_slice %675 {offsets = [0, 0], sizes = [8, 8], strides = [1, 1]} : vector<8x32xf32> to vector<8x8xf32>
    %687 = vector.extract_strided_slice %675 {offsets = [0, 8], sizes = [8, 8], strides = [1, 1]} : vector<8x32xf32> to vector<8x8xf32>
    %688 = vector.extract_strided_slice %675 {offsets = [0, 16], sizes = [8, 8], strides = [1, 1]} : vector<8x32xf32> to vector<8x8xf32>
    %689 = vector.extract_strided_slice %675 {offsets = [0, 24], sizes = [8, 8], strides = [1, 1]} : vector<8x32xf32> to vector<8x8xf32>
    %690 = vector.shape_cast %686 : vector<8x8xf32> to vector<1x8x8xf32>
    %691 = vector.shape_cast %687 : vector<8x8xf32> to vector<1x8x8xf32>
    %692 = vector.shape_cast %688 : vector<8x8xf32> to vector<1x8x8xf32>
    %693 = vector.shape_cast %689 : vector<8x8xf32> to vector<1x8x8xf32>
    %694 = tpu.concatenate %690, %691, %692, %693 in 0 : vector<1x8x8xf32>, vector<1x8x8xf32>, vector<1x8x8xf32>, vector<1x8x8xf32> -> vector<4x8x8xf32>
    %695 = arith.truncf %694 : vector<4x8x8xf32> to vector<4x8x8xbf16>
    %696 = vector.extract_strided_slice %682 {offsets = [0, 0], sizes = [8, 8], strides = [1, 1]} : vector<8x32xf32> to vector<8x8xf32>
    %697 = vector.extract_strided_slice %682 {offsets = [0, 8], sizes = [8, 8], strides = [1, 1]} : vector<8x32xf32> to vector<8x8xf32>
    %698 = vector.extract_strided_slice %682 {offsets = [0, 16], sizes = [8, 8], strides = [1, 1]} : vector<8x32xf32> to vector<8x8xf32>
    %699 = vector.extract_strided_slice %682 {offsets = [0, 24], sizes = [8, 8], strides = [1, 1]} : vector<8x32xf32> to vector<8x8xf32>
    %700 = vector.shape_cast %696 : vector<8x8xf32> to vector<1x8x8xf32>
    %701 = vector.shape_cast %697 : vector<8x8xf32> to vector<1x8x8xf32>
    %702 = vector.shape_cast %698 : vector<8x8xf32> to vector<1x8x8xf32>
    %703 = vector.shape_cast %699 : vector<8x8xf32> to vector<1x8x8xf32>
    %704 = tpu.concatenate %700, %701, %702, %703 in 0 : vector<1x8x8xf32>, vector<1x8x8xf32>, vector<1x8x8xf32>, vector<1x8x8xf32> -> vector<4x8x8xf32>
    %705 = arith.truncf %704 : vector<4x8x8xf32> to vector<4x8x8xbf16>
    %706 = vector.extract_strided_slice %683 {offsets = [0, 0], sizes = [8, 8], strides = [1, 1]} : vector<8x32xf32> to vector<8x8xf32>
    %707 = vector.extract_strided_slice %683 {offsets = [0, 8], sizes = [8, 8], strides = [1, 1]} : vector<8x32xf32> to vector<8x8xf32>
    %708 = vector.extract_strided_slice %683 {offsets = [0, 16], sizes = [8, 8], strides = [1, 1]} : vector<8x32xf32> to vector<8x8xf32>
    %709 = vector.extract_strided_slice %683 {offsets = [0, 24], sizes = [8, 8], strides = [1, 1]} : vector<8x32xf32> to vector<8x8xf32>
    %710 = vector.shape_cast %706 : vector<8x8xf32> to vector<1x8x8xf32>
    %711 = vector.shape_cast %707 : vector<8x8xf32> to vector<1x8x8xf32>
    %712 = vector.shape_cast %708 : vector<8x8xf32> to vector<1x8x8xf32>
    %713 = vector.shape_cast %709 : vector<8x8xf32> to vector<1x8x8xf32>
    %714 = tpu.concatenate %710, %711, %712, %713 in 0 : vector<1x8x8xf32>, vector<1x8x8xf32>, vector<1x8x8xf32>, vector<1x8x8xf32> -> vector<4x8x8xf32>
    %715 = arith.truncf %714 : vector<4x8x8xf32> to vector<4x8x8xbf16>
    "tpu.trace_start"() <{level = 10 : i32, message = "hqd,hkd->hqk"}> : () -> ()
    %cst_184 = arith.constant dense<0.000000e+00> : vector<4x8x8xf32>
    %716 = tpu.matmul %695, %705, %cst_184 {dimension_numbers = #tpu.dot_dimension_numbers<[2], [2], [1], [1], [0, 0, 0, 1, 1, 1], [0], [0]>} : vector<4x8x8xbf16>, vector<4x8x8xbf16>, vector<4x8x8xf32> -> vector<4x8x8xf32>
    "tpu.trace_stop"() : () -> ()
    %cst_185 = arith.constant 0.353553385 : f32
    %717 = vector.broadcast %cst_185 : f32 to vector<4x8x8xf32>
    %718 = arith.mulf %716, %717 : vector<4x8x8xf32>
    %719 = vector.broadcast %32 : vector<1x1x8xf32> to vector<4x8x8xf32>
    %720 = arith.addf %718, %719 : vector<4x8x8xf32>
    %cst_186 = arith.constant dense<0xFF800000> : vector<4x8xf32>
    %721 = vector.multi_reduction <maximumf>, %720, %cst_186 [2] : vector<4x8x8xf32> to vector<4x8xf32>
    %722 = vector.shape_cast %721 : vector<4x8xf32> to vector<4x8x1xf32>
    %723 = vector.broadcast %722 : vector<4x8x1xf32> to vector<4x8x8xf32>
    %724 = arith.subf %720, %723 : vector<4x8x8xf32>
    %725 = math.exp %724 : vector<4x8x8xf32>
    %cst_187 = arith.constant dense<0.000000e+00> : vector<4x8xf32>
    %726 = vector.multi_reduction <add>, %725, %cst_187 [2] : vector<4x8x8xf32> to vector<4x8xf32>
    %727 = vector.shape_cast %726 : vector<4x8xf32> to vector<4x8x1xf32>
    %728 = tpu.reciprocal %727 {approx = true} : vector<4x8x1xf32> -> vector<4x8x1xf32>
    %729 = vector.broadcast %728 : vector<4x8x1xf32> to vector<4x8x8xf32>
    %730 = arith.mulf %725, %729 : vector<4x8x8xf32>
    %731 = arith.truncf %730 : vector<4x8x8xf32> to vector<4x8x8xbf16>
    "tpu.trace_start"() <{level = 10 : i32, message = "hqk,hkd->hqd"}> : () -> ()
    %cst_188 = arith.constant dense<0.000000e+00> : vector<4x8x8xf32>
    %732 = tpu.matmul %731, %715, %cst_188 {dimension_numbers = #tpu.dot_dimension_numbers<[2], [1], [1], [2], [0, 0, 0, 1, 1, 2], [0], [0]>} : vector<4x8x8xbf16>, vector<4x8x8xbf16>, vector<4x8x8xf32> -> vector<4x8x8xf32>
    "tpu.trace_stop"() : () -> ()
    %733 = vector.extract_strided_slice %732 {offsets = [0, 0, 0], sizes = [1, 8, 8], strides = [1, 1, 1]} : vector<4x8x8xf32> to vector<1x8x8xf32>
    %734 = vector.shape_cast %733 : vector<1x8x8xf32> to vector<8x8xf32>
    %735 = vector.extract_strided_slice %732 {offsets = [1, 0, 0], sizes = [1, 8, 8], strides = [1, 1, 1]} : vector<4x8x8xf32> to vector<1x8x8xf32>
    %736 = vector.shape_cast %735 : vector<1x8x8xf32> to vector<8x8xf32>
    %737 = vector.extract_strided_slice %732 {offsets = [2, 0, 0], sizes = [1, 8, 8], strides = [1, 1, 1]} : vector<4x8x8xf32> to vector<1x8x8xf32>
    %738 = vector.shape_cast %737 : vector<1x8x8xf32> to vector<8x8xf32>
    %739 = vector.extract_strided_slice %732 {offsets = [3, 0, 0], sizes = [1, 8, 8], strides = [1, 1, 1]} : vector<4x8x8xf32> to vector<1x8x8xf32>
    %740 = vector.shape_cast %739 : vector<1x8x8xf32> to vector<8x8xf32>
    %741 = tpu.concatenate %734, %736, %738, %740 in 1 : vector<8x8xf32>, vector<8x8xf32>, vector<8x8xf32>, vector<8x8xf32> -> vector<8x32xf32>
    %742 = arith.truncf %741 : vector<8x32xf32> to vector<8x32xbf16>
    %cst_189 = arith.constant dense<0.000000e+00> : vector<8x32xf32>
    %743 = tpu.matmul %742, %684, %cst_189 {dimension_numbers = #tpu.dot_dimension_numbers<[1], [0], [0], [1], [0, 0, 1, 1], [], []>} : vector<8x32xbf16>, vector<32x32xbf16>, vector<8x32xf32> -> vector<8x32xf32>
    %744 = vector.broadcast %685 : vector<1x32xf32> to vector<8x32xf32>
    %745 = arith.addf %743, %744 : vector<8x32xf32>
    %746 = arith.addf %647, %745 : vector<8x32xf32>
    %c38 = arith.constant 38 : index
    %c0_190 = arith.constant 0 : index
    %747 = vector.load %arg6[%c38, %c0_190] : memref<48x128xf32, #tpu.memory_space<vmem>>, vector<1x32xf32>
    %c39 = arith.constant 39 : index
    %c0_191 = arith.constant 0 : index
    %748 = vector.load %arg6[%c39, %c0_191] : memref<48x128xf32, #tpu.memory_space<vmem>>, vector<1x32xf32>
    %cst_192 = arith.constant dense<0.000000e+00> : vector<8xf32>
    %749 = vector.multi_reduction <add>, %746, %cst_192 [1] : vector<8x32xf32> to vector<8xf32>
    %750 = vector.shape_cast %749 : vector<8xf32> to vector<8x1xf32>
    %cst_193 = arith.constant 3.200000e+01 : f32
    %751 = vector.broadcast %cst_193 : f32 to vector<8x1xf32>
    %752 = arith.divf %750, %751 : vector<8x1xf32>
    %753 = vector.broadcast %752 : vector<8x1xf32> to vector<8x32xf32>
    %754 = arith.subf %746, %753 : vector<8x32xf32>
    %755 = arith.mulf %754, %754 : vector<8x32xf32>
    %cst_194 = arith.constant dense<0.000000e+00> : vector<8xf32>
    %756 = vector.multi_reduction <add>, %755, %cst_194 [1] : vector<8x32xf32> to vector<8xf32>
    %757 = vector.shape_cast %756 : vector<8xf32> to vector<8x1xf32>
    %cst_195 = arith.constant 0.0322580636 : f32
    %758 = vector.broadcast %cst_195 : f32 to vector<8x1xf32>
    %759 = arith.mulf %757, %758 : vector<8x1xf32>
    %760 = vector.broadcast %747 : vector<1x32xf32> to vector<8x32xf32>
    %761 = arith.mulf %760, %754 : vector<8x32xf32>
    %762 = math.sqrt %759 : vector<8x1xf32>
    %cst_196 = arith.constant 9.99999997E-7 : f32
    %763 = vector.broadcast %cst_196 : f32 to vector<8x1xf32>
    %764 = arith.addf %762, %763 : vector<8x1xf32>
    %765 = vector.broadcast %764 : vector<8x1xf32> to vector<8x32xf32>
    %766 = arith.divf %761, %765 : vector<8x32xf32>
    %767 = vector.broadcast %748 : vector<1x32xf32> to vector<8x32xf32>
    %768 = arith.addf %766, %767 : vector<8x32xf32>
    %c0_197 = arith.constant 0 : index
    %c960 = arith.constant 960 : index
    %769 = vector.load %arg4[%c0_197, %c960] : memref<32x1024xbf16, #tpu.memory_space<vmem>>, vector<32x64xbf16>
    %c40 = arith.constant 40 : index
    %c0_198 = arith.constant 0 : index
    %770 = vector.load %arg6[%c40, %c0_198] : memref<48x128xf32, #tpu.memory_space<vmem>>, vector<1x64xf32>
    %771 = arith.truncf %768 : vector<8x32xf32> to vector<8x32xbf16>
    %cst_199 = arith.constant dense<0.000000e+00> : vector<8x64xf32>
    %772 = tpu.matmul %771, %769, %cst_199 {dimension_numbers = #tpu.dot_dimension_numbers<[1], [0], [0], [1], [0, 0, 1, 1], [], []>} : vector<8x32xbf16>, vector<32x64xbf16>, vector<8x64xf32> -> vector<8x64xf32>
    %773 = vector.broadcast %770 : vector<1x64xf32> to vector<8x64xf32>
    %774 = arith.addf %772, %773 : vector<8x64xf32>
    %cst_200 = arith.constant 0.000000e+00 : f32
    %775 = vector.broadcast %cst_200 : f32 to vector<8x64xf32>
    %776 = arith.maximumf %774, %775 : vector<8x64xf32>
    %c0_201 = arith.constant 0 : index
    %c96_202 = arith.constant 96 : index
    %777 = vector.load %arg5[%c0_201, %c96_202] : memref<64x128xbf16, #tpu.memory_space<vmem>>, vector<64x32xbf16>
    %778 = arith.truncf %776 : vector<8x64xf32> to vector<8x64xbf16>
    %cst_203 = arith.constant dense<0.000000e+00> : vector<8x32xf32>
    %779 = tpu.matmul %778, %777, %cst_203 {dimension_numbers = #tpu.dot_dimension_numbers<[1], [0], [0], [1], [0, 0, 1, 1], [], []>} : vector<8x64xbf16>, vector<64x32xbf16>, vector<8x32xf32> -> vector<8x32xf32>
    %c41 = arith.constant 41 : index
    %c0_204 = arith.constant 0 : index
    %780 = vector.load %arg6[%c41, %c0_204] : memref<48x128xf32, #tpu.memory_space<vmem>>, vector<1x32xf32>
    %781 = vector.broadcast %780 : vector<1x32xf32> to vector<8x32xf32>
    %782 = arith.addf %779, %781 : vector<8x32xf32>
    %783 = arith.addf %746, %782 : vector<8x32xf32>
    %c44 = arith.constant 44 : index
    %c0_205 = arith.constant 0 : index
    %784 = vector.load %arg6[%c44, %c0_205] : memref<48x128xf32, #tpu.memory_space<vmem>>, vector<1x32xf32>
    %c45 = arith.constant 45 : index
    %c0_206 = arith.constant 0 : index
    %785 = vector.load %arg6[%c45, %c0_206] : memref<48x128xf32, #tpu.memory_space<vmem>>, vector<1x32xf32>
    %cst_207 = arith.constant dense<0.000000e+00> : vector<8xf32>
    %786 = vector.multi_reduction <add>, %783, %cst_207 [1] : vector<8x32xf32> to vector<8xf32>
    %787 = vector.shape_cast %786 : vector<8xf32> to vector<8x1xf32>
    %cst_208 = arith.constant 3.200000e+01 : f32
    %788 = vector.broadcast %cst_208 : f32 to vector<8x1xf32>
    %789 = arith.divf %787, %788 : vector<8x1xf32>
    %790 = vector.broadcast %789 : vector<8x1xf32> to vector<8x32xf32>
    %791 = arith.subf %783, %790 : vector<8x32xf32>
    %792 = arith.mulf %791, %791 : vector<8x32xf32>
    %cst_209 = arith.constant dense<0.000000e+00> : vector<8xf32>
    %793 = vector.multi_reduction <add>, %792, %cst_209 [1] : vector<8x32xf32> to vector<8xf32>
    %794 = vector.shape_cast %793 : vector<8xf32> to vector<8x1xf32>
    %cst_210 = arith.constant 0.0322580636 : f32
    %795 = vector.broadcast %cst_210 : f32 to vector<8x1xf32>
    %796 = arith.mulf %794, %795 : vector<8x1xf32>
    %797 = vector.broadcast %784 : vector<1x32xf32> to vector<8x32xf32>
    %798 = arith.mulf %797, %791 : vector<8x32xf32>
    %799 = math.sqrt %796 : vector<8x1xf32>
    %cst_211 = arith.constant 9.99999997E-7 : f32
    %800 = vector.broadcast %cst_211 : f32 to vector<8x1xf32>
    %801 = arith.addf %799, %800 : vector<8x1xf32>
    %802 = vector.broadcast %801 : vector<8x1xf32> to vector<8x32xf32>
    %803 = arith.divf %798, %802 : vector<8x32xf32>
    %804 = vector.broadcast %785 : vector<1x32xf32> to vector<8x32xf32>
    %805 = arith.addf %803, %804 : vector<8x32xf32>
    %c0_212 = arith.constant 0 : index
    %c0_213 = arith.constant 0 : index
    %c0_214 = arith.constant 0 : index
    %806 = vector.load %arg8[%c0_212, %c0_213, %c0_214] : memref<1x8x32xf32, #tpu.memory_space<vmem>>, vector<1x8x32xf32>
    %807 = vector.shape_cast %806 : vector<1x8x32xf32> to vector<8x32xf32>
    %808 = vector.shape_cast %805 : vector<8x32xf32> to vector<1x8x32xf32>
    tpu.vector_store %arg8[%c0_212, %c0_213, %c0_214], %808 {strides = array<i32>} : memref<1x8x32xf32, #tpu.memory_space<vmem>>, vector<1x8x32xf32>,
    return
  }
  func.func @transform_0(%arg0: i32) -> (i32, i32, i32) {
    %c0_i32 = arith.constant 0 : i32
    %c0_i32_0 = arith.constant 0 : i32
    %c0_i32_1 = arith.constant 0 : i32
    return %arg0, %c0_i32, %c0_i32_0 : i32, i32, i32
  }
  func.func @transform_1(%arg0: i32) -> (i32, i32, i32) {
    %c0_i32 = arith.constant 0 : i32
    %c0_i32_0 = arith.constant 0 : i32
    %c0_i32_1 = arith.constant 0 : i32
    return %arg0, %c0_i32, %c0_i32_0 : i32, i32, i32
  }
  func.func @transform_2(%arg0: i32) -> (i32, i32, i32) {
    %c0_i32 = arith.constant 0 : i32
    %c0_i32_0 = arith.constant 0 : i32
    %c0_i32_1 = arith.constant 0 : i32
    return %arg0, %c0_i32, %c0_i32_0 : i32, i32, i32
  }
  func.func @transform_3(%arg0: i32) -> (i32, i32) {
    %c0_i32 = arith.constant 0 : i32
    %c0_i32_0 = arith.constant 0 : i32
    %c0_i32_1 = arith.constant 0 : i32
    return %c0_i32, %c0_i32_0 : i32, i32
  }
  func.func @transform_4(%arg0: i32) -> (i32, i32) {
    %c0_i32 = arith.constant 0 : i32
    %c0_i32_0 = arith.constant 0 : i32
    %c0_i32_1 = arith.constant 0 : i32
    return %c0_i32, %c0_i32_0 : i32, i32
  }
  func.func @transform_5(%arg0: i32) -> (i32, i32) {
    %c0_i32 = arith.constant 0 : i32
    %c0_i32_0 = arith.constant 0 : i32
    %c0_i32_1 = arith.constant 0 : i32
    return %c0_i32, %c0_i32_0 : i32, i32
  }
  func.func @transform_6(%arg0: i32) -> (i32, i32) {
    %c0_i32 = arith.constant 0 : i32
    %c0_i32_0 = arith.constant 0 : i32
    %c0_i32_1 = arith.constant 0 : i32
    return %c0_i32, %c0_i32_0 : i32, i32
  }
  func.func @transform_7(%arg0: i32) -> (i32, i32, i32) {
    %c0_i32 = arith.constant 0 : i32
    %c0_i32_0 = arith.constant 0 : i32
    %c0_i32_1 = arith.constant 0 : i32
    return %arg0, %c0_i32, %c0_i32_0 : i32, i32, i32
  }
}

</mosaic_0001>

<llo_original>
// kernel: _lambda_.1
$region0: #{_lambda_.1}
  #allocation0 [shape = 'u32[]', space=smem, size = 0x4, offset = 0x4, fixed_abs, tag = 'smem constant byte address 0x4 - core index']
  #allocation1 [shape = 'u32[144,128]{1,0:T(1,128)}', space=vmem, size = 0x12000, scoped, tag = 'internal scratch']
  %s0 = inlined_call_operand.vmem [shape: s32[2,8,1], index: 0, kind: input, shape index: {}]
  %s1 = inlined_call_operand.vmem [shape: s32[2,8,1], index: 1, kind: input, shape index: {}]
  %s2 = inlined_call_operand.vmem [shape: f32[2,1,8], index: 2, kind: input, shape index: {}]
  %s3 = inlined_call_operand.vmem [shape: bf16[32,1024], index: 3, kind: input, shape index: {}]
  %s4 = inlined_call_operand.vmem [shape: bf16[64,128], index: 4, kind: input, shape index: {}]
  %s5 = inlined_call_operand.vmem [shape: f32[48,128], index: 5, kind: input, shape index: {}]
  %s6 = inlined_call_operand.vmem [shape: f32[96,32], index: 6, kind: input, shape index: {}]
  %s7 = inlined_call_operand.hbm [shape: f32[2,8,32], index: 7, kind: output, shape index: {}]
  %s8 = sld [smem:[#allocation0]]
  $region61: #{_lambda_.1} parent=0
    _
  %s10 = ssub.s32 1, %s8
  %s11 = scalar_select 0, %s10, %s8
  $region1: #{_lambda_.1} parent=0
    #allocation2 [shape = 'u8[8192]{0}', space=vmem, size = 0x2000, scoped, tag = 'output window, operand 0']
    #allocation3 [shape = 's32[2]{0}', space=sflag, size = 0x8, scoped, tag = 'scoped memory for _lambda_.1']
    %12 = vsyncpa [#allocation3], 0
    %s13 = scalar_lea.sflag [#allocation3], 1
    %14 = vsyncpa %s13, 0
    loop: start=0, step=1, limit=4
    $region2: #{_lambda_.1} parent=1 // loop_pre_header
      _
    $region3: #{_lambda_.1} parent=1 // loop_header
      %s16 = sphi 0, %s20
      %p17 = scmp.ge.s32.totalorder %s16, 4
      %s26 = sphi 0, %s28
      %s29 = sphi 0, %s26
      %s30 = sphi 0, %s29
      %s46 = sphi 0, %s30
      %s52 = sphi 0, %s54
      %s55 = sphi 0, %s52
      %s56 = sphi 0, %s55
      %s72 = sphi 0, %s56
      %s78 = sphi 0, %s80
      %s81 = sphi 0, %s78
      %s82 = sphi 0, %s81
      %s98 = sphi 0, %s82
      %s102 = sphi 0, %s102
      %s104 = sphi 0, %s102
      %s105 = sphi 0, %s104
      %s119 = sphi 0, %s105
      %s123 = sphi 0, %s123
      %s125 = sphi 0, %s123
      %s126 = sphi 0, %s125
      %s140 = sphi 0, %s126
      %s144 = sphi 0, %s144
      %s146 = sphi 0, %s144
      %s147 = sphi 0, %s146
      %s161 = sphi 0, %s147
      %s165 = sphi 0, %s165
      %s167 = sphi 0, %s165
      %s168 = sphi 0, %s167
      %s182 = sphi 0, %s168
      %s188 = sphi 0, %s190
      %s191 = sphi 0, %s188
      %s192 = sphi 0, %s191
      %s208 = sphi 0, %s192
    $region4: #{_lambda_.1} parent=1 // loop_header_branch
      %19 = sbr.rel (%p17) target = $region8
    $region5: #{_lambda_.1} parent=1 // loop_body
      %s21 = ssub.s32 %s16, 1
      %s22 = ssub.s32 %s16, 2
      %s23 = sadd.s32 %s16, 1
      %s24 = ssub.s32 %s16, %s23
      %p25 = scmp.eq.s32.totalorder %s24, 0
      %s27 = sadd.s32 %s26, 1
      %s28 = scalar_select %p25, %s26, %s27
      %p31 = pneg %p25
      %p32 = scmp.eq.s32.totalorder %s16, 1
      %p33 = por %p31, %p32
      %p34 = scmp.ne.s32.totalorder %s26, %s29
      %p35 = scmp.eq.s32.totalorder %s16, 0
      %p36 = por %p34, %p35
      %p37 = scmp.ne.s32.totalorder %s26, %s29
      %p38 = scmp.eq.s32.totalorder %s21, 1
      %p39 = por %p37, %p38
      %p40 = scmp.ne.s32.totalorder %s29, %s30
      %p41 = scmp.eq.s32.totalorder %s21, 0
      %p42 = por %p40, %p41
      %p43 = scmp.ne.s32.totalorder %s29, %s30
      %p44 = scmp.eq.s32.totalorder %s22, 1
      %p45 = por %p43, %p44
      %p47 = scmp.ne.s32.totalorder %s30, %s46
      %p48 = scmp.eq.s32.totalorder %s22, 0
      %p49 = por %p47, %p48
      %s50 = ssub.s32 %s16, %s23
      %p51 = scmp.eq.s32.totalorder %s50, 0
      %s53 = sadd.s32 %s52, 1
      %s54 = scalar_select %p51, %s52, %s53
      %p57 = pneg %p51
      %p58 = scmp.eq.s32.totalorder %s16, 1
      %p59 = por %p57, %p58
      %p60 = scmp.ne.s32.totalorder %s52, %s55
      %p61 = scmp.eq.s32.totalorder %s16, 0
      %p62 = por %p60, %p61
      %p63 = scmp.ne.s32.totalorder %s52, %s55
      %p64 = scmp.eq.s32.totalorder %s21, 1
      %p65 = por %p63, %p64
      %p66 = scmp.ne.s32.totalorder %s55, %s56
      %p67 = scmp.eq.s32.totalorder %s21, 0
      %p68 = por %p66, %p67
      %p69 = scmp.ne.s32.totalorder %s55, %s56
      %p70 = scmp.eq.s32.totalorder %s22, 1
      %p71 = por %p69, %p70
      %p73 = scmp.ne.s32.totalorder %s56, %s72
      %p74 = scmp.eq.s32.totalorder %s22, 0
      %p75 = por %p73, %p74
      %s76 = ssub.s32 %s16, %s23
      %p77 = scmp.eq.s32.totalorder %s76, 0
      %s79 = sadd.s32 %s78, 1
      %s80 = scalar_select %p77, %s78, %s79
      %p83 = pneg %p77
      %p84 = scmp.eq.s32.totalorder %s16, 1
      %p85 = por %p83, %p84
      %p86 = scmp.ne.s32.totalorder %s78, %s81
      %p87 = scmp.eq.s32.totalorder %s16, 0
      %p88 = por %p86, %p87
      %p89 = scmp.ne.s32.totalorder %s78, %s81
      %p90 = scmp.eq.s32.totalorder %s21, 1
      %p91 = por %p89, %p90
      %p92 = scmp.ne.s32.totalorder %s81, %s82
      %p93 = scmp.eq.s32.totalorder %s21, 0
      %p94 = por %p92, %p93
      %p95 = scmp.ne.s32.totalorder %s81, %s82
      %p96 = scmp.eq.s32.totalorder %s22, 1
      %p97 = por %p95, %p96
      %p99 = scmp.ne.s32.totalorder %s82, %s98
      %p100 = scmp.eq.s32.totalorder %s22, 0
      %p101 = por %p99, %p100
      %s103 = sadd.s32 %s102, 1
      %p106 = scmp.eq.s32.totalorder %s16, 1
      %p107 = scmp.ne.s32.totalorder %s102, %s104
      %p108 = scmp.eq.s32.totalorder %s16, 0
      %p109 = por %p107, %p108
      %p110 = scmp.ne.s32.totalorder %s102, %s104
      %p111 = scmp.eq.s32.totalorder %s21, 1
      %p112 = por %p110, %p111
      %p113 = scmp.ne.s32.totalorder %s104, %s105
      %p114 = scmp.eq.s32.totalorder %s21, 0
      %p115 = por %p113, %p114
      %p116 = scmp.ne.s32.totalorder %s104, %s105
      %p117 = scmp.eq.s32.totalorder %s22, 1
      %p118 = por %p116, %p117
      %p120 = scmp.ne.s32.totalorder %s105, %s119
      %p121 = scmp.eq.s32.totalorder %s22, 0
      %p122 = por %p120, %p121
      %s124 = sadd.s32 %s123, 1
      %p127 = scmp.eq.s32.totalorder %s16, 1
      %p128 = scmp.ne.s32.totalorder %s123, %s125
      %p129 = scmp.eq.s32.totalorder %s16, 0
      %p130 = por %p128, %p129
      %p131 = scmp.ne.s32.totalorder %s123, %s125
      %p132 = scmp.eq.s32.totalorder %s21, 1
      %p133 = por %p131, %p132
      %p134 = scmp.ne.s32.totalorder %s125, %s126
      %p135 = scmp.eq.s32.totalorder %s21, 0
      %p136 = por %p134, %p135
      %p137 = scmp.ne.s32.totalorder %s125, %s126
      %p138 = scmp.eq.s32.totalorder %s22, 1
      %p139 = por %p137, %p138
      %p141 = scmp.ne.s32.totalorder %s126, %s140
      %p142 = scmp.eq.s32.totalorder %s22, 0
      %p143 = por %p141, %p142
      %s145 = sadd.s32 %s144, 1
      %p148 = scmp.eq.s32.totalorder %s16, 1
      %p149 = scmp.ne.s32.totalorder %s144, %s146
      %p150 = scmp.eq.s32.totalorder %s16, 0
      %p151 = por %p149, %p150
      %p152 = scmp.ne.s32.totalorder %s144, %s146
      %p153 = scmp.eq.s32.totalorder %s21, 1
      %p154 = por %p152, %p153
      %p155 = scmp.ne.s32.totalorder %s146, %s147
      %p156 = scmp.eq.s32.totalorder %s21, 0
      %p157 = por %p155, %p156
      %p158 = scmp.ne.s32.totalorder %s146, %s147
      %p159 = scmp.eq.s32.totalorder %s22, 1
      %p160 = por %p158, %p159
      %p162 = scmp.ne.s32.totalorder %s147, %s161
      %p163 = scmp.eq.s32.totalorder %s22, 0
      %p164 = por %p162, %p163
      %s166 = sadd.s32 %s165, 1
      %p169 = scmp.eq.s32.totalorder %s16, 1
      %p170 = scmp.ne.s32.totalorder %s165, %s167
      %p171 = scmp.eq.s32.totalorder %s16, 0
      %p172 = por %p170, %p171
      %p173 = scmp.ne.s32.totalorder %s165, %s167
      %p174 = scmp.eq.s32.totalorder %s21, 1
      %p175 = por %p173, %p174
      %p176 = scmp.ne.s32.totalorder %s167, %s168
      %p177 = scmp.eq.s32.totalorder %s21, 0
      %p178 = por %p176, %p177
      %p179 = scmp.ne.s32.totalorder %s167, %s168
      %p180 = scmp.eq.s32.totalorder %s22, 1
      %p181 = por %p179, %p180
      %p183 = scmp.ne.s32.totalorder %s168, %s182
      %p184 = scmp.eq.s32.totalorder %s22, 0
      %p185 = por %p183, %p184
      %s186 = ssub.s32 %s16, %s23
      %p187 = scmp.eq.s32.totalorder %s186, 0
      %s189 = sadd.s32 %s188, 1
      %s190 = scalar_select %p187, %s188, %s189
      %p193 = pneg %p187
      %p194 = scmp.eq.s32.totalorder %s16, 1
      %p195 = por %p193, %p194
      %p196 = scmp.ne.s32.totalorder %s188, %s191
      %p197 = scmp.eq.s32.totalorder %s16, 0
      %p198 = por %p196, %p197
      %p199 = scmp.ne.s32.totalorder %s188, %s191
      %p200 = scmp.eq.s32.totalorder %s21, 1
      %p201 = por %p199, %p200
      %p202 = scmp.ne.s32.totalorder %s191, %s192
      %p203 = scmp.eq.s32.totalorder %s21, 0
      %p204 = por %p202, %p203
      %p205 = scmp.ne.s32.totalorder %s191, %s192
      %p206 = scmp.eq.s32.totalorder %s22, 1
      %p207 = por %p205, %p206
      %p209 = scmp.ne.s32.totalorder %s192, %s208
      %p210 = scmp.eq.s32.totalorder %s22, 0
      %p211 = por %p209, %p210
      %p212 = scmp.le.s32.totalorder 1, %s16
      %p213 = scmp.lt.s32.totalorder %s16, 3
      %p214 = pnand %p212, %p213
      %p215 = pneg %p214
      // Predicated region
      $region9: #{_lambda_.1} parent=5 // pred_check
        _
      $region10: #{_lambda_.1} parent=5 // pred_check_branch
        %217 = sbr.rel (%p214) target = $region12
      $region11: #{_lambda_.1} parent=5 // pred_region
        %s218 = ssub.s32 %s16, 1
        // Predicated region
        $region13: #{_lambda_.1} parent=11 // pred_check
          %p219 = pneg %p115
        $region14: #{_lambda_.1} parent=11 // pred_check_branch
          %221 = sbr.rel (%p219) target = $region16
        $region15: #{_lambda_.1} parent=11 // pred_region
          _
        $region16: #{_lambda_.1} parent=11 // pred_fallthru
          _
        // Predicated region
        $region17: #{_lambda_.1} parent=11 // pred_check
          %p222 = pneg %p136
        $region18: #{_lambda_.1} parent=11 // pred_check_branch
          %224 = sbr.rel (%p222) target = $region20
        $region19: #{_lambda_.1} parent=11 // pred_region
          _
        $region20: #{_lambda_.1} parent=11 // pred_fallthru
          _
        // Predicated region
        $region21: #{_lambda_.1} parent=11 // pred_check
          %p225 = pneg %p157
        $region22: #{_lambda_.1} parent=11 // pred_check_branch
          %227 = sbr.rel (%p225) target = $region24
        $region23: #{_lambda_.1} parent=11 // pred_region
          _
        $region24: #{_lambda_.1} parent=11 // pred_fallthru
          _
        // Predicated region
        $region25: #{_lambda_.1} parent=11 // pred_check
          %p228 = pneg %p178
        $region26: #{_lambda_.1} parent=11 // pred_check_branch
          %230 = sbr.rel (%p228) target = $region28
        $region27: #{_lambda_.1} parent=11 // pred_region
          _
        $region28: #{_lambda_.1} parent=11 // pred_fallthru
          _
      $region12: #{_lambda_.1} parent=5 // pred_fallthru
        _
      %p231 = scmp.lt.s32.totalorder %s16, 2
      // Predicated region
      $region29: #{_lambda_.1} parent=5 // pred_check
        %p232 = pneg %p231
      $region30: #{_lambda_.1} parent=5 // pred_check_branch
        %234 = sbr.rel (%p232) target = $region32
      $region31: #{_lambda_.1} parent=5 // pred_region
        // Predicated region
        $region33: #{_lambda_.1} parent=31 // pred_check
          %p235 = pneg %p36
        $region34: #{_lambda_.1} parent=31 // pred_check_branch
          %237 = sbr.rel (%p235) target = $region36
        $region35: #{_lambda_.1} parent=31 // pred_region
          %p238 = scmp.lt.s32.totalorder %s16, 1
          %s239 = scalar_select %p238, %s16, 1
          %s240 = smul.addr %s239, 8
          %s241 = scalar_lea.vmem %s0, %s240
        $region36: #{_lambda_.1} parent=31 // pred_fallthru
          _
        // Predicated region
        $region37: #{_lambda_.1} parent=31 // pred_check
          %p242 = pneg %p62
        $region38: #{_lambda_.1} parent=31 // pred_check_branch
          %244 = sbr.rel (%p242) target = $region40
        $region39: #{_lambda_.1} parent=31 // pred_region
          %p245 = scmp.lt.s32.totalorder %s16, 1
          %s246 = scalar_select %p245, %s16, 1
          %s247 = smul.addr %s246, 8
          %s248 = scalar_lea.vmem %s1, %s247
        $region40: #{_lambda_.1} parent=31 // pred_fallthru
          _
        // Predicated region
        $region41: #{_lambda_.1} parent=31 // pred_check
          %p249 = pneg %p88
        $region42: #{_lambda_.1} parent=31 // pred_check_branch
          %251 = sbr.rel (%p249) target = $region44
        $region43: #{_lambda_.1} parent=31 // pred_region
          %p252 = scmp.lt.s32.totalorder %s16, 1
          %s253 = scalar_select %p252, %s16, 1
          %s254 = scalar_lea.vmem %s2, %s253
        $region44: #{_lambda_.1} parent=31 // pred_fallthru
          _
      $region32: #{_lambda_.1} parent=5 // pred_fallthru
        _
      %p255 = scmp.le.s32.totalorder 1, %s16
      %p256 = scmp.lt.s32.totalorder %s16, 3
      %p257 = pnand %p255, %p256
      %p258 = pneg %p257
      // Predicated region
      $region45: #{_lambda_.1} parent=5 // pred_check
        _
      $region46: #{_lambda_.1} parent=5 // pred_check_branch
        %260 = sbr.rel (%p257) target = $region48
      $region47: #{_lambda_.1} parent=5 // pred_region
        %s261 = ssub.s32 %s16, 1
        %p262 = scmp.lt.s32.totalorder %s21, 1
        %s263 = scalar_select %p262, %s21, 1
        %s264 = smul.addr %s263, 8
        %s265 = scalar_lea.vmem %s0, %s264
        %p266 = pneg %p42
        %p267 = pneg %p39
        %p268 = scmp.lt.s32.totalorder %s21, 1
        %s269 = scalar_select %p268, %s21, 1
        %s270 = smul.addr %s269, 8
        %s271 = scalar_lea.vmem %s1, %s270
        %p272 = pneg %p68
        %p273 = pneg %p65
        %p274 = scmp.lt.s32.totalorder %s21, 1
        %s275 = scalar_select %p274, %s21, 1
        %s276 = scalar_lea.vmem %s2, %s275
        %p277 = pneg %p94
        %p278 = pneg %p91
        %p279 = pneg %p115
        %p280 = pneg %p112
        %p281 = pneg %p136
        %p282 = pneg %p133
        %p283 = pneg %p157
        %p284 = pneg %p154
        %p285 = pneg %p178
        %p286 = pneg %p175
        %p287 = pneg %p204
        %p288 = pneg %p201
        %s289 = sand.u32 %s191, 1
        %s290 = scalar_lea.sflag [#allocation3], %s289
        %s291 = sand.u32 %s191, 1
        %s292 = smul.addr %s291, 8
        %s293 = scalar_lea.vmem [#allocation2], %s292
        %p294 = scmp.lt.s32.totalorder %s21, 1
        %s295 = scalar_select %p294, %s21, 1
        %s296 = smul.addr %s295, 8
        %s297 = scalar_lea.vmem %s0, %s296
        %p298 = scmp.lt.s32.totalorder %s21, 1
        %s299 = scalar_select %p298, %s21, 1
        %s300 = smul.addr %s299, 8
        %s301 = scalar_lea.vmem %s1, %s300
        %p302 = scmp.lt.s32.totalorder %s21, 1
        %s303 = scalar_select %p302, %s21, 1
        %s304 = scalar_lea.vmem %s2, %s303
        %v306 = vld [vmem:[%s297] sm:$0xff]
        %v307 = vld [vmem:[%s301] sm:$0xff]
        %v308 = vlaneseq
        %v309 = vand.u32 %v308, 127
        %310 = vset.pattern.permute.xlu0 0
        %311 = vperm.xlu0 %310, %v306
        %v312 = vpop.permute.xlu0 %311
        %vm313 = vcmp.eq.s32.totalorder %v309, %v312
        %v314 = vsel %vm313, 1, 0
        %v315 = vcvt.s32.f32 %v314
        %316 = vset.pattern.permute.xlu0 0
        %317 = vperm.xlu0 %316, %v307
        %v318 = vpop.permute.xlu0 %317
        %vm319 = vcmp.eq.s32.totalorder %v309, %v318
        %v320 = vsel %vm319, 1, 0
        %v321 = vcvt.s32.f32 %v320
        %v322 = vld [vmem:[%s6] sm:$0xff]
        %v323 = vld [vmem:[%s6 + $0x8] sm:$0xff]
        %vm324 = vcmask 130048
        %v326 = vsel %vm324, %v315, 0
        %328 = vmatprep.subr.mxu0 0.0
        %329 = vmatpush1.msra.mxu0 %v322
        %330 = vmatprep.subr.mxu0 0.0
        %331 = vmatpush1.msra.mxu0 %v323
        %332 = vmatprep.subr.mxu0 0.0
        %333 = vmatpush1.msra.mxu0 0.0
        %334 = vmatprep.subr.mxu0 0.0
        %335 = vmatpush1.msra.mxu0 0.0
        %336 = vmatprep.subr.mxu0 0.0
        %337 = vmatpush1.msra.mxu0 0.0
        %338 = vmatprep.subr.mxu0 0.0
        %339 = vmatpush1.msra.mxu0 0.0
        %340 = vmatprep.subr.mxu0 0.0
        %341 = vmatpush1.msra.mxu0 0.0
        %342 = vmatprep.subr.mxu0 0.0
        %343 = vmatpush1.msra.mxu0 0.0
        %344 = vmatprep.subr.mxu0 0.0
        %345 = vmatpush1.msra.mxu0 0.0
        %346 = vmatprep.subr.mxu0 0.0
        %347 = vmatpush1.msra.mxu0 0.0
        %348 = vmatprep.subr.mxu0 0.0
        %349 = vmatpush1.msra.mxu0 0.0
        %350 = vmatprep.subr.mxu0 0.0
        %351 = vmatpush1.msra.mxu0 0.0
        %352 = vmatprep.subr.mxu0 0.0
        %353 = vmatpush1.msra.mxu0 0.0
        %354 = vmatprep.subr.mxu0 0.0
        %355 = vmatpush1.msra.mxu0 0.0
        %356 = vmatprep.subr.mxu0 0.0
        %357 = vmatpush1.msra.mxu0 0.0
        %358 = vmatprep.subr.mxu0 0.0
        %359 = vmatpush1.msra.mxu0 0.0
        %360 = vmatprep.subr.mxu0 0.0
        %361 = vmatpush1.msra.mxu0 0.0
        %362 = vmatprep.subr.mxu0 0.0
        %363 = vmatpush1.msra.mxu0 0.0
        %364 = vmatprep.subr.mxu0 0.0
        %365 = vmatpush1.msra.mxu0 0.0
        %366 = vmatprep.subr.mxu0 0.0
        %367 = vmatpush1.msra.mxu0 0.0
        %368 = vmatprep.subr.mxu0 0.0
        %369 = vmatpush1.msra.mxu0 0.0
        %370 = vmatprep.subr.mxu0 0.0
        %371 = vmatpush1.msra.mxu0 0.0
        %372 = vmatprep.subr.mxu0 0.0
        %373 = vmatpush1.msra.mxu0 0.0
        %374 = vmatprep.subr.mxu0 0.0
        %375 = vmatpush1.msra.mxu0 0.0
        %376 = vmatprep.subr.mxu0 0.0
        %377 = vmatpush1.msra.mxu0 0.0
        %378 = vmatprep.subr.mxu0 0.0
        %379 = vmatpush1.msra.mxu0 0.0
        %380 = vmatprep.subr.mxu0 0.0
        %381 = vmatpush1.msra.mxu0 0.0
        %382 = vmatprep.subr.mxu0 0.0
        %383 = vmatpush1.msra.mxu0 0.0
        %384 = vmatprep.subr.mxu0 0.0
        %385 = vmatpush1.msra.mxu0 0.0
        %386 = vmatprep.subr.mxu0 0.0
        %387 = vmatpush1.msra.mxu0 0.0
        %388 = vmatprep.subr.mxu0 0.0
        %389 = vmatpush1.msra.mxu0 0.0
        %390 = vmatprep.subr.mxu0 0.0
        %391 = vmatpush1.msra.mxu0 0.0
        %392 = vmatprep.mubr.f32.mxu0 0.0
        %393 = vmatmul.mubr.f32.gmra.mrb[0].mxu0 %v326
        %v394 = vpop.f32.mrb[0].mxu0
        %v395 = vadd.f32 0.0, %v394
        %v396 = vpop.f32.mrb[0].mxu0
        %397 = vdwg.mxu0
        %v398 = vmul.f32 %v395, 5.656854
        %v399 = vld [vmem:[%s6 + $0x20] sm:$0xff]
        %v400 = vadd.f32 %v398, %v399
        %v401 = vld [vmem:[%s6 + $0x10] sm:$0xff]
        %v402 = vld [vmem:[%s6 + $0x18] sm:$0xff]
        %v404 = vsel %vm324, %v321, 0
        %406 = vmatprep.subr.mxu0 0.0
        %407 = vmatpush1.msra.mxu0 %v401
        %408 = vmatprep.subr.mxu0 0.0
        %409 = vmatpush1.msra.mxu0 %v402
        %410 = vmatprep.subr.mxu0 0.0
        %411 = vmatpush1.msra.mxu0 0.0
        %412 = vmatprep.subr.mxu0 0.0
        %413 = vmatpush1.msra.mxu0 0.0
        %414 = vmatprep.subr.mxu0 0.0
        %415 = vmatpush1.msra.mxu0 0.0
        %416 = vmatprep.subr.mxu0 0.0
        %417 = vmatpush1.msra.mxu0 0.0
        %418 = vmatprep.subr.mxu0 0.0
        %419 = vmatpush1.msra.mxu0 0.0
        %420 = vmatprep.subr.mxu0 0.0
        %421 = vmatpush1.msra.mxu0 0.0
        %422 = vmatprep.subr.mxu0 0.0
        %423 = vmatpush1.msra.mxu0 0.0
        %424 = vmatprep.subr.mxu0 0.0
        %425 = vmatpush1.msra.mxu0 0.0
        %426 = vmatprep.subr.mxu0 0.0
        %427 = vmatpush1.msra.mxu0 0.0
        %428 = vmatprep.subr.mxu0 0.0
        %429 = vmatpush1.msra.mxu0 0.0
        %430 = vmatprep.subr.mxu0 0.0
        %431 = vmatpush1.msra.mxu0 0.0
        %432 = vmatprep.subr.mxu0 0.0
        %433 = vmatpush1.msra.mxu0 0.0
        %434 = vmatprep.subr.mxu0 0.0
        %435 = vmatpush1.msra.mxu0 0.0
        %436 = vmatprep.subr.mxu0 0.0
        %437 = vmatpush1.msra.mxu0 0.0
        %438 = vmatprep.subr.mxu0 0.0
        %439 = vmatpush1.msra.mxu0 0.0
        %440 = vmatprep.subr.mxu0 0.0
        %441 = vmatpush1.msra.mxu0 0.0
        %442 = vmatprep.subr.mxu0 0.0
        %443 = vmatpush1.msra.mxu0 0.0
        %444 = vmatprep.subr.mxu0 0.0
        %445 = vmatpush1.msra.mxu0 0.0
        %446 = vmatprep.subr.mxu0 0.0
        %447 = vmatpush1.msra.mxu0 0.0
        %448 = vmatprep.subr.mxu0 0.0
        %449 = vmatpush1.msra.mxu0 0.0
        %450 = vmatprep.subr.mxu0 0.0
        %451 = vmatpush1.msra.mxu0 0.0
        %452 = vmatprep.subr.mxu0 0.0
        %453 = vmatpush1.msra.mxu0 0.0
        %454 = vmatprep.subr.mxu0 0.0
        %455 = vmatpush1.msra.mxu0 0.0
        %456 = vmatprep.subr.mxu0 0.0
        %457 = vmatpush1.msra.mxu0 0.0
        %458 = vmatprep.subr.mxu0 0.0
        %459 = vmatpush1.msra.mxu0 0.0
        %460 = vmatprep.subr.mxu0 0.0
        %461 = vmatpush1.msra.mxu0 0.0
        %462 = vmatprep.subr.mxu0 0.0
        %463 = vmatpush1.msra.mxu0 0.0
        %464 = vmatprep.subr.mxu0 0.0
        %465 = vmatpush1.msra.mxu0 0.0
        %466 = vmatprep.subr.mxu0 0.0
        %467 = vmatpush1.msra.mxu0 0.0
        %468 = vmatprep.subr.mxu0 0.0
        %469 = vmatpush1.msra.mxu0 0.0
        %470 = vmatprep.mubr.f32.mxu0 0.0
        %471 = vmatmul.mubr.f32.gmra.mrb[0].mxu0 %v404
        %v472 = vpop.f32.mrb[0].mxu0
        %v473 = vadd.f32 0.0, %v472
        %v474 = vpop.f32.mrb[0].mxu0
        %475 = vdwg.mxu0
        %v476 = vmul.f32 %v473, 5.656854
        %v477 = vadd.f32 %v476, %v399
        %v478 = vld [vmem:[%s304] sm:$0x1]
        %v479 = vsub.f32 1.0, %v478
        %v480 = vmul.f32 %v479, -1e+09
        %v481 = vlaneseq
        %v482 = vshrl.u32 %v481, 7
        %vm483 = vcmp.ge.s32.totalorder %v482, %v309
        %v484 = vsel %vm483, 0.0, -1e+09
        %v485 = vld [vmem:[%s5] sm:$0x1]
        %v486 = vld [vmem:[%s5 + $0x1] sm:$0x1]
        %vm487 = vcmask 261120
        %v488 = vsel %vm487, %v400, 0.0
        %489 = vadd.xlane.f32.xlu0 %v488
        %v490 = vpop.xlane.xlu0 %489
        %v491 = vrcp.pop 32.0
        %v492 = vmul.f32 %v490, %v491
        %v493 = vsub.f32 %v400, %v492
        %v494 = vmul.f32 %v493, %v493
        %v495 = vsel %vm487, %v494, 0.0
        %496 = vadd.xlane.f32.xlu0 %v495
        %v497 = vpop.xlane.xlu0 %496
        %v498 = vmul.f32 %v497, 0.032258064
        %v499 = vlaneseq
        %v500 = vshrl.u32 %v499, 7
        %v501 = vsub.s32 0, %v500
        %v502 = vrot.slane %v485, %v501
        %v503 = vmul.f32 %v502, %v493
        %v504 = vrsqrt.pop %v498
        %v505 = vmul.f32 %v498, %v504
        %vm506 = vcmp.eq.f32.partialorder %v498, inf
        %v507 = vsel %vm506, %v498, %v505
        %vm508 = vcmp.eq.f32.partialorder %v498, 0.0
        %v509 = vand.u32 %v498, 2147483648
        %v510 = vsel %vm508, %v509, %v507
        %v511 = vadd.f32 %v510, 1e-06
        %v512 = vrcp.pop %v511
        %v513 = vmul.f32 %v503, %v512
        %v514 = vlaneseq
        %v515 = vshrl.u32 %v514, 7
        %v516 = vsub.s32 0, %v515
        %v517 = vrot.slane %v486, %v516
        %v518 = vadd.f32 %v513, %v517
        %v519 = vld [vmem:[%s3] sm:$0xf]
        %v520 = vld [vmem:[%s3 + $0x20] sm:$0xf]
        %v521 = vld [vmem:[%s3 + $0x40] sm:$0xf]
        %v522 = vld [vmem:[%s3 + $0x60] sm:$0xf]
        %v523 = vld [vmem:[%s5 + $0x2] sm:$0x1]
        %v524 = vpack.c.bf16 %v518, %v518
        %v525 = vlaneseq
        %v526 = vshrl.u32 %v525, 7
        %v527 = vsub.s32 0, %v526
        %v528 = vrot.slane %v523, %v527
        %v533 = vunpack.c.l.b16 %v519
        %v534 = vunpack.c.l.b16 %v520
        %v535 = vunpack.c.l.b16 %v521
        %v536 = vunpack.c.l.b16 %v522
        %v537 = vpack.c.b16 %v534, %v533
        %v538 = vpack.c.b16 %v536, %v535
        %v542 = vsel %vm487, %v524, 0
        %544 = vmatprep.subr.bf16.mxu0 0
        %545 = vmatpush1.bf16.msra.mxu0 %v537
        %546 = vmatprep.subr.bf16.mxu0 0
        %547 = vmatpush1.bf16.msra.mxu0 %v538
        %548 = vmatprep.subr.bf16.mxu0 0
        %549 = vmatpush1.bf16.msra.mxu0 0
        %550 = vmatprep.subr.bf16.mxu0 0
        %551 = vmatpush1.bf16.msra.mxu0 0
        %552 = vmatprep.subr.bf16.mxu0 0
        %553 = vmatpush1.bf16.msra.mxu0 0
        %554 = vmatprep.subr.bf16.mxu0 0
        %555 = vmatpush1.bf16.msra.mxu0 0
        %556 = vmatprep.subr.bf16.mxu0 0
        %557 = vmatpush1.bf16.msra.mxu0 0
        %558 = vmatprep.subr.bf16.mxu0 0
        %559 = vmatpush1.bf16.msra.mxu0 0
        %560 = vmatprep.subr.bf16.mxu0 0
        %561 = vmatpush1.bf16.msra.mxu0 0
        %562 = vmatprep.subr.bf16.mxu0 0
        %563 = vmatpush1.bf16.msra.mxu0 0
        %564 = vmatprep.subr.bf16.mxu0 0
        %565 = vmatpush1.bf16.msra.mxu0 0
        %566 = vmatprep.subr.bf16.mxu0 0
        %567 = vmatpush1.bf16.msra.mxu0 0
        %568 = vmatprep.subr.bf16.mxu0 0
        %569 = vmatpush1.bf16.msra.mxu0 0
        %570 = vmatprep.subr.bf16.mxu0 0
        %571 = vmatpush1.bf16.msra.mxu0 0
        %572 = vmatprep.subr.bf16.mxu0 0
        %573 = vmatpush1.bf16.msra.mxu0 0
        %574 = vmatprep.subr.bf16.mxu0 0
        %575 = vmatpush1.bf16.msra.mxu0 0
        %576 = vmatprep.mubr.bf16.mxu0 0
        %577 = vmatmul.mubr.bf16.gmra.mrb[0].mxu0 %v542
        %v578 = vpop.f32.mrb[0].mxu0
        %v579 = vadd.f32 %v528, %v578
        %v580 = vpop.f32.mrb[0].mxu0
        %v581 = vpop.f32.mrb[0].mxu0
        %v582 = vpop.f32.mrb[0].mxu0
        %583 = vdwg.mxu0
        %v584 = vld [vmem:[%s5 + $0x3] sm:$0x1]
        %586 = vrot.lane.b32.xlu0 %v579, 120
        %v587 = vpop.permute.xlu0 %586
        %589 = vrot.lane.b32.xlu0 %v579, 112
        %v590 = vpop.permute.xlu0 %589
        %592 = vrot.lane.b32.xlu0 %v579, 104
        %v593 = vpop.permute.xlu0 %592
        %v595 = vpack.c.bf16 %v579, %v579
        %v596 = vpack.c.bf16 %v587, %v587
        %v597 = vpack.c.bf16 %v590, %v590
        %v598 = vpack.c.bf16 %v593, %v593
        %600 = vrot.lane.b32.xlu0 %v595, 96
        %v601 = vpop.permute.xlu0 %600
        %vm602 = vcmask 64512
        %v604 = vsel %vm602, %v595, 0
        %v607 = vsel %vm602, %v601, 0
        %609 = vmatprep.subr.bf16.mxu0 0
        %610 = vmatpush1.bf16.xpose.msra.mxu0 %v607
        %611 = vmatprep.subr.bf16.mxu0 0
        %612 = vmatpush1.bf16.xpose.msra.mxu0 0
        %613 = vmatprep.subr.bf16.mxu0 0
        %614 = vmatpush1.bf16.xpose.msra.mxu0 0
        %615 = vmatprep.subr.bf16.mxu0 0
        %616 = vmatpush1.bf16.xpose.msra.mxu0 0
        %617 = vmatprep.subr.bf16.mxu0 0
        %618 = vmatpush1.bf16.xpose.msra.mxu0 0
        %619 = vmatprep.subr.bf16.mxu0 0
        %620 = vmatpush1.bf16.xpose.msra.mxu0 0
        %621 = vmatprep.subr.bf16.mxu0 0
        %622 = vmatpush1.bf16.xpose.msra.mxu0 0
        %623 = vmatprep.subr.bf16.mxu0 0
        %624 = vmatpush1.bf16.xpose.msra.mxu0 0
        %625 = vmatprep.subr.bf16.mxu0 0
        %626 = vmatpush1.bf16.xpose.msra.mxu0 0
        %627 = vmatprep.subr.bf16.mxu0 0
        %628 = vmatpush1.bf16.xpose.msra.mxu0 0
        %629 = vmatprep.subr.bf16.mxu0 0
        %630 = vmatpush1.bf16.xpose.msra.mxu0 0
        %631 = vmatprep.subr.bf16.mxu0 0
        %632 = vmatpush1.bf16.xpose.msra.mxu0 0
        %633 = vmatprep.subr.bf16.mxu0 0
        %634 = vmatpush1.bf16.xpose.msra.mxu0 0
        %635 = vmatprep.subr.bf16.mxu0 0
        %636 = vmatpush1.bf16.xpose.msra.mxu0 0
        %637 = vmatprep.subr.bf16.mxu0 0
        %638 = vmatpush1.bf16.xpose.msra.mxu0 0
        %639 = vmatprep.subr.bf16.mxu0 0
        %640 = vmatpush1.bf16.xpose.msra.mxu0 0
        %641 = vmatprep.mubr.bf16.mxu0 0
        %642 = vmatmul.mubr.bf16.gmra.mrb[0].mxu0 %v604
        %v643 = vpop.f32.mrb[0].mxu0
        %v644 = vadd.f32 0.0, %v643
        %v645 = vpop.f32.mrb[0].mxu0
        %v646 = vpop.f32.mrb[0].mxu0
        %v647 = vpop.f32.mrb[0].mxu0
        %648 = vdwg.mxu0
        %650 = vrot.lane.b32.xlu0 %v596, 96
        %v651 = vpop.permute.xlu0 %650
        %v653 = vsel %vm602, %v596, 0
        %v656 = vsel %vm602, %v651, 0
        %658 = vmatprep.subr.bf16.mxu0 0
        %659 = vmatpush1.bf16.xpose.msra.mxu0 %v656
        %660 = vmatprep.subr.bf16.mxu0 0
        %661 = vmatpush1.bf16.xpose.msra.mxu0 0
        %662 = vmatprep.subr.bf16.mxu0 0
        %663 = vmatpush1.bf16.xpose.msra.mxu0 0
        %664 = vmatprep.subr.bf16.mxu0 0
        %665 = vmatpush1.bf16.xpose.msra.mxu0 0
        %666 = vmatprep.subr.bf16.mxu0 0
        %667 = vmatpush1.bf16.xpose.msra.mxu0 0
        %668 = vmatprep.subr.bf16.mxu0 0
        %669 = vmatpush1.bf16.xpose.msra.mxu0 0
        %670 = vmatprep.subr.bf16.mxu0 0
        %671 = vmatpush1.bf16.xpose.msra.mxu0 0
        %672 = vmatprep.subr.bf16.mxu0 0
        %673 = vmatpush1.bf16.xpose.msra.mxu0 0
        %674 = vmatprep.subr.bf16.mxu0 0
        %675 = vmatpush1.bf16.xpose.msra.mxu0 0
        %676 = vmatprep.subr.bf16.mxu0 0
        %677 = vmatpush1.bf16.xpose.msra.mxu0 0
        %678 = vmatprep.subr.bf16.mxu0 0
        %679 = vmatpush1.bf16.xpose.msra.mxu0 0
        %680 = vmatprep.subr.bf16.mxu0 0
        %681 = vmatpush1.bf16.xpose.msra.mxu0 0
        %682 = vmatprep.subr.bf16.mxu0 0
        %683 = vmatpush1.bf16.xpose.msra.mxu0 0
        %684 = vmatprep.subr.bf16.mxu0 0
        %685 = vmatpush1.bf16.xpose.msra.mxu0 0
        %686 = vmatprep.subr.bf16.mxu0 0
        %687 = vmatpush1.bf16.xpose.msra.mxu0 0
        %688 = vmatprep.subr.bf16.mxu0 0
        %689 = vmatpush1.bf16.xpose.msra.mxu0 0
        %690 = vmatprep.mubr.bf16.mxu0 0
        %691 = vmatmul.mubr.bf16.gmra.mrb[0].mxu0 %v653
        %v692 = vpop.f32.mrb[0].mxu0
        %v693 = vadd.f32 0.0, %v692
        %v694 = vpop.f32.mrb[0].mxu0
        %v695 = vpop.f32.mrb[0].mxu0
        %v696 = vpop.f32.mrb[0].mxu0
        %697 = vdwg.mxu0
        %699 = vrot.lane.b32.xlu0 %v597, 96
        %v700 = vpop.permute.xlu0 %699
        %v702 = vsel %vm602, %v597, 0
        %v705 = vsel %vm602, %v700, 0
        %707 = vmatprep.subr.bf16.mxu0 0
        %708 = vmatpush1.bf16.xpose.msra.mxu0 %v705
        %709 = vmatprep.subr.bf16.mxu0 0
        %710 = vmatpush1.bf16.xpose.msra.mxu0 0
        %711 = vmatprep.subr.bf16.mxu0 0
        %712 = vmatpush1.bf16.xpose.msra.mxu0 0
        %713 = vmatprep.subr.bf16.mxu0 0
        %714 = vmatpush1.bf16.xpose.msra.mxu0 0
        %715 = vmatprep.subr.bf16.mxu0 0
        %716 = vmatpush1.bf16.xpose.msra.mxu0 0
        %717 = vmatprep.subr.bf16.mxu0 0
        %718 = vmatpush1.bf16.xpose.msra.mxu0 0
        %719 = vmatprep.subr.bf16.mxu0 0
        %720 = vmatpush1.bf16.xpose.msra.mxu0 0
        %721 = vmatprep.subr.bf16.mxu0 0
        %722 = vmatpush1.bf16.xpose.msra.mxu0 0
        %723 = vmatprep.subr.bf16.mxu0 0
        %724 = vmatpush1.bf16.xpose.msra.mxu0 0
        %725 = vmatprep.subr.bf16.mxu0 0
        %726 = vmatpush1.bf16.xpose.msra.mxu0 0
        %727 = vmatprep.subr.bf16.mxu0 0
        %728 = vmatpush1.bf16.xpose.msra.mxu0 0
        %729 = vmatprep.subr.bf16.mxu0 0
        %730 = vmatpush1.bf16.xpose.msra.mxu0 0
        %731 = vmatprep.subr.bf16.mxu0 0
        %732 = vmatpush1.bf16.xpose.msra.mxu0 0
        %733 = vmatprep.subr.bf16.mxu0 0
        %734 = vmatpush1.bf16.xpose.msra.mxu0 0
        %735 = vmatprep.subr.bf16.mxu0 0
        %736 = vmatpush1.bf16.xpose.msra.mxu0 0
        %737 = vmatprep.subr.bf16.mxu0 0
        %738 = vmatpush1.bf16.xpose.msra.mxu0 0
        %739 = vmatprep.mubr.bf16.mxu0 0
        %740 = vmatmul.mubr.bf16.gmra.mrb[0].mxu0 %v702
        %v741 = vpop.f32.mrb[0].mxu0
        %v742 = vadd.f32 0.0, %v741
        %v743 = vpop.f32.mrb[0].mxu0
        %v744 = vpop.f32.mrb[0].mxu0
        %v745 = vpop.f32.mrb[0].mxu0
        %746 = vdwg.mxu0
        %748 = vrot.lane.b32.xlu0 %v598, 96
        %v749 = vpop.permute.xlu0 %748
        %v751 = vsel %vm602, %v598, 0
        %v754 = vsel %vm602, %v749, 0
        %756 = vmatprep.subr.bf16.mxu0 0
        %757 = vmatpush1.bf16.xpose.msra.mxu0 %v754
        %758 = vmatprep.subr.bf16.mxu0 0
        %759 = vmatpush1.bf16.xpose.msra.mxu0 0
        %760 = vmatprep.subr.bf16.mxu0 0
        %761 = vmatpush1.bf16.xpose.msra.mxu0 0
        %762 = vmatprep.subr.bf16.mxu0 0
        %763 = vmatpush1.bf16.xpose.msra.mxu0 0
        %764 = vmatprep.subr.bf16.mxu0 0
        %765 = vmatpush1.bf16.xpose.msra.mxu0 0
        %766 = vmatprep.subr.bf16.mxu0 0
        %767 = vmatpush1.bf16.xpose.msra.mxu0 0
        %768 = vmatprep.subr.bf16.mxu0 0
        %769 = vmatpush1.bf16.xpose.msra.mxu0 0
        %770 = vmatprep.subr.bf16.mxu0 0
        %771 = vmatpush1.bf16.xpose.msra.mxu0 0
        %772 = vmatprep.subr.bf16.mxu0 0
        %773 = vmatpush1.bf16.xpose.msra.mxu0 0
        %774 = vmatprep.subr.bf16.mxu0 0
        %775 = vmatpush1.bf16.xpose.msra.mxu0 0
        %776 = vmatprep.subr.bf16.mxu0 0
        %777 = vmatpush1.bf16.xpose.msra.mxu0 0
        %778 = vmatprep.subr.bf16.mxu0 0
        %779 = vmatpush1.bf16.xpose.msra.mxu0 0
        %780 = vmatprep.subr.bf16.mxu0 0
        %781 = vmatpush1.bf16.xpose.msra.mxu0 0
        %782 = vmatprep.subr.bf16.mxu0 0
        %783 = vmatpush1.bf16.xpose.msra.mxu0 0
        %784 = vmatprep.subr.bf16.mxu0 0
        %785 = vmatpush1.bf16.xpose.msra.mxu0 0
        %786 = vmatprep.subr.bf16.mxu0 0
        %787 = vmatpush1.bf16.xpose.msra.mxu0 0
        %788 = vmatprep.mubr.bf16.mxu0 0
        %789 = vmatmul.mubr.bf16.gmra.mrb[0].mxu0 %v751
        %v790 = vpop.f32.mrb[0].mxu0
        %v791 = vadd.f32 0.0, %v790
        %v792 = vpop.f32.mrb[0].mxu0
        %v793 = vpop.f32.mrb[0].mxu0
        %v794 = vpop.f32.mrb[0].mxu0
        %795 = vdwg.mxu0
        %v796 = vmul.f32 %v644, 0.35355338
        %v797 = vmul.f32 %v693, 0.35355338
        %v798 = vmul.f32 %v742, 0.35355338
        %v799 = vmul.f32 %v791, 0.35355338
        %v801 = vlaneseq
        %v802 = vshrl.u32 %v801, 7
        %v803 = vsub.s32 0, %v802
        %v804 = vrot.slane %v480, %v803
        %v806 = vadd.f32 %v796, %v804
        %v807 = vadd.f32 %v797, %v804
        %v808 = vadd.f32 %v798, %v804
        %v809 = vadd.f32 %v799, %v804
        %v810 = vsel %vm602, %v806, -inf
        %811 = vmax.xlane.f32.xlu0 %v810
        %v812 = vpop.xlane.xlu0 %811
        %v813 = vsel %vm602, %v807, -inf
        %814 = vmax.xlane.f32.xlu0 %v813
        %v815 = vpop.xlane.xlu0 %814
        %v816 = vsel %vm602, %v808, -inf
        %817 = vmax.xlane.f32.xlu0 %v816
        %v818 = vpop.xlane.xlu0 %817
        %v819 = vsel %vm602, %v809, -inf
        %820 = vmax.xlane.f32.xlu0 %v819
        %v821 = vpop.xlane.xlu0 %820
        %v822 = vsub.f32 %v806, %v812
        %v823 = vsub.f32 %v807, %v815
        %v824 = vsub.f32 %v808, %v818
        %v825 = vsub.f32 %v809, %v821
        %v826 = vmul.f32 %v822, 1.442695
        %v827 = vpow.pop %v826
        %v828 = vmul.f32 %v823, 1.442695
        %v829 = vpow.pop %v828
        %v830 = vmul.f32 %v824, 1.442695
        %v831 = vpow.pop %v830
        %v832 = vmul.f32 %v825, 1.442695
        %v833 = vpow.pop %v832
        %v834 = vsel %vm602, %v827, 0.0
        %835 = vadd.xlane.f32.xlu0 %v834
        %v836 = vpop.xlane.xlu0 %835
        %v837 = vsel %vm602, %v829, 0.0
        %838 = vadd.xlane.f32.xlu0 %v837
        %v839 = vpop.xlane.xlu0 %838
        %v840 = vsel %vm602, %v831, 0.0
        %841 = vadd.xlane.f32.xlu0 %v840
        %v842 = vpop.xlane.xlu0 %841
        %v843 = vsel %vm602, %v833, 0.0
        %844 = vadd.xlane.f32.xlu0 %v843
        %v845 = vpop.xlane.xlu0 %844
        %v846 = vrcp.pop %v836
        %v847 = vrcp.pop %v839
        %v848 = vrcp.pop %v842
        %v849 = vrcp.pop %v845
        %v850 = vmul.f32 %v827, %v846
        %v851 = vmul.f32 %v829, %v847
        %v852 = vmul.f32 %v831, %v848
        %v853 = vmul.f32 %v833, %v849
        %v854 = vpack.c.bf16 %v850, %v850
        %v855 = vpack.c.bf16 %v851, %v851
        %v856 = vpack.c.bf16 %v852, %v852
        %v857 = vpack.c.bf16 %v853, %v853
        %858 = vrot.lane.b32.xlu0 %v595, 64
        %v859 = vpop.permute.xlu0 %858
        %v861 = vsel %vm602, %v854, 0
        %vm863 = vcmask 1043456
        %v865 = vsel %vm863, %v859, 0
        %867 = vmatprep.subr.bf16.mxu0 0
        %868 = vmatpush1.bf16.msra.mxu0 %v865
        %869 = vmatprep.subr.bf16.mxu0 0
        %870 = vmatpush1.bf16.msra.mxu0 0
        %871 = vmatprep.subr.bf16.mxu0 0
        %872 = vmatpush1.bf16.msra.mxu0 0
        %873 = vmatprep.subr.bf16.mxu0 0
        %874 = vmatpush1.bf16.msra.mxu0 0
        %875 = vmatprep.subr.bf16.mxu0 0
        %876 = vmatpush1.bf16.msra.mxu0 0
        %877 = vmatprep.subr.bf16.mxu0 0
        %878 = vmatpush1.bf16.msra.mxu0 0
        %879 = vmatprep.subr.bf16.mxu0 0
        %880 = vmatpush1.bf16.msra.mxu0 0
        %881 = vmatprep.subr.bf16.mxu0 0
        %882 = vmatpush1.bf16.msra.mxu0 0
        %883 = vmatprep.subr.bf16.mxu0 0
        %884 = vmatpush1.bf16.msra.mxu0 0
        %885 = vmatprep.subr.bf16.mxu0 0
        %886 = vmatpush1.bf16.msra.mxu0 0
        %887 = vmatprep.subr.bf16.mxu0 0
        %888 = vmatpush1.bf16.msra.mxu0 0
        %889 = vmatprep.subr.bf16.mxu0 0
        %890 = vmatpush1.bf16.msra.mxu0 0
        %891 = vmatprep.subr.bf16.mxu0 0
        %892 = vmatpush1.bf16.msra.mxu0 0
        %893 = vmatprep.subr.bf16.mxu0 0
        %894 = vmatpush1.bf16.msra.mxu0 0
        %895 = vmatprep.subr.bf16.mxu0 0
        %896 = vmatpush1.bf16.msra.mxu0 0
        %897 = vmatprep.subr.bf16.mxu0 0
        %898 = vmatpush1.bf16.msra.mxu0 0
        %899 = vmatprep.mubr.bf16.mxu0 0
        %900 = vmatmul.mubr.bf16.gmra.mrb[0].mxu0 %v861
        %v901 = vpop.f32.mrb[0].mxu0
        %v902 = vadd.f32 0.0, %v901
        %v903 = vpop.f32.mrb[0].mxu0
        %v904 = vpop.f32.mrb[0].mxu0
        %v905 = vpop.f32.mrb[0].mxu0
        %906 = vdwg.mxu0
        %907 = vrot.lane.b32.xlu0 %v596, 64
        %v908 = vpop.permute.xlu0 %907
        %v910 = vsel %vm602, %v855, 0
        %v913 = vsel %vm863, %v908, 0
        %915 = vmatprep.subr.bf16.mxu0 0
        %916 = vmatpush1.bf16.msra.mxu0 %v913
        %917 = vmatprep.subr.bf16.mxu0 0
        %918 = vmatpush1.bf16.msra.mxu0 0
        %919 = vmatprep.subr.bf16.mxu0 0
        %920 = vmatpush1.bf16.msra.mxu0 0
        %921 = vmatprep.subr.bf16.mxu0 0
        %922 = vmatpush1.bf16.msra.mxu0 0
        %923 = vmatprep.subr.bf16.mxu0 0
        %924 = vmatpush1.bf16.msra.mxu0 0
        %925 = vmatprep.subr.bf16.mxu0 0
        %926 = vmatpush1.bf16.msra.mxu0 0
        %927 = vmatprep.subr.bf16.mxu0 0
        %928 = vmatpush1.bf16.msra.mxu0 0
        %929 = vmatprep.subr.bf16.mxu0 0
        %930 = vmatpush1.bf16.msra.mxu0 0
        %931 = vmatprep.subr.bf16.mxu0 0
        %932 = vmatpush1.bf16.msra.mxu0 0
        %933 = vmatprep.subr.bf16.mxu0 0
        %934 = vmatpush1.bf16.msra.mxu0 0
        %935 = vmatprep.subr.bf16.mxu0 0
        %936 = vmatpush1.bf16.msra.mxu0 0
        %937 = vmatprep.subr.bf16.mxu0 0
        %938 = vmatpush1.bf16.msra.mxu0 0
        %939 = vmatprep.subr.bf16.mxu0 0
        %940 = vmatpush1.bf16.msra.mxu0 0
        %941 = vmatprep.subr.bf16.mxu0 0
        %942 = vmatpush1.bf16.msra.mxu0 0
        %943 = vmatprep.subr.bf16.mxu0 0
        %944 = vmatpush1.bf16.msra.mxu0 0
        %945 = vmatprep.subr.bf16.mxu0 0
        %946 = vmatpush1.bf16.msra.mxu0 0
        %947 = vmatprep.mubr.bf16.mxu0 0
        %948 = vmatmul.mubr.bf16.gmra.mrb[0].mxu0 %v910
        %v949 = vpop.f32.mrb[0].mxu0
        %v950 = vadd.f32 0.0, %v949
        %v951 = vpop.f32.mrb[0].mxu0
        %v952 = vpop.f32.mrb[0].mxu0
        %v953 = vpop.f32.mrb[0].mxu0
        %954 = vdwg.mxu0
        %955 = vrot.lane.b32.xlu0 %v597, 64
        %v956 = vpop.permute.xlu0 %955
        %v958 = vsel %vm602, %v856, 0
        %v961 = vsel %vm863, %v956, 0
        %963 = vmatprep.subr.bf16.mxu0 0
        %964 = vmatpush1.bf16.msra.mxu0 %v961
        %965 = vmatprep.subr.bf16.mxu0 0
        %966 = vmatpush1.bf16.msra.mxu0 0
        %967 = vmatprep.subr.bf16.mxu0 0
        %968 = vmatpush1.bf16.msra.mxu0 0
        %969 = vmatprep.subr.bf16.mxu0 0
        %970 = vmatpush1.bf16.msra.mxu0 0
        %971 = vmatprep.subr.bf16.mxu0 0
        %972 = vmatpush1.bf16.msra.mxu0 0
        %973 = vmatprep.subr.bf16.mxu0 0
        %974 = vmatpush1.bf16.msra.mxu0 0
        %975 = vmatprep.subr.bf16.mxu0 0
        %976 = vmatpush1.bf16.msra.mxu0 0
        %977 = vmatprep.subr.bf16.mxu0 0
        %978 = vmatpush1.bf16.msra.mxu0 0
        %979 = vmatprep.subr.bf16.mxu0 0
        %980 = vmatpush1.bf16.msra.mxu0 0
        %981 = vmatprep.subr.bf16.mxu0 0
        %982 = vmatpush1.bf16.msra.mxu0 0
        %983 = vmatprep.subr.bf16.mxu0 0
        %984 = vmatpush1.bf16.msra.mxu0 0
        %985 = vmatprep.subr.bf16.mxu0 0
        %986 = vmatpush1.bf16.msra.mxu0 0
        %987 = vmatprep.subr.bf16.mxu0 0
        %988 = vmatpush1.bf16.msra.mxu0 0
        %989 = vmatprep.subr.bf16.mxu0 0
        %990 = vmatpush1.bf16.msra.mxu0 0
        %991 = vmatprep.subr.bf16.mxu0 0
        %992 = vmatpush1.bf16.msra.mxu0 0
        %993 = vmatprep.subr.bf16.mxu0 0
        %994 = vmatpush1.bf16.msra.mxu0 0
        %995 = vmatprep.mubr.bf16.mxu0 0
        %996 = vmatmul.mubr.bf16.gmra.mrb[0].mxu0 %v958
        %v997 = vpop.f32.mrb[0].mxu0
        %v998 = vadd.f32 0.0, %v997
        %v999 = vpop.f32.mrb[0].mxu0
        %v1000 = vpop.f32.mrb[0].mxu0
        %v1001 = vpop.f32.mrb[0].mxu0
        %1002 = vdwg.mxu0
        %1003 = vrot.lane.b32.xlu0 %v598, 64
        %v1004 = vpop.permute.xlu0 %1003
        %v1006 = vsel %vm602, %v857, 0
        %v1009 = vsel %vm863, %v1004, 0
        %1011 = vmatprep.subr.bf16.mxu0 0
        %1012 = vmatpush1.bf16.msra.mxu0 %v1009
        %1013 = vmatprep.subr.bf16.mxu0 0
        %1014 = vmatpush1.bf16.msra.mxu0 0
        %1015 = vmatprep.subr.bf16.mxu0 0
        %1016 = vmatpush1.bf16.msra.mxu0 0
        %1017 = vmatprep.subr.bf16.mxu0 0
        %1018 = vmatpush1.bf16.msra.mxu0 0
        %1019 = vmatprep.subr.bf16.mxu0 0
        %1020 = vmatpush1.bf16.msra.mxu0 0
        %1021 = vmatprep.subr.bf16.mxu0 0
        %1022 = vmatpush1.bf16.msra.mxu0 0
        %1023 = vmatprep.subr.bf16.mxu0 0
        %1024 = vmatpush1.bf16.msra.mxu0 0
        %1025 = vmatprep.subr.bf16.mxu0 0
        %1026 = vmatpush1.bf16.msra.mxu0 0
        %1027 = vmatprep.subr.bf16.mxu0 0
        %1028 = vmatpush1.bf16.msra.mxu0 0
        %1029 = vmatprep.subr.bf16.mxu0 0
        %1030 = vmatpush1.bf16.msra.mxu0 0
        %1031 = vmatprep.subr.bf16.mxu0 0
        %1032 = vmatpush1.bf16.msra.mxu0 0
        %1033 = vmatprep.subr.bf16.mxu0 0
        %1034 = vmatpush1.bf16.msra.mxu0 0
        %1035 = vmatprep.subr.bf16.mxu0 0
        %1036 = vmatpush1.bf16.msra.mxu0 0
        %1037 = vmatprep.subr.bf16.mxu0 0
        %1038 = vmatpush1.bf16.msra.mxu0 0
        %1039 = vmatprep.subr.bf16.mxu0 0
        %1040 = vmatpush1.bf16.msra.mxu0 0
        %1041 = vmatprep.subr.bf16.mxu0 0
        %1042 = vmatpush1.bf16.msra.mxu0 0
        %1043 = vmatprep.mubr.bf16.mxu0 0
        %1044 = vmatmul.mubr.bf16.gmra.mrb[0].mxu0 %v1006
        %v1045 = vpop.f32.mrb[0].mxu0
        %v1046 = vadd.f32 0.0, %v1045
        %v1047 = vpop.f32.mrb[0].mxu0
        %v1048 = vpop.f32.mrb[0].mxu0
        %v1049 = vpop.f32.mrb[0].mxu0
        %1050 = vdwg.mxu0
        %1052 = vrot.lane.b32.xlu0 %v950, 8
        %v1053 = vpop.permute.xlu0 %1052
        %1056 = vrot.lane.b32.xlu0 %v998, 16
        %v1057 = vpop.permute.xlu0 %1056
        %1060 = vrot.lane.b32.xlu0 %v1046, 24
        %v1061 = vpop.permute.xlu0 %1060
        %v1063 = vsel %vm602, %v902, %v1053
        %v1064 = vsel %vm324, %v1063, %v1057
        %vm1065 = vcmask 195584
        %v1066 = vsel %vm1065, %v1064, %v1061
        %v1067 = vpack.c.bf16 %v1066, %v1066
        %v1068 = vlaneseq
        %v1069 = vshrl.u32 %v1068, 7
        %v1070 = vsub.s32 0, %v1069
        %v1071 = vrot.slane %v584, %v1070
        %1072 = vrot.lane.b32.xlu0 %v537, 32
        %v1073 = vpop.permute.xlu0 %1072
        %1074 = vrot.lane.b32.xlu0 %v538, 32
        %v1075 = vpop.permute.xlu0 %1074
        %v1079 = vsel %vm487, %v1067, 0
        %1081 = vmatprep.subr.bf16.mxu0 0
        %1082 = vmatpush1.bf16.msra.mxu0 %v1073
        %1083 = vmatprep.subr.bf16.mxu0 0
        %1084 = vmatpush1.bf16.msra.mxu0 %v1075
        %1085 = vmatprep.subr.bf16.mxu0 0
        %1086 = vmatpush1.bf16.msra.mxu0 0
        %1087 = vmatprep.subr.bf16.mxu0 0
        %1088 = vmatpush1.bf16.msra.mxu0 0
        %1089 = vmatprep.subr.bf16.mxu0 0
        %1090 = vmatpush1.bf16.msra.mxu0 0
        %1091 = vmatprep.subr.bf16.mxu0 0
        %1092 = vmatpush1.bf16.msra.mxu0 0
        %1093 = vmatprep.subr.bf16.mxu0 0
        %1094 = vmatpush1.bf16.msra.mxu0 0
        %1095 = vmatprep.subr.bf16.mxu0 0
        %1096 = vmatpush1.bf16.msra.mxu0 0
        %1097 = vmatprep.subr.bf16.mxu0 0
        %1098 = vmatpush1.bf16.msra.mxu0 0
        %1099 = vmatprep.subr.bf16.mxu0 0
        %1100 = vmatpush1.bf16.msra.mxu0 0
        %1101 = vmatprep.subr.bf16.mxu0 0
        %1102 = vmatpush1.bf16.msra.mxu0 0
        %1103 = vmatprep.subr.bf16.mxu0 0
        %1104 = vmatpush1.bf16.msra.mxu0 0
        %1105 = vmatprep.subr.bf16.mxu0 0
        %1106 = vmatpush1.bf16.msra.mxu0 0
        %1107 = vmatprep.subr.bf16.mxu0 0
        %1108 = vmatpush1.bf16.msra.mxu0 0
        %1109 = vmatprep.subr.bf16.mxu0 0
        %1110 = vmatpush1.bf16.msra.mxu0 0
        %1111 = vmatprep.subr.bf16.mxu0 0
        %1112 = vmatpush1.bf16.msra.mxu0 0
        %1113 = vmatprep.mubr.bf16.mxu0 0
        %1114 = vmatmul.mubr.bf16.gmra.mrb[0].mxu0 %v1079
        %v1115 = vpop.f32.mrb[0].mxu0
        %v1116 = vadd.f32 %v1071, %v1115
        %v1117 = vpop.f32.mrb[0].mxu0
        %v1118 = vpop.f32.mrb[0].mxu0
        %v1119 = vpop.f32.mrb[0].mxu0
        %1120 = vdwg.mxu0
        %v1121 = vadd.f32 %v400, %v1116
        %v1122 = vld [vmem:[%s5 + $0x4] sm:$0x1]
        %v1123 = vld [vmem:[%s5 + $0x5] sm:$0x1]
        %v1124 = vsel %vm487, %v1121, 0.0
        %1125 = vadd.xlane.f32.xlu0 %v1124
        %v1126 = vpop.xlane.xlu0 %1125
        %v1127 = vmul.f32 %v1126, %v491
        %v1128 = vsub.f32 %v1121, %v1127
        %v1129 = vmul.f32 %v1128, %v1128
        %v1130 = vsel %vm487, %v1129, 0.0
        %1131 = vadd.xlane.f32.xlu0 %v1130
        %v1132 = vpop.xlane.xlu0 %1131
        %v1133 = vmul.f32 %v1132, 0.032258064
        %v1134 = vlaneseq
        %v1135 = vshrl.u32 %v1134, 7
        %v1136 = vsub.s32 0, %v1135
        %v1137 = vrot.slane %v1122, %v1136
        %v1138 = vmul.f32 %v1137, %v1128
        %v1139 = vrsqrt.pop %v1133
        %v1140 = vmul.f32 %v1133, %v1139
        %vm1141 = vcmp.eq.f32.partialorder %v1133, inf
        %v1142 = vsel %vm1141, %v1133, %v1140
        %vm1143 = vcmp.eq.f32.partialorder %v1133, 0.0
        %v1144 = vand.u32 %v1133, 2147483648
        %v1145 = vsel %vm1143, %v1144, %v1142
        %v1146 = vadd.f32 %v1145, 1e-06
        %v1147 = vrcp.pop %v1146
        %v1148 = vmul.f32 %v1138, %v1147
        %v1149 = vlaneseq
        %v1150 = vshrl.u32 %v1149, 7
        %v1151 = vsub.s32 0, %v1150
        %v1152 = vrot.slane %v1123, %v1151
        %v1153 = vadd.f32 %v1148, %v1152
        %v1154 = vld [vmem:[%s3 + $0x4] sm:$0xf]
        %v1155 = vld [vmem:[%s3 + $0x24] sm:$0xf]
        %v1156 = vld [vmem:[%s3 + $0x44] sm:$0xf]
        %v1157 = vld [vmem:[%s3 + $0x64] sm:$0xf]
        %v1158 = vld [vmem:[%s5 + $0x6] sm:$0x1]
        %v1159 = vpack.c.bf16 %v1153, %v1153
        %v1160 = vlaneseq
        %v1161 = vshrl.u32 %v1160, 7
        %v1162 = vsub.s32 0, %v1161
        %v1163 = vrot.slane %v1158, %v1162
        %v1168 = vunpack.c.l.b16 %v1154
        %v1169 = vunpack.c.l.b16 %v1155
        %v1170 = vunpack.c.l.b16 %v1156
        %v1171 = vunpack.c.l.b16 %v1157
        %v1172 = vpack.c.b16 %v1169, %v1168
        %v1173 = vpack.c.b16 %v1171, %v1170
        %v1177 = vsel %vm487, %v1159, 0
        %1179 = vmatprep.subr.bf16.mxu0 0
        %1180 = vmatpush1.bf16.msra.mxu0 %v1172
        %1181 = vmatprep.subr.bf16.mxu0 0
        %1182 = vmatpush1.bf16.msra.mxu0 %v1173
        %1183 = vmatprep.subr.bf16.mxu0 0
        %1184 = vmatpush1.bf16.msra.mxu0 0
        %1185 = vmatprep.subr.bf16.mxu0 0
        %1186 = vmatpush1.bf16.msra.mxu0 0
        %1187 = vmatprep.subr.bf16.mxu0 0
        %1188 = vmatpush1.bf16.msra.mxu0 0
        %1189 = vmatprep.subr.bf16.mxu0 0
        %1190 = vmatpush1.bf16.msra.mxu0 0
        %1191 = vmatprep.subr.bf16.mxu0 0
        %1192 = vmatpush1.bf16.msra.mxu0 0
        %1193 = vmatprep.subr.bf16.mxu0 0
        %1194 = vmatpush1.bf16.msra.mxu0 0
        %1195 = vmatprep.subr.bf16.mxu0 0
        %1196 = vmatpush1.bf16.msra.mxu0 0
        %1197 = vmatprep.subr.bf16.mxu0 0
        %1198 = vmatpush1.bf16.msra.mxu0 0
        %1199 = vmatprep.subr.bf16.mxu0 0
        %1200 = vmatpush1.bf16.msra.mxu0 0
        %1201 = vmatprep.subr.bf16.mxu0 0
        %1202 = vmatpush1.bf16.msra.mxu0 0
        %1203 = vmatprep.subr.bf16.mxu0 0
        %1204 = vmatpush1.bf16.msra.mxu0 0
        %1205 = vmatprep.subr.bf16.mxu0 0
        %1206 = vmatpush1.bf16.msra.mxu0 0
        %1207 = vmatprep.subr.bf16.mxu0 0
        %1208 = vmatpush1.bf16.msra.mxu0 0
        %1209 = vmatprep.subr.bf16.mxu0 0
        %1210 = vmatpush1.bf16.msra.mxu0 0
        %1211 = vmatprep.mubr.bf16.mxu0 0
        %1212 = vmatmul.mubr.bf16.gmra.mrb[0].mxu0 %v1177
        %v1213 = vpop.f32.mrb[0].mxu0
        %v1214 = vadd.f32 %v1163, %v1213
        %v1215 = vpop.f32.mrb[0].mxu0
        %v1216 = vpop.f32.mrb[0].mxu0
        %v1217 = vpop.f32.mrb[0].mxu0
        %1218 = vdwg.mxu0
        %v1219 = vmax.f32 %v1214, 0.0
        %v1220 = vld [vmem:[%s4] sm:$0xf]
        %v1221 = vld [vmem:[%s4 + $0x4] sm:$0xf]
        %v1222 = vld [vmem:[%s4 + $0x8] sm:$0xf]
        %v1223 = vld [vmem:[%s4 + $0xc] sm:$0xf]
        %v1224 = vld [vmem:[%s4 + $0x10] sm:$0xf]
        %v1225 = vld [vmem:[%s4 + $0x14] sm:$0xf]
        %v1226 = vld [vmem:[%s4 + $0x18] sm:$0xf]
        %v1227 = vld [vmem:[%s4 + $0x1c] sm:$0xf]
        %v1228 = vpack.c.bf16 %v1219, %v1219
        %v1229 = vld [vmem:[%s5 + $0x7] sm:$0x1]
        %v1230 = vlaneseq
        %v1231 = vshrl.u32 %v1230, 7
        %v1232 = vsub.s32 0, %v1231
        %v1233 = vrot.slane %v1229, %v1232
        %v1242 = vunpack.c.l.b16 %v1220
        %v1243 = vunpack.c.l.b16 %v1221
        %v1244 = vunpack.c.l.b16 %v1222
        %v1245 = vunpack.c.l.b16 %v1223
        %v1246 = vunpack.c.l.b16 %v1224
        %v1247 = vunpack.c.l.b16 %v1225
        %v1248 = vunpack.c.l.b16 %v1226
        %v1249 = vunpack.c.l.b16 %v1227
        %v1250 = vpack.c.b16 %v1243, %v1242
        %v1251 = vpack.c.b16 %v1245, %v1244
        %v1252 = vpack.c.b16 %v1247, %v1246
        %v1253 = vpack.c.b16 %v1249, %v1248
        %vm1258 = vcmask 523264
        %v1260 = vsel %vm1258, %v1228, 0
        %1262 = vmatprep.subr.bf16.mxu0 0
        %1263 = vmatpush1.bf16.msra.mxu0 %v1250
        %1264 = vmatprep.subr.bf16.mxu0 0
        %1265 = vmatpush1.bf16.msra.mxu0 %v1251
        %1266 = vmatprep.subr.bf16.mxu0 0
        %1267 = vmatpush1.bf16.msra.mxu0 %v1252
        %1268 = vmatprep.subr.bf16.mxu0 0
        %1269 = vmatpush1.bf16.msra.mxu0 %v1253
        %1270 = vmatprep.subr.bf16.mxu0 0
        %1271 = vmatpush1.bf16.msra.mxu0 0
        %1272 = vmatprep.subr.bf16.mxu0 0
        %1273 = vmatpush1.bf16.msra.mxu0 0
        %1274 = vmatprep.subr.bf16.mxu0 0
        %1275 = vmatpush1.bf16.msra.mxu0 0
        %1276 = vmatprep.subr.bf16.mxu0 0
        %1277 = vmatpush1.bf16.msra.mxu0 0
        %1278 = vmatprep.subr.bf16.mxu0 0
        %1279 = vmatpush1.bf16.msra.mxu0 0
        %1280 = vmatprep.subr.bf16.mxu0 0
        %1281 = vmatpush1.bf16.msra.mxu0 0
        %1282 = vmatprep.subr.bf16.mxu0 0
        %1283 = vmatpush1.bf16.msra.mxu0 0
        %1284 = vmatprep.subr.bf16.mxu0 0
        %1285 = vmatpush1.bf16.msra.mxu0 0
        %1286 = vmatprep.subr.bf16.mxu0 0
        %1287 = vmatpush1.bf16.msra.mxu0 0
        %1288 = vmatprep.subr.bf16.mxu0 0
        %1289 = vmatpush1.bf16.msra.mxu0 0
        %1290 = vmatprep.subr.bf16.mxu0 0
        %1291 = vmatpush1.bf16.msra.mxu0 0
        %1292 = vmatprep.subr.bf16.mxu0 0
        %1293 = vmatpush1.bf16.msra.mxu0 0
        %1294 = vmatprep.mubr.bf16.mxu0 0
        %1295 = vmatmul.mubr.bf16.gmra.mrb[0].mxu0 %v1260
        %v1296 = vpop.f32.mrb[0].mxu0
        %v1297 = vadd.f32 %v1233, %v1296
        %v1298 = vpop.f32.mrb[0].mxu0
        %v1299 = vpop.f32.mrb[0].mxu0
        %v1300 = vpop.f32.mrb[0].mxu0
        %1301 = vdwg.mxu0
        %v1302 = vadd.f32 %v1121, %v1297
        %v1303 = vld [vmem:[%s5 + $0x8] sm:$0x1]
        %v1304 = vld [vmem:[%s5 + $0x9] sm:$0x1]
        %v1305 = vsel %vm487, %v1302, 0.0
        %1306 = vadd.xlane.f32.xlu0 %v1305
        %v1307 = vpop.xlane.xlu0 %1306
        %v1308 = vmul.f32 %v1307, %v491
        %v1309 = vsub.f32 %v1302, %v1308
        %v1310 = vmul.f32 %v1309, %v1309
        %v1311 = vsel %vm487, %v1310, 0.0
        %1312 = vadd.xlane.f32.xlu0 %v1311
        %v1313 = vpop.xlane.xlu0 %1312
        %v1314 = vmul.f32 %v1313, 0.032258064
        %v1315 = vlaneseq
        %v1316 = vshrl.u32 %v1315, 7
        %v1317 = vsub.s32 0, %v1316
        %v1318 = vrot.slane %v1303, %v1317
        %v1319 = vmul.f32 %v1318, %v1309
        %v1320 = vrsqrt.pop %v1314
        %v1321 = vmul.f32 %v1314, %v1320
        %vm1322 = vcmp.eq.f32.partialorder %v1314, inf
        %v1323 = vsel %vm1322, %v1314, %v1321
        %vm1324 = vcmp.eq.f32.partialorder %v1314, 0.0
        %v1325 = vand.u32 %v1314, 2147483648
        %v1326 = vsel %vm1324, %v1325, %v1323
        %v1327 = vadd.f32 %v1326, 1e-06
        %v1328 = vrcp.pop %v1327
        %v1329 = vmul.f32 %v1319, %v1328
        %v1330 = vlaneseq
        %v1331 = vshrl.u32 %v1330, 7
        %v1332 = vsub.s32 0, %v1331
        %v1333 = vrot.slane %v1304, %v1332
        %v1334 = vadd.f32 %v1329, %v1333
        %v1335 = vld [vmem:[%s3 + $0x4] sm:$0xff]
        %v1336 = vld [vmem:[%s3 + $0x24] sm:$0xff]
        %v1337 = vld [vmem:[%s3 + $0x44] sm:$0xff]
        %v1338 = vld [vmem:[%s3 + $0x64] sm:$0xff]
        %v1339 = vld [vmem:[%s5 + $0xa] sm:$0x1]
        %v1340 = vpack.c.bf16 %v1334, %v1334
        %v1341 = vlaneseq
        %v1342 = vshrl.u32 %v1341, 7
        %v1343 = vsub.s32 0, %v1342
        %v1344 = vrot.slane %v1339, %v1343
        %v1349 = vunpack.c.l.b16 %v1335
        %v1350 = vunpack.c.h.b16 %v1335
        %v1351 = vunpack.c.l.b16 %v1336
        %v1352 = vunpack.c.h.b16 %v1336
        %v1353 = vunpack.c.l.b16 %v1337
        %v1354 = vunpack.c.h.b16 %v1337
        %v1355 = vunpack.c.l.b16 %v1338
        %v1356 = vunpack.c.h.b16 %v1338
        %v1357 = vpack.c.b16 %v1351, %v1349
        %v1358 = vpack.c.b16 %v1352, %v1350
        %v1359 = vpack.c.b16 %v1355, %v1353
        %v1360 = vpack.c.b16 %v1356, %v1354
        %1361 = vrot.lane.b32.xlu0 %v1357, 64
        %v1362 = vpop.permute.xlu0 %1361
        %1363 = vrot.lane.b32.xlu0 %v1358, 64
        %v1364 = vpop.permute.xlu0 %1363
        %1365 = vrot.lane.b32.xlu0 %v1359, 64
        %v1366 = vpop.permute.xlu0 %1365
        %1367 = vrot.lane.b32.xlu0 %v1360, 64
        %v1368 = vpop.permute.xlu0 %1367
        %vm1369 = vcmask 523264
        %v1370 = vsel %vm1369, %v1362, %v1364
        %v1371 = vsel %vm1369, %v1366, %v1368
        %v1375 = vsel %vm487, %v1340, 0
        %1377 = vmatprep.subr.bf16.mxu0 0
        %1378 = vmatpush1.bf16.msra.mxu0 %v1370
        %1379 = vmatprep.subr.bf16.mxu0 0
        %1380 = vmatpush1.bf16.msra.mxu0 %v1371
        %1381 = vmatprep.subr.bf16.mxu0 0
        %1382 = vmatpush1.bf16.msra.mxu0 0
        %1383 = vmatprep.subr.bf16.mxu0 0
        %1384 = vmatpush1.bf16.msra.mxu0 0
        %1385 = vmatprep.subr.bf16.mxu0 0
        %1386 = vmatpush1.bf16.msra.mxu0 0
        %1387 = vmatprep.subr.bf16.mxu0 0
        %1388 = vmatpush1.bf16.msra.mxu0 0
        %1389 = vmatprep.subr.bf16.mxu0 0
        %1390 = vmatpush1.bf16.msra.mxu0 0
        %1391 = vmatprep.subr.bf16.mxu0 0
        %1392 = vmatpush1.bf16.msra.mxu0 0
        %1393 = vmatprep.subr.bf16.mxu0 0
        %1394 = vmatpush1.bf16.msra.mxu0 0
        %1395 = vmatprep.subr.bf16.mxu0 0
        %1396 = vmatpush1.bf16.msra.mxu0 0
        %1397 = vmatprep.subr.bf16.mxu0 0
        %1398 = vmatpush1.bf16.msra.mxu0 0
        %1399 = vmatprep.subr.bf16.mxu0 0
        %1400 = vmatpush1.bf16.msra.mxu0 0
        %1401 = vmatprep.subr.bf16.mxu0 0
        %1402 = vmatpush1.bf16.msra.mxu0 0
        %1403 = vmatprep.subr.bf16.mxu0 0
        %1404 = vmatpush1.bf16.msra.mxu0 0
        %1405 = vmatprep.subr.bf16.mxu0 0
        %1406 = vmatpush1.bf16.msra.mxu0 0
        %1407 = vmatprep.subr.bf16.mxu0 0
        %1408 = vmatpush1.bf16.msra.mxu0 0
        %1409 = vmatprep.mubr.bf16.mxu0 0
        %1410 = vmatmul.mubr.bf16.gmra.mrb[0].mxu0 %v1375
        %v1411 = vpop.f32.mrb[0].mxu0
        %v1412 = vadd.f32 %v1344, %v1411
        %v1413 = vpop.f32.mrb[0].mxu0
        %v1414 = vpop.f32.mrb[0].mxu0
        %v1415 = vpop.f32.mrb[0].mxu0
        %1416 = vdwg.mxu0
        %v1417 = vld [vmem:[%s3 + $0x8] sm:$0xf]
        %v1418 = vld [vmem:[%s3 + $0x28] sm:$0xf]
        %v1419 = vld [vmem:[%s3 + $0x48] sm:$0xf]
        %v1420 = vld [vmem:[%s3 + $0x68] sm:$0xf]
        %v1421 = vld [vmem:[%s5 + $0xb] sm:$0x1]
        %1423 = vrot.lane.b32.xlu0 %v1412, 120
        %v1424 = vpop.permute.xlu0 %1423
        %1426 = vrot.lane.b32.xlu0 %v1412, 112
        %v1427 = vpop.permute.xlu0 %1426
        %1429 = vrot.lane.b32.xlu0 %v1412, 104
        %v1430 = vpop.permute.xlu0 %1429
        %v1432 = vpack.c.bf16 %v1412, %v1412
        %v1433 = vpack.c.bf16 %v1424, %v1424
        %v1434 = vpack.c.bf16 %v1427, %v1427
        %v1435 = vpack.c.bf16 %v1430, %v1430
        %1437 = vrot.lane.b32.xlu0 %v1432, 96
        %v1438 = vpop.permute.xlu0 %1437
        %v1440 = vsel %vm602, %v1432, 0
        %v1443 = vsel %vm602, %v1438, 0
        %1445 = vmatprep.subr.bf16.mxu0 0
        %1446 = vmatpush1.bf16.xpose.msra.mxu0 %v1443
        %1447 = vmatprep.subr.bf16.mxu0 0
        %1448 = vmatpush1.bf16.xpose.msra.mxu0 0
        %1449 = vmatprep.subr.bf16.mxu0 0
        %1450 = vmatpush1.bf16.xpose.msra.mxu0 0
        %1451 = vmatprep.subr.bf16.mxu0 0
        %1452 = vmatpush1.bf16.xpose.msra.mxu0 0
        %1453 = vmatprep.subr.bf16.mxu0 0
        %1454 = vmatpush1.bf16.xpose.msra.mxu0 0
        %1455 = vmatprep.subr.bf16.mxu0 0
        %1456 = vmatpush1.bf16.xpose.msra.mxu0 0
        %1457 = vmatprep.subr.bf16.mxu0 0
        %1458 = vmatpush1.bf16.xpose.msra.mxu0 0
        %1459 = vmatprep.subr.bf16.mxu0 0
        %1460 = vmatpush1.bf16.xpose.msra.mxu0 0
        %1461 = vmatprep.subr.bf16.mxu0 0
        %1462 = vmatpush1.bf16.xpose.msra.mxu0 0
        %1463 = vmatprep.subr.bf16.mxu0 0
        %1464 = vmatpush1.bf16.xpose.msra.mxu0 0
        %1465 = vmatprep.subr.bf16.mxu0 0
        %1466 = vmatpush1.bf16.xpose.msra.mxu0 0
        %1467 = vmatprep.subr.bf16.mxu0 0
        %1468 = vmatpush1.bf16.xpose.msra.mxu0 0
        %1469 = vmatprep.subr.bf16.mxu0 0
        %1470 = vmatpush1.bf16.xpose.msra.mxu0 0
        %1471 = vmatprep.subr.bf16.mxu0 0
        %1472 = vmatpush1.bf16.xpose.msra.mxu0 0
        %1473 = vmatprep.subr.bf16.mxu0 0
        %1474 = vmatpush1.bf16.xpose.msra.mxu0 0
        %1475 = vmatprep.subr.bf16.mxu0 0
        %1476 = vmatpush1.bf16.xpose.msra.mxu0 0
        %1477 = vmatprep.mubr.bf16.mxu0 0
        %1478 = vmatmul.mubr.bf16.gmra.mrb[0].mxu0 %v1440
        %v1479 = vpop.f32.mrb[0].mxu0
        %v1480 = vadd.f32 0.0, %v1479
        %v1481 = vpop.f32.mrb[0].mxu0
        %v1482 = vpop.f32.mrb[0].mxu0
        %v1483 = vpop.f32.mrb[0].mxu0
        %1484 = vdwg.mxu0
        %1486 = vrot.lane.b32.xlu0 %v1433, 96
        %v1487 = vpop.permute.xlu0 %1486
        %v1489 = vsel %vm602, %v1433, 0
        %v1492 = vsel %vm602, %v1487, 0
        %1494 = vmatprep.subr.bf16.mxu0 0
        %1495 = vmatpush1.bf16.xpose.msra.mxu0 %v1492
        %1496 = vmatprep.subr.bf16.mxu0 0
        %1497 = vmatpush1.bf16.xpose.msra.mxu0 0
        %1498 = vmatprep.subr.bf16.mxu0 0
        %1499 = vmatpush1.bf16.xpose.msra.mxu0 0
        %1500 = vmatprep.subr.bf16.mxu0 0
        %1501 = vmatpush1.bf16.xpose.msra.mxu0 0
        %1502 = vmatprep.subr.bf16.mxu0 0
        %1503 = vmatpush1.bf16.xpose.msra.mxu0 0
        %1504 = vmatprep.subr.bf16.mxu0 0
        %1505 = vmatpush1.bf16.xpose.msra.mxu0 0
        %1506 = vmatprep.subr.bf16.mxu0 0
        %1507 = vmatpush1.bf16.xpose.msra.mxu0 0
        %1508 = vmatprep.subr.bf16.mxu0 0
        %1509 = vmatpush1.bf16.xpose.msra.mxu0 0
        %1510 = vmatprep.subr.bf16.mxu0 0
        %1511 = vmatpush1.bf16.xpose.msra.mxu0 0
        %1512 = vmatprep.subr.bf16.mxu0 0
        %1513 = vmatpush1.bf16.xpose.msra.mxu0 0
        %1514 = vmatprep.subr.bf16.mxu0 0
        %1515 = vmatpush1.bf16.xpose.msra.mxu0 0
        %1516 = vmatprep.subr.bf16.mxu0 0
        %1517 = vmatpush1.bf16.xpose.msra.mxu0 0
        %1518 = vmatprep.subr.bf16.mxu0 0
        %1519 = vmatpush1.bf16.xpose.msra.mxu0 0
        %1520 = vmatprep.subr.bf16.mxu0 0
        %1521 = vmatpush1.bf16.xpose.msra.mxu0 0
        %1522 = vmatprep.subr.bf16.mxu0 0
        %1523 = vmatpush1.bf16.xpose.msra.mxu0 0
        %1524 = vmatprep.subr.bf16.mxu0 0
        %1525 = vmatpush1.bf16.xpose.msra.mxu0 0
        %1526 = vmatprep.mubr.bf16.mxu0 0
        %1527 = vmatmul.mubr.bf16.gmra.mrb[0].mxu0 %v1489
        %v1528 = vpop.f32.mrb[0].mxu0
        %v1529 = vadd.f32 0.0, %v1528
        %v1530 = vpop.f32.mrb[0].mxu0
        %v1531 = vpop.f32.mrb[0].mxu0
        %v1532 = vpop.f32.mrb[0].mxu0
        %1533 = vdwg.mxu0
        %1535 = vrot.lane.b32.xlu0 %v1434, 96
        %v1536 = vpop.permute.xlu0 %1535
        %v1538 = vsel %vm602, %v1434, 0
        %v1541 = vsel %vm602, %v1536, 0
        %1543 = vmatprep.subr.bf16.mxu0 0
        %1544 = vmatpush1.bf16.xpose.msra.mxu0 %v1541
        %1545 = vmatprep.subr.bf16.mxu0 0
        %1546 = vmatpush1.bf16.xpose.msra.mxu0 0
        %1547 = vmatprep.subr.bf16.mxu0 0
        %1548 = vmatpush1.bf16.xpose.msra.mxu0 0
        %1549 = vmatprep.subr.bf16.mxu0 0
        %1550 = vmatpush1.bf16.xpose.msra.mxu0 0
        %1551 = vmatprep.subr.bf16.mxu0 0
        %1552 = vmatpush1.bf16.xpose.msra.mxu0 0
        %1553 = vmatprep.subr.bf16.mxu0 0
        %1554 = vmatpush1.bf16.xpose.msra.mxu0 0
        %1555 = vmatprep.subr.bf16.mxu0 0
        %1556 = vmatpush1.bf16.xpose.msra.mxu0 0
        %1557 = vmatprep.subr.bf16.mxu0 0
        %1558 = vmatpush1.bf16.xpose.msra.mxu0 0
        %1559 = vmatprep.subr.bf16.mxu0 0
        %1560 = vmatpush1.bf16.xpose.msra.mxu0 0
        %1561 = vmatprep.subr.bf16.mxu0 0
        %1562 = vmatpush1.bf16.xpose.msra.mxu0 0
        %1563 = vmatprep.subr.bf16.mxu0 0
        %1564 = vmatpush1.bf16.xpose.msra.mxu0 0
        %1565 = vmatprep.subr.bf16.mxu0 0
        %1566 = vmatpush1.bf16.xpose.msra.mxu0 0
        %1567 = vmatprep.subr.bf16.mxu0 0
        %1568 = vmatpush1.bf16.xpose.msra.mxu0 0
        %1569 = vmatprep.subr.bf16.mxu0 0
        %1570 = vmatpush1.bf16.xpose.msra.mxu0 0
        %1571 = vmatprep.subr.bf16.mxu0 0
        %1572 = vmatpush1.bf16.xpose.msra.mxu0 0
        %1573 = vmatprep.subr.bf16.mxu0 0
        %1574 = vmatpush1.bf16.xpose.msra.mxu0 0
        %1575 = vmatprep.mubr.bf16.mxu0 0
        %1576 = vmatmul.mubr.bf16.gmra.mrb[0].mxu0 %v1538
        %v1577 = vpop.f32.mrb[0].mxu0
        %v1578 = vadd.f32 0.0, %v1577
        %v1579 = vpop.f32.mrb[0].mxu0
        %v1580 = vpop.f32.mrb[0].mxu0
        %v1581 = vpop.f32.mrb[0].mxu0
        %1582 = vdwg.mxu0
        %1584 = vrot.lane.b32.xlu0 %v1435, 96
        %v1585 = vpop.permute.xlu0 %1584
        %v1587 = vsel %vm602, %v1435, 0
        %v1590 = vsel %vm602, %v1585, 0
        %1592 = vmatprep.subr.bf16.mxu0 0
        %1593 = vmatpush1.bf16.xpose.msra.mxu0 %v1590
        %1594 = vmatprep.subr.bf16.mxu0 0
        %1595 = vmatpush1.bf16.xpose.msra.mxu0 0
        %1596 = vmatprep.subr.bf16.mxu0 0
        %1597 = vmatpush1.bf16.xpose.msra.mxu0 0
        %1598 = vmatprep.subr.bf16.mxu0 0
        %1599 = vmatpush1.bf16.xpose.msra.mxu0 0
        %1600 = vmatprep.subr.bf16.mxu0 0
        %1601 = vmatpush1.bf16.xpose.msra.mxu0 0
        %1602 = vmatprep.subr.bf16.mxu0 0
        %1603 = vmatpush1.bf16.xpose.msra.mxu0 0
        %1604 = vmatprep.subr.bf16.mxu0 0
        %1605 = vmatpush1.bf16.xpose.msra.mxu0 0
        %1606 = vmatprep.subr.bf16.mxu0 0
        %1607 = vmatpush1.bf16.xpose.msra.mxu0 0
        %1608 = vmatprep.subr.bf16.mxu0 0
        %1609 = vmatpush1.bf16.xpose.msra.mxu0 0
        %1610 = vmatprep.subr.bf16.mxu0 0
        %1611 = vmatpush1.bf16.xpose.msra.mxu0 0
        %1612 = vmatprep.subr.bf16.mxu0 0
        %1613 = vmatpush1.bf16.xpose.msra.mxu0 0
        %1614 = vmatprep.subr.bf16.mxu0 0
        %1615 = vmatpush1.bf16.xpose.msra.mxu0 0
        %1616 = vmatprep.subr.bf16.mxu0 0
        %1617 = vmatpush1.bf16.xpose.msra.mxu0 0
        %1618 = vmatprep.subr.bf16.mxu0 0
        %1619 = vmatpush1.bf16.xpose.msra.mxu0 0
        %1620 = vmatprep.subr.bf16.mxu0 0
        %1621 = vmatpush1.bf16.xpose.msra.mxu0 0
        %1622 = vmatprep.subr.bf16.mxu0 0
        %1623 = vmatpush1.bf16.xpose.msra.mxu0 0
        %1624 = vmatprep.mubr.bf16.mxu0 0
        %1625 = vmatmul.mubr.bf16.gmra.mrb[0].mxu0 %v1587
        %v1626 = vpop.f32.mrb[0].mxu0
        %v1627 = vadd.f32 0.0, %v1626
        %v1628 = vpop.f32.mrb[0].mxu0
        %v1629 = vpop.f32.mrb[0].mxu0
        %v1630 = vpop.f32.mrb[0].mxu0
        %1631 = vdwg.mxu0
        %v1632 = vmul.f32 %v1480, 0.35355338
        %v1633 = vmul.f32 %v1529, 0.35355338
        %v1634 = vmul.f32 %v1578, 0.35355338
        %v1635 = vmul.f32 %v1627, 0.35355338
        %v1636 = vadd.f32 %v1632, %v804
        %v1637 = vadd.f32 %v1633, %v804
        %v1638 = vadd.f32 %v1634, %v804
        %v1639 = vadd.f32 %v1635, %v804
        %v1640 = vsel %vm602, %v1636, -inf
        %1641 = vmax.xlane.f32.xlu0 %v1640
        %v1642 = vpop.xlane.xlu0 %1641
        %v1643 = vsel %vm602, %v1637, -inf
        %1644 = vmax.xlane.f32.xlu0 %v1643
        %v1645 = vpop.xlane.xlu0 %1644
        %v1646 = vsel %vm602, %v1638, -inf
        %1647 = vmax.xlane.f32.xlu0 %v1646
        %v1648 = vpop.xlane.xlu0 %1647
        %v1649 = vsel %vm602, %v1639, -inf
        %1650 = vmax.xlane.f32.xlu0 %v1649
        %v1651 = vpop.xlane.xlu0 %1650
        %v1652 = vsub.f32 %v1636, %v1642
        %v1653 = vsub.f32 %v1637, %v1645
        %v1654 = vsub.f32 %v1638, %v1648
        %v1655 = vsub.f32 %v1639, %v1651
        %v1656 = vmul.f32 %v1652, 1.442695
        %v1657 = vpow.pop %v1656
        %v1658 = vmul.f32 %v1653, 1.442695
        %v1659 = vpow.pop %v1658
        %v1660 = vmul.f32 %v1654, 1.442695
        %v1661 = vpow.pop %v1660
        %v1662 = vmul.f32 %v1655, 1.442695
        %v1663 = vpow.pop %v1662
        %v1664 = vsel %vm602, %v1657, 0.0
        %1665 = vadd.xlane.f32.xlu0 %v1664
        %v1666 = vpop.xlane.xlu0 %1665
        %v1667 = vsel %vm602, %v1659, 0.0
        %1668 = vadd.xlane.f32.xlu0 %v1667
        %v1669 = vpop.xlane.xlu0 %1668
        %v1670 = vsel %vm602, %v1661, 0.0
        %1671 = vadd.xlane.f32.xlu0 %v1670
        %v1672 = vpop.xlane.xlu0 %1671
        %v1673 = vsel %vm602, %v1663, 0.0
        %1674 = vadd.xlane.f32.xlu0 %v1673
        %v1675 = vpop.xlane.xlu0 %1674
        %v1676 = vrcp.pop %v1666
        %v1677 = vrcp.pop %v1669
        %v1678 = vrcp.pop %v1672
        %v1679 = vrcp.pop %v1675
        %v1680 = vmul.f32 %v1657, %v1676
        %v1681 = vmul.f32 %v1659, %v1677
        %v1682 = vmul.f32 %v1661, %v1678
        %v1683 = vmul.f32 %v1663, %v1679
        %v1684 = vpack.c.bf16 %v1680, %v1680
        %v1685 = vpack.c.bf16 %v1681, %v1681
        %v1686 = vpack.c.bf16 %v1682, %v1682
        %v1687 = vpack.c.bf16 %v1683, %v1683
        %1688 = vrot.lane.b32.xlu0 %v1432, 64
        %v1689 = vpop.permute.xlu0 %1688
        %v1691 = vsel %vm602, %v1684, 0
        %v1694 = vsel %vm863, %v1689, 0
        %1696 = vmatprep.subr.bf16.mxu0 0
        %1697 = vmatpush1.bf16.msra.mxu0 %v1694
        %1698 = vmatprep.subr.bf16.mxu0 0
        %1699 = vmatpush1.bf16.msra.mxu0 0
        %1700 = vmatprep.subr.bf16.mxu0 0
        %1701 = vmatpush1.bf16.msra.mxu0 0
        %1702 = vmatprep.subr.bf16.mxu0 0
        %1703 = vmatpush1.bf16.msra.mxu0 0
        %1704 = vmatprep.subr.bf16.mxu0 0
        %1705 = vmatpush1.bf16.msra.mxu0 0
        %1706 = vmatprep.subr.bf16.mxu0 0
        %1707 = vmatpush1.bf16.msra.mxu0 0
        %1708 = vmatprep.subr.bf16.mxu0 0
        %1709 = vmatpush1.bf16.msra.mxu0 0
        %1710 = vmatprep.subr.bf16.mxu0 0
        %1711 = vmatpush1.bf16.msra.mxu0 0
        %1712 = vmatprep.subr.bf16.mxu0 0
        %1713 = vmatpush1.bf16.msra.mxu0 0
        %1714 = vmatprep.subr.bf16.mxu0 0
        %1715 = vmatpush1.bf16.msra.mxu0 0
        %1716 = vmatprep.subr.bf16.mxu0 0
        %1717 = vmatpush1.bf16.msra.mxu0 0
        %1718 = vmatprep.subr.bf16.mxu0 0
        %1719 = vmatpush1.bf16.msra.mxu0 0
        %1720 = vmatprep.subr.bf16.mxu0 0
        %1721 = vmatpush1.bf16.msra.mxu0 0
        %1722 = vmatprep.subr.bf16.mxu0 0
        %1723 = vmatpush1.bf16.msra.mxu0 0
        %1724 = vmatprep.subr.bf16.mxu0 0
        %1725 = vmatpush1.bf16.msra.mxu0 0
        %1726 = vmatprep.subr.bf16.mxu0 0
        %1727 = vmatpush1.bf16.msra.mxu0 0
        %1728 = vmatprep.mubr.bf16.mxu0 0
        %1729 = vmatmul.mubr.bf16.gmra.mrb[0].mxu0 %v1691
        %v1730 = vpop.f32.mrb[0].mxu0
        %v1731 = vadd.f32 0.0, %v1730
        %v1732 = vpop.f32.mrb[0].mxu0
        %v1733 = vpop.f32.mrb[0].mxu0
        %v1734 = vpop.f32.mrb[0].mxu0
        %1735 = vdwg.mxu0
        %1736 = vrot.lane.b32.xlu0 %v1433, 64
        %v1737 = vpop.permute.xlu0 %1736
        %v1739 = vsel %vm602, %v1685, 0
        %v1742 = vsel %vm863, %v1737, 0
        %1744 = vmatprep.subr.bf16.mxu0 0
        %1745 = vmatpush1.bf16.msra.mxu0 %v1742
        %1746 = vmatprep.subr.bf16.mxu0 0
        %1747 = vmatpush1.bf16.msra.mxu0 0
        %1748 = vmatprep.subr.bf16.mxu0 0
        %1749 = vmatpush1.bf16.msra.mxu0 0
        %1750 = vmatprep.subr.bf16.mxu0 0
        %1751 = vmatpush1.bf16.msra.mxu0 0
        %1752 = vmatprep.subr.bf16.mxu0 0
        %1753 = vmatpush1.bf16.msra.mxu0 0
        %1754 = vmatprep.subr.bf16.mxu0 0
        %1755 = vmatpush1.bf16.msra.mxu0 0
        %1756 = vmatprep.subr.bf16.mxu0 0
        %1757 = vmatpush1.bf16.msra.mxu0 0
        %1758 = vmatprep.subr.bf16.mxu0 0
        %1759 = vmatpush1.bf16.msra.mxu0 0
        %1760 = vmatprep.subr.bf16.mxu0 0
        %1761 = vmatpush1.bf16.msra.mxu0 0
        %1762 = vmatprep.subr.bf16.mxu0 0
        %1763 = vmatpush1.bf16.msra.mxu0 0
        %1764 = vmatprep.subr.bf16.mxu0 0
        %1765 = vmatpush1.bf16.msra.mxu0 0
        %1766 = vmatprep.subr.bf16.mxu0 0
        %1767 = vmatpush1.bf16.msra.mxu0 0
        %1768 = vmatprep.subr.bf16.mxu0 0
        %1769 = vmatpush1.bf16.msra.mxu0 0
        %1770 = vmatprep.subr.bf16.mxu0 0
        %1771 = vmatpush1.bf16.msra.mxu0 0
        %1772 = vmatprep.subr.bf16.mxu0 0
        %1773 = vmatpush1.bf16.msra.mxu0 0
        %1774 = vmatprep.subr.bf16.mxu0 0
        %1775 = vmatpush1.bf16.msra.mxu0 0
        %1776 = vmatprep.mubr.bf16.mxu0 0
        %1777 = vmatmul.mubr.bf16.gmra.mrb[0].mxu0 %v1739
        %v1778 = vpop.f32.mrb[0].mxu0
        %v1779 = vadd.f32 0.0, %v1778
        %v1780 = vpop.f32.mrb[0].mxu0
        %v1781 = vpop.f32.mrb[0].mxu0
        %v1782 = vpop.f32.mrb[0].mxu0
        %1783 = vdwg.mxu0
        %1784 = vrot.lane.b32.xlu0 %v1434, 64
        %v1785 = vpop.permute.xlu0 %1784
        %v1787 = vsel %vm602, %v1686, 0
        %v1790 = vsel %vm863, %v1785, 0
        %1792 = vmatprep.subr.bf16.mxu0 0
        %1793 = vmatpush1.bf16.msra.mxu0 %v1790
        %1794 = vmatprep.subr.bf16.mxu0 0
        %1795 = vmatpush1.bf16.msra.mxu0 0
        %1796 = vmatprep.subr.bf16.mxu0 0
        %1797 = vmatpush1.bf16.msra.mxu0 0
        %1798 = vmatprep.subr.bf16.mxu0 0
        %1799 = vmatpush1.bf16.msra.mxu0 0
        %1800 = vmatprep.subr.bf16.mxu0 0
        %1801 = vmatpush1.bf16.msra.mxu0 0
        %1802 = vmatprep.subr.bf16.mxu0 0
        %1803 = vmatpush1.bf16.msra.mxu0 0
        %1804 = vmatprep.subr.bf16.mxu0 0
        %1805 = vmatpush1.bf16.msra.mxu0 0
        %1806 = vmatprep.subr.bf16.mxu0 0
        %1807 = vmatpush1.bf16.msra.mxu0 0
        %1808 = vmatprep.subr.bf16.mxu0 0
        %1809 = vmatpush1.bf16.msra.mxu0 0
        %1810 = vmatprep.subr.bf16.mxu0 0
        %1811 = vmatpush1.bf16.msra.mxu0 0
        %1812 = vmatprep.subr.bf16.mxu0 0
        %1813 = vmatpush1.bf16.msra.mxu0 0
        %1814 = vmatprep.subr.bf16.mxu0 0
        %1815 = vmatpush1.bf16.msra.mxu0 0
        %1816 = vmatprep.subr.bf16.mxu0 0
        %1817 = vmatpush1.bf16.msra.mxu0 0
        %1818 = vmatprep.subr.bf16.mxu0 0
        %1819 = vmatpush1.bf16.msra.mxu0 0
        %1820 = vmatprep.subr.bf16.mxu0 0
        %1821 = vmatpush1.bf16.msra.mxu0 0
        %1822 = vmatprep.subr.bf16.mxu0 0
        %1823 = vmatpush1.bf16.msra.mxu0 0
        %1824 = vmatprep.mubr.bf16.mxu0 0
        %1825 = vmatmul.mubr.bf16.gmra.mrb[0].mxu0 %v1787
        %v1826 = vpop.f32.mrb[0].mxu0
        %v1827 = vadd.f32 0.0, %v1826
        %v1828 = vpop.f32.mrb[0].mxu0
        %v1829 = vpop.f32.mrb[0].mxu0
        %v1830 = vpop.f32.mrb[0].mxu0
        %1831 = vdwg.mxu0
        %1832 = vrot.lane.b32.xlu0 %v1435, 64
        %v1833 = vpop.permute.xlu0 %1832
        %v1835 = vsel %vm602, %v1687, 0
        %v1838 = vsel %vm863, %v1833, 0
        %1840 = vmatprep.subr.bf16.mxu0 0
        %1841 = vmatpush1.bf16.msra.mxu0 %v1838
        %1842 = vmatprep.subr.bf16.mxu0 0
        %1843 = vmatpush1.bf16.msra.mxu0 0
        %1844 = vmatprep.subr.bf16.mxu0 0
        %1845 = vmatpush1.bf16.msra.mxu0 0
        %1846 = vmatprep.subr.bf16.mxu0 0
        %1847 = vmatpush1.bf16.msra.mxu0 0
        %1848 = vmatprep.subr.bf16.mxu0 0
        %1849 = vmatpush1.bf16.msra.mxu0 0
        %1850 = vmatprep.subr.bf16.mxu0 0
        %1851 = vmatpush1.bf16.msra.mxu0 0
        %1852 = vmatprep.subr.bf16.mxu0 0
        %1853 = vmatpush1.bf16.msra.mxu0 0
        %1854 = vmatprep.subr.bf16.mxu0 0
        %1855 = vmatpush1.bf16.msra.mxu0 0
        %1856 = vmatprep.subr.bf16.mxu0 0
        %1857 = vmatpush1.bf16.msra.mxu0 0
        %1858 = vmatprep.subr.bf16.mxu0 0
        %1859 = vmatpush1.bf16.msra.mxu0 0
        %1860 = vmatprep.subr.bf16.mxu0 0
        %1861 = vmatpush1.bf16.msra.mxu0 0
        %1862 = vmatprep.subr.bf16.mxu0 0
        %1863 = vmatpush1.bf16.msra.mxu0 0
        %1864 = vmatprep.subr.bf16.mxu0 0
        %1865 = vmatpush1.bf16.msra.mxu0 0
        %1866 = vmatprep.subr.bf16.mxu0 0
        %1867 = vmatpush1.bf16.msra.mxu0 0
        %1868 = vmatprep.subr.bf16.mxu0 0
        %1869 = vmatpush1.bf16.msra.mxu0 0
        %1870 = vmatprep.subr.bf16.mxu0 0
        %1871 = vmatpush1.bf16.msra.mxu0 0
        %1872 = vmatprep.mubr.bf16.mxu0 0
        %1873 = vmatmul.mubr.bf16.gmra.mrb[0].mxu0 %v1835
        %v1874 = vpop.f32.mrb[0].mxu0
        %v1875 = vadd.f32 0.0, %v1874
        %v1876 = vpop.f32.mrb[0].mxu0
        %v1877 = vpop.f32.mrb[0].mxu0
        %v1878 = vpop.f32.mrb[0].mxu0
        %1879 = vdwg.mxu0
        %1881 = vrot.lane.b32.xlu0 %v1779, 8
        %v1882 = vpop.permute.xlu0 %1881
        %1885 = vrot.lane.b32.xlu0 %v1827, 16
        %v1886 = vpop.permute.xlu0 %1885
        %1889 = vrot.lane.b32.xlu0 %v1875, 24
        %v1890 = vpop.permute.xlu0 %1889
        %v1892 = vsel %vm602, %v1731, %v1882
        %v1893 = vsel %vm324, %v1892, %v1886
        %v1894 = vsel %vm1065, %v1893, %v1890
        %v1895 = vpack.c.bf16 %v1894, %v1894
        %v1896 = vlaneseq
        %v1897 = vshrl.u32 %v1896, 7
        %v1898 = vsub.s32 0, %v1897
        %v1899 = vrot.slane %v1421, %v1898
        %v1904 = vunpack.c.l.b16 %v1417
        %v1905 = vunpack.c.l.b16 %v1418
        %v1906 = vunpack.c.l.b16 %v1419
        %v1907 = vunpack.c.l.b16 %v1420
        %v1908 = vpack.c.b16 %v1905, %v1904
        %v1909 = vpack.c.b16 %v1907, %v1906
        %1910 = vrot.lane.b32.xlu0 %v1908, 96
        %v1911 = vpop.permute.xlu0 %1910
        %1912 = vrot.lane.b32.xlu0 %v1909, 96
        %v1913 = vpop.permute.xlu0 %1912
        %v1917 = vsel %vm487, %v1895, 0
        %1919 = vmatprep.subr.bf16.mxu0 0
        %1920 = vmatpush1.bf16.msra.mxu0 %v1911
        %1921 = vmatprep.subr.bf16.mxu0 0
        %1922 = vmatpush1.bf16.msra.mxu0 %v1913
        %1923 = vmatprep.subr.bf16.mxu0 0
        %1924 = vmatpush1.bf16.msra.mxu0 0
        %1925 = vmatprep.subr.bf16.mxu0 0
        %1926 = vmatpush1.bf16.msra.mxu0 0
        %1927 = vmatprep.subr.bf16.mxu0 0
        %1928 = vmatpush1.bf16.msra.mxu0 0
        %1929 = vmatprep.subr.bf16.mxu0 0
        %1930 = vmatpush1.bf16.msra.mxu0 0
        %1931 = vmatprep.subr.bf16.mxu0 0
        %1932 = vmatpush1.bf16.msra.mxu0 0
        %1933 = vmatprep.subr.bf16.mxu0 0
        %1934 = vmatpush1.bf16.msra.mxu0 0
        %1935 = vmatprep.subr.bf16.mxu0 0
        %1936 = vmatpush1.bf16.msra.mxu0 0
        %1937 = vmatprep.subr.bf16.mxu0 0
        %1938 = vmatpush1.bf16.msra.mxu0 0
        %1939 = vmatprep.subr.bf16.mxu0 0
        %1940 = vmatpush1.bf16.msra.mxu0 0
        %1941 = vmatprep.subr.bf16.mxu0 0
        %1942 = vmatpush1.bf16.msra.mxu0 0
        %1943 = vmatprep.subr.bf16.mxu0 0
        %1944 = vmatpush1.bf16.msra.mxu0 0
        %1945 = vmatprep.subr.bf16.mxu0 0
        %1946 = vmatpush1.bf16.msra.mxu0 0
        %1947 = vmatprep.subr.bf16.mxu0 0
        %1948 = vmatpush1.bf16.msra.mxu0 0
        %1949 = vmatprep.subr.bf16.mxu0 0
        %1950 = vmatpush1.bf16.msra.mxu0 0
        %1951 = vmatprep.mubr.bf16.mxu0 0
        %1952 = vmatmul.mubr.bf16.gmra.mrb[0].mxu0 %v1917
        %v1953 = vpop.f32.mrb[0].mxu0
        %v1954 = vadd.f32 %v1899, %v1953
        %v1955 = vpop.f32.mrb[0].mxu0
        %v1956 = vpop.f32.mrb[0].mxu0
        %v1957 = vpop.f32.mrb[0].mxu0
        %1958 = vdwg.mxu0
        %v1959 = vadd.f32 %v1302, %v1954
        %v1960 = vld [vmem:[%s5 + $0xc] sm:$0x1]
        %v1961 = vld [vmem:[%s5 + $0xd] sm:$0x1]
        %v1962 = vsel %vm487, %v1959, 0.0
        %1963 = vadd.xlane.f32.xlu0 %v1962
        %v1964 = vpop.xlane.xlu0 %1963
        %v1965 = vmul.f32 %v1964, %v491
        %v1966 = vsub.f32 %v1959, %v1965
        %v1967 = vmul.f32 %v1966, %v1966
        %v1968 = vsel %vm487, %v1967, 0.0
        %1969 = vadd.xlane.f32.xlu0 %v1968
        %v1970 = vpop.xlane.xlu0 %1969
        %v1971 = vmul.f32 %v1970, 0.032258064
        %v1972 = vlaneseq
        %v1973 = vshrl.u32 %v1972, 7
        %v1974 = vsub.s32 0, %v1973
        %v1975 = vrot.slane %v1960, %v1974
        %v1976 = vmul.f32 %v1975, %v1966
        %v1977 = vrsqrt.pop %v1971
        %v1978 = vmul.f32 %v1971, %v1977
        %vm1979 = vcmp.eq.f32.partialorder %v1971, inf
        %v1980 = vsel %vm1979, %v1971, %v1978
        %vm1981 = vcmp.eq.f32.partialorder %v1971, 0.0
        %v1982 = vand.u32 %v1971, 2147483648
        %v1983 = vsel %vm1981, %v1982, %v1980
        %v1984 = vadd.f32 %v1983, 1e-06
        %v1985 = vrcp.pop %v1984
        %v1986 = vmul.f32 %v1976, %v1985
        %v1987 = vlaneseq
        %v1988 = vshrl.u32 %v1987, 7
        %v1989 = vsub.s32 0, %v1988
        %v1990 = vrot.slane %v1961, %v1989
        %v1991 = vadd.f32 %v1986, %v1990
        %v1992 = vld [vmem:[%s3 + $0x8] sm:$0xf]
        %v1993 = vld [vmem:[%s3 + $0x28] sm:$0xf]
        %v1994 = vld [vmem:[%s3 + $0x48] sm:$0xf]
        %v1995 = vld [vmem:[%s3 + $0x68] sm:$0xf]
        %v1996 = vld [vmem:[%s5 + $0xe] sm:$0x1]
        %v1997 = vpack.c.bf16 %v1991, %v1991
        %v1998 = vlaneseq
        %v1999 = vshrl.u32 %v1998, 7
        %v2000 = vsub.s32 0, %v1999
        %v2001 = vrot.slane %v1996, %v2000
        %v2006 = vunpack.c.l.b16 %v1992
        %v2007 = vunpack.c.l.b16 %v1993
        %v2008 = vunpack.c.l.b16 %v1994
        %v2009 = vunpack.c.l.b16 %v1995
        %v2010 = vpack.c.b16 %v2007, %v2006
        %v2011 = vpack.c.b16 %v2009, %v2008
        %2012 = vrot.lane.b32.xlu0 %v2010, 64
        %v2013 = vpop.permute.xlu0 %2012
        %2014 = vrot.lane.b32.xlu0 %v2011, 64
        %v2015 = vpop.permute.xlu0 %2014
        %v2019 = vsel %vm487, %v1997, 0
        %2021 = vmatprep.subr.bf16.mxu0 0
        %2022 = vmatpush1.bf16.msra.mxu0 %v2013
        %2023 = vmatprep.subr.bf16.mxu0 0
        %2024 = vmatpush1.bf16.msra.mxu0 %v2015
        %2025 = vmatprep.subr.bf16.mxu0 0
        %2026 = vmatpush1.bf16.msra.mxu0 0
        %2027 = vmatprep.subr.bf16.mxu0 0
        %2028 = vmatpush1.bf16.msra.mxu0 0
        %2029 = vmatprep.subr.bf16.mxu0 0
        %2030 = vmatpush1.bf16.msra.mxu0 0
        %2031 = vmatprep.subr.bf16.mxu0 0
        %2032 = vmatpush1.bf16.msra.mxu0 0
        %2033 = vmatprep.subr.bf16.mxu0 0
        %2034 = vmatpush1.bf16.msra.mxu0 0
        %2035 = vmatprep.subr.bf16.mxu0 0
        %2036 = vmatpush1.bf16.msra.mxu0 0
        %2037 = vmatprep.subr.bf16.mxu0 0
        %2038 = vmatpush1.bf16.msra.mxu0 0
        %2039 = vmatprep.subr.bf16.mxu0 0
        %2040 = vmatpush1.bf16.msra.mxu0 0
        %2041 = vmatprep.subr.bf16.mxu0 0
        %2042 = vmatpush1.bf16.msra.mxu0 0
        %2043 = vmatprep.subr.bf16.mxu0 0
        %2044 = vmatpush1.bf16.msra.mxu0 0
        %2045 = vmatprep.subr.bf16.mxu0 0
        %2046 = vmatpush1.bf16.msra.mxu0 0
        %2047 = vmatprep.subr.bf16.mxu0 0
        %2048 = vmatpush1.bf16.msra.mxu0 0
        %2049 = vmatprep.subr.bf16.mxu0 0
        %2050 = vmatpush1.bf16.msra.mxu0 0
        %2051 = vmatprep.subr.bf16.mxu0 0
        %2052 = vmatpush1.bf16.msra.mxu0 0
        %2053 = vmatprep.mubr.bf16.mxu0 0
        %2054 = vmatmul.mubr.bf16.gmra.mrb[0].mxu0 %v2019
        %v2055 = vpop.f32.mrb[0].mxu0
        %v2056 = vadd.f32 %v2001, %v2055
        %v2057 = vpop.f32.mrb[0].mxu0
        %v2058 = vpop.f32.mrb[0].mxu0
        %v2059 = vpop.f32.mrb[0].mxu0
        %2060 = vdwg.mxu0
        %v2061 = vmax.f32 %v2056, 0.0
        %v2062 = vld [vmem:[%s4] sm:$0xf]
        %v2063 = vld [vmem:[%s4 + $0x4] sm:$0xf]
        %v2064 = vld [vmem:[%s4 + $0x8] sm:$0xf]
        %v2065 = vld [vmem:[%s4 + $0xc] sm:$0xf]
        %v2066 = vld [vmem:[%s4 + $0x10] sm:$0xf]
        %v2067 = vld [vmem:[%s4 + $0x14] sm:$0xf]
        %v2068 = vld [vmem:[%s4 + $0x18] sm:$0xf]
        %v2069 = vld [vmem:[%s4 + $0x1c] sm:$0xf]
        %v2070 = vpack.c.bf16 %v2061, %v2061
        %v2071 = vld [vmem:[%s5 + $0xf] sm:$0x1]
        %v2072 = vlaneseq
        %v2073 = vshrl.u32 %v2072, 7
        %v2074 = vsub.s32 0, %v2073
        %v2075 = vrot.slane %v2071, %v2074
        %v2084 = vunpack.c.l.b16 %v2062
        %v2085 = vunpack.c.l.b16 %v2063
        %v2086 = vunpack.c.l.b16 %v2064
        %v2087 = vunpack.c.l.b16 %v2065
        %v2088 = vunpack.c.l.b16 %v2066
        %v2089 = vunpack.c.l.b16 %v2067
        %v2090 = vunpack.c.l.b16 %v2068
        %v2091 = vunpack.c.l.b16 %v2069
        %v2092 = vpack.c.b16 %v2085, %v2084
        %v2093 = vpack.c.b16 %v2087, %v2086
        %v2094 = vpack.c.b16 %v2089, %v2088
        %v2095 = vpack.c.b16 %v2091, %v2090
        %2096 = vrot.lane.b32.xlu0 %v2092, 96
        %v2097 = vpop.permute.xlu0 %2096
        %2098 = vrot.lane.b32.xlu0 %v2093, 96
        %v2099 = vpop.permute.xlu0 %2098
        %2100 = vrot.lane.b32.xlu0 %v2094, 96
        %v2101 = vpop.permute.xlu0 %2100
        %2102 = vrot.lane.b32.xlu0 %v2095, 96
        %v2103 = vpop.permute.xlu0 %2102
        %v2109 = vsel %vm1258, %v2070, 0
        %2111 = vmatprep.subr.bf16.mxu0 0
        %2112 = vmatpush1.bf16.msra.mxu0 %v2097
        %2113 = vmatprep.subr.bf16.mxu0 0
        %2114 = vmatpush1.bf16.msra.mxu0 %v2099
        %2115 = vmatprep.subr.bf16.mxu0 0
        %2116 = vmatpush1.bf16.msra.mxu0 %v2101
        %2117 = vmatprep.subr.bf16.mxu0 0
        %2118 = vmatpush1.bf16.msra.mxu0 %v2103
        %2119 = vmatprep.subr.bf16.mxu0 0
        %2120 = vmatpush1.bf16.msra.mxu0 0
        %2121 = vmatprep.subr.bf16.mxu0 0
        %2122 = vmatpush1.bf16.msra.mxu0 0
        %2123 = vmatprep.subr.bf16.mxu0 0
        %2124 = vmatpush1.bf16.msra.mxu0 0
        %2125 = vmatprep.subr.bf16.mxu0 0
        %2126 = vmatpush1.bf16.msra.mxu0 0
        %2127 = vmatprep.subr.bf16.mxu0 0
        %2128 = vmatpush1.bf16.msra.mxu0 0
        %2129 = vmatprep.subr.bf16.mxu0 0
        %2130 = vmatpush1.bf16.msra.mxu0 0
        %2131 = vmatprep.subr.bf16.mxu0 0
        %2132 = vmatpush1.bf16.msra.mxu0 0
        %2133 = vmatprep.subr.bf16.mxu0 0
        %2134 = vmatpush1.bf16.msra.mxu0 0
        %2135 = vmatprep.subr.bf16.mxu0 0
        %2136 = vmatpush1.bf16.msra.mxu0 0
        %2137 = vmatprep.subr.bf16.mxu0 0
        %2138 = vmatpush1.bf16.msra.mxu0 0
        %2139 = vmatprep.subr.bf16.mxu0 0
        %2140 = vmatpush1.bf16.msra.mxu0 0
        %2141 = vmatprep.subr.bf16.mxu0 0
        %2142 = vmatpush1.bf16.msra.mxu0 0
        %2143 = vmatprep.mubr.bf16.mxu0 0
        %2144 = vmatmul.mubr.bf16.gmra.mrb[0].mxu0 %v2109
        %v2145 = vpop.f32.mrb[0].mxu0
        %v2146 = vadd.f32 %v2075, %v2145
        %v2147 = vpop.f32.mrb[0].mxu0
        %v2148 = vpop.f32.mrb[0].mxu0
        %v2149 = vpop.f32.mrb[0].mxu0
        %2150 = vdwg.mxu0
        %v2151 = vadd.f32 %v1959, %v2146
        %v2152 = vld [vmem:[%s5 + $0x2a] sm:$0x1]
        %v2153 = vld [vmem:[%s5 + $0x2b] sm:$0x1]
        %v2154 = vsel %vm487, %v2151, 0.0
        %2155 = vadd.xlane.f32.xlu0 %v2154
        %v2156 = vpop.xlane.xlu0 %2155
        %v2157 = vmul.f32 %v2156, %v491
        %v2158 = vsub.f32 %v2151, %v2157
        %v2159 = vmul.f32 %v2158, %v2158
        %v2160 = vsel %vm487, %v2159, 0.0
        %2161 = vadd.xlane.f32.xlu0 %v2160
        %v2162 = vpop.xlane.xlu0 %2161
        %v2163 = vmul.f32 %v2162, 0.032258064
        %v2164 = vlaneseq
        %v2165 = vshrl.u32 %v2164, 7
        %v2166 = vsub.s32 0, %v2165
        %v2167 = vrot.slane %v2152, %v2166
        %v2168 = vmul.f32 %v2167, %v2158
        %v2169 = vrsqrt.pop %v2163
        %v2170 = vmul.f32 %v2163, %v2169
        %vm2171 = vcmp.eq.f32.partialorder %v2163, inf
        %v2172 = vsel %vm2171, %v2163, %v2170
        %vm2173 = vcmp.eq.f32.partialorder %v2163, 0.0
        %v2174 = vand.u32 %v2163, 2147483648
        %v2175 = vsel %vm2173, %v2174, %v2172
        %v2176 = vadd.f32 %v2175, 1e-06
        %v2177 = vrcp.pop %v2176
        %v2178 = vmul.f32 %v2168, %v2177
        %v2179 = vlaneseq
        %v2180 = vshrl.u32 %v2179, 7
        %v2181 = vsub.s32 0, %v2180
        %v2182 = vrot.slane %v2153, %v2181
        %v2183 = vadd.f32 %v2178, %v2182
        %v2184 = vld [vmem:[%s5 + $0x10] sm:$0x1]
        %v2185 = vld [vmem:[%s5 + $0x11] sm:$0x1]
        %v2186 = vsel %vm487, %v477, 0.0
        %2187 = vadd.xlane.f32.xlu0 %v2186
        %v2188 = vpop.xlane.xlu0 %2187
        %v2189 = vmul.f32 %v2188, %v491
        %v2190 = vsub.f32 %v477, %v2189
        %v2191 = vmul.f32 %v2190, %v2190
        %v2192 = vsel %vm487, %v2191, 0.0
        %2193 = vadd.xlane.f32.xlu0 %v2192
        %v2194 = vpop.xlane.xlu0 %2193
        %v2195 = vmul.f32 %v2194, 0.032258064
        %v2196 = vlaneseq
        %v2197 = vshrl.u32 %v2196, 7
        %v2198 = vsub.s32 0, %v2197
        %v2199 = vrot.slane %v2184, %v2198
        %v2200 = vmul.f32 %v2199, %v2190
        %v2201 = vrsqrt.pop %v2195
        %v2202 = vmul.f32 %v2195, %v2201
        %vm2203 = vcmp.eq.f32.partialorder %v2195, inf
        %v2204 = vsel %vm2203, %v2195, %v2202
        %vm2205 = vcmp.eq.f32.partialorder %v2195, 0.0
        %v2206 = vand.u32 %v2195, 2147483648
        %v2207 = vsel %vm2205, %v2206, %v2204
        %v2208 = vadd.f32 %v2207, 1e-06
        %v2209 = vrcp.pop %v2208
        %v2210 = vmul.f32 %v2200, %v2209
        %v2211 = vlaneseq
        %v2212 = vshrl.u32 %v2211, 7
        %v2213 = vsub.s32 0, %v2212
        %v2214 = vrot.slane %v2185, %v2213
        %v2215 = vadd.f32 %v2210, %v2214
        %v2216 = vld [vmem:[%s3 + $0xc] sm:$0xf]
        %v2217 = vld [vmem:[%s3 + $0x2c] sm:$0xf]
        %v2218 = vld [vmem:[%s3 + $0x4c] sm:$0xf]
        %v2219 = vld [vmem:[%s3 + $0x6c] sm:$0xf]
        %v2220 = vld [vmem:[%s5 + $0x12] sm:$0x1]
        %v2221 = vpack.c.bf16 %v2215, %v2215
        %v2222 = vlaneseq
        %v2223 = vshrl.u32 %v2222, 7
        %v2224 = vsub.s32 0, %v2223
        %v2225 = vrot.slane %v2220, %v2224
        %v2230 = vunpack.c.l.b16 %v2216
        %v2231 = vunpack.c.l.b16 %v2217
        %v2232 = vunpack.c.l.b16 %v2218
        %v2233 = vunpack.c.l.b16 %v2219
        %v2234 = vpack.c.b16 %v2231, %v2230
        %v2235 = vpack.c.b16 %v2233, %v2232
        %v2239 = vsel %vm487, %v2221, 0
        %2241 = vmatprep.subr.bf16.mxu0 0
        %2242 = vmatpush1.bf16.msra.mxu0 %v2234
        %2243 = vmatprep.subr.bf16.mxu0 0
        %2244 = vmatpush1.bf16.msra.mxu0 %v2235
        %2245 = vmatprep.subr.bf16.mxu0 0
        %2246 = vmatpush1.bf16.msra.mxu0 0
        %2247 = vmatprep.subr.bf16.mxu0 0
        %2248 = vmatpush1.bf16.msra.mxu0 0
        %2249 = vmatprep.subr.bf16.mxu0 0
        %2250 = vmatpush1.bf16.msra.mxu0 0
        %2251 = vmatprep.subr.bf16.mxu0 0
        %2252 = vmatpush1.bf16.msra.mxu0 0
        %2253 = vmatprep.subr.bf16.mxu0 0
        %2254 = vmatpush1.bf16.msra.mxu0 0
        %2255 = vmatprep.subr.bf16.mxu0 0
        %2256 = vmatpush1.bf16.msra.mxu0 0
        %2257 = vmatprep.subr.bf16.mxu0 0
        %2258 = vmatpush1.bf16.msra.mxu0 0
        %2259 = vmatprep.subr.bf16.mxu0 0
        %2260 = vmatpush1.bf16.msra.mxu0 0
        %2261 = vmatprep.subr.bf16.mxu0 0
        %2262 = vmatpush1.bf16.msra.mxu0 0
        %2263 = vmatprep.subr.bf16.mxu0 0
        %2264 = vmatpush1.bf16.msra.mxu0 0
        %2265 = vmatprep.subr.bf16.mxu0 0
        %2266 = vmatpush1.bf16.msra.mxu0 0
        %2267 = vmatprep.subr.bf16.mxu0 0
        %2268 = vmatpush1.bf16.msra.mxu0 0
        %2269 = vmatprep.subr.bf16.mxu0 0
        %2270 = vmatpush1.bf16.msra.mxu0 0
        %2271 = vmatprep.subr.bf16.mxu0 0
        %2272 = vmatpush1.bf16.msra.mxu0 0
        %2273 = vmatprep.mubr.bf16.mxu0 0
        %2274 = vmatmul.mubr.bf16.gmra.mrb[0].mxu0 %v2239
        %v2275 = vpop.f32.mrb[0].mxu0
        %v2276 = vadd.f32 %v2225, %v2275
        %v2277 = vpop.f32.mrb[0].mxu0
        %v2278 = vpop.f32.mrb[0].mxu0
        %v2279 = vpop.f32.mrb[0].mxu0
        %2280 = vdwg.mxu0
        %v2281 = vld [vmem:[%s5 + $0x13] sm:$0x1]
        %2283 = vrot.lane.b32.xlu0 %v2276, 120
        %v2284 = vpop.permute.xlu0 %2283
        %2286 = vrot.lane.b32.xlu0 %v2276, 112
        %v2287 = vpop.permute.xlu0 %2286
        %2289 = vrot.lane.b32.xlu0 %v2276, 104
        %v2290 = vpop.permute.xlu0 %2289
        %v2292 = vpack.c.bf16 %v2276, %v2276
        %v2293 = vpack.c.bf16 %v2284, %v2284
        %v2294 = vpack.c.bf16 %v2287, %v2287
        %v2295 = vpack.c.bf16 %v2290, %v2290
        %2297 = vrot.lane.b32.xlu0 %v2292, 96
        %v2298 = vpop.permute.xlu0 %2297
        %v2300 = vsel %vm602, %v2292, 0
        %v2303 = vsel %vm602, %v2298, 0
        %2305 = vmatprep.subr.bf16.mxu0 0
        %2306 = vmatpush1.bf16.xpose.msra.mxu0 %v2303
        %2307 = vmatprep.subr.bf16.mxu0 0
        %2308 = vmatpush1.bf16.xpose.msra.mxu0 0
        %2309 = vmatprep.subr.bf16.mxu0 0
        %2310 = vmatpush1.bf16.xpose.msra.mxu0 0
        %2311 = vmatprep.subr.bf16.mxu0 0
        %2312 = vmatpush1.bf16.xpose.msra.mxu0 0
        %2313 = vmatprep.subr.bf16.mxu0 0
        %2314 = vmatpush1.bf16.xpose.msra.mxu0 0
        %2315 = vmatprep.subr.bf16.mxu0 0
        %2316 = vmatpush1.bf16.xpose.msra.mxu0 0
        %2317 = vmatprep.subr.bf16.mxu0 0
        %2318 = vmatpush1.bf16.xpose.msra.mxu0 0
        %2319 = vmatprep.subr.bf16.mxu0 0
        %2320 = vmatpush1.bf16.xpose.msra.mxu0 0
        %2321 = vmatprep.subr.bf16.mxu0 0
        %2322 = vmatpush1.bf16.xpose.msra.mxu0 0
        %2323 = vmatprep.subr.bf16.mxu0 0
        %2324 = vmatpush1.bf16.xpose.msra.mxu0 0
        %2325 = vmatprep.subr.bf16.mxu0 0
        %2326 = vmatpush1.bf16.xpose.msra.mxu0 0
        %2327 = vmatprep.subr.bf16.mxu0 0
        %2328 = vmatpush1.bf16.xpose.msra.mxu0 0
        %2329 = vmatprep.subr.bf16.mxu0 0
        %2330 = vmatpush1.bf16.xpose.msra.mxu0 0
        %2331 = vmatprep.subr.bf16.mxu0 0
        %2332 = vmatpush1.bf16.xpose.msra.mxu0 0
        %2333 = vmatprep.subr.bf16.mxu0 0
        %2334 = vmatpush1.bf16.xpose.msra.mxu0 0
        %2335 = vmatprep.subr.bf16.mxu0 0
        %2336 = vmatpush1.bf16.xpose.msra.mxu0 0
        %2337 = vmatprep.mubr.bf16.mxu0 0
        %2338 = vmatmul.mubr.bf16.gmra.mrb[0].mxu0 %v2300
        %v2339 = vpop.f32.mrb[0].mxu0
        %v2340 = vadd.f32 0.0, %v2339
        %v2341 = vpop.f32.mrb[0].mxu0
        %v2342 = vpop.f32.mrb[0].mxu0
        %v2343 = vpop.f32.mrb[0].mxu0
        %2344 = vdwg.mxu0
        %2346 = vrot.lane.b32.xlu0 %v2293, 96
        %v2347 = vpop.permute.xlu0 %2346
        %v2349 = vsel %vm602, %v2293, 0
        %v2352 = vsel %vm602, %v2347, 0
        %2354 = vmatprep.subr.bf16.mxu0 0
        %2355 = vmatpush1.bf16.xpose.msra.mxu0 %v2352
        %2356 = vmatprep.subr.bf16.mxu0 0
        %2357 = vmatpush1.bf16.xpose.msra.mxu0 0
        %2358 = vmatprep.subr.bf16.mxu0 0
        %2359 = vmatpush1.bf16.xpose.msra.mxu0 0
        %2360 = vmatprep.subr.bf16.mxu0 0
        %2361 = vmatpush1.bf16.xpose.msra.mxu0 0
        %2362 = vmatprep.subr.bf16.mxu0 0
        %2363 = vmatpush1.bf16.xpose.msra.mxu0 0
        %2364 = vmatprep.subr.bf16.mxu0 0
        %2365 = vmatpush1.bf16.xpose.msra.mxu0 0
        %2366 = vmatprep.subr.bf16.mxu0 0
        %2367 = vmatpush1.bf16.xpose.msra.mxu0 0
        %2368 = vmatprep.subr.bf16.mxu0 0
        %2369 = vmatpush1.bf16.xpose.msra.mxu0 0
        %2370 = vmatprep.subr.bf16.mxu0 0
        %2371 = vmatpush1.bf16.xpose.msra.mxu0 0
        %2372 = vmatprep.subr.bf16.mxu0 0
        %2373 = vmatpush1.bf16.xpose.msra.mxu0 0
        %2374 = vmatprep.subr.bf16.mxu0 0
        %2375 = vmatpush1.bf16.xpose.msra.mxu0 0
        %2376 = vmatprep.subr.bf16.mxu0 0
        %2377 = vmatpush1.bf16.xpose.msra.mxu0 0
        %2378 = vmatprep.subr.bf16.mxu0 0
        %2379 = vmatpush1.bf16.xpose.msra.mxu0 0
        %2380 = vmatprep.subr.bf16.mxu0 0
        %2381 = vmatpush1.bf16.xpose.msra.mxu0 0
        %2382 = vmatprep.subr.bf16.mxu0 0
        %2383 = vmatpush1.bf16.xpose.msra.mxu0 0
        %2384 = vmatprep.subr.bf16.mxu0 0
        %2385 = vmatpush1.bf16.xpose.msra.mxu0 0
        %2386 = vmatprep.mubr.bf16.mxu0 0
        %2387 = vmatmul.mubr.bf16.gmra.mrb[0].mxu0 %v2349
        %v2388 = vpop.f32.mrb[0].mxu0
        %v2389 = vadd.f32 0.0, %v2388
        %v2390 = vpop.f32.mrb[0].mxu0
        %v2391 = vpop.f32.mrb[0].mxu0
        %v2392 = vpop.f32.mrb[0].mxu0
        %2393 = vdwg.mxu0
        %2395 = vrot.lane.b32.xlu0 %v2294, 96
        %v2396 = vpop.permute.xlu0 %2395
        %v2398 = vsel %vm602, %v2294, 0
        %v2401 = vsel %vm602, %v2396, 0
        %2403 = vmatprep.subr.bf16.mxu0 0
        %2404 = vmatpush1.bf16.xpose.msra.mxu0 %v2401
        %2405 = vmatprep.subr.bf16.mxu0 0
        %2406 = vmatpush1.bf16.xpose.msra.mxu0 0
        %2407 = vmatprep.subr.bf16.mxu0 0
        %2408 = vmatpush1.bf16.xpose.msra.mxu0 0
        %2409 = vmatprep.subr.bf16.mxu0 0
        %2410 = vmatpush1.bf16.xpose.msra.mxu0 0
        %2411 = vmatprep.subr.bf16.mxu0 0
        %2412 = vmatpush1.bf16.xpose.msra.mxu0 0
        %2413 = vmatprep.subr.bf16.mxu0 0
        %2414 = vmatpush1.bf16.xpose.msra.mxu0 0
        %2415 = vmatprep.subr.bf16.mxu0 0
        %2416 = vmatpush1.bf16.xpose.msra.mxu0 0
        %2417 = vmatprep.subr.bf16.mxu0 0
        %2418 = vmatpush1.bf16.xpose.msra.mxu0 0
        %2419 = vmatprep.subr.bf16.mxu0 0
        %2420 = vmatpush1.bf16.xpose.msra.mxu0 0
        %2421 = vmatprep.subr.bf16.mxu0 0
        %2422 = vmatpush1.bf16.xpose.msra.mxu0 0
        %2423 = vmatprep.subr.bf16.mxu0 0
        %2424 = vmatpush1.bf16.xpose.msra.mxu0 0
        %2425 = vmatprep.subr.bf16.mxu0 0
        %2426 = vmatpush1.bf16.xpose.msra.mxu0 0
        %2427 = vmatprep.subr.bf16.mxu0 0
        %2428 = vmatpush1.bf16.xpose.msra.mxu0 0
        %2429 = vmatprep.subr.bf16.mxu0 0
        %2430 = vmatpush1.bf16.xpose.msra.mxu0 0
        %2431 = vmatprep.subr.bf16.mxu0 0
        %2432 = vmatpush1.bf16.xpose.msra.mxu0 0
        %2433 = vmatprep.subr.bf16.mxu0 0
        %2434 = vmatpush1.bf16.xpose.msra.mxu0 0
        %2435 = vmatprep.mubr.bf16.mxu0 0
        %2436 = vmatmul.mubr.bf16.gmra.mrb[0].mxu0 %v2398
        %v2437 = vpop.f32.mrb[0].mxu0
        %v2438 = vadd.f32 0.0, %v2437
        %v2439 = vpop.f32.mrb[0].mxu0
        %v2440 = vpop.f32.mrb[0].mxu0
        %v2441 = vpop.f32.mrb[0].mxu0
        %2442 = vdwg.mxu0
        %2444 = vrot.lane.b32.xlu0 %v2295, 96
        %v2445 = vpop.permute.xlu0 %2444
        %v2447 = vsel %vm602, %v2295, 0
        %v2450 = vsel %vm602, %v2445, 0
        %2452 = vmatprep.subr.bf16.mxu0 0
        %2453 = vmatpush1.bf16.xpose.msra.mxu0 %v2450
        %2454 = vmatprep.subr.bf16.mxu0 0
        %2455 = vmatpush1.bf16.xpose.msra.mxu0 0
        %2456 = vmatprep.subr.bf16.mxu0 0
        %2457 = vmatpush1.bf16.xpose.msra.mxu0 0
        %2458 = vmatprep.subr.bf16.mxu0 0
        %2459 = vmatpush1.bf16.xpose.msra.mxu0 0
        %2460 = vmatprep.subr.bf16.mxu0 0
        %2461 = vmatpush1.bf16.xpose.msra.mxu0 0
        %2462 = vmatprep.subr.bf16.mxu0 0
        %2463 = vmatpush1.bf16.xpose.msra.mxu0 0
        %2464 = vmatprep.subr.bf16.mxu0 0
        %2465 = vmatpush1.bf16.xpose.msra.mxu0 0
        %2466 = vmatprep.subr.bf16.mxu0 0
        %2467 = vmatpush1.bf16.xpose.msra.mxu0 0
        %2468 = vmatprep.subr.bf16.mxu0 0
        %2469 = vmatpush1.bf16.xpose.msra.mxu0 0
        %2470 = vmatprep.subr.bf16.mxu0 0
        %2471 = vmatpush1.bf16.xpose.msra.mxu0 0
        %2472 = vmatprep.subr.bf16.mxu0 0
        %2473 = vmatpush1.bf16.xpose.msra.mxu0 0
        %2474 = vmatprep.subr.bf16.mxu0 0
        %2475 = vmatpush1.bf16.xpose.msra.mxu0 0
        %2476 = vmatprep.subr.bf16.mxu0 0
        %2477 = vmatpush1.bf16.xpose.msra.mxu0 0
        %2478 = vmatprep.subr.bf16.mxu0 0
        %2479 = vmatpush1.bf16.xpose.msra.mxu0 0
        %2480 = vmatprep.subr.bf16.mxu0 0
        %2481 = vmatpush1.bf16.xpose.msra.mxu0 0
        %2482 = vmatprep.subr.bf16.mxu0 0
        %2483 = vmatpush1.bf16.xpose.msra.mxu0 0
        %2484 = vmatprep.mubr.bf16.mxu0 0
        %2485 = vmatmul.mubr.bf16.gmra.mrb[0].mxu0 %v2447
        %v2486 = vpop.f32.mrb[0].mxu0
        %v2487 = vadd.f32 0.0, %v2486
        %v2488 = vpop.f32.mrb[0].mxu0
        %v2489 = vpop.f32.mrb[0].mxu0
        %v2490 = vpop.f32.mrb[0].mxu0
        %2491 = vdwg.mxu0
        %v2492 = vmul.f32 %v2340, 0.35355338
        %v2493 = vmul.f32 %v2389, 0.35355338
        %v2494 = vmul.f32 %v2438, 0.35355338
        %v2495 = vmul.f32 %v2487, 0.35355338
        %v2496 = vadd.f32 %v2492, %v484
        %v2497 = vadd.f32 %v2493, %v484
        %v2498 = vadd.f32 %v2494, %v484
        %v2499 = vadd.f32 %v2495, %v484
        %v2500 = vsel %vm602, %v2496, -inf
        %2501 = vmax.xlane.f32.xlu0 %v2500
        %v2502 = vpop.xlane.xlu0 %2501
        %v2503 = vsel %vm602, %v2497, -inf
        %2504 = vmax.xlane.f32.xlu0 %v2503
        %v2505 = vpop.xlane.xlu0 %2504
        %v2506 = vsel %vm602, %v2498, -inf
        %2507 = vmax.xlane.f32.xlu0 %v2506
        %v2508 = vpop.xlane.xlu0 %2507
        %v2509 = vsel %vm602, %v2499, -inf
        %2510 = vmax.xlane.f32.xlu0 %v2509
        %v2511 = vpop.xlane.xlu0 %2510
        %v2512 = vsub.f32 %v2496, %v2502
        %v2513 = vsub.f32 %v2497, %v2505
        %v2514 = vsub.f32 %v2498, %v2508
        %v2515 = vsub.f32 %v2499, %v2511
        %v2516 = vmul.f32 %v2512, 1.442695
        %v2517 = vpow.pop %v2516
        %v2518 = vmul.f32 %v2513, 1.442695
        %v2519 = vpow.pop %v2518
        %v2520 = vmul.f32 %v2514, 1.442695
        %v2521 = vpow.pop %v2520
        %v2522 = vmul.f32 %v2515, 1.442695
        %v2523 = vpow.pop %v2522
        %v2524 = vsel %vm602, %v2517, 0.0
        %2525 = vadd.xlane.f32.xlu0 %v2524
        %v2526 = vpop.xlane.xlu0 %2525
        %v2527 = vsel %vm602, %v2519, 0.0
        %2528 = vadd.xlane.f32.xlu0 %v2527
        %v2529 = vpop.xlane.xlu0 %2528
        %v2530 = vsel %vm602, %v2521, 0.0
        %2531 = vadd.xlane.f32.xlu0 %v2530
        %v2532 = vpop.xlane.xlu0 %2531
        %v2533 = vsel %vm602, %v2523, 0.0
        %2534 = vadd.xlane.f32.xlu0 %v2533
        %v2535 = vpop.xlane.xlu0 %2534
        %v2536 = vrcp.pop %v2526
        %v2537 = vrcp.pop %v2529
        %v2538 = vrcp.pop %v2532
        %v2539 = vrcp.pop %v2535
        %v2540 = vmul.f32 %v2517, %v2536
        %v2541 = vmul.f32 %v2519, %v2537
        %v2542 = vmul.f32 %v2521, %v2538
        %v2543 = vmul.f32 %v2523, %v2539
        %v2544 = vpack.c.bf16 %v2540, %v2540
        %v2545 = vpack.c.bf16 %v2541, %v2541
        %v2546 = vpack.c.bf16 %v2542, %v2542
        %v2547 = vpack.c.bf16 %v2543, %v2543
        %2548 = vrot.lane.b32.xlu0 %v2292, 64
        %v2549 = vpop.permute.xlu0 %2548
        %v2551 = vsel %vm602, %v2544, 0
        %v2554 = vsel %vm863, %v2549, 0
        %2556 = vmatprep.subr.bf16.mxu0 0
        %2557 = vmatpush1.bf16.msra.mxu0 %v2554
        %2558 = vmatprep.subr.bf16.mxu0 0
        %2559 = vmatpush1.bf16.msra.mxu0 0
        %2560 = vmatprep.subr.bf16.mxu0 0
        %2561 = vmatpush1.bf16.msra.mxu0 0
        %2562 = vmatprep.subr.bf16.mxu0 0
        %2563 = vmatpush1.bf16.msra.mxu0 0
        %2564 = vmatprep.subr.bf16.mxu0 0
        %2565 = vmatpush1.bf16.msra.mxu0 0
        %2566 = vmatprep.subr.bf16.mxu0 0
        %2567 = vmatpush1.bf16.msra.mxu0 0
        %2568 = vmatprep.subr.bf16.mxu0 0
        %2569 = vmatpush1.bf16.msra.mxu0 0
        %2570 = vmatprep.subr.bf16.mxu0 0
        %2571 = vmatpush1.bf16.msra.mxu0 0
        %2572 = vmatprep.subr.bf16.mxu0 0
        %2573 = vmatpush1.bf16.msra.mxu0 0
        %2574 = vmatprep.subr.bf16.mxu0 0
        %2575 = vmatpush1.bf16.msra.mxu0 0
        %2576 = vmatprep.subr.bf16.mxu0 0
        %2577 = vmatpush1.bf16.msra.mxu0 0
        %2578 = vmatprep.subr.bf16.mxu0 0
        %2579 = vmatpush1.bf16.msra.mxu0 0
        %2580 = vmatprep.subr.bf16.mxu0 0
        %2581 = vmatpush1.bf16.msra.mxu0 0
        %2582 = vmatprep.subr.bf16.mxu0 0
        %2583 = vmatpush1.bf16.msra.mxu0 0
        %2584 = vmatprep.subr.bf16.mxu0 0
        %2585 = vmatpush1.bf16.msra.mxu0 0
        %2586 = vmatprep.subr.bf16.mxu0 0
        %2587 = vmatpush1.bf16.msra.mxu0 0
        %2588 = vmatprep.mubr.bf16.mxu0 0
        %2589 = vmatmul.mubr.bf16.gmra.mrb[0].mxu0 %v2551
        %v2590 = vpop.f32.mrb[0].mxu0
        %v2591 = vadd.f32 0.0, %v2590
        %v2592 = vpop.f32.mrb[0].mxu0
        %v2593 = vpop.f32.mrb[0].mxu0
        %v2594 = vpop.f32.mrb[0].mxu0
        %2595 = vdwg.mxu0
        %2596 = vrot.lane.b32.xlu0 %v2293, 64
        %v2597 = vpop.permute.xlu0 %2596
        %v2599 = vsel %vm602, %v2545, 0
        %v2602 = vsel %vm863, %v2597, 0
        %2604 = vmatprep.subr.bf16.mxu0 0
        %2605 = vmatpush1.bf16.msra.mxu0 %v2602
        %2606 = vmatprep.subr.bf16.mxu0 0
        %2607 = vmatpush1.bf16.msra.mxu0 0
        %2608 = vmatprep.subr.bf16.mxu0 0
        %2609 = vmatpush1.bf16.msra.mxu0 0
        %2610 = vmatprep.subr.bf16.mxu0 0
        %2611 = vmatpush1.bf16.msra.mxu0 0
        %2612 = vmatprep.subr.bf16.mxu0 0
        %2613 = vmatpush1.bf16.msra.mxu0 0
        %2614 = vmatprep.subr.bf16.mxu0 0
        %2615 = vmatpush1.bf16.msra.mxu0 0
        %2616 = vmatprep.subr.bf16.mxu0 0
        %2617 = vmatpush1.bf16.msra.mxu0 0
        %2618 = vmatprep.subr.bf16.mxu0 0
        %2619 = vmatpush1.bf16.msra.mxu0 0
        %2620 = vmatprep.subr.bf16.mxu0 0
        %2621 = vmatpush1.bf16.msra.mxu0 0
        %2622 = vmatprep.subr.bf16.mxu0 0
        %2623 = vmatpush1.bf16.msra.mxu0 0
        %2624 = vmatprep.subr.bf16.mxu0 0
        %2625 = vmatpush1.bf16.msra.mxu0 0
        %2626 = vmatprep.subr.bf16.mxu0 0
        %2627 = vmatpush1.bf16.msra.mxu0 0
        %2628 = vmatprep.subr.bf16.mxu0 0
        %2629 = vmatpush1.bf16.msra.mxu0 0
        %2630 = vmatprep.subr.bf16.mxu0 0
        %2631 = vmatpush1.bf16.msra.mxu0 0
        %2632 = vmatprep.subr.bf16.mxu0 0
        %2633 = vmatpush1.bf16.msra.mxu0 0
        %2634 = vmatprep.subr.bf16.mxu0 0
        %2635 = vmatpush1.bf16.msra.mxu0 0
        %2636 = vmatprep.mubr.bf16.mxu0 0
        %2637 = vmatmul.mubr.bf16.gmra.mrb[0].mxu0 %v2599
        %v2638 = vpop.f32.mrb[0].mxu0
        %v2639 = vadd.f32 0.0, %v2638
        %v2640 = vpop.f32.mrb[0].mxu0
        %v2641 = vpop.f32.mrb[0].mxu0
        %v2642 = vpop.f32.mrb[0].mxu0
        %2643 = vdwg.mxu0
        %2644 = vrot.lane.b32.xlu0 %v2294, 64
        %v2645 = vpop.permute.xlu0 %2644
        %v2647 = vsel %vm602, %v2546, 0
        %v2650 = vsel %vm863, %v2645, 0
        %2652 = vmatprep.subr.bf16.mxu0 0
        %2653 = vmatpush1.bf16.msra.mxu0 %v2650
        %2654 = vmatprep.subr.bf16.mxu0 0
        %2655 = vmatpush1.bf16.msra.mxu0 0
        %2656 = vmatprep.subr.bf16.mxu0 0
        %2657 = vmatpush1.bf16.msra.mxu0 0
        %2658 = vmatprep.subr.bf16.mxu0 0
        %2659 = vmatpush1.bf16.msra.mxu0 0
        %2660 = vmatprep.subr.bf16.mxu0 0
        %2661 = vmatpush1.bf16.msra.mxu0 0
        %2662 = vmatprep.subr.bf16.mxu0 0
        %2663 = vmatpush1.bf16.msra.mxu0 0
        %2664 = vmatprep.subr.bf16.mxu0 0
        %2665 = vmatpush1.bf16.msra.mxu0 0
        %2666 = vmatprep.subr.bf16.mxu0 0
        %2667 = vmatpush1.bf16.msra.mxu0 0
        %2668 = vmatprep.subr.bf16.mxu0 0
        %2669 = vmatpush1.bf16.msra.mxu0 0
        %2670 = vmatprep.subr.bf16.mxu0 0
        %2671 = vmatpush1.bf16.msra.mxu0 0
        %2672 = vmatprep.subr.bf16.mxu0 0
        %2673 = vmatpush1.bf16.msra.mxu0 0
        %2674 = vmatprep.subr.bf16.mxu0 0
        %2675 = vmatpush1.bf16.msra.mxu0 0
        %2676 = vmatprep.subr.bf16.mxu0 0
        %2677 = vmatpush1.bf16.msra.mxu0 0
        %2678 = vmatprep.subr.bf16.mxu0 0
        %2679 = vmatpush1.bf16.msra.mxu0 0
        %2680 = vmatprep.subr.bf16.mxu0 0
        %2681 = vmatpush1.bf16.msra.mxu0 0
        %2682 = vmatprep.subr.bf16.mxu0 0
        %2683 = vmatpush1.bf16.msra.mxu0 0
        %2684 = vmatprep.mubr.bf16.mxu0 0
        %2685 = vmatmul.mubr.bf16.gmra.mrb[0].mxu0 %v2647
        %v2686 = vpop.f32.mrb[0].mxu0
        %v2687 = vadd.f32 0.0, %v2686
        %v2688 = vpop.f32.mrb[0].mxu0
        %v2689 = vpop.f32.mrb[0].mxu0
        %v2690 = vpop.f32.mrb[0].mxu0
        %2691 = vdwg.mxu0
        %2692 = vrot.lane.b32.xlu0 %v2295, 64
        %v2693 = vpop.permute.xlu0 %2692
        %v2695 = vsel %vm602, %v2547, 0
        %v2698 = vsel %vm863, %v2693, 0
        %2700 = vmatprep.subr.bf16.mxu0 0
        %2701 = vmatpush1.bf16.msra.mxu0 %v2698
        %2702 = vmatprep.subr.bf16.mxu0 0
        %2703 = vmatpush1.bf16.msra.mxu0 0
        %2704 = vmatprep.subr.bf16.mxu0 0
        %2705 = vmatpush1.bf16.msra.mxu0 0
        %2706 = vmatprep.subr.bf16.mxu0 0
        %2707 = vmatpush1.bf16.msra.mxu0 0
        %2708 = vmatprep.subr.bf16.mxu0 0
        %2709 = vmatpush1.bf16.msra.mxu0 0
        %2710 = vmatprep.subr.bf16.mxu0 0
        %2711 = vmatpush1.bf16.msra.mxu0 0
        %2712 = vmatprep.subr.bf16.mxu0 0
        %2713 = vmatpush1.bf16.msra.mxu0 0
        %2714 = vmatprep.subr.bf16.mxu0 0
        %2715 = vmatpush1.bf16.msra.mxu0 0
        %2716 = vmatprep.subr.bf16.mxu0 0
        %2717 = vmatpush1.bf16.msra.mxu0 0
        %2718 = vmatprep.subr.bf16.mxu0 0
        %2719 = vmatpush1.bf16.msra.mxu0 0
        %2720 = vmatprep.subr.bf16.mxu0 0
        %2721 = vmatpush1.bf16.msra.mxu0 0
        %2722 = vmatprep.subr.bf16.mxu0 0
        %2723 = vmatpush1.bf16.msra.mxu0 0
        %2724 = vmatprep.subr.bf16.mxu0 0
        %2725 = vmatpush1.bf16.msra.mxu0 0
        %2726 = vmatprep.subr.bf16.mxu0 0
        %2727 = vmatpush1.bf16.msra.mxu0 0
        %2728 = vmatprep.subr.bf16.mxu0 0
        %2729 = vmatpush1.bf16.msra.mxu0 0
        %2730 = vmatprep.subr.bf16.mxu0 0
        %2731 = vmatpush1.bf16.msra.mxu0 0
        %2732 = vmatprep.mubr.bf16.mxu0 0
        %2733 = vmatmul.mubr.bf16.gmra.mrb[0].mxu0 %v2695
        %v2734 = vpop.f32.mrb[0].mxu0
        %v2735 = vadd.f32 0.0, %v2734
        %v2736 = vpop.f32.mrb[0].mxu0
        %v2737 = vpop.f32.mrb[0].mxu0
        %v2738 = vpop.f32.mrb[0].mxu0
        %2739 = vdwg.mxu0
        %2741 = vrot.lane.b32.xlu0 %v2639, 8
        %v2742 = vpop.permute.xlu0 %2741
        %2745 = vrot.lane.b32.xlu0 %v2687, 16
        %v2746 = vpop.permute.xlu0 %2745
        %2749 = vrot.lane.b32.xlu0 %v2735, 24
        %v2750 = vpop.permute.xlu0 %2749
        %v2752 = vsel %vm602, %v2591, %v2742
        %v2753 = vsel %vm324, %v2752, %v2746
        %v2754 = vsel %vm1065, %v2753, %v2750
        %v2755 = vpack.c.bf16 %v2754, %v2754
        %v2756 = vlaneseq
        %v2757 = vshrl.u32 %v2756, 7
        %v2758 = vsub.s32 0, %v2757
        %v2759 = vrot.slane %v2281, %v2758
        %2760 = vrot.lane.b32.xlu0 %v2234, 32
        %v2761 = vpop.permute.xlu0 %2760
        %2762 = vrot.lane.b32.xlu0 %v2235, 32
        %v2763 = vpop.permute.xlu0 %2762
        %v2767 = vsel %vm487, %v2755, 0
        %2769 = vmatprep.subr.bf16.mxu0 0
        %2770 = vmatpush1.bf16.msra.mxu0 %v2761
        %2771 = vmatprep.subr.bf16.mxu0 0
        %2772 = vmatpush1.bf16.msra.mxu0 %v2763
        %2773 = vmatprep.subr.bf16.mxu0 0
        %2774 = vmatpush1.bf16.msra.mxu0 0
        %2775 = vmatprep.subr.bf16.mxu0 0
        %2776 = vmatpush1.bf16.msra.mxu0 0
        %2777 = vmatprep.subr.bf16.mxu0 0
        %2778 = vmatpush1.bf16.msra.mxu0 0
        %2779 = vmatprep.subr.bf16.mxu0 0
        %2780 = vmatpush1.bf16.msra.mxu0 0
        %2781 = vmatprep.subr.bf16.mxu0 0
        %2782 = vmatpush1.bf16.msra.mxu0 0
        %2783 = vmatprep.subr.bf16.mxu0 0
        %2784 = vmatpush1.bf16.msra.mxu0 0
        %2785 = vmatprep.subr.bf16.mxu0 0
        %2786 = vmatpush1.bf16.msra.mxu0 0
        %2787 = vmatprep.subr.bf16.mxu0 0
        %2788 = vmatpush1.bf16.msra.mxu0 0
        %2789 = vmatprep.subr.bf16.mxu0 0
        %2790 = vmatpush1.bf16.msra.mxu0 0
        %2791 = vmatprep.subr.bf16.mxu0 0
        %2792 = vmatpush1.bf16.msra.mxu0 0
        %2793 = vmatprep.subr.bf16.mxu0 0
        %2794 = vmatpush1.bf16.msra.mxu0 0
        %2795 = vmatprep.subr.bf16.mxu0 0
        %2796 = vmatpush1.bf16.msra.mxu0 0
        %2797 = vmatprep.subr.bf16.mxu0 0
        %2798 = vmatpush1.bf16.msra.mxu0 0
        %2799 = vmatprep.subr.bf16.mxu0 0
        %2800 = vmatpush1.bf16.msra.mxu0 0
        %2801 = vmatprep.mubr.bf16.mxu0 0
        %2802 = vmatmul.mubr.bf16.gmra.mrb[0].mxu0 %v2767
        %v2803 = vpop.f32.mrb[0].mxu0
        %v2804 = vadd.f32 %v2759, %v2803
        %v2805 = vpop.f32.mrb[0].mxu0
        %v2806 = vpop.f32.mrb[0].mxu0
        %v2807 = vpop.f32.mrb[0].mxu0
        %2808 = vdwg.mxu0
        %v2809 = vadd.f32 %v477, %v2804
        %v2810 = vld [vmem:[%s5 + $0x14] sm:$0x1]
        %v2811 = vld [vmem:[%s5 + $0x15] sm:$0x1]
        %v2812 = vsel %vm487, %v2809, 0.0
        %2813 = vadd.xlane.f32.xlu0 %v2812
        %v2814 = vpop.xlane.xlu0 %2813
        %v2815 = vmul.f32 %v2814, %v491
        %v2816 = vsub.f32 %v2809, %v2815
        %v2817 = vmul.f32 %v2816, %v2816
        %v2818 = vsel %vm487, %v2817, 0.0
        %2819 = vadd.xlane.f32.xlu0 %v2818
        %v2820 = vpop.xlane.xlu0 %2819
        %v2821 = vmul.f32 %v2820, 0.032258064
        %v2822 = vlaneseq
        %v2823 = vshrl.u32 %v2822, 7
        %v2824 = vsub.s32 0, %v2823
        %v2825 = vrot.slane %v2810, %v2824
        %v2826 = vmul.f32 %v2825, %v2816
        %v2827 = vrsqrt.pop %v2821
        %v2828 = vmul.f32 %v2821, %v2827
        %vm2829 = vcmp.eq.f32.partialorder %v2821, inf
        %v2830 = vsel %vm2829, %v2821, %v2828
        %vm2831 = vcmp.eq.f32.partialorder %v2821, 0.0
        %v2832 = vand.u32 %v2821, 2147483648
        %v2833 = vsel %vm2831, %v2832, %v2830
        %v2834 = vadd.f32 %v2833, 1e-06
        %v2835 = vrcp.pop %v2834
        %v2836 = vmul.f32 %v2826, %v2835
        %v2837 = vlaneseq
        %v2838 = vshrl.u32 %v2837, 7
        %v2839 = vsub.s32 0, %v2838
        %v2840 = vrot.slane %v2811, %v2839
        %v2841 = vadd.f32 %v2836, %v2840
        %v2842 = vld [vmem:[%s3 + $0x10] sm:$0xf]
        %v2843 = vld [vmem:[%s3 + $0x30] sm:$0xf]
        %v2844 = vld [vmem:[%s3 + $0x50] sm:$0xf]
        %v2845 = vld [vmem:[%s3 + $0x70] sm:$0xf]
        %v2846 = vld [vmem:[%s5 + $0x16] sm:$0x1]
        %v2847 = vpack.c.bf16 %v2841, %v2841
        %v2848 = vlaneseq
        %v2849 = vshrl.u32 %v2848, 7
        %v2850 = vsub.s32 0, %v2849
        %v2851 = vrot.slane %v2846, %v2850
        %v2856 = vunpack.c.l.b16 %v2842
        %v2857 = vunpack.c.l.b16 %v2843
        %v2858 = vunpack.c.l.b16 %v2844
        %v2859 = vunpack.c.l.b16 %v2845
        %v2860 = vpack.c.b16 %v2857, %v2856
        %v2861 = vpack.c.b16 %v2859, %v2858
        %v2865 = vsel %vm487, %v2847, 0
        %2867 = vmatprep.subr.bf16.mxu0 0
        %2868 = vmatpush1.bf16.msra.mxu0 %v2860
        %2869 = vmatprep.subr.bf16.mxu0 0
        %2870 = vmatpush1.bf16.msra.mxu0 %v2861
        %2871 = vmatprep.subr.bf16.mxu0 0
        %2872 = vmatpush1.bf16.msra.mxu0 0
        %2873 = vmatprep.subr.bf16.mxu0 0
        %2874 = vmatpush1.bf16.msra.mxu0 0
        %2875 = vmatprep.subr.bf16.mxu0 0
        %2876 = vmatpush1.bf16.msra.mxu0 0
        %2877 = vmatprep.subr.bf16.mxu0 0
        %2878 = vmatpush1.bf16.msra.mxu0 0
        %2879 = vmatprep.subr.bf16.mxu0 0
        %2880 = vmatpush1.bf16.msra.mxu0 0
        %2881 = vmatprep.subr.bf16.mxu0 0
        %2882 = vmatpush1.bf16.msra.mxu0 0
        %2883 = vmatprep.subr.bf16.mxu0 0
        %2884 = vmatpush1.bf16.msra.mxu0 0
        %2885 = vmatprep.subr.bf16.mxu0 0
        %2886 = vmatpush1.bf16.msra.mxu0 0
        %2887 = vmatprep.subr.bf16.mxu0 0
        %2888 = vmatpush1.bf16.msra.mxu0 0
        %2889 = vmatprep.subr.bf16.mxu0 0
        %2890 = vmatpush1.bf16.msra.mxu0 0
        %2891 = vmatprep.subr.bf16.mxu0 0
        %2892 = vmatpush1.bf16.msra.mxu0 0
        %2893 = vmatprep.subr.bf16.mxu0 0
        %2894 = vmatpush1.bf16.msra.mxu0 0
        %2895 = vmatprep.subr.bf16.mxu0 0
        %2896 = vmatpush1.bf16.msra.mxu0 0
        %2897 = vmatprep.subr.bf16.mxu0 0
        %2898 = vmatpush1.bf16.msra.mxu0 0
        %2899 = vmatprep.mubr.bf16.mxu0 0
        %2900 = vmatmul.mubr.bf16.gmra.mrb[0].mxu0 %v2865
        %v2901 = vpop.f32.mrb[0].mxu0
        %v2902 = vadd.f32 %v2851, %v2901
        %v2903 = vpop.f32.mrb[0].mxu0
        %v2904 = vpop.f32.mrb[0].mxu0
        %v2905 = vpop.f32.mrb[0].mxu0
        %2906 = vdwg.mxu0
        %v2907 = vld [vmem:[%s5 + $0x17] sm:$0x1]
        %v2908 = vpack.c.bf16 %v2183, %v2183
        %v2909 = vlaneseq
        %v2910 = vshrl.u32 %v2909, 7
        %v2911 = vsub.s32 0, %v2910
        %v2912 = vrot.slane %v2907, %v2911
        %2913 = vrot.lane.b32.xlu0 %v2860, 96
        %v2914 = vpop.permute.xlu0 %2913
        %2915 = vrot.lane.b32.xlu0 %v2861, 96
        %v2916 = vpop.permute.xlu0 %2915
        %v2920 = vsel %vm487, %v2908, 0
        %2922 = vmatprep.subr.bf16.mxu0 0
        %2923 = vmatpush1.bf16.msra.mxu0 %v2914
        %2924 = vmatprep.subr.bf16.mxu0 0
        %2925 = vmatpush1.bf16.msra.mxu0 %v2916
        %2926 = vmatprep.subr.bf16.mxu0 0
        %2927 = vmatpush1.bf16.msra.mxu0 0
        %2928 = vmatprep.subr.bf16.mxu0 0
        %2929 = vmatpush1.bf16.msra.mxu0 0
        %2930 = vmatprep.subr.bf16.mxu0 0
        %2931 = vmatpush1.bf16.msra.mxu0 0
        %2932 = vmatprep.subr.bf16.mxu0 0
        %2933 = vmatpush1.bf16.msra.mxu0 0
        %2934 = vmatprep.subr.bf16.mxu0 0
        %2935 = vmatpush1.bf16.msra.mxu0 0
        %2936 = vmatprep.subr.bf16.mxu0 0
        %2937 = vmatpush1.bf16.msra.mxu0 0
        %2938 = vmatprep.subr.bf16.mxu0 0
        %2939 = vmatpush1.bf16.msra.mxu0 0
        %2940 = vmatprep.subr.bf16.mxu0 0
        %2941 = vmatpush1.bf16.msra.mxu0 0
        %2942 = vmatprep.subr.bf16.mxu0 0
        %2943 = vmatpush1.bf16.msra.mxu0 0
        %2944 = vmatprep.subr.bf16.mxu0 0
        %2945 = vmatpush1.bf16.msra.mxu0 0
        %2946 = vmatprep.subr.bf16.mxu0 0
        %2947 = vmatpush1.bf16.msra.mxu0 0
        %2948 = vmatprep.subr.bf16.mxu0 0
        %2949 = vmatpush1.bf16.msra.mxu0 0
        %2950 = vmatprep.subr.bf16.mxu0 0
        %2951 = vmatpush1.bf16.msra.mxu0 0
        %2952 = vmatprep.subr.bf16.mxu0 0
        %2953 = vmatpush1.bf16.msra.mxu0 0
        %2954 = vmatprep.mubr.bf16.mxu0 0
        %2955 = vmatmul.mubr.bf16.gmra.mrb[0].mxu0 %v2920
        %v2956 = vpop.f32.mrb[0].mxu0
        %v2957 = vadd.f32 %v2912, %v2956
        %v2958 = vpop.f32.mrb[0].mxu0
        %v2959 = vpop.f32.mrb[0].mxu0
        %v2960 = vpop.f32.mrb[0].mxu0
        %2961 = vdwg.mxu0
        %v2962 = vld [vmem:[%s5 + $0x18] sm:$0x1]
        %2964 = vrot.lane.b32.xlu0 %v2902, 120
        %v2965 = vpop.permute.xlu0 %2964
        %2967 = vrot.lane.b32.xlu0 %v2902, 112
        %v2968 = vpop.permute.xlu0 %2967
        %2970 = vrot.lane.b32.xlu0 %v2902, 104
        %v2971 = vpop.permute.xlu0 %2970
        %v2973 = vpack.c.bf16 %v2902, %v2902
        %v2974 = vpack.c.bf16 %v2965, %v2965
        %v2975 = vpack.c.bf16 %v2968, %v2968
        %v2976 = vpack.c.bf16 %v2971, %v2971
        %2978 = vrot.lane.b32.xlu0 %v2957, 120
        %v2979 = vpop.permute.xlu0 %2978
        %2981 = vrot.lane.b32.xlu0 %v2957, 112
        %v2982 = vpop.permute.xlu0 %2981
        %2984 = vrot.lane.b32.xlu0 %v2957, 104
        %v2985 = vpop.permute.xlu0 %2984
        %v2987 = vpack.c.bf16 %v2957, %v2957
        %v2988 = vpack.c.bf16 %v2979, %v2979
        %v2989 = vpack.c.bf16 %v2982, %v2982
        %v2990 = vpack.c.bf16 %v2985, %v2985
        %v2992 = vsel %vm602, %v2973, 0
        %v2995 = vsel %vm602, %v2987, 0
        %2997 = vmatprep.subr.bf16.mxu0 0
        %2998 = vmatpush1.bf16.xpose.msra.mxu0 %v2995
        %2999 = vmatprep.subr.bf16.mxu0 0
        %3000 = vmatpush1.bf16.xpose.msra.mxu0 0
        %3001 = vmatprep.subr.bf16.mxu0 0
        %3002 = vmatpush1.bf16.xpose.msra.mxu0 0
        %3003 = vmatprep.subr.bf16.mxu0 0
        %3004 = vmatpush1.bf16.xpose.msra.mxu0 0
        %3005 = vmatprep.subr.bf16.mxu0 0
        %3006 = vmatpush1.bf16.xpose.msra.mxu0 0
        %3007 = vmatprep.subr.bf16.mxu0 0
        %3008 = vmatpush1.bf16.xpose.msra.mxu0 0
        %3009 = vmatprep.subr.bf16.mxu0 0
        %3010 = vmatpush1.bf16.xpose.msra.mxu0 0
        %3011 = vmatprep.subr.bf16.mxu0 0
        %3012 = vmatpush1.bf16.xpose.msra.mxu0 0
        %3013 = vmatprep.subr.bf16.mxu0 0
        %3014 = vmatpush1.bf16.xpose.msra.mxu0 0
        %3015 = vmatprep.subr.bf16.mxu0 0
        %3016 = vmatpush1.bf16.xpose.msra.mxu0 0
        %3017 = vmatprep.subr.bf16.mxu0 0
        %3018 = vmatpush1.bf16.xpose.msra.mxu0 0
        %3019 = vmatprep.subr.bf16.mxu0 0
        %3020 = vmatpush1.bf16.xpose.msra.mxu0 0
        %3021 = vmatprep.subr.bf16.mxu0 0
        %3022 = vmatpush1.bf16.xpose.msra.mxu0 0
        %3023 = vmatprep.subr.bf16.mxu0 0
        %3024 = vmatpush1.bf16.xpose.msra.mxu0 0
        %3025 = vmatprep.subr.bf16.mxu0 0
        %3026 = vmatpush1.bf16.xpose.msra.mxu0 0
        %3027 = vmatprep.subr.bf16.mxu0 0
        %3028 = vmatpush1.bf16.xpose.msra.mxu0 0
        %3029 = vmatprep.mubr.bf16.mxu0 0
        %3030 = vmatmul.mubr.bf16.gmra.mrb[0].mxu0 %v2992
        %v3031 = vpop.f32.mrb[0].mxu0
        %v3032 = vadd.f32 0.0, %v3031
        %v3033 = vpop.f32.mrb[0].mxu0
        %v3034 = vpop.f32.mrb[0].mxu0
        %v3035 = vpop.f32.mrb[0].mxu0
        %3036 = vdwg.mxu0
        %v3038 = vsel %vm602, %v2974, 0
        %v3041 = vsel %vm602, %v2988, 0
        %3043 = vmatprep.subr.bf16.mxu0 0
        %3044 = vmatpush1.bf16.xpose.msra.mxu0 %v3041
        %3045 = vmatprep.subr.bf16.mxu0 0
        %3046 = vmatpush1.bf16.xpose.msra.mxu0 0
        %3047 = vmatprep.subr.bf16.mxu0 0
        %3048 = vmatpush1.bf16.xpose.msra.mxu0 0
        %3049 = vmatprep.subr.bf16.mxu0 0
        %3050 = vmatpush1.bf16.xpose.msra.mxu0 0
        %3051 = vmatprep.subr.bf16.mxu0 0
        %3052 = vmatpush1.bf16.xpose.msra.mxu0 0
        %3053 = vmatprep.subr.bf16.mxu0 0
        %3054 = vmatpush1.bf16.xpose.msra.mxu0 0
        %3055 = vmatprep.subr.bf16.mxu0 0
        %3056 = vmatpush1.bf16.xpose.msra.mxu0 0
        %3057 = vmatprep.subr.bf16.mxu0 0
        %3058 = vmatpush1.bf16.xpose.msra.mxu0 0
        %3059 = vmatprep.subr.bf16.mxu0 0
        %3060 = vmatpush1.bf16.xpose.msra.mxu0 0
        %3061 = vmatprep.subr.bf16.mxu0 0
        %3062 = vmatpush1.bf16.xpose.msra.mxu0 0
        %3063 = vmatprep.subr.bf16.mxu0 0
        %3064 = vmatpush1.bf16.xpose.msra.mxu0 0
        %3065 = vmatprep.subr.bf16.mxu0 0
        %3066 = vmatpush1.bf16.xpose.msra.mxu0 0
        %3067 = vmatprep.subr.bf16.mxu0 0
        %3068 = vmatpush1.bf16.xpose.msra.mxu0 0
        %3069 = vmatprep.subr.bf16.mxu0 0
        %3070 = vmatpush1.bf16.xpose.msra.mxu0 0
        %3071 = vmatprep.subr.bf16.mxu0 0
        %3072 = vmatpush1.bf16.xpose.msra.mxu0 0
        %3073 = vmatprep.subr.bf16.mxu0 0
        %3074 = vmatpush1.bf16.xpose.msra.mxu0 0
        %3075 = vmatprep.mubr.bf16.mxu0 0
        %3076 = vmatmul.mubr.bf16.gmra.mrb[0].mxu0 %v3038
        %v3077 = vpop.f32.mrb[0].mxu0
        %v3078 = vadd.f32 0.0, %v3077
        %v3079 = vpop.f32.mrb[0].mxu0
        %v3080 = vpop.f32.mrb[0].mxu0
        %v3081 = vpop.f32.mrb[0].mxu0
        %3082 = vdwg.mxu0
        %v3084 = vsel %vm602, %v2975, 0
        %v3087 = vsel %vm602, %v2989, 0
        %3089 = vmatprep.subr.bf16.mxu0 0
        %3090 = vmatpush1.bf16.xpose.msra.mxu0 %v3087
        %3091 = vmatprep.subr.bf16.mxu0 0
        %3092 = vmatpush1.bf16.xpose.msra.mxu0 0
        %3093 = vmatprep.subr.bf16.mxu0 0
        %3094 = vmatpush1.bf16.xpose.msra.mxu0 0
        %3095 = vmatprep.subr.bf16.mxu0 0
        %3096 = vmatpush1.bf16.xpose.msra.mxu0 0
        %3097 = vmatprep.subr.bf16.mxu0 0
        %3098 = vmatpush1.bf16.xpose.msra.mxu0 0
        %3099 = vmatprep.subr.bf16.mxu0 0
        %3100 = vmatpush1.bf16.xpose.msra.mxu0 0
        %3101 = vmatprep.subr.bf16.mxu0 0
        %3102 = vmatpush1.bf16.xpose.msra.mxu0 0
        %3103 = vmatprep.subr.bf16.mxu0 0
        %3104 = vmatpush1.bf16.xpose.msra.mxu0 0
        %3105 = vmatprep.subr.bf16.mxu0 0
        %3106 = vmatpush1.bf16.xpose.msra.mxu0 0
        %3107 = vmatprep.subr.bf16.mxu0 0
        %3108 = vmatpush1.bf16.xpose.msra.mxu0 0
        %3109 = vmatprep.subr.bf16.mxu0 0
        %3110 = vmatpush1.bf16.xpose.msra.mxu0 0
        %3111 = vmatprep.subr.bf16.mxu0 0
        %3112 = vmatpush1.bf16.xpose.msra.mxu0 0
        %3113 = vmatprep.subr.bf16.mxu0 0
        %3114 = vmatpush1.bf16.xpose.msra.mxu0 0
        %3115 = vmatprep.subr.bf16.mxu0 0
        %3116 = vmatpush1.bf16.xpose.msra.mxu0 0
        %3117 = vmatprep.subr.bf16.mxu0 0
        %3118 = vmatpush1.bf16.xpose.msra.mxu0 0
        %3119 = vmatprep.subr.bf16.mxu0 0
        %3120 = vmatpush1.bf16.xpose.msra.mxu0 0
        %3121 = vmatprep.mubr.bf16.mxu0 0
        %3122 = vmatmul.mubr.bf16.gmra.mrb[0].mxu0 %v3084
        %v3123 = vpop.f32.mrb[0].mxu0
        %v3124 = vadd.f32 0.0, %v3123
        %v3125 = vpop.f32.mrb[0].mxu0
        %v3126 = vpop.f32.mrb[0].mxu0
        %v3127 = vpop.f32.mrb[0].mxu0
        %3128 = vdwg.mxu0
        %v3130 = vsel %vm602, %v2976, 0
        %v3133 = vsel %vm602, %v2990, 0
        %3135 = vmatprep.subr.bf16.mxu0 0
        %3136 = vmatpush1.bf16.xpose.msra.mxu0 %v3133
        %3137 = vmatprep.subr.bf16.mxu0 0
        %3138 = vmatpush1.bf16.xpose.msra.mxu0 0
        %3139 = vmatprep.subr.bf16.mxu0 0
        %3140 = vmatpush1.bf16.xpose.msra.mxu0 0
        %3141 = vmatprep.subr.bf16.mxu0 0
        %3142 = vmatpush1.bf16.xpose.msra.mxu0 0
        %3143 = vmatprep.subr.bf16.mxu0 0
        %3144 = vmatpush1.bf16.xpose.msra.mxu0 0
        %3145 = vmatprep.subr.bf16.mxu0 0
        %3146 = vmatpush1.bf16.xpose.msra.mxu0 0
        %3147 = vmatprep.subr.bf16.mxu0 0
        %3148 = vmatpush1.bf16.xpose.msra.mxu0 0
        %3149 = vmatprep.subr.bf16.mxu0 0
        %3150 = vmatpush1.bf16.xpose.msra.mxu0 0
        %3151 = vmatprep.subr.bf16.mxu0 0
        %3152 = vmatpush1.bf16.xpose.msra.mxu0 0
        %3153 = vmatprep.subr.bf16.mxu0 0
        %3154 = vmatpush1.bf16.xpose.msra.mxu0 0
        %3155 = vmatprep.subr.bf16.mxu0 0
        %3156 = vmatpush1.bf16.xpose.msra.mxu0 0
        %3157 = vmatprep.subr.bf16.mxu0 0
        %3158 = vmatpush1.bf16.xpose.msra.mxu0 0
        %3159 = vmatprep.subr.bf16.mxu0 0
        %3160 = vmatpush1.bf16.xpose.msra.mxu0 0
        %3161 = vmatprep.subr.bf16.mxu0 0
        %3162 = vmatpush1.bf16.xpose.msra.mxu0 0
        %3163 = vmatprep.subr.bf16.mxu0 0
        %3164 = vmatpush1.bf16.xpose.msra.mxu0 0
        %3165 = vmatprep.subr.bf16.mxu0 0
        %3166 = vmatpush1.bf16.xpose.msra.mxu0 0
        %3167 = vmatprep.mubr.bf16.mxu0 0
        %3168 = vmatmul.mubr.bf16.gmra.mrb[0].mxu0 %v3130
        %v3169 = vpop.f32.mrb[0].mxu0
        %v3170 = vadd.f32 0.0, %v3169
        %v3171 = vpop.f32.mrb[0].mxu0
        %v3172 = vpop.f32.mrb[0].mxu0
        %v3173 = vpop.f32.mrb[0].mxu0
        %3174 = vdwg.mxu0
        %v3175 = vmul.f32 %v3032, 0.35355338
        %v3176 = vmul.f32 %v3078, 0.35355338
        %v3177 = vmul.f32 %v3124, 0.35355338
        %v3178 = vmul.f32 %v3170, 0.35355338
        %v3179 = vadd.f32 %v3175, %v804
        %v3180 = vadd.f32 %v3176, %v804
        %v3181 = vadd.f32 %v3177, %v804
        %v3182 = vadd.f32 %v3178, %v804
        %v3183 = vsel %vm602, %v3179, -inf
        %3184 = vmax.xlane.f32.xlu0 %v3183
        %v3185 = vpop.xlane.xlu0 %3184
        %v3186 = vsel %vm602, %v3180, -inf
        %3187 = vmax.xlane.f32.xlu0 %v3186
        %v3188 = vpop.xlane.xlu0 %3187
        %v3189 = vsel %vm602, %v3181, -inf
        %3190 = vmax.xlane.f32.xlu0 %v3189
        %v3191 = vpop.xlane.xlu0 %3190
        %v3192 = vsel %vm602, %v3182, -inf
        %3193 = vmax.xlane.f32.xlu0 %v3192
        %v3194 = vpop.xlane.xlu0 %3193
        %v3195 = vsub.f32 %v3179, %v3185
        %v3196 = vsub.f32 %v3180, %v3188
        %v3197 = vsub.f32 %v3181, %v3191
        %v3198 = vsub.f32 %v3182, %v3194
        %v3199 = vmul.f32 %v3195, 1.442695
        %v3200 = vpow.pop %v3199
        %v3201 = vmul.f32 %v3196, 1.442695
        %v3202 = vpow.pop %v3201
        %v3203 = vmul.f32 %v3197, 1.442695
        %v3204 = vpow.pop %v3203
        %v3205 = vmul.f32 %v3198, 1.442695
        %v3206 = vpow.pop %v3205
        %v3207 = vsel %vm602, %v3200, 0.0
        %3208 = vadd.xlane.f32.xlu0 %v3207
        %v3209 = vpop.xlane.xlu0 %3208
        %v3210 = vsel %vm602, %v3202, 0.0
        %3211 = vadd.xlane.f32.xlu0 %v3210
        %v3212 = vpop.xlane.xlu0 %3211
        %v3213 = vsel %vm602, %v3204, 0.0
        %3214 = vadd.xlane.f32.xlu0 %v3213
        %v3215 = vpop.xlane.xlu0 %3214
        %v3216 = vsel %vm602, %v3206, 0.0
        %3217 = vadd.xlane.f32.xlu0 %v3216
        %v3218 = vpop.xlane.xlu0 %3217
        %v3219 = vrcp.pop %v3209
        %v3220 = vrcp.pop %v3212
        %v3221 = vrcp.pop %v3215
        %v3222 = vrcp.pop %v3218
        %v3223 = vmul.f32 %v3200, %v3219
        %v3224 = vmul.f32 %v3202, %v3220
        %v3225 = vmul.f32 %v3204, %v3221
        %v3226 = vmul.f32 %v3206, %v3222
        %v3227 = vpack.c.bf16 %v3223, %v3223
        %v3228 = vpack.c.bf16 %v3224, %v3224
        %v3229 = vpack.c.bf16 %v3225, %v3225
        %v3230 = vpack.c.bf16 %v3226, %v3226
        %3232 = vrot.lane.b32.xlu0 %v2987, 96
        %v3233 = vpop.permute.xlu0 %3232
        %v3235 = vsel %vm602, %v3227, 0
        %v3238 = vsel %vm863, %v3233, 0
        %3240 = vmatprep.subr.bf16.mxu0 0
        %3241 = vmatpush1.bf16.msra.mxu0 %v3238
        %3242 = vmatprep.subr.bf16.mxu0 0
        %3243 = vmatpush1.bf16.msra.mxu0 0
        %3244 = vmatprep.subr.bf16.mxu0 0
        %3245 = vmatpush1.bf16.msra.mxu0 0
        %3246 = vmatprep.subr.bf16.mxu0 0
        %3247 = vmatpush1.bf16.msra.mxu0 0
        %3248 = vmatprep.subr.bf16.mxu0 0
        %3249 = vmatpush1.bf16.msra.mxu0 0
        %3250 = vmatprep.subr.bf16.mxu0 0
        %3251 = vmatpush1.bf16.msra.mxu0 0
        %3252 = vmatprep.subr.bf16.mxu0 0
        %3253 = vmatpush1.bf16.msra.mxu0 0
        %3254 = vmatprep.subr.bf16.mxu0 0
        %3255 = vmatpush1.bf16.msra.mxu0 0
        %3256 = vmatprep.subr.bf16.mxu0 0
        %3257 = vmatpush1.bf16.msra.mxu0 0
        %3258 = vmatprep.subr.bf16.mxu0 0
        %3259 = vmatpush1.bf16.msra.mxu0 0
        %3260 = vmatprep.subr.bf16.mxu0 0
        %3261 = vmatpush1.bf16.msra.mxu0 0
        %3262 = vmatprep.subr.bf16.mxu0 0
        %3263 = vmatpush1.bf16.msra.mxu0 0
        %3264 = vmatprep.subr.bf16.mxu0 0
        %3265 = vmatpush1.bf16.msra.mxu0 0
        %3266 = vmatprep.subr.bf16.mxu0 0
        %3267 = vmatpush1.bf16.msra.mxu0 0
        %3268 = vmatprep.subr.bf16.mxu0 0
        %3269 = vmatpush1.bf16.msra.mxu0 0
        %3270 = vmatprep.subr.bf16.mxu0 0
        %3271 = vmatpush1.bf16.msra.mxu0 0
        %3272 = vmatprep.mubr.bf16.mxu0 0
        %3273 = vmatmul.mubr.bf16.gmra.mrb[0].mxu0 %v3235
        %v3274 = vpop.f32.mrb[0].mxu0
        %v3275 = vadd.f32 0.0, %v3274
        %v3276 = vpop.f32.mrb[0].mxu0
        %v3277 = vpop.f32.mrb[0].mxu0
        %v3278 = vpop.f32.mrb[0].mxu0
        %3279 = vdwg.mxu0
        %3281 = vrot.lane.b32.xlu0 %v2988, 96
        %v3282 = vpop.permute.xlu0 %3281
        %v3284 = vsel %vm602, %v3228, 0
        %v3287 = vsel %vm863, %v3282, 0
        %3289 = vmatprep.subr.bf16.mxu0 0
        %3290 = vmatpush1.bf16.msra.mxu0 %v3287
        %3291 = vmatprep.subr.bf16.mxu0 0
        %3292 = vmatpush1.bf16.msra.mxu0 0
        %3293 = vmatprep.subr.bf16.mxu0 0
        %3294 = vmatpush1.bf16.msra.mxu0 0
        %3295 = vmatprep.subr.bf16.mxu0 0
        %3296 = vmatpush1.bf16.msra.mxu0 0
        %3297 = vmatprep.subr.bf16.mxu0 0
        %3298 = vmatpush1.bf16.msra.mxu0 0
        %3299 = vmatprep.subr.bf16.mxu0 0
        %3300 = vmatpush1.bf16.msra.mxu0 0
        %3301 = vmatprep.subr.bf16.mxu0 0
        %3302 = vmatpush1.bf16.msra.mxu0 0
        %3303 = vmatprep.subr.bf16.mxu0 0
        %3304 = vmatpush1.bf16.msra.mxu0 0
        %3305 = vmatprep.subr.bf16.mxu0 0
        %3306 = vmatpush1.bf16.msra.mxu0 0
        %3307 = vmatprep.subr.bf16.mxu0 0
        %3308 = vmatpush1.bf16.msra.mxu0 0
        %3309 = vmatprep.subr.bf16.mxu0 0
        %3310 = vmatpush1.bf16.msra.mxu0 0
        %3311 = vmatprep.subr.bf16.mxu0 0
        %3312 = vmatpush1.bf16.msra.mxu0 0
        %3313 = vmatprep.subr.bf16.mxu0 0
        %3314 = vmatpush1.bf16.msra.mxu0 0
        %3315 = vmatprep.subr.bf16.mxu0 0
        %3316 = vmatpush1.bf16.msra.mxu0 0
        %3317 = vmatprep.subr.bf16.mxu0 0
        %3318 = vmatpush1.bf16.msra.mxu0 0
        %3319 = vmatprep.subr.bf16.mxu0 0
        %3320 = vmatpush1.bf16.msra.mxu0 0
        %3321 = vmatprep.mubr.bf16.mxu0 0
        %3322 = vmatmul.mubr.bf16.gmra.mrb[0].mxu0 %v3284
        %v3323 = vpop.f32.mrb[0].mxu0
        %v3324 = vadd.f32 0.0, %v3323
        %v3325 = vpop.f32.mrb[0].mxu0
        %v3326 = vpop.f32.mrb[0].mxu0
        %v3327 = vpop.f32.mrb[0].mxu0
        %3328 = vdwg.mxu0
        %3330 = vrot.lane.b32.xlu0 %v2989, 96
        %v3331 = vpop.permute.xlu0 %3330
        %v3333 = vsel %vm602, %v3229, 0
        %v3336 = vsel %vm863, %v3331, 0
        %3338 = vmatprep.subr.bf16.mxu0 0
        %3339 = vmatpush1.bf16.msra.mxu0 %v3336
        %3340 = vmatprep.subr.bf16.mxu0 0
        %3341 = vmatpush1.bf16.msra.mxu0 0
        %3342 = vmatprep.subr.bf16.mxu0 0
        %3343 = vmatpush1.bf16.msra.mxu0 0
        %3344 = vmatprep.subr.bf16.mxu0 0
        %3345 = vmatpush1.bf16.msra.mxu0 0
        %3346 = vmatprep.subr.bf16.mxu0 0
        %3347 = vmatpush1.bf16.msra.mxu0 0
        %3348 = vmatprep.subr.bf16.mxu0 0
        %3349 = vmatpush1.bf16.msra.mxu0 0
        %3350 = vmatprep.subr.bf16.mxu0 0
        %3351 = vmatpush1.bf16.msra.mxu0 0
        %3352 = vmatprep.subr.bf16.mxu0 0
        %3353 = vmatpush1.bf16.msra.mxu0 0
        %3354 = vmatprep.subr.bf16.mxu0 0
        %3355 = vmatpush1.bf16.msra.mxu0 0
        %3356 = vmatprep.subr.bf16.mxu0 0
        %3357 = vmatpush1.bf16.msra.mxu0 0
        %3358 = vmatprep.subr.bf16.mxu0 0
        %3359 = vmatpush1.bf16.msra.mxu0 0
        %3360 = vmatprep.subr.bf16.mxu0 0
        %3361 = vmatpush1.bf16.msra.mxu0 0
        %3362 = vmatprep.subr.bf16.mxu0 0
        %3363 = vmatpush1.bf16.msra.mxu0 0
        %3364 = vmatprep.subr.bf16.mxu0 0
        %3365 = vmatpush1.bf16.msra.mxu0 0
        %3366 = vmatprep.subr.bf16.mxu0 0
        %3367 = vmatpush1.bf16.msra.mxu0 0
        %3368 = vmatprep.subr.bf16.mxu0 0
        %3369 = vmatpush1.bf16.msra.mxu0 0
        %3370 = vmatprep.mubr.bf16.mxu0 0
        %3371 = vmatmul.mubr.bf16.gmra.mrb[0].mxu0 %v3333
        %v3372 = vpop.f32.mrb[0].mxu0
        %v3373 = vadd.f32 0.0, %v3372
        %v3374 = vpop.f32.mrb[0].mxu0
        %v3375 = vpop.f32.mrb[0].mxu0
        %v3376 = vpop.f32.mrb[0].mxu0
        %3377 = vdwg.mxu0
        %3379 = vrot.lane.b32.xlu0 %v2990, 96
        %v3380 = vpop.permute.xlu0 %3379
        %v3382 = vsel %vm602, %v3230, 0
        %v3385 = vsel %vm863, %v3380, 0
        %3387 = vmatprep.subr.bf16.mxu0 0
        %3388 = vmatpush1.bf16.msra.mxu0 %v3385
        %3389 = vmatprep.subr.bf16.mxu0 0
        %3390 = vmatpush1.bf16.msra.mxu0 0
        %3391 = vmatprep.subr.bf16.mxu0 0
        %3392 = vmatpush1.bf16.msra.mxu0 0
        %3393 = vmatprep.subr.bf16.mxu0 0
        %3394 = vmatpush1.bf16.msra.mxu0 0
        %3395 = vmatprep.subr.bf16.mxu0 0
        %3396 = vmatpush1.bf16.msra.mxu0 0
        %3397 = vmatprep.subr.bf16.mxu0 0
        %3398 = vmatpush1.bf16.msra.mxu0 0
        %3399 = vmatprep.subr.bf16.mxu0 0
        %3400 = vmatpush1.bf16.msra.mxu0 0
        %3401 = vmatprep.subr.bf16.mxu0 0
        %3402 = vmatpush1.bf16.msra.mxu0 0
        %3403 = vmatprep.subr.bf16.mxu0 0
        %3404 = vmatpush1.bf16.msra.mxu0 0
        %3405 = vmatprep.subr.bf16.mxu0 0
        %3406 = vmatpush1.bf16.msra.mxu0 0
        %3407 = vmatprep.subr.bf16.mxu0 0
        %3408 = vmatpush1.bf16.msra.mxu0 0
        %3409 = vmatprep.subr.bf16.mxu0 0
        %3410 = vmatpush1.bf16.msra.mxu0 0
        %3411 = vmatprep.subr.bf16.mxu0 0
        %3412 = vmatpush1.bf16.msra.mxu0 0
        %3413 = vmatprep.subr.bf16.mxu0 0
        %3414 = vmatpush1.bf16.msra.mxu0 0
        %3415 = vmatprep.subr.bf16.mxu0 0
        %3416 = vmatpush1.bf16.msra.mxu0 0
        %3417 = vmatprep.subr.bf16.mxu0 0
        %3418 = vmatpush1.bf16.msra.mxu0 0
        %3419 = vmatprep.mubr.bf16.mxu0 0
        %3420 = vmatmul.mubr.bf16.gmra.mrb[0].mxu0 %v3382
        %v3421 = vpop.f32.mrb[0].mxu0
        %v3422 = vadd.f32 0.0, %v3421
        %v3423 = vpop.f32.mrb[0].mxu0
        %v3424 = vpop.f32.mrb[0].mxu0
        %v3425 = vpop.f32.mrb[0].mxu0
        %3426 = vdwg.mxu0
        %3428 = vrot.lane.b32.xlu0 %v3324, 8
        %v3429 = vpop.permute.xlu0 %3428
        %3432 = vrot.lane.b32.xlu0 %v3373, 16
        %v3433 = vpop.permute.xlu0 %3432
        %3436 = vrot.lane.b32.xlu0 %v3422, 24
        %v3437 = vpop.permute.xlu0 %3436
        %v3439 = vsel %vm602, %v3275, %v3429
        %v3440 = vsel %vm324, %v3439, %v3433
        %v3441 = vsel %vm1065, %v3440, %v3437
        %v3442 = vpack.c.bf16 %v3441, %v3441
        %v3443 = vlaneseq
        %v3444 = vshrl.u32 %v3443, 7
        %v3445 = vsub.s32 0, %v3444
        %v3446 = vrot.slane %v2962, %v3445
        %3447 = vrot.lane.b32.xlu0 %v2860, 32
        %v3448 = vpop.permute.xlu0 %3447
        %3449 = vrot.lane.b32.xlu0 %v2861, 32
        %v3450 = vpop.permute.xlu0 %3449
        %v3454 = vsel %vm487, %v3442, 0
        %3456 = vmatprep.subr.bf16.mxu0 0
        %3457 = vmatpush1.bf16.msra.mxu0 %v3448
        %3458 = vmatprep.subr.bf16.mxu0 0
        %3459 = vmatpush1.bf16.msra.mxu0 %v3450
        %3460 = vmatprep.subr.bf16.mxu0 0
        %3461 = vmatpush1.bf16.msra.mxu0 0
        %3462 = vmatprep.subr.bf16.mxu0 0
        %3463 = vmatpush1.bf16.msra.mxu0 0
        %3464 = vmatprep.subr.bf16.mxu0 0
        %3465 = vmatpush1.bf16.msra.mxu0 0
        %3466 = vmatprep.subr.bf16.mxu0 0
        %3467 = vmatpush1.bf16.msra.mxu0 0
        %3468 = vmatprep.subr.bf16.mxu0 0
        %3469 = vmatpush1.bf16.msra.mxu0 0
        %3470 = vmatprep.subr.bf16.mxu0 0
        %3471 = vmatpush1.bf16.msra.mxu0 0
        %3472 = vmatprep.subr.bf16.mxu0 0
        %3473 = vmatpush1.bf16.msra.mxu0 0
        %3474 = vmatprep.subr.bf16.mxu0 0
        %3475 = vmatpush1.bf16.msra.mxu0 0
        %3476 = vmatprep.subr.bf16.mxu0 0
        %3477 = vmatpush1.bf16.msra.mxu0 0
        %3478 = vmatprep.subr.bf16.mxu0 0
        %3479 = vmatpush1.bf16.msra.mxu0 0
        %3480 = vmatprep.subr.bf16.mxu0 0
        %3481 = vmatpush1.bf16.msra.mxu0 0
        %3482 = vmatprep.subr.bf16.mxu0 0
        %3483 = vmatpush1.bf16.msra.mxu0 0
        %3484 = vmatprep.subr.bf16.mxu0 0
        %3485 = vmatpush1.bf16.msra.mxu0 0
        %3486 = vmatprep.subr.bf16.mxu0 0
        %3487 = vmatpush1.bf16.msra.mxu0 0
        %3488 = vmatprep.mubr.bf16.mxu0 0
        %3489 = vmatmul.mubr.bf16.gmra.mrb[0].mxu0 %v3454
        %v3490 = vpop.f32.mrb[0].mxu0
        %v3491 = vadd.f32 %v3446, %v3490
        %v3492 = vpop.f32.mrb[0].mxu0
        %v3493 = vpop.f32.mrb[0].mxu0
        %v3494 = vpop.f32.mrb[0].mxu0
        %3495 = vdwg.mxu0
        %v3496 = vadd.f32 %v2809, %v3491
        %v3497 = vld [vmem:[%s5 + $0x19] sm:$0x1]
        %v3498 = vld [vmem:[%s5 + $0x1a] sm:$0x1]
        %v3499 = vsel %vm487, %v3496, 0.0
        %3500 = vadd.xlane.f32.xlu0 %v3499
        %v3501 = vpop.xlane.xlu0 %3500
        %v3502 = vmul.f32 %v3501, %v491
        %v3503 = vsub.f32 %v3496, %v3502
        %v3504 = vmul.f32 %v3503, %v3503
        %v3505 = vsel %vm487, %v3504, 0.0
        %3506 = vadd.xlane.f32.xlu0 %v3505
        %v3507 = vpop.xlane.xlu0 %3506
        %v3508 = vmul.f32 %v3507, 0.032258064
        %v3509 = vlaneseq
        %v3510 = vshrl.u32 %v3509, 7
        %v3511 = vsub.s32 0, %v3510
        %v3512 = vrot.slane %v3497, %v3511
        %v3513 = vmul.f32 %v3512, %v3503
        %v3514 = vrsqrt.pop %v3508
        %v3515 = vmul.f32 %v3508, %v3514
        %vm3516 = vcmp.eq.f32.partialorder %v3508, inf
        %v3517 = vsel %vm3516, %v3508, %v3515
        %vm3518 = vcmp.eq.f32.partialorder %v3508, 0.0
        %v3519 = vand.u32 %v3508, 2147483648
        %v3520 = vsel %vm3518, %v3519, %v3517
        %v3521 = vadd.f32 %v3520, 1e-06
        %v3522 = vrcp.pop %v3521
        %v3523 = vmul.f32 %v3513, %v3522
        %v3524 = vlaneseq
        %v3525 = vshrl.u32 %v3524, 7
        %v3526 = vsub.s32 0, %v3525
        %v3527 = vrot.slane %v3498, %v3526
        %v3528 = vadd.f32 %v3523, %v3527
        %v3529 = vld [vmem:[%s3 + $0x14] sm:$0xf]
        %v3530 = vld [vmem:[%s3 + $0x34] sm:$0xf]
        %v3531 = vld [vmem:[%s3 + $0x54] sm:$0xf]
        %v3532 = vld [vmem:[%s3 + $0x74] sm:$0xf]
        %v3533 = vld [vmem:[%s5 + $0x1b] sm:$0x1]
        %v3534 = vpack.c.bf16 %v3528, %v3528
        %v3535 = vlaneseq
        %v3536 = vshrl.u32 %v3535, 7
        %v3537 = vsub.s32 0, %v3536
        %v3538 = vrot.slane %v3533, %v3537
        %v3543 = vunpack.c.l.b16 %v3529
        %v3544 = vunpack.c.l.b16 %v3530
        %v3545 = vunpack.c.l.b16 %v3531
        %v3546 = vunpack.c.l.b16 %v3532
        %v3547 = vpack.c.b16 %v3544, %v3543
        %v3548 = vpack.c.b16 %v3546, %v3545
        %v3552 = vsel %vm487, %v3534, 0
        %3554 = vmatprep.subr.bf16.mxu0 0
        %3555 = vmatpush1.bf16.msra.mxu0 %v3547
        %3556 = vmatprep.subr.bf16.mxu0 0
        %3557 = vmatpush1.bf16.msra.mxu0 %v3548
        %3558 = vmatprep.subr.bf16.mxu0 0
        %3559 = vmatpush1.bf16.msra.mxu0 0
        %3560 = vmatprep.subr.bf16.mxu0 0
        %3561 = vmatpush1.bf16.msra.mxu0 0
        %3562 = vmatprep.subr.bf16.mxu0 0
        %3563 = vmatpush1.bf16.msra.mxu0 0
        %3564 = vmatprep.subr.bf16.mxu0 0
        %3565 = vmatpush1.bf16.msra.mxu0 0
        %3566 = vmatprep.subr.bf16.mxu0 0
        %3567 = vmatpush1.bf16.msra.mxu0 0
        %3568 = vmatprep.subr.bf16.mxu0 0
        %3569 = vmatpush1.bf16.msra.mxu0 0
        %3570 = vmatprep.subr.bf16.mxu0 0
        %3571 = vmatpush1.bf16.msra.mxu0 0
        %3572 = vmatprep.subr.bf16.mxu0 0
        %3573 = vmatpush1.bf16.msra.mxu0 0
        %3574 = vmatprep.subr.bf16.mxu0 0
        %3575 = vmatpush1.bf16.msra.mxu0 0
        %3576 = vmatprep.subr.bf16.mxu0 0
        %3577 = vmatpush1.bf16.msra.mxu0 0
        %3578 = vmatprep.subr.bf16.mxu0 0
        %3579 = vmatpush1.bf16.msra.mxu0 0
        %3580 = vmatprep.subr.bf16.mxu0 0
        %3581 = vmatpush1.bf16.msra.mxu0 0
        %3582 = vmatprep.subr.bf16.mxu0 0
        %3583 = vmatpush1.bf16.msra.mxu0 0
        %3584 = vmatprep.subr.bf16.mxu0 0
        %3585 = vmatpush1.bf16.msra.mxu0 0
        %3586 = vmatprep.mubr.bf16.mxu0 0
        %3587 = vmatmul.mubr.bf16.gmra.mrb[0].mxu0 %v3552
        %v3588 = vpop.f32.mrb[0].mxu0
        %v3589 = vadd.f32 %v3538, %v3588
        %v3590 = vpop.f32.mrb[0].mxu0
        %v3591 = vpop.f32.mrb[0].mxu0
        %v3592 = vpop.f32.mrb[0].mxu0
        %3593 = vdwg.mxu0
        %v3594 = vmax.f32 %v3589, 0.0
        %v3595 = vld [vmem:[%s4] sm:$0xf]
        %v3596 = vld [vmem:[%s4 + $0x4] sm:$0xf]
        %v3597 = vld [vmem:[%s4 + $0x8] sm:$0xf]
        %v3598 = vld [vmem:[%s4 + $0xc] sm:$0xf]
        %v3599 = vld [vmem:[%s4 + $0x10] sm:$0xf]
        %v3600 = vld [vmem:[%s4 + $0x14] sm:$0xf]
        %v3601 = vld [vmem:[%s4 + $0x18] sm:$0xf]
        %v3602 = vld [vmem:[%s4 + $0x1c] sm:$0xf]
        %v3603 = vpack.c.bf16 %v3594, %v3594
        %v3604 = vld [vmem:[%s5 + $0x1c] sm:$0x1]
        %v3605 = vlaneseq
        %v3606 = vshrl.u32 %v3605, 7
        %v3607 = vsub.s32 0, %v3606
        %v3608 = vrot.slane %v3604, %v3607
        %v3617 = vunpack.c.l.b16 %v3595
        %v3618 = vunpack.c.l.b16 %v3596
        %v3619 = vunpack.c.l.b16 %v3597
        %v3620 = vunpack.c.l.b16 %v3598
        %v3621 = vunpack.c.l.b16 %v3599
        %v3622 = vunpack.c.l.b16 %v3600
        %v3623 = vunpack.c.l.b16 %v3601
        %v3624 = vunpack.c.l.b16 %v3602
        %v3625 = vpack.c.b16 %v3618, %v3617
        %v3626 = vpack.c.b16 %v3620, %v3619
        %v3627 = vpack.c.b16 %v3622, %v3621
        %v3628 = vpack.c.b16 %v3624, %v3623
        %3629 = vrot.lane.b32.xlu0 %v3625, 64
        %v3630 = vpop.permute.xlu0 %3629
        %3631 = vrot.lane.b32.xlu0 %v3626, 64
        %v3632 = vpop.permute.xlu0 %3631
        %3633 = vrot.lane.b32.xlu0 %v3627, 64
        %v3634 = vpop.permute.xlu0 %3633
        %3635 = vrot.lane.b32.xlu0 %v3628, 64
        %v3636 = vpop.permute.xlu0 %3635
        %v3642 = vsel %vm1258, %v3603, 0
        %3644 = vmatprep.subr.bf16.mxu0 0
        %3645 = vmatpush1.bf16.msra.mxu0 %v3630
        %3646 = vmatprep.subr.bf16.mxu0 0
        %3647 = vmatpush1.bf16.msra.mxu0 %v3632
        %3648 = vmatprep.subr.bf16.mxu0 0
        %3649 = vmatpush1.bf16.msra.mxu0 %v3634
        %3650 = vmatprep.subr.bf16.mxu0 0
        %3651 = vmatpush1.bf16.msra.mxu0 %v3636
        %3652 = vmatprep.subr.bf16.mxu0 0
        %3653 = vmatpush1.bf16.msra.mxu0 0
        %3654 = vmatprep.subr.bf16.mxu0 0
        %3655 = vmatpush1.bf16.msra.mxu0 0
        %3656 = vmatprep.subr.bf16.mxu0 0
        %3657 = vmatpush1.bf16.msra.mxu0 0
        %3658 = vmatprep.subr.bf16.mxu0 0
        %3659 = vmatpush1.bf16.msra.mxu0 0
        %3660 = vmatprep.subr.bf16.mxu0 0
        %3661 = vmatpush1.bf16.msra.mxu0 0
        %3662 = vmatprep.subr.bf16.mxu0 0
        %3663 = vmatpush1.bf16.msra.mxu0 0
        %3664 = vmatprep.subr.bf16.mxu0 0
        %3665 = vmatpush1.bf16.msra.mxu0 0
        %3666 = vmatprep.subr.bf16.mxu0 0
        %3667 = vmatpush1.bf16.msra.mxu0 0
        %3668 = vmatprep.subr.bf16.mxu0 0
        %3669 = vmatpush1.bf16.msra.mxu0 0
        %3670 = vmatprep.subr.bf16.mxu0 0
        %3671 = vmatpush1.bf16.msra.mxu0 0
        %3672 = vmatprep.subr.bf16.mxu0 0
        %3673 = vmatpush1.bf16.msra.mxu0 0
        %3674 = vmatprep.subr.bf16.mxu0 0
        %3675 = vmatpush1.bf16.msra.mxu0 0
        %3676 = vmatprep.mubr.bf16.mxu0 0
        %3677 = vmatmul.mubr.bf16.gmra.mrb[0].mxu0 %v3642
        %v3678 = vpop.f32.mrb[0].mxu0
        %v3679 = vadd.f32 %v3608, %v3678
        %v3680 = vpop.f32.mrb[0].mxu0
        %v3681 = vpop.f32.mrb[0].mxu0
        %v3682 = vpop.f32.mrb[0].mxu0
        %3683 = vdwg.mxu0
        %v3684 = vadd.f32 %v3496, %v3679
        %v3685 = vld [vmem:[%s5 + $0x1d] sm:$0x1]
        %v3686 = vld [vmem:[%s5 + $0x1e] sm:$0x1]
        %v3687 = vsel %vm487, %v3684, 0.0
        %3688 = vadd.xlane.f32.xlu0 %v3687
        %v3689 = vpop.xlane.xlu0 %3688
        %v3690 = vmul.f32 %v3689, %v491
        %v3691 = vsub.f32 %v3684, %v3690
        %v3692 = vmul.f32 %v3691, %v3691
        %v3693 = vsel %vm487, %v3692, 0.0
        %3694 = vadd.xlane.f32.xlu0 %v3693
        %v3695 = vpop.xlane.xlu0 %3694
        %v3696 = vmul.f32 %v3695, 0.032258064
        %v3697 = vlaneseq
        %v3698 = vshrl.u32 %v3697, 7
        %v3699 = vsub.s32 0, %v3698
        %v3700 = vrot.slane %v3685, %v3699
        %v3701 = vmul.f32 %v3700, %v3691
        %v3702 = vrsqrt.pop %v3696
        %v3703 = vmul.f32 %v3696, %v3702
        %vm3704 = vcmp.eq.f32.partialorder %v3696, inf
        %v3705 = vsel %vm3704, %v3696, %v3703
        %vm3706 = vcmp.eq.f32.partialorder %v3696, 0.0
        %v3707 = vand.u32 %v3696, 2147483648
        %v3708 = vsel %vm3706, %v3707, %v3705
        %v3709 = vadd.f32 %v3708, 1e-06
        %v3710 = vrcp.pop %v3709
        %v3711 = vmul.f32 %v3701, %v3710
        %v3712 = vlaneseq
        %v3713 = vshrl.u32 %v3712, 7
        %v3714 = vsub.s32 0, %v3713
        %v3715 = vrot.slane %v3686, %v3714
        %v3716 = vadd.f32 %v3711, %v3715
        %v3717 = vld [vmem:[%s3 + $0x14] sm:$0xff]
        %v3718 = vld [vmem:[%s3 + $0x34] sm:$0xff]
        %v3719 = vld [vmem:[%s3 + $0x54] sm:$0xff]
        %v3720 = vld [vmem:[%s3 + $0x74] sm:$0xff]
        %v3721 = vld [vmem:[%s5 + $0x1f] sm:$0x1]
        %v3722 = vpack.c.bf16 %v3716, %v3716
        %v3723 = vlaneseq
        %v3724 = vshrl.u32 %v3723, 7
        %v3725 = vsub.s32 0, %v3724
        %v3726 = vrot.slane %v3721, %v3725
        %v3731 = vunpack.c.l.b16 %v3717
        %v3732 = vunpack.c.h.b16 %v3717
        %v3733 = vunpack.c.l.b16 %v3718
        %v3734 = vunpack.c.h.b16 %v3718
        %v3735 = vunpack.c.l.b16 %v3719
        %v3736 = vunpack.c.h.b16 %v3719
        %v3737 = vunpack.c.l.b16 %v3720
        %v3738 = vunpack.c.h.b16 %v3720
        %v3739 = vpack.c.b16 %v3733, %v3731
        %v3740 = vpack.c.b16 %v3734, %v3732
        %v3741 = vpack.c.b16 %v3737, %v3735
        %v3742 = vpack.c.b16 %v3738, %v3736
        %3743 = vrot.lane.b32.xlu0 %v3739, 64
        %v3744 = vpop.permute.xlu0 %3743
        %3745 = vrot.lane.b32.xlu0 %v3740, 64
        %v3746 = vpop.permute.xlu0 %3745
        %3747 = vrot.lane.b32.xlu0 %v3741, 64
        %v3748 = vpop.permute.xlu0 %3747
        %3749 = vrot.lane.b32.xlu0 %v3742, 64
        %v3750 = vpop.permute.xlu0 %3749
        %v3751 = vsel %vm1369, %v3744, %v3746
        %v3752 = vsel %vm1369, %v3748, %v3750
        %v3756 = vsel %vm487, %v3722, 0
        %3758 = vmatprep.subr.bf16.mxu0 0
        %3759 = vmatpush1.bf16.msra.mxu0 %v3751
        %3760 = vmatprep.subr.bf16.mxu0 0
        %3761 = vmatpush1.bf16.msra.mxu0 %v3752
        %3762 = vmatprep.subr.bf16.mxu0 0
        %3763 = vmatpush1.bf16.msra.mxu0 0
        %3764 = vmatprep.subr.bf16.mxu0 0
        %3765 = vmatpush1.bf16.msra.mxu0 0
        %3766 = vmatprep.subr.bf16.mxu0 0
        %3767 = vmatpush1.bf16.msra.mxu0 0
        %3768 = vmatprep.subr.bf16.mxu0 0
        %3769 = vmatpush1.bf16.msra.mxu0 0
        %3770 = vmatprep.subr.bf16.mxu0 0
        %3771 = vmatpush1.bf16.msra.mxu0 0
        %3772 = vmatprep.subr.bf16.mxu0 0
        %3773 = vmatpush1.bf16.msra.mxu0 0
        %3774 = vmatprep.subr.bf16.mxu0 0
        %3775 = vmatpush1.bf16.msra.mxu0 0
        %3776 = vmatprep.subr.bf16.mxu0 0
        %3777 = vmatpush1.bf16.msra.mxu0 0
        %3778 = vmatprep.subr.bf16.mxu0 0
        %3779 = vmatpush1.bf16.msra.mxu0 0
        %3780 = vmatprep.subr.bf16.mxu0 0
        %3781 = vmatpush1.bf16.msra.mxu0 0
        %3782 = vmatprep.subr.bf16.mxu0 0
        %3783 = vmatpush1.bf16.msra.mxu0 0
        %3784 = vmatprep.subr.bf16.mxu0 0
        %3785 = vmatpush1.bf16.msra.mxu0 0
        %3786 = vmatprep.subr.bf16.mxu0 0
        %3787 = vmatpush1.bf16.msra.mxu0 0
        %3788 = vmatprep.subr.bf16.mxu0 0
        %3789 = vmatpush1.bf16.msra.mxu0 0
        %3790 = vmatprep.mubr.bf16.mxu0 0
        %3791 = vmatmul.mubr.bf16.gmra.mrb[0].mxu0 %v3756
        %v3792 = vpop.f32.mrb[0].mxu0
        %v3793 = vadd.f32 %v3726, %v3792
        %v3794 = vpop.f32.mrb[0].mxu0
        %v3795 = vpop.f32.mrb[0].mxu0
        %v3796 = vpop.f32.mrb[0].mxu0
        %3797 = vdwg.mxu0
        %v3798 = vld [vmem:[%s3 + $0x18] sm:$0xf]
        %v3799 = vld [vmem:[%s3 + $0x38] sm:$0xf]
        %v3800 = vld [vmem:[%s3 + $0x58] sm:$0xf]
        %v3801 = vld [vmem:[%s3 + $0x78] sm:$0xf]
        %v3802 = vld [vmem:[%s5 + $0x20] sm:$0x1]
        %3804 = vrot.lane.b32.xlu0 %v3793, 120
        %v3805 = vpop.permute.xlu0 %3804
        %3807 = vrot.lane.b32.xlu0 %v3793, 112
        %v3808 = vpop.permute.xlu0 %3807
        %3810 = vrot.lane.b32.xlu0 %v3793, 104
        %v3811 = vpop.permute.xlu0 %3810
        %v3813 = vpack.c.bf16 %v3793, %v3793
        %v3814 = vpack.c.bf16 %v3805, %v3805
        %v3815 = vpack.c.bf16 %v3808, %v3808
        %v3816 = vpack.c.bf16 %v3811, %v3811
        %3818 = vrot.lane.b32.xlu0 %v3813, 96
        %v3819 = vpop.permute.xlu0 %3818
        %v3821 = vsel %vm602, %v3813, 0
        %v3824 = vsel %vm602, %v3819, 0
        %3826 = vmatprep.subr.bf16.mxu0 0
        %3827 = vmatpush1.bf16.xpose.msra.mxu0 %v3824
        %3828 = vmatprep.subr.bf16.mxu0 0
        %3829 = vmatpush1.bf16.xpose.msra.mxu0 0
        %3830 = vmatprep.subr.bf16.mxu0 0
        %3831 = vmatpush1.bf16.xpose.msra.mxu0 0
        %3832 = vmatprep.subr.bf16.mxu0 0
        %3833 = vmatpush1.bf16.xpose.msra.mxu0 0
        %3834 = vmatprep.subr.bf16.mxu0 0
        %3835 = vmatpush1.bf16.xpose.msra.mxu0 0
        %3836 = vmatprep.subr.bf16.mxu0 0
        %3837 = vmatpush1.bf16.xpose.msra.mxu0 0
        %3838 = vmatprep.subr.bf16.mxu0 0
        %3839 = vmatpush1.bf16.xpose.msra.mxu0 0
        %3840 = vmatprep.subr.bf16.mxu0 0
        %3841 = vmatpush1.bf16.xpose.msra.mxu0 0
        %3842 = vmatprep.subr.bf16.mxu0 0
        %3843 = vmatpush1.bf16.xpose.msra.mxu0 0
        %3844 = vmatprep.subr.bf16.mxu0 0
        %3845 = vmatpush1.bf16.xpose.msra.mxu0 0
        %3846 = vmatprep.subr.bf16.mxu0 0
        %3847 = vmatpush1.bf16.xpose.msra.mxu0 0
        %3848 = vmatprep.subr.bf16.mxu0 0
        %3849 = vmatpush1.bf16.xpose.msra.mxu0 0
        %3850 = vmatprep.subr.bf16.mxu0 0
        %3851 = vmatpush1.bf16.xpose.msra.mxu0 0
        %3852 = vmatprep.subr.bf16.mxu0 0
        %3853 = vmatpush1.bf16.xpose.msra.mxu0 0
        %3854 = vmatprep.subr.bf16.mxu0 0
        %3855 = vmatpush1.bf16.xpose.msra.mxu0 0
        %3856 = vmatprep.subr.bf16.mxu0 0
        %3857 = vmatpush1.bf16.xpose.msra.mxu0 0
        %3858 = vmatprep.mubr.bf16.mxu0 0
        %3859 = vmatmul.mubr.bf16.gmra.mrb[0].mxu0 %v3821
        %v3860 = vpop.f32.mrb[0].mxu0
        %v3861 = vadd.f32 0.0, %v3860
        %v3862 = vpop.f32.mrb[0].mxu0
        %v3863 = vpop.f32.mrb[0].mxu0
        %v3864 = vpop.f32.mrb[0].mxu0
        %3865 = vdwg.mxu0
        %3867 = vrot.lane.b32.xlu0 %v3814, 96
        %v3868 = vpop.permute.xlu0 %3867
        %v3870 = vsel %vm602, %v3814, 0
        %v3873 = vsel %vm602, %v3868, 0
        %3875 = vmatprep.subr.bf16.mxu0 0
        %3876 = vmatpush1.bf16.xpose.msra.mxu0 %v3873
        %3877 = vmatprep.subr.bf16.mxu0 0
        %3878 = vmatpush1.bf16.xpose.msra.mxu0 0
        %3879 = vmatprep.subr.bf16.mxu0 0
        %3880 = vmatpush1.bf16.xpose.msra.mxu0 0
        %3881 = vmatprep.subr.bf16.mxu0 0
        %3882 = vmatpush1.bf16.xpose.msra.mxu0 0
        %3883 = vmatprep.subr.bf16.mxu0 0
        %3884 = vmatpush1.bf16.xpose.msra.mxu0 0
        %3885 = vmatprep.subr.bf16.mxu0 0
        %3886 = vmatpush1.bf16.xpose.msra.mxu0 0
        %3887 = vmatprep.subr.bf16.mxu0 0
        %3888 = vmatpush1.bf16.xpose.msra.mxu0 0
        %3889 = vmatprep.subr.bf16.mxu0 0
        %3890 = vmatpush1.bf16.xpose.msra.mxu0 0
        %3891 = vmatprep.subr.bf16.mxu0 0
        %3892 = vmatpush1.bf16.xpose.msra.mxu0 0
        %3893 = vmatprep.subr.bf16.mxu0 0
        %3894 = vmatpush1.bf16.xpose.msra.mxu0 0
        %3895 = vmatprep.subr.bf16.mxu0 0
        %3896 = vmatpush1.bf16.xpose.msra.mxu0 0
        %3897 = vmatprep.subr.bf16.mxu0 0
        %3898 = vmatpush1.bf16.xpose.msra.mxu0 0
        %3899 = vmatprep.subr.bf16.mxu0 0
        %3900 = vmatpush1.bf16.xpose.msra.mxu0 0
        %3901 = vmatprep.subr.bf16.mxu0 0
        %3902 = vmatpush1.bf16.xpose.msra.mxu0 0
        %3903 = vmatprep.subr.bf16.mxu0 0
        %3904 = vmatpush1.bf16.xpose.msra.mxu0 0
        %3905 = vmatprep.subr.bf16.mxu0 0
        %3906 = vmatpush1.bf16.xpose.msra.mxu0 0
        %3907 = vmatprep.mubr.bf16.mxu0 0
        %3908 = vmatmul.mubr.bf16.gmra.mrb[0].mxu0 %v3870
        %v3909 = vpop.f32.mrb[0].mxu0
        %v3910 = vadd.f32 0.0, %v3909
        %v3911 = vpop.f32.mrb[0].mxu0
        %v3912 = vpop.f32.mrb[0].mxu0
        %v3913 = vpop.f32.mrb[0].mxu0
        %3914 = vdwg.mxu0
        %3916 = vrot.lane.b32.xlu0 %v3815, 96
        %v3917 = vpop.permute.xlu0 %3916
        %v3919 = vsel %vm602, %v3815, 0
        %v3922 = vsel %vm602, %v3917, 0
        %3924 = vmatprep.subr.bf16.mxu0 0
        %3925 = vmatpush1.bf16.xpose.msra.mxu0 %v3922
        %3926 = vmatprep.subr.bf16.mxu0 0
        %3927 = vmatpush1.bf16.xpose.msra.mxu0 0
        %3928 = vmatprep.subr.bf16.mxu0 0
        %3929 = vmatpush1.bf16.xpose.msra.mxu0 0
        %3930 = vmatprep.subr.bf16.mxu0 0
        %3931 = vmatpush1.bf16.xpose.msra.mxu0 0
        %3932 = vmatprep.subr.bf16.mxu0 0
        %3933 = vmatpush1.bf16.xpose.msra.mxu0 0
        %3934 = vmatprep.subr.bf16.mxu0 0
        %3935 = vmatpush1.bf16.xpose.msra.mxu0 0
        %3936 = vmatprep.subr.bf16.mxu0 0
        %3937 = vmatpush1.bf16.xpose.msra.mxu0 0
        %3938 = vmatprep.subr.bf16.mxu0 0
        %3939 = vmatpush1.bf16.xpose.msra.mxu0 0
        %3940 = vmatprep.subr.bf16.mxu0 0
        %3941 = vmatpush1.bf16.xpose.msra.mxu0 0
        %3942 = vmatprep.subr.bf16.mxu0 0
        %3943 = vmatpush1.bf16.xpose.msra.mxu0 0
        %3944 = vmatprep.subr.bf16.mxu0 0
        %3945 = vmatpush1.bf16.xpose.msra.mxu0 0
        %3946 = vmatprep.subr.bf16.mxu0 0
        %3947 = vmatpush1.bf16.xpose.msra.mxu0 0
        %3948 = vmatprep.subr.bf16.mxu0 0
        %3949 = vmatpush1.bf16.xpose.msra.mxu0 0
        %3950 = vmatprep.subr.bf16.mxu0 0
        %3951 = vmatpush1.bf16.xpose.msra.mxu0 0
        %3952 = vmatprep.subr.bf16.mxu0 0
        %3953 = vmatpush1.bf16.xpose.msra.mxu0 0
        %3954 = vmatprep.subr.bf16.mxu0 0
        %3955 = vmatpush1.bf16.xpose.msra.mxu0 0
        %3956 = vmatprep.mubr.bf16.mxu0 0
        %3957 = vmatmul.mubr.bf16.gmra.mrb[0].mxu0 %v3919
        %v3958 = vpop.f32.mrb[0].mxu0
        %v3959 = vadd.f32 0.0, %v3958
        %v3960 = vpop.f32.mrb[0].mxu0
        %v3961 = vpop.f32.mrb[0].mxu0
        %v3962 = vpop.f32.mrb[0].mxu0
        %3963 = vdwg.mxu0
        %3965 = vrot.lane.b32.xlu0 %v3816, 96
        %v3966 = vpop.permute.xlu0 %3965
        %v3968 = vsel %vm602, %v3816, 0
        %v3971 = vsel %vm602, %v3966, 0
        %3973 = vmatprep.subr.bf16.mxu0 0
        %3974 = vmatpush1.bf16.xpose.msra.mxu0 %v3971
        %3975 = vmatprep.subr.bf16.mxu0 0
        %3976 = vmatpush1.bf16.xpose.msra.mxu0 0
        %3977 = vmatprep.subr.bf16.mxu0 0
        %3978 = vmatpush1.bf16.xpose.msra.mxu0 0
        %3979 = vmatprep.subr.bf16.mxu0 0
        %3980 = vmatpush1.bf16.xpose.msra.mxu0 0
        %3981 = vmatprep.subr.bf16.mxu0 0
        %3982 = vmatpush1.bf16.xpose.msra.mxu0 0
        %3983 = vmatprep.subr.bf16.mxu0 0
        %3984 = vmatpush1.bf16.xpose.msra.mxu0 0
        %3985 = vmatprep.subr.bf16.mxu0 0
        %3986 = vmatpush1.bf16.xpose.msra.mxu0 0
        %3987 = vmatprep.subr.bf16.mxu0 0
        %3988 = vmatpush1.bf16.xpose.msra.mxu0 0
        %3989 = vmatprep.subr.bf16.mxu0 0
        %3990 = vmatpush1.bf16.xpose.msra.mxu0 0
        %3991 = vmatprep.subr.bf16.mxu0 0
        %3992 = vmatpush1.bf16.xpose.msra.mxu0 0
        %3993 = vmatprep.subr.bf16.mxu0 0
        %3994 = vmatpush1.bf16.xpose.msra.mxu0 0
        %3995 = vmatprep.subr.bf16.mxu0 0
        %3996 = vmatpush1.bf16.xpose.msra.mxu0 0
        %3997 = vmatprep.subr.bf16.mxu0 0
        %3998 = vmatpush1.bf16.xpose.msra.mxu0 0
        %3999 = vmatprep.subr.bf16.mxu0 0
        %4000 = vmatpush1.bf16.xpose.msra.mxu0 0
        %4001 = vmatprep.subr.bf16.mxu0 0
        %4002 = vmatpush1.bf16.xpose.msra.mxu0 0
        %4003 = vmatprep.subr.bf16.mxu0 0
        %4004 = vmatpush1.bf16.xpose.msra.mxu0 0
        %4005 = vmatprep.mubr.bf16.mxu0 0
        %4006 = vmatmul.mubr.bf16.gmra.mrb[0].mxu0 %v3968
        %v4007 = vpop.f32.mrb[0].mxu0
        %v4008 = vadd.f32 0.0, %v4007
        %v4009 = vpop.f32.mrb[0].mxu0
        %v4010 = vpop.f32.mrb[0].mxu0
        %v4011 = vpop.f32.mrb[0].mxu0
        %4012 = vdwg.mxu0
        %v4013 = vmul.f32 %v3861, 0.35355338
        %v4014 = vmul.f32 %v3910, 0.35355338
        %v4015 = vmul.f32 %v3959, 0.35355338
        %v4016 = vmul.f32 %v4008, 0.35355338
        %v4017 = vadd.f32 %v4013, %v484
        %v4018 = vadd.f32 %v4014, %v484
        %v4019 = vadd.f32 %v4015, %v484
        %v4020 = vadd.f32 %v4016, %v484
        %v4021 = vsel %vm602, %v4017, -inf
        %4022 = vmax.xlane.f32.xlu0 %v4021
        %v4023 = vpop.xlane.xlu0 %4022
        %v4024 = vsel %vm602, %v4018, -inf
        %4025 = vmax.xlane.f32.xlu0 %v4024
        %v4026 = vpop.xlane.xlu0 %4025
        %v4027 = vsel %vm602, %v4019, -inf
        %4028 = vmax.xlane.f32.xlu0 %v4027
        %v4029 = vpop.xlane.xlu0 %4028
        %v4030 = vsel %vm602, %v4020, -inf
        %4031 = vmax.xlane.f32.xlu0 %v4030
        %v4032 = vpop.xlane.xlu0 %4031
        %v4033 = vsub.f32 %v4017, %v4023
        %v4034 = vsub.f32 %v4018, %v4026
        %v4035 = vsub.f32 %v4019, %v4029
        %v4036 = vsub.f32 %v4020, %v4032
        %v4037 = vmul.f32 %v4033, 1.442695
        %v4038 = vpow.pop %v4037
        %v4039 = vmul.f32 %v4034, 1.442695
        %v4040 = vpow.pop %v4039
        %v4041 = vmul.f32 %v4035, 1.442695
        %v4042 = vpow.pop %v4041
        %v4043 = vmul.f32 %v4036, 1.442695
        %v4044 = vpow.pop %v4043
        %v4045 = vsel %vm602, %v4038, 0.0
        %4046 = vadd.xlane.f32.xlu0 %v4045
        %v4047 = vpop.xlane.xlu0 %4046
        %v4048 = vsel %vm602, %v4040, 0.0
        %4049 = vadd.xlane.f32.xlu0 %v4048
        %v4050 = vpop.xlane.xlu0 %4049
        %v4051 = vsel %vm602, %v4042, 0.0
        %4052 = vadd.xlane.f32.xlu0 %v4051
        %v4053 = vpop.xlane.xlu0 %4052
        %v4054 = vsel %vm602, %v4044, 0.0
        %4055 = vadd.xlane.f32.xlu0 %v4054
        %v4056 = vpop.xlane.xlu0 %4055
        %v4057 = vrcp.pop %v4047
        %v4058 = vrcp.pop %v4050
        %v4059 = vrcp.pop %v4053
        %v4060 = vrcp.pop %v4056
        %v4061 = vmul.f32 %v4038, %v4057
        %v4062 = vmul.f32 %v4040, %v4058
        %v4063 = vmul.f32 %v4042, %v4059
        %v4064 = vmul.f32 %v4044, %v4060
        %v4065 = vpack.c.bf16 %v4061, %v4061
        %v4066 = vpack.c.bf16 %v4062, %v4062
        %v4067 = vpack.c.bf16 %v4063, %v4063
        %v4068 = vpack.c.bf16 %v4064, %v4064
        %4069 = vrot.lane.b32.xlu0 %v3813, 64
        %v4070 = vpop.permute.xlu0 %4069
        %v4072 = vsel %vm602, %v4065, 0
        %v4075 = vsel %vm863, %v4070, 0
        %4077 = vmatprep.subr.bf16.mxu0 0
        %4078 = vmatpush1.bf16.msra.mxu0 %v4075
        %4079 = vmatprep.subr.bf16.mxu0 0
        %4080 = vmatpush1.bf16.msra.mxu0 0
        %4081 = vmatprep.subr.bf16.mxu0 0
        %4082 = vmatpush1.bf16.msra.mxu0 0
        %4083 = vmatprep.subr.bf16.mxu0 0
        %4084 = vmatpush1.bf16.msra.mxu0 0
        %4085 = vmatprep.subr.bf16.mxu0 0
        %4086 = vmatpush1.bf16.msra.mxu0 0
        %4087 = vmatprep.subr.bf16.mxu0 0
        %4088 = vmatpush1.bf16.msra.mxu0 0
        %4089 = vmatprep.subr.bf16.mxu0 0
        %4090 = vmatpush1.bf16.msra.mxu0 0
        %4091 = vmatprep.subr.bf16.mxu0 0
        %4092 = vmatpush1.bf16.msra.mxu0 0
        %4093 = vmatprep.subr.bf16.mxu0 0
        %4094 = vmatpush1.bf16.msra.mxu0 0
        %4095 = vmatprep.subr.bf16.mxu0 0
        %4096 = vmatpush1.bf16.msra.mxu0 0
        %4097 = vmatprep.subr.bf16.mxu0 0
        %4098 = vmatpush1.bf16.msra.mxu0 0
        %4099 = vmatprep.subr.bf16.mxu0 0
        %4100 = vmatpush1.bf16.msra.mxu0 0
        %4101 = vmatprep.subr.bf16.mxu0 0
        %4102 = vmatpush1.bf16.msra.mxu0 0
        %4103 = vmatprep.subr.bf16.mxu0 0
        %4104 = vmatpush1.bf16.msra.mxu0 0
        %4105 = vmatprep.subr.bf16.mxu0 0
        %4106 = vmatpush1.bf16.msra.mxu0 0
        %4107 = vmatprep.subr.bf16.mxu0 0
        %4108 = vmatpush1.bf16.msra.mxu0 0
        %4109 = vmatprep.mubr.bf16.mxu0 0
        %4110 = vmatmul.mubr.bf16.gmra.mrb[0].mxu0 %v4072
        %v4111 = vpop.f32.mrb[0].mxu0
        %v4112 = vadd.f32 0.0, %v4111
        %v4113 = vpop.f32.mrb[0].mxu0
        %v4114 = vpop.f32.mrb[0].mxu0
        %v4115 = vpop.f32.mrb[0].mxu0
        %4116 = vdwg.mxu0
        %4117 = vrot.lane.b32.xlu0 %v3814, 64
        %v4118 = vpop.permute.xlu0 %4117
        %v4120 = vsel %vm602, %v4066, 0
        %v4123 = vsel %vm863, %v4118, 0
        %4125 = vmatprep.subr.bf16.mxu0 0
        %4126 = vmatpush1.bf16.msra.mxu0 %v4123
        %4127 = vmatprep.subr.bf16.mxu0 0
        %4128 = vmatpush1.bf16.msra.mxu0 0
        %4129 = vmatprep.subr.bf16.mxu0 0
        %4130 = vmatpush1.bf16.msra.mxu0 0
        %4131 = vmatprep.subr.bf16.mxu0 0
        %4132 = vmatpush1.bf16.msra.mxu0 0
        %4133 = vmatprep.subr.bf16.mxu0 0
        %4134 = vmatpush1.bf16.msra.mxu0 0
        %4135 = vmatprep.subr.bf16.mxu0 0
        %4136 = vmatpush1.bf16.msra.mxu0 0
        %4137 = vmatprep.subr.bf16.mxu0 0
        %4138 = vmatpush1.bf16.msra.mxu0 0
        %4139 = vmatprep.subr.bf16.mxu0 0
        %4140 = vmatpush1.bf16.msra.mxu0 0
        %4141 = vmatprep.subr.bf16.mxu0 0
        %4142 = vmatpush1.bf16.msra.mxu0 0
        %4143 = vmatprep.subr.bf16.mxu0 0
        %4144 = vmatpush1.bf16.msra.mxu0 0
        %4145 = vmatprep.subr.bf16.mxu0 0
        %4146 = vmatpush1.bf16.msra.mxu0 0
        %4147 = vmatprep.subr.bf16.mxu0 0
        %4148 = vmatpush1.bf16.msra.mxu0 0
        %4149 = vmatprep.subr.bf16.mxu0 0
        %4150 = vmatpush1.bf16.msra.mxu0 0
        %4151 = vmatprep.subr.bf16.mxu0 0
        %4152 = vmatpush1.bf16.msra.mxu0 0
        %4153 = vmatprep.subr.bf16.mxu0 0
        %4154 = vmatpush1.bf16.msra.mxu0 0
        %4155 = vmatprep.subr.bf16.mxu0 0
        %4156 = vmatpush1.bf16.msra.mxu0 0
        %4157 = vmatprep.mubr.bf16.mxu0 0
        %4158 = vmatmul.mubr.bf16.gmra.mrb[0].mxu0 %v4120
        %v4159 = vpop.f32.mrb[0].mxu0
        %v4160 = vadd.f32 0.0, %v4159
        %v4161 = vpop.f32.mrb[0].mxu0
        %v4162 = vpop.f32.mrb[0].mxu0
        %v4163 = vpop.f32.mrb[0].mxu0
        %4164 = vdwg.mxu0
        %4165 = vrot.lane.b32.xlu0 %v3815, 64
        %v4166 = vpop.permute.xlu0 %4165
        %v4168 = vsel %vm602, %v4067, 0
        %v4171 = vsel %vm863, %v4166, 0
        %4173 = vmatprep.subr.bf16.mxu0 0
        %4174 = vmatpush1.bf16.msra.mxu0 %v4171
        %4175 = vmatprep.subr.bf16.mxu0 0
        %4176 = vmatpush1.bf16.msra.mxu0 0
        %4177 = vmatprep.subr.bf16.mxu0 0
        %4178 = vmatpush1.bf16.msra.mxu0 0
        %4179 = vmatprep.subr.bf16.mxu0 0
        %4180 = vmatpush1.bf16.msra.mxu0 0
        %4181 = vmatprep.subr.bf16.mxu0 0
        %4182 = vmatpush1.bf16.msra.mxu0 0
        %4183 = vmatprep.subr.bf16.mxu0 0
        %4184 = vmatpush1.bf16.msra.mxu0 0
        %4185 = vmatprep.subr.bf16.mxu0 0
        %4186 = vmatpush1.bf16.msra.mxu0 0
        %4187 = vmatprep.subr.bf16.mxu0 0
        %4188 = vmatpush1.bf16.msra.mxu0 0
        %4189 = vmatprep.subr.bf16.mxu0 0
        %4190 = vmatpush1.bf16.msra.mxu0 0
        %4191 = vmatprep.subr.bf16.mxu0 0
        %4192 = vmatpush1.bf16.msra.mxu0 0
        %4193 = vmatprep.subr.bf16.mxu0 0
        %4194 = vmatpush1.bf16.msra.mxu0 0
        %4195 = vmatprep.subr.bf16.mxu0 0
        %4196 = vmatpush1.bf16.msra.mxu0 0
        %4197 = vmatprep.subr.bf16.mxu0 0
        %4198 = vmatpush1.bf16.msra.mxu0 0
        %4199 = vmatprep.subr.bf16.mxu0 0
        %4200 = vmatpush1.bf16.msra.mxu0 0
        %4201 = vmatprep.subr.bf16.mxu0 0
        %4202 = vmatpush1.bf16.msra.mxu0 0
        %4203 = vmatprep.subr.bf16.mxu0 0
        %4204 = vmatpush1.bf16.msra.mxu0 0
        %4205 = vmatprep.mubr.bf16.mxu0 0
        %4206 = vmatmul.mubr.bf16.gmra.mrb[0].mxu0 %v4168
        %v4207 = vpop.f32.mrb[0].mxu0
        %v4208 = vadd.f32 0.0, %v4207
        %v4209 = vpop.f32.mrb[0].mxu0
        %v4210 = vpop.f32.mrb[0].mxu0
        %v4211 = vpop.f32.mrb[0].mxu0
        %4212 = vdwg.mxu0
        %4213 = vrot.lane.b32.xlu0 %v3816, 64
        %v4214 = vpop.permute.xlu0 %4213
        %v4216 = vsel %vm602, %v4068, 0
        %v4219 = vsel %vm863, %v4214, 0
        %4221 = vmatprep.subr.bf16.mxu0 0
        %4222 = vmatpush1.bf16.msra.mxu0 %v4219
        %4223 = vmatprep.subr.bf16.mxu0 0
        %4224 = vmatpush1.bf16.msra.mxu0 0
        %4225 = vmatprep.subr.bf16.mxu0 0
        %4226 = vmatpush1.bf16.msra.mxu0 0
        %4227 = vmatprep.subr.bf16.mxu0 0
        %4228 = vmatpush1.bf16.msra.mxu0 0
        %4229 = vmatprep.subr.bf16.mxu0 0
        %4230 = vmatpush1.bf16.msra.mxu0 0
        %4231 = vmatprep.subr.bf16.mxu0 0
        %4232 = vmatpush1.bf16.msra.mxu0 0
        %4233 = vmatprep.subr.bf16.mxu0 0
        %4234 = vmatpush1.bf16.msra.mxu0 0
        %4235 = vmatprep.subr.bf16.mxu0 0
        %4236 = vmatpush1.bf16.msra.mxu0 0
        %4237 = vmatprep.subr.bf16.mxu0 0
        %4238 = vmatpush1.bf16.msra.mxu0 0
        %4239 = vmatprep.subr.bf16.mxu0 0
        %4240 = vmatpush1.bf16.msra.mxu0 0
        %4241 = vmatprep.subr.bf16.mxu0 0
        %4242 = vmatpush1.bf16.msra.mxu0 0
        %4243 = vmatprep.subr.bf16.mxu0 0
        %4244 = vmatpush1.bf16.msra.mxu0 0
        %4245 = vmatprep.subr.bf16.mxu0 0
        %4246 = vmatpush1.bf16.msra.mxu0 0
        %4247 = vmatprep.subr.bf16.mxu0 0
        %4248 = vmatpush1.bf16.msra.mxu0 0
        %4249 = vmatprep.subr.bf16.mxu0 0
        %4250 = vmatpush1.bf16.msra.mxu0 0
        %4251 = vmatprep.subr.bf16.mxu0 0
        %4252 = vmatpush1.bf16.msra.mxu0 0
        %4253 = vmatprep.mubr.bf16.mxu0 0
        %4254 = vmatmul.mubr.bf16.gmra.mrb[0].mxu0 %v4216
        %v4255 = vpop.f32.mrb[0].mxu0
        %v4256 = vadd.f32 0.0, %v4255
        %v4257 = vpop.f32.mrb[0].mxu0
        %v4258 = vpop.f32.mrb[0].mxu0
        %v4259 = vpop.f32.mrb[0].mxu0
        %4260 = vdwg.mxu0
        %4262 = vrot.lane.b32.xlu0 %v4160, 8
        %v4263 = vpop.permute.xlu0 %4262
        %4266 = vrot.lane.b32.xlu0 %v4208, 16
        %v4267 = vpop.permute.xlu0 %4266
        %4270 = vrot.lane.b32.xlu0 %v4256, 24
        %v4271 = vpop.permute.xlu0 %4270
        %v4273 = vsel %vm602, %v4112, %v4263
        %v4274 = vsel %vm324, %v4273, %v4267
        %v4275 = vsel %vm1065, %v4274, %v4271
        %v4276 = vpack.c.bf16 %v4275, %v4275
        %v4277 = vlaneseq
        %v4278 = vshrl.u32 %v4277, 7
        %v4279 = vsub.s32 0, %v4278
        %v4280 = vrot.slane %v3802, %v4279
        %v4285 = vunpack.c.l.b16 %v3798
        %v4286 = vunpack.c.l.b16 %v3799
        %v4287 = vunpack.c.l.b16 %v3800
        %v4288 = vunpack.c.l.b16 %v3801
        %v4289 = vpack.c.b16 %v4286, %v4285
        %v4290 = vpack.c.b16 %v4288, %v4287
        %4291 = vrot.lane.b32.xlu0 %v4289, 96
        %v4292 = vpop.permute.xlu0 %4291
        %4293 = vrot.lane.b32.xlu0 %v4290, 96
        %v4294 = vpop.permute.xlu0 %4293
        %v4298 = vsel %vm487, %v4276, 0
        %4300 = vmatprep.subr.bf16.mxu0 0
        %4301 = vmatpush1.bf16.msra.mxu0 %v4292
        %4302 = vmatprep.subr.bf16.mxu0 0
        %4303 = vmatpush1.bf16.msra.mxu0 %v4294
        %4304 = vmatprep.subr.bf16.mxu0 0
        %4305 = vmatpush1.bf16.msra.mxu0 0
        %4306 = vmatprep.subr.bf16.mxu0 0
        %4307 = vmatpush1.bf16.msra.mxu0 0
        %4308 = vmatprep.subr.bf16.mxu0 0
        %4309 = vmatpush1.bf16.msra.mxu0 0
        %4310 = vmatprep.subr.bf16.mxu0 0
        %4311 = vmatpush1.bf16.msra.mxu0 0
        %4312 = vmatprep.subr.bf16.mxu0 0
        %4313 = vmatpush1.bf16.msra.mxu0 0
        %4314 = vmatprep.subr.bf16.mxu0 0
        %4315 = vmatpush1.bf16.msra.mxu0 0
        %4316 = vmatprep.subr.bf16.mxu0 0
        %4317 = vmatpush1.bf16.msra.mxu0 0
        %4318 = vmatprep.subr.bf16.mxu0 0
        %4319 = vmatpush1.bf16.msra.mxu0 0
        %4320 = vmatprep.subr.bf16.mxu0 0
        %4321 = vmatpush1.bf16.msra.mxu0 0
        %4322 = vmatprep.subr.bf16.mxu0 0
        %4323 = vmatpush1.bf16.msra.mxu0 0
        %4324 = vmatprep.subr.bf16.mxu0 0
        %4325 = vmatpush1.bf16.msra.mxu0 0
        %4326 = vmatprep.subr.bf16.mxu0 0
        %4327 = vmatpush1.bf16.msra.mxu0 0
        %4328 = vmatprep.subr.bf16.mxu0 0
        %4329 = vmatpush1.bf16.msra.mxu0 0
        %4330 = vmatprep.subr.bf16.mxu0 0
        %4331 = vmatpush1.bf16.msra.mxu0 0
        %4332 = vmatprep.mubr.bf16.mxu0 0
        %4333 = vmatmul.mubr.bf16.gmra.mrb[0].mxu0 %v4298
        %v4334 = vpop.f32.mrb[0].mxu0
        %v4335 = vadd.f32 %v4280, %v4334
        %v4336 = vpop.f32.mrb[0].mxu0
        %v4337 = vpop.f32.mrb[0].mxu0
        %v4338 = vpop.f32.mrb[0].mxu0
        %4339 = vdwg.mxu0
        %v4340 = vadd.f32 %v3684, %v4335
        %v4341 = vld [vmem:[%s5 + $0x21] sm:$0x1]
        %v4342 = vld [vmem:[%s5 + $0x22] sm:$0x1]
        %v4343 = vsel %vm487, %v4340, 0.0
        %4344 = vadd.xlane.f32.xlu0 %v4343
        %v4345 = vpop.xlane.xlu0 %4344
        %v4346 = vmul.f32 %v4345, %v491
        %v4347 = vsub.f32 %v4340, %v4346
        %v4348 = vmul.f32 %v4347, %v4347
        %v4349 = vsel %vm487, %v4348, 0.0
        %4350 = vadd.xlane.f32.xlu0 %v4349
        %v4351 = vpop.xlane.xlu0 %4350
        %v4352 = vmul.f32 %v4351, 0.032258064
        %v4353 = vlaneseq
        %v4354 = vshrl.u32 %v4353, 7
        %v4355 = vsub.s32 0, %v4354
        %v4356 = vrot.slane %v4341, %v4355
        %v4357 = vmul.f32 %v4356, %v4347
        %v4358 = vrsqrt.pop %v4352
        %v4359 = vmul.f32 %v4352, %v4358
        %vm4360 = vcmp.eq.f32.partialorder %v4352, inf
        %v4361 = vsel %vm4360, %v4352, %v4359
        %vm4362 = vcmp.eq.f32.partialorder %v4352, 0.0
        %v4363 = vand.u32 %v4352, 2147483648
        %v4364 = vsel %vm4362, %v4363, %v4361
        %v4365 = vadd.f32 %v4364, 1e-06
        %v4366 = vrcp.pop %v4365
        %v4367 = vmul.f32 %v4357, %v4366
        %v4368 = vlaneseq
        %v4369 = vshrl.u32 %v4368, 7
        %v4370 = vsub.s32 0, %v4369
        %v4371 = vrot.slane %v4342, %v4370
        %v4372 = vadd.f32 %v4367, %v4371
        %v4373 = vld [vmem:[%s3 + $0x18] sm:$0xf]
        %v4374 = vld [vmem:[%s3 + $0x38] sm:$0xf]
        %v4375 = vld [vmem:[%s3 + $0x58] sm:$0xf]
        %v4376 = vld [vmem:[%s3 + $0x78] sm:$0xf]
        %v4377 = vld [vmem:[%s5 + $0x23] sm:$0x1]
        %v4378 = vpack.c.bf16 %v4372, %v4372
        %v4379 = vlaneseq
        %v4380 = vshrl.u32 %v4379, 7
        %v4381 = vsub.s32 0, %v4380
        %v4382 = vrot.slane %v4377, %v4381
        %v4387 = vunpack.c.l.b16 %v4373
        %v4388 = vunpack.c.l.b16 %v4374
        %v4389 = vunpack.c.l.b16 %v4375
        %v4390 = vunpack.c.l.b16 %v4376
        %v4391 = vpack.c.b16 %v4388, %v4387
        %v4392 = vpack.c.b16 %v4390, %v4389
        %4393 = vrot.lane.b32.xlu0 %v4391, 64
        %v4394 = vpop.permute.xlu0 %4393
        %4395 = vrot.lane.b32.xlu0 %v4392, 64
        %v4396 = vpop.permute.xlu0 %4395
        %v4400 = vsel %vm487, %v4378, 0
        %4402 = vmatprep.subr.bf16.mxu0 0
        %4403 = vmatpush1.bf16.msra.mxu0 %v4394
        %4404 = vmatprep.subr.bf16.mxu0 0
        %4405 = vmatpush1.bf16.msra.mxu0 %v4396
        %4406 = vmatprep.subr.bf16.mxu0 0
        %4407 = vmatpush1.bf16.msra.mxu0 0
        %4408 = vmatprep.subr.bf16.mxu0 0
        %4409 = vmatpush1.bf16.msra.mxu0 0
        %4410 = vmatprep.subr.bf16.mxu0 0
        %4411 = vmatpush1.bf16.msra.mxu0 0
        %4412 = vmatprep.subr.bf16.mxu0 0
        %4413 = vmatpush1.bf16.msra.mxu0 0
        %4414 = vmatprep.subr.bf16.mxu0 0
        %4415 = vmatpush1.bf16.msra.mxu0 0
        %4416 = vmatprep.subr.bf16.mxu0 0
        %4417 = vmatpush1.bf16.msra.mxu0 0
        %4418 = vmatprep.subr.bf16.mxu0 0
        %4419 = vmatpush1.bf16.msra.mxu0 0
        %4420 = vmatprep.subr.bf16.mxu0 0
        %4421 = vmatpush1.bf16.msra.mxu0 0
        %4422 = vmatprep.subr.bf16.mxu0 0
        %4423 = vmatpush1.bf16.msra.mxu0 0
        %4424 = vmatprep.subr.bf16.mxu0 0
        %4425 = vmatpush1.bf16.msra.mxu0 0
        %4426 = vmatprep.subr.bf16.mxu0 0
        %4427 = vmatpush1.bf16.msra.mxu0 0
        %4428 = vmatprep.subr.bf16.mxu0 0
        %4429 = vmatpush1.bf16.msra.mxu0 0
        %4430 = vmatprep.subr.bf16.mxu0 0
        %4431 = vmatpush1.bf16.msra.mxu0 0
        %4432 = vmatprep.subr.bf16.mxu0 0
        %4433 = vmatpush1.bf16.msra.mxu0 0
        %4434 = vmatprep.mubr.bf16.mxu0 0
        %4435 = vmatmul.mubr.bf16.gmra.mrb[0].mxu0 %v4400
        %v4436 = vpop.f32.mrb[0].mxu0
        %v4437 = vadd.f32 %v4382, %v4436
        %v4438 = vpop.f32.mrb[0].mxu0
        %v4439 = vpop.f32.mrb[0].mxu0
        %v4440 = vpop.f32.mrb[0].mxu0
        %4441 = vdwg.mxu0
        %v4442 = vld [vmem:[%s3 + $0x18] sm:$0xff]
        %v4443 = vld [vmem:[%s3 + $0x38] sm:$0xff]
        %v4444 = vld [vmem:[%s3 + $0x58] sm:$0xff]
        %v4445 = vld [vmem:[%s3 + $0x78] sm:$0xff]
        %v4446 = vld [vmem:[%s5 + $0x24] sm:$0x1]
        %v4447 = vlaneseq
        %v4448 = vshrl.u32 %v4447, 7
        %v4449 = vsub.s32 0, %v4448
        %v4450 = vrot.slane %v4446, %v4449
        %v4455 = vunpack.c.l.b16 %v4442
        %v4456 = vunpack.c.h.b16 %v4442
        %v4457 = vunpack.c.l.b16 %v4443
        %v4458 = vunpack.c.h.b16 %v4443
        %v4459 = vunpack.c.l.b16 %v4444
        %v4460 = vunpack.c.h.b16 %v4444
        %v4461 = vunpack.c.l.b16 %v4445
        %v4462 = vunpack.c.h.b16 %v4445
        %v4463 = vpack.c.b16 %v4457, %v4455
        %v4464 = vpack.c.b16 %v4458, %v4456
        %v4465 = vpack.c.b16 %v4461, %v4459
        %v4466 = vpack.c.b16 %v4462, %v4460
        %4467 = vrot.lane.b32.xlu0 %v4463, 32
        %v4468 = vpop.permute.xlu0 %4467
        %4469 = vrot.lane.b32.xlu0 %v4464, 32
        %v4470 = vpop.permute.xlu0 %4469
        %4471 = vrot.lane.b32.xlu0 %v4465, 32
        %v4472 = vpop.permute.xlu0 %4471
        %4473 = vrot.lane.b32.xlu0 %v4466, 32
        %v4474 = vpop.permute.xlu0 %4473
        %vm4475 = vcmask 261120
        %v4476 = vsel %vm4475, %v4468, %v4470
        %v4477 = vsel %vm4475, %v4472, %v4474
        %4480 = vmatprep.subr.bf16.mxu0 0
        %4481 = vmatpush1.bf16.msra.mxu0 %v4476
        %4482 = vmatprep.subr.bf16.mxu0 0
        %4483 = vmatpush1.bf16.msra.mxu0 %v4477
        %4484 = vmatprep.subr.bf16.mxu0 0
        %4485 = vmatpush1.bf16.msra.mxu0 0
        %4486 = vmatprep.subr.bf16.mxu0 0
        %4487 = vmatpush1.bf16.msra.mxu0 0
        %4488 = vmatprep.subr.bf16.mxu0 0
        %4489 = vmatpush1.bf16.msra.mxu0 0
        %4490 = vmatprep.subr.bf16.mxu0 0
        %4491 = vmatpush1.bf16.msra.mxu0 0
        %4492 = vmatprep.subr.bf16.mxu0 0
        %4493 = vmatpush1.bf16.msra.mxu0 0
        %4494 = vmatprep.subr.bf16.mxu0 0
        %4495 = vmatpush1.bf16.msra.mxu0 0
        %4496 = vmatprep.subr.bf16.mxu0 0
        %4497 = vmatpush1.bf16.msra.mxu0 0
        %4498 = vmatprep.subr.bf16.mxu0 0
        %4499 = vmatpush1.bf16.msra.mxu0 0
        %4500 = vmatprep.subr.bf16.mxu0 0
        %4501 = vmatpush1.bf16.msra.mxu0 0
        %4502 = vmatprep.subr.bf16.mxu0 0
        %4503 = vmatpush1.bf16.msra.mxu0 0
        %4504 = vmatprep.subr.bf16.mxu0 0
        %4505 = vmatpush1.bf16.msra.mxu0 0
        %4506 = vmatprep.subr.bf16.mxu0 0
        %4507 = vmatpush1.bf16.msra.mxu0 0
        %4508 = vmatprep.subr.bf16.mxu0 0
        %4509 = vmatpush1.bf16.msra.mxu0 0
        %4510 = vmatprep.subr.bf16.mxu0 0
        %4511 = vmatpush1.bf16.msra.mxu0 0
        %4512 = vmatprep.mubr.bf16.mxu0 0
        %4513 = vmatmul.mubr.bf16.gmra.mrb[0].mxu0 %v2920
        %v4514 = vpop.f32.mrb[0].mxu0
        %v4515 = vadd.f32 %v4450, %v4514
        %v4516 = vpop.f32.mrb[0].mxu0
        %v4517 = vpop.f32.mrb[0].mxu0
        %v4518 = vpop.f32.mrb[0].mxu0
        %4519 = vdwg.mxu0
        %v4520 = vld [vmem:[%s3 + $0x1c] sm:$0xf]
        %v4521 = vld [vmem:[%s3 + $0x3c] sm:$0xf]
        %v4522 = vld [vmem:[%s3 + $0x5c] sm:$0xf]
        %v4523 = vld [vmem:[%s3 + $0x7c] sm:$0xf]
        %v4524 = vld [vmem:[%s5 + $0x25] sm:$0x1]
        %4526 = vrot.lane.b32.xlu0 %v4437, 120
        %v4527 = vpop.permute.xlu0 %4526
        %4529 = vrot.lane.b32.xlu0 %v4437, 112
        %v4530 = vpop.permute.xlu0 %4529
        %4532 = vrot.lane.b32.xlu0 %v4437, 104
        %v4533 = vpop.permute.xlu0 %4532
        %v4535 = vpack.c.bf16 %v4437, %v4437
        %v4536 = vpack.c.bf16 %v4527, %v4527
        %v4537 = vpack.c.bf16 %v4530, %v4530
        %v4538 = vpack.c.bf16 %v4533, %v4533
        %4540 = vrot.lane.b32.xlu0 %v4515, 120
        %v4541 = vpop.permute.xlu0 %4540
        %4543 = vrot.lane.b32.xlu0 %v4515, 112
        %v4544 = vpop.permute.xlu0 %4543
        %4546 = vrot.lane.b32.xlu0 %v4515, 104
        %v4547 = vpop.permute.xlu0 %4546
        %v4549 = vpack.c.bf16 %v4515, %v4515
        %v4550 = vpack.c.bf16 %v4541, %v4541
        %v4551 = vpack.c.bf16 %v4544, %v4544
        %v4552 = vpack.c.bf16 %v4547, %v4547
        %v4554 = vsel %vm602, %v4535, 0
        %v4557 = vsel %vm602, %v4549, 0
        %4559 = vmatprep.subr.bf16.mxu0 0
        %4560 = vmatpush1.bf16.xpose.msra.mxu0 %v4557
        %4561 = vmatprep.subr.bf16.mxu0 0
        %4562 = vmatpush1.bf16.xpose.msra.mxu0 0
        %4563 = vmatprep.subr.bf16.mxu0 0
        %4564 = vmatpush1.bf16.xpose.msra.mxu0 0
        %4565 = vmatprep.subr.bf16.mxu0 0
        %4566 = vmatpush1.bf16.xpose.msra.mxu0 0
        %4567 = vmatprep.subr.bf16.mxu0 0
        %4568 = vmatpush1.bf16.xpose.msra.mxu0 0
        %4569 = vmatprep.subr.bf16.mxu0 0
        %4570 = vmatpush1.bf16.xpose.msra.mxu0 0
        %4571 = vmatprep.subr.bf16.mxu0 0
        %4572 = vmatpush1.bf16.xpose.msra.mxu0 0
        %4573 = vmatprep.subr.bf16.mxu0 0
        %4574 = vmatpush1.bf16.xpose.msra.mxu0 0
        %4575 = vmatprep.subr.bf16.mxu0 0
        %4576 = vmatpush1.bf16.xpose.msra.mxu0 0
        %4577 = vmatprep.subr.bf16.mxu0 0
        %4578 = vmatpush1.bf16.xpose.msra.mxu0 0
        %4579 = vmatprep.subr.bf16.mxu0 0
        %4580 = vmatpush1.bf16.xpose.msra.mxu0 0
        %4581 = vmatprep.subr.bf16.mxu0 0
        %4582 = vmatpush1.bf16.xpose.msra.mxu0 0
        %4583 = vmatprep.subr.bf16.mxu0 0
        %4584 = vmatpush1.bf16.xpose.msra.mxu0 0
        %4585 = vmatprep.subr.bf16.mxu0 0
        %4586 = vmatpush1.bf16.xpose.msra.mxu0 0
        %4587 = vmatprep.subr.bf16.mxu0 0
        %4588 = vmatpush1.bf16.xpose.msra.mxu0 0
        %4589 = vmatprep.subr.bf16.mxu0 0
        %4590 = vmatpush1.bf16.xpose.msra.mxu0 0
        %4591 = vmatprep.mubr.bf16.mxu0 0
        %4592 = vmatmul.mubr.bf16.gmra.mrb[0].mxu0 %v4554
        %v4593 = vpop.f32.mrb[0].mxu0
        %v4594 = vadd.f32 0.0, %v4593
        %v4595 = vpop.f32.mrb[0].mxu0
        %v4596 = vpop.f32.mrb[0].mxu0
        %v4597 = vpop.f32.mrb[0].mxu0
        %4598 = vdwg.mxu0
        %v4600 = vsel %vm602, %v4536, 0
        %v4603 = vsel %vm602, %v4550, 0
        %4605 = vmatprep.subr.bf16.mxu0 0
        %4606 = vmatpush1.bf16.xpose.msra.mxu0 %v4603
        %4607 = vmatprep.subr.bf16.mxu0 0
        %4608 = vmatpush1.bf16.xpose.msra.mxu0 0
        %4609 = vmatprep.subr.bf16.mxu0 0
        %4610 = vmatpush1.bf16.xpose.msra.mxu0 0
        %4611 = vmatprep.subr.bf16.mxu0 0
        %4612 = vmatpush1.bf16.xpose.msra.mxu0 0
        %4613 = vmatprep.subr.bf16.mxu0 0
        %4614 = vmatpush1.bf16.xpose.msra.mxu0 0
        %4615 = vmatprep.subr.bf16.mxu0 0
        %4616 = vmatpush1.bf16.xpose.msra.mxu0 0
        %4617 = vmatprep.subr.bf16.mxu0 0
        %4618 = vmatpush1.bf16.xpose.msra.mxu0 0
        %4619 = vmatprep.subr.bf16.mxu0 0
        %4620 = vmatpush1.bf16.xpose.msra.mxu0 0
        %4621 = vmatprep.subr.bf16.mxu0 0
        %4622 = vmatpush1.bf16.xpose.msra.mxu0 0
        %4623 = vmatprep.subr.bf16.mxu0 0
        %4624 = vmatpush1.bf16.xpose.msra.mxu0 0
        %4625 = vmatprep.subr.bf16.mxu0 0
        %4626 = vmatpush1.bf16.xpose.msra.mxu0 0
        %4627 = vmatprep.subr.bf16.mxu0 0
        %4628 = vmatpush1.bf16.xpose.msra.mxu0 0
        %4629 = vmatprep.subr.bf16.mxu0 0
        %4630 = vmatpush1.bf16.xpose.msra.mxu0 0
        %4631 = vmatprep.subr.bf16.mxu0 0
        %4632 = vmatpush1.bf16.xpose.msra.mxu0 0
        %4633 = vmatprep.subr.bf16.mxu0 0
        %4634 = vmatpush1.bf16.xpose.msra.mxu0 0
        %4635 = vmatprep.subr.bf16.mxu0 0
        %4636 = vmatpush1.bf16.xpose.msra.mxu0 0
        %4637 = vmatprep.mubr.bf16.mxu0 0
        %4638 = vmatmul.mubr.bf16.gmra.mrb[0].mxu0 %v4600
        %v4639 = vpop.f32.mrb[0].mxu0
        %v4640 = vadd.f32 0.0, %v4639
        %v4641 = vpop.f32.mrb[0].mxu0
        %v4642 = vpop.f32.mrb[0].mxu0
        %v4643 = vpop.f32.mrb[0].mxu0
        %4644 = vdwg.mxu0
        %v4646 = vsel %vm602, %v4537, 0
        %v4649 = vsel %vm602, %v4551, 0
        %4651 = vmatprep.subr.bf16.mxu0 0
        %4652 = vmatpush1.bf16.xpose.msra.mxu0 %v4649
        %4653 = vmatprep.subr.bf16.mxu0 0
        %4654 = vmatpush1.bf16.xpose.msra.mxu0 0
        %4655 = vmatprep.subr.bf16.mxu0 0
        %4656 = vmatpush1.bf16.xpose.msra.mxu0 0
        %4657 = vmatprep.subr.bf16.mxu0 0
        %4658 = vmatpush1.bf16.xpose.msra.mxu0 0
        %4659 = vmatprep.subr.bf16.mxu0 0
        %4660 = vmatpush1.bf16.xpose.msra.mxu0 0
        %4661 = vmatprep.subr.bf16.mxu0 0
        %4662 = vmatpush1.bf16.xpose.msra.mxu0 0
        %4663 = vmatprep.subr.bf16.mxu0 0
        %4664 = vmatpush1.bf16.xpose.msra.mxu0 0
        %4665 = vmatprep.subr.bf16.mxu0 0
        %4666 = vmatpush1.bf16.xpose.msra.mxu0 0
        %4667 = vmatprep.subr.bf16.mxu0 0
        %4668 = vmatpush1.bf16.xpose.msra.mxu0 0
        %4669 = vmatprep.subr.bf16.mxu0 0
        %4670 = vmatpush1.bf16.xpose.msra.mxu0 0
        %4671 = vmatprep.subr.bf16.mxu0 0
        %4672 = vmatpush1.bf16.xpose.msra.mxu0 0
        %4673 = vmatprep.subr.bf16.mxu0 0
        %4674 = vmatpush1.bf16.xpose.msra.mxu0 0
        %4675 = vmatprep.subr.bf16.mxu0 0
        %4676 = vmatpush1.bf16.xpose.msra.mxu0 0
        %4677 = vmatprep.subr.bf16.mxu0 0
        %4678 = vmatpush1.bf16.xpose.msra.mxu0 0
        %4679 = vmatprep.subr.bf16.mxu0 0
        %4680 = vmatpush1.bf16.xpose.msra.mxu0 0
        %4681 = vmatprep.subr.bf16.mxu0 0
        %4682 = vmatpush1.bf16.xpose.msra.mxu0 0
        %4683 = vmatprep.mubr.bf16.mxu0 0
        %4684 = vmatmul.mubr.bf16.gmra.mrb[0].mxu0 %v4646
        %v4685 = vpop.f32.mrb[0].mxu0
        %v4686 = vadd.f32 0.0, %v4685
        %v4687 = vpop.f32.mrb[0].mxu0
        %v4688 = vpop.f32.mrb[0].mxu0
        %v4689 = vpop.f32.mrb[0].mxu0
        %4690 = vdwg.mxu0
        %v4692 = vsel %vm602, %v4538, 0
        %v4695 = vsel %vm602, %v4552, 0
        %4697 = vmatprep.subr.bf16.mxu0 0
        %4698 = vmatpush1.bf16.xpose.msra.mxu0 %v4695
        %4699 = vmatprep.subr.bf16.mxu0 0
        %4700 = vmatpush1.bf16.xpose.msra.mxu0 0
        %4701 = vmatprep.subr.bf16.mxu0 0
        %4702 = vmatpush1.bf16.xpose.msra.mxu0 0
        %4703 = vmatprep.subr.bf16.mxu0 0
        %4704 = vmatpush1.bf16.xpose.msra.mxu0 0
        %4705 = vmatprep.subr.bf16.mxu0 0
        %4706 = vmatpush1.bf16.xpose.msra.mxu0 0
        %4707 = vmatprep.subr.bf16.mxu0 0
        %4708 = vmatpush1.bf16.xpose.msra.mxu0 0
        %4709 = vmatprep.subr.bf16.mxu0 0
        %4710 = vmatpush1.bf16.xpose.msra.mxu0 0
        %4711 = vmatprep.subr.bf16.mxu0 0
        %4712 = vmatpush1.bf16.xpose.msra.mxu0 0
        %4713 = vmatprep.subr.bf16.mxu0 0
        %4714 = vmatpush1.bf16.xpose.msra.mxu0 0
        %4715 = vmatprep.subr.bf16.mxu0 0
        %4716 = vmatpush1.bf16.xpose.msra.mxu0 0
        %4717 = vmatprep.subr.bf16.mxu0 0
        %4718 = vmatpush1.bf16.xpose.msra.mxu0 0
        %4719 = vmatprep.subr.bf16.mxu0 0
        %4720 = vmatpush1.bf16.xpose.msra.mxu0 0
        %4721 = vmatprep.subr.bf16.mxu0 0
        %4722 = vmatpush1.bf16.xpose.msra.mxu0 0
        %4723 = vmatprep.subr.bf16.mxu0 0
        %4724 = vmatpush1.bf16.xpose.msra.mxu0 0
        %4725 = vmatprep.subr.bf16.mxu0 0
        %4726 = vmatpush1.bf16.xpose.msra.mxu0 0
        %4727 = vmatprep.subr.bf16.mxu0 0
        %4728 = vmatpush1.bf16.xpose.msra.mxu0 0
        %4729 = vmatprep.mubr.bf16.mxu0 0
        %4730 = vmatmul.mubr.bf16.gmra.mrb[0].mxu0 %v4692
        %v4731 = vpop.f32.mrb[0].mxu0
        %v4732 = vadd.f32 0.0, %v4731
        %v4733 = vpop.f32.mrb[0].mxu0
        %v4734 = vpop.f32.mrb[0].mxu0
        %v4735 = vpop.f32.mrb[0].mxu0
        %4736 = vdwg.mxu0
        %v4737 = vmul.f32 %v4594, 0.35355338
        %v4738 = vmul.f32 %v4640, 0.35355338
        %v4739 = vmul.f32 %v4686, 0.35355338
        %v4740 = vmul.f32 %v4732, 0.35355338
        %v4741 = vadd.f32 %v4737, %v804
        %v4742 = vadd.f32 %v4738, %v804
        %v4743 = vadd.f32 %v4739, %v804
        %v4744 = vadd.f32 %v4740, %v804
        %v4745 = vsel %vm602, %v4741, -inf
        %4746 = vmax.xlane.f32.xlu0 %v4745
        %v4747 = vpop.xlane.xlu0 %4746
        %v4748 = vsel %vm602, %v4742, -inf
        %4749 = vmax.xlane.f32.xlu0 %v4748
        %v4750 = vpop.xlane.xlu0 %4749
        %v4751 = vsel %vm602, %v4743, -inf
        %4752 = vmax.xlane.f32.xlu0 %v4751
        %v4753 = vpop.xlane.xlu0 %4752
        %v4754 = vsel %vm602, %v4744, -inf
        %4755 = vmax.xlane.f32.xlu0 %v4754
        %v4756 = vpop.xlane.xlu0 %4755
        %v4757 = vsub.f32 %v4741, %v4747
        %v4758 = vsub.f32 %v4742, %v4750
        %v4759 = vsub.f32 %v4743, %v4753
        %v4760 = vsub.f32 %v4744, %v4756
        %v4761 = vmul.f32 %v4757, 1.442695
        %v4762 = vpow.pop %v4761
        %v4763 = vmul.f32 %v4758, 1.442695
        %v4764 = vpow.pop %v4763
        %v4765 = vmul.f32 %v4759, 1.442695
        %v4766 = vpow.pop %v4765
        %v4767 = vmul.f32 %v4760, 1.442695
        %v4768 = vpow.pop %v4767
        %v4769 = vsel %vm602, %v4762, 0.0
        %4770 = vadd.xlane.f32.xlu0 %v4769
        %v4771 = vpop.xlane.xlu0 %4770
        %v4772 = vsel %vm602, %v4764, 0.0
        %4773 = vadd.xlane.f32.xlu0 %v4772
        %v4774 = vpop.xlane.xlu0 %4773
        %v4775 = vsel %vm602, %v4766, 0.0
        %4776 = vadd.xlane.f32.xlu0 %v4775
        %v4777 = vpop.xlane.xlu0 %4776
        %v4778 = vsel %vm602, %v4768, 0.0
        %4779 = vadd.xlane.f32.xlu0 %v4778
        %v4780 = vpop.xlane.xlu0 %4779
        %v4781 = vrcp.pop %v4771
        %v4782 = vrcp.pop %v4774
        %v4783 = vrcp.pop %v4777
        %v4784 = vrcp.pop %v4780
        %v4785 = vmul.f32 %v4762, %v4781
        %v4786 = vmul.f32 %v4764, %v4782
        %v4787 = vmul.f32 %v4766, %v4783
        %v4788 = vmul.f32 %v4768, %v4784
        %v4789 = vpack.c.bf16 %v4785, %v4785
        %v4790 = vpack.c.bf16 %v4786, %v4786
        %v4791 = vpack.c.bf16 %v4787, %v4787
        %v4792 = vpack.c.bf16 %v4788, %v4788
        %4794 = vrot.lane.b32.xlu0 %v4549, 96
        %v4795 = vpop.permute.xlu0 %4794
        %v4797 = vsel %vm602, %v4789, 0
        %v4800 = vsel %vm863, %v4795, 0
        %4802 = vmatprep.subr.bf16.mxu0 0
        %4803 = vmatpush1.bf16.msra.mxu0 %v4800
        %4804 = vmatprep.subr.bf16.mxu0 0
        %4805 = vmatpush1.bf16.msra.mxu0 0
        %4806 = vmatprep.subr.bf16.mxu0 0
        %4807 = vmatpush1.bf16.msra.mxu0 0
        %4808 = vmatprep.subr.bf16.mxu0 0
        %4809 = vmatpush1.bf16.msra.mxu0 0
        %4810 = vmatprep.subr.bf16.mxu0 0
        %4811 = vmatpush1.bf16.msra.mxu0 0
        %4812 = vmatprep.subr.bf16.mxu0 0
        %4813 = vmatpush1.bf16.msra.mxu0 0
        %4814 = vmatprep.subr.bf16.mxu0 0
        %4815 = vmatpush1.bf16.msra.mxu0 0
        %4816 = vmatprep.subr.bf16.mxu0 0
        %4817 = vmatpush1.bf16.msra.mxu0 0
        %4818 = vmatprep.subr.bf16.mxu0 0
        %4819 = vmatpush1.bf16.msra.mxu0 0
        %4820 = vmatprep.subr.bf16.mxu0 0
        %4821 = vmatpush1.bf16.msra.mxu0 0
        %4822 = vmatprep.subr.bf16.mxu0 0
        %4823 = vmatpush1.bf16.msra.mxu0 0
        %4824 = vmatprep.subr.bf16.mxu0 0
        %4825 = vmatpush1.bf16.msra.mxu0 0
        %4826 = vmatprep.subr.bf16.mxu0 0
        %4827 = vmatpush1.bf16.msra.mxu0 0
        %4828 = vmatprep.subr.bf16.mxu0 0
        %4829 = vmatpush1.bf16.msra.mxu0 0
        %4830 = vmatprep.subr.bf16.mxu0 0
        %4831 = vmatpush1.bf16.msra.mxu0 0
        %4832 = vmatprep.subr.bf16.mxu0 0
        %4833 = vmatpush1.bf16.msra.mxu0 0
        %4834 = vmatprep.mubr.bf16.mxu0 0
        %4835 = vmatmul.mubr.bf16.gmra.mrb[0].mxu0 %v4797
        %v4836 = vpop.f32.mrb[0].mxu0
        %v4837 = vadd.f32 0.0, %v4836
        %v4838 = vpop.f32.mrb[0].mxu0
        %v4839 = vpop.f32.mrb[0].mxu0
        %v4840 = vpop.f32.mrb[0].mxu0
        %4841 = vdwg.mxu0
        %4843 = vrot.lane.b32.xlu0 %v4550, 96
        %v4844 = vpop.permute.xlu0 %4843
        %v4846 = vsel %vm602, %v4790, 0
        %v4849 = vsel %vm863, %v4844, 0
        %4851 = vmatprep.subr.bf16.mxu0 0
        %4852 = vmatpush1.bf16.msra.mxu0 %v4849
        %4853 = vmatprep.subr.bf16.mxu0 0
        %4854 = vmatpush1.bf16.msra.mxu0 0
        %4855 = vmatprep.subr.bf16.mxu0 0
        %4856 = vmatpush1.bf16.msra.mxu0 0
        %4857 = vmatprep.subr.bf16.mxu0 0
        %4858 = vmatpush1.bf16.msra.mxu0 0
        %4859 = vmatprep.subr.bf16.mxu0 0
        %4860 = vmatpush1.bf16.msra.mxu0 0
        %4861 = vmatprep.subr.bf16.mxu0 0
        %4862 = vmatpush1.bf16.msra.mxu0 0
        %4863 = vmatprep.subr.bf16.mxu0 0
        %4864 = vmatpush1.bf16.msra.mxu0 0
        %4865 = vmatprep.subr.bf16.mxu0 0
        %4866 = vmatpush1.bf16.msra.mxu0 0
        %4867 = vmatprep.subr.bf16.mxu0 0
        %4868 = vmatpush1.bf16.msra.mxu0 0
        %4869 = vmatprep.subr.bf16.mxu0 0
        %4870 = vmatpush1.bf16.msra.mxu0 0
        %4871 = vmatprep.subr.bf16.mxu0 0
        %4872 = vmatpush1.bf16.msra.mxu0 0
        %4873 = vmatprep.subr.bf16.mxu0 0
        %4874 = vmatpush1.bf16.msra.mxu0 0
        %4875 = vmatprep.subr.bf16.mxu0 0
        %4876 = vmatpush1.bf16.msra.mxu0 0
        %4877 = vmatprep.subr.bf16.mxu0 0
        %4878 = vmatpush1.bf16.msra.mxu0 0
        %4879 = vmatprep.subr.bf16.mxu0 0
        %4880 = vmatpush1.bf16.msra.mxu0 0
        %4881 = vmatprep.subr.bf16.mxu0 0
        %4882 = vmatpush1.bf16.msra.mxu0 0
        %4883 = vmatprep.mubr.bf16.mxu0 0
        %4884 = vmatmul.mubr.bf16.gmra.mrb[0].mxu0 %v4846
        %v4885 = vpop.f32.mrb[0].mxu0
        %v4886 = vadd.f32 0.0, %v4885
        %v4887 = vpop.f32.mrb[0].mxu0
        %v4888 = vpop.f32.mrb[0].mxu0
        %v4889 = vpop.f32.mrb[0].mxu0
        %4890 = vdwg.mxu0
        %4892 = vrot.lane.b32.xlu0 %v4551, 96
        %v4893 = vpop.permute.xlu0 %4892
        %v4895 = vsel %vm602, %v4791, 0
        %v4898 = vsel %vm863, %v4893, 0
        %4900 = vmatprep.subr.bf16.mxu0 0
        %4901 = vmatpush1.bf16.msra.mxu0 %v4898
        %4902 = vmatprep.subr.bf16.mxu0 0
        %4903 = vmatpush1.bf16.msra.mxu0 0
        %4904 = vmatprep.subr.bf16.mxu0 0
        %4905 = vmatpush1.bf16.msra.mxu0 0
        %4906 = vmatprep.subr.bf16.mxu0 0
        %4907 = vmatpush1.bf16.msra.mxu0 0
        %4908 = vmatprep.subr.bf16.mxu0 0
        %4909 = vmatpush1.bf16.msra.mxu0 0
        %4910 = vmatprep.subr.bf16.mxu0 0
        %4911 = vmatpush1.bf16.msra.mxu0 0
        %4912 = vmatprep.subr.bf16.mxu0 0
        %4913 = vmatpush1.bf16.msra.mxu0 0
        %4914 = vmatprep.subr.bf16.mxu0 0
        %4915 = vmatpush1.bf16.msra.mxu0 0
        %4916 = vmatprep.subr.bf16.mxu0 0
        %4917 = vmatpush1.bf16.msra.mxu0 0
        %4918 = vmatprep.subr.bf16.mxu0 0
        %4919 = vmatpush1.bf16.msra.mxu0 0
        %4920 = vmatprep.subr.bf16.mxu0 0
        %4921 = vmatpush1.bf16.msra.mxu0 0
        %4922 = vmatprep.subr.bf16.mxu0 0
        %4923 = vmatpush1.bf16.msra.mxu0 0
        %4924 = vmatprep.subr.bf16.mxu0 0
        %4925 = vmatpush1.bf16.msra.mxu0 0
        %4926 = vmatprep.subr.bf16.mxu0 0
        %4927 = vmatpush1.bf16.msra.mxu0 0
        %4928 = vmatprep.subr.bf16.mxu0 0
        %4929 = vmatpush1.bf16.msra.mxu0 0
        %4930 = vmatprep.subr.bf16.mxu0 0
        %4931 = vmatpush1.bf16.msra.mxu0 0
        %4932 = vmatprep.mubr.bf16.mxu0 0
        %4933 = vmatmul.mubr.bf16.gmra.mrb[0].mxu0 %v4895
        %v4934 = vpop.f32.mrb[0].mxu0
        %v4935 = vadd.f32 0.0, %v4934
        %v4936 = vpop.f32.mrb[0].mxu0
        %v4937 = vpop.f32.mrb[0].mxu0
        %v4938 = vpop.f32.mrb[0].mxu0
        %4939 = vdwg.mxu0
        %4941 = vrot.lane.b32.xlu0 %v4552, 96
        %v4942 = vpop.permute.xlu0 %4941
        %v4944 = vsel %vm602, %v4792, 0
        %v4947 = vsel %vm863, %v4942, 0
        %4949 = vmatprep.subr.bf16.mxu0 0
        %4950 = vmatpush1.bf16.msra.mxu0 %v4947
        %4951 = vmatprep.subr.bf16.mxu0 0
        %4952 = vmatpush1.bf16.msra.mxu0 0
        %4953 = vmatprep.subr.bf16.mxu0 0
        %4954 = vmatpush1.bf16.msra.mxu0 0
        %4955 = vmatprep.subr.bf16.mxu0 0
        %4956 = vmatpush1.bf16.msra.mxu0 0
        %4957 = vmatprep.subr.bf16.mxu0 0
        %4958 = vmatpush1.bf16.msra.mxu0 0
        %4959 = vmatprep.subr.bf16.mxu0 0
        %4960 = vmatpush1.bf16.msra.mxu0 0
        %4961 = vmatprep.subr.bf16.mxu0 0
        %4962 = vmatpush1.bf16.msra.mxu0 0
        %4963 = vmatprep.subr.bf16.mxu0 0
        %4964 = vmatpush1.bf16.msra.mxu0 0
        %4965 = vmatprep.subr.bf16.mxu0 0
        %4966 = vmatpush1.bf16.msra.mxu0 0
        %4967 = vmatprep.subr.bf16.mxu0 0
        %4968 = vmatpush1.bf16.msra.mxu0 0
        %4969 = vmatprep.subr.bf16.mxu0 0
        %4970 = vmatpush1.bf16.msra.mxu0 0
        %4971 = vmatprep.subr.bf16.mxu0 0
        %4972 = vmatpush1.bf16.msra.mxu0 0
        %4973 = vmatprep.subr.bf16.mxu0 0
        %4974 = vmatpush1.bf16.msra.mxu0 0
        %4975 = vmatprep.subr.bf16.mxu0 0
        %4976 = vmatpush1.bf16.msra.mxu0 0
        %4977 = vmatprep.subr.bf16.mxu0 0
        %4978 = vmatpush1.bf16.msra.mxu0 0
        %4979 = vmatprep.subr.bf16.mxu0 0
        %4980 = vmatpush1.bf16.msra.mxu0 0
        %4981 = vmatprep.mubr.bf16.mxu0 0
        %4982 = vmatmul.mubr.bf16.gmra.mrb[0].mxu0 %v4944
        %v4983 = vpop.f32.mrb[0].mxu0
        %v4984 = vadd.f32 0.0, %v4983
        %v4985 = vpop.f32.mrb[0].mxu0
        %v4986 = vpop.f32.mrb[0].mxu0
        %v4987 = vpop.f32.mrb[0].mxu0
        %4988 = vdwg.mxu0
        %4990 = vrot.lane.b32.xlu0 %v4886, 8
        %v4991 = vpop.permute.xlu0 %4990
        %4994 = vrot.lane.b32.xlu0 %v4935, 16
        %v4995 = vpop.permute.xlu0 %4994
        %4998 = vrot.lane.b32.xlu0 %v4984, 24
        %v4999 = vpop.permute.xlu0 %4998
        %v5001 = vsel %vm602, %v4837, %v4991
        %v5002 = vsel %vm324, %v5001, %v4995
        %v5003 = vsel %vm1065, %v5002, %v4999
        %v5004 = vpack.c.bf16 %v5003, %v5003
        %v5005 = vlaneseq
        %v5006 = vshrl.u32 %v5005, 7
        %v5007 = vsub.s32 0, %v5006
        %v5008 = vrot.slane %v4524, %v5007
        %v5013 = vunpack.c.l.b16 %v4520
        %v5014 = vunpack.c.l.b16 %v4521
        %v5015 = vunpack.c.l.b16 %v4522
        %v5016 = vunpack.c.l.b16 %v4523
        %v5017 = vpack.c.b16 %v5014, %v5013
        %v5018 = vpack.c.b16 %v5016, %v5015
        %5019 = vrot.lane.b32.xlu0 %v5017, 96
        %v5020 = vpop.permute.xlu0 %5019
        %5021 = vrot.lane.b32.xlu0 %v5018, 96
        %v5022 = vpop.permute.xlu0 %5021
        %v5026 = vsel %vm487, %v5004, 0
        %5028 = vmatprep.subr.bf16.mxu0 0
        %5029 = vmatpush1.bf16.msra.mxu0 %v5020
        %5030 = vmatprep.subr.bf16.mxu0 0
        %5031 = vmatpush1.bf16.msra.mxu0 %v5022
        %5032 = vmatprep.subr.bf16.mxu0 0
        %5033 = vmatpush1.bf16.msra.mxu0 0
        %5034 = vmatprep.subr.bf16.mxu0 0
        %5035 = vmatpush1.bf16.msra.mxu0 0
        %5036 = vmatprep.subr.bf16.mxu0 0
        %5037 = vmatpush1.bf16.msra.mxu0 0
        %5038 = vmatprep.subr.bf16.mxu0 0
        %5039 = vmatpush1.bf16.msra.mxu0 0
        %5040 = vmatprep.subr.bf16.mxu0 0
        %5041 = vmatpush1.bf16.msra.mxu0 0
        %5042 = vmatprep.subr.bf16.mxu0 0
        %5043 = vmatpush1.bf16.msra.mxu0 0
        %5044 = vmatprep.subr.bf16.mxu0 0
        %5045 = vmatpush1.bf16.msra.mxu0 0
        %5046 = vmatprep.subr.bf16.mxu0 0
        %5047 = vmatpush1.bf16.msra.mxu0 0
        %5048 = vmatprep.subr.bf16.mxu0 0
        %5049 = vmatpush1.bf16.msra.mxu0 0
        %5050 = vmatprep.subr.bf16.mxu0 0
        %5051 = vmatpush1.bf16.msra.mxu0 0
        %5052 = vmatprep.subr.bf16.mxu0 0
        %5053 = vmatpush1.bf16.msra.mxu0 0
        %5054 = vmatprep.subr.bf16.mxu0 0
        %5055 = vmatpush1.bf16.msra.mxu0 0
        %5056 = vmatprep.subr.bf16.mxu0 0
        %5057 = vmatpush1.bf16.msra.mxu0 0
        %5058 = vmatprep.subr.bf16.mxu0 0
        %5059 = vmatpush1.bf16.msra.mxu0 0
        %5060 = vmatprep.mubr.bf16.mxu0 0
        %5061 = vmatmul.mubr.bf16.gmra.mrb[0].mxu0 %v5026
        %v5062 = vpop.f32.mrb[0].mxu0
        %v5063 = vadd.f32 %v5008, %v5062
        %v5064 = vpop.f32.mrb[0].mxu0
        %v5065 = vpop.f32.mrb[0].mxu0
        %v5066 = vpop.f32.mrb[0].mxu0
        %5067 = vdwg.mxu0
        %v5068 = vadd.f32 %v4340, %v5063
        %v5069 = vld [vmem:[%s5 + $0x26] sm:$0x1]
        %v5070 = vld [vmem:[%s5 + $0x27] sm:$0x1]
        %v5071 = vsel %vm487, %v5068, 0.0
        %5072 = vadd.xlane.f32.xlu0 %v5071
        %v5073 = vpop.xlane.xlu0 %5072
        %v5074 = vmul.f32 %v5073, %v491
        %v5075 = vsub.f32 %v5068, %v5074
        %v5076 = vmul.f32 %v5075, %v5075
        %v5077 = vsel %vm487, %v5076, 0.0
        %5078 = vadd.xlane.f32.xlu0 %v5077
        %v5079 = vpop.xlane.xlu0 %5078
        %v5080 = vmul.f32 %v5079, 0.032258064
        %v5081 = vlaneseq
        %v5082 = vshrl.u32 %v5081, 7
        %v5083 = vsub.s32 0, %v5082
        %v5084 = vrot.slane %v5069, %v5083
        %v5085 = vmul.f32 %v5084, %v5075
        %v5086 = vrsqrt.pop %v5080
        %v5087 = vmul.f32 %v5080, %v5086
        %vm5088 = vcmp.eq.f32.partialorder %v5080, inf
        %v5089 = vsel %vm5088, %v5080, %v5087
        %vm5090 = vcmp.eq.f32.partialorder %v5080, 0.0
        %v5091 = vand.u32 %v5080, 2147483648
        %v5092 = vsel %vm5090, %v5091, %v5089
        %v5093 = vadd.f32 %v5092, 1e-06
        %v5094 = vrcp.pop %v5093
        %v5095 = vmul.f32 %v5085, %v5094
        %v5096 = vlaneseq
        %v5097 = vshrl.u32 %v5096, 7
        %v5098 = vsub.s32 0, %v5097
        %v5099 = vrot.slane %v5070, %v5098
        %v5100 = vadd.f32 %v5095, %v5099
        %v5101 = vld [vmem:[%s3 + $0x1c] sm:$0xf]
        %v5102 = vld [vmem:[%s3 + $0x3c] sm:$0xf]
        %v5103 = vld [vmem:[%s3 + $0x5c] sm:$0xf]
        %v5104 = vld [vmem:[%s3 + $0x7c] sm:$0xf]
        %v5105 = vld [vmem:[%s5 + $0x28] sm:$0x1]
        %v5106 = vpack.c.bf16 %v5100, %v5100
        %v5107 = vlaneseq
        %v5108 = vshrl.u32 %v5107, 7
        %v5109 = vsub.s32 0, %v5108
        %v5110 = vrot.slane %v5105, %v5109
        %v5115 = vunpack.c.l.b16 %v5101
        %v5116 = vunpack.c.l.b16 %v5102
        %v5117 = vunpack.c.l.b16 %v5103
        %v5118 = vunpack.c.l.b16 %v5104
        %v5119 = vpack.c.b16 %v5116, %v5115
        %v5120 = vpack.c.b16 %v5118, %v5117
        %5121 = vrot.lane.b32.xlu0 %v5119, 64
        %v5122 = vpop.permute.xlu0 %5121
        %5123 = vrot.lane.b32.xlu0 %v5120, 64
        %v5124 = vpop.permute.xlu0 %5123
        %v5128 = vsel %vm487, %v5106, 0
        %5130 = vmatprep.subr.bf16.mxu0 0
        %5131 = vmatpush1.bf16.msra.mxu0 %v5122
        %5132 = vmatprep.subr.bf16.mxu0 0
        %5133 = vmatpush1.bf16.msra.mxu0 %v5124
        %5134 = vmatprep.subr.bf16.mxu0 0
        %5135 = vmatpush1.bf16.msra.mxu0 0
        %5136 = vmatprep.subr.bf16.mxu0 0
        %5137 = vmatpush1.bf16.msra.mxu0 0
        %5138 = vmatprep.subr.bf16.mxu0 0
        %5139 = vmatpush1.bf16.msra.mxu0 0
        %5140 = vmatprep.subr.bf16.mxu0 0
        %5141 = vmatpush1.bf16.msra.mxu0 0
        %5142 = vmatprep.subr.bf16.mxu0 0
        %5143 = vmatpush1.bf16.msra.mxu0 0
        %5144 = vmatprep.subr.bf16.mxu0 0
        %5145 = vmatpush1.bf16.msra.mxu0 0
        %5146 = vmatprep.subr.bf16.mxu0 0
        %5147 = vmatpush1.bf16.msra.mxu0 0
        %5148 = vmatprep.subr.bf16.mxu0 0
        %5149 = vmatpush1.bf16.msra.mxu0 0
        %5150 = vmatprep.subr.bf16.mxu0 0
        %5151 = vmatpush1.bf16.msra.mxu0 0
        %5152 = vmatprep.subr.bf16.mxu0 0
        %5153 = vmatpush1.bf16.msra.mxu0 0
        %5154 = vmatprep.subr.bf16.mxu0 0
        %5155 = vmatpush1.bf16.msra.mxu0 0
        %5156 = vmatprep.subr.bf16.mxu0 0
        %5157 = vmatpush1.bf16.msra.mxu0 0
        %5158 = vmatprep.subr.bf16.mxu0 0
        %5159 = vmatpush1.bf16.msra.mxu0 0
        %5160 = vmatprep.subr.bf16.mxu0 0
        %5161 = vmatpush1.bf16.msra.mxu0 0
        %5162 = vmatprep.mubr.bf16.mxu0 0
        %5163 = vmatmul.mubr.bf16.gmra.mrb[0].mxu0 %v5128
        %v5164 = vpop.f32.mrb[0].mxu0
        %v5165 = vadd.f32 %v5110, %v5164
        %v5166 = vpop.f32.mrb[0].mxu0
        %v5167 = vpop.f32.mrb[0].mxu0
        %v5168 = vpop.f32.mrb[0].mxu0
        %5169 = vdwg.mxu0
        %v5170 = vmax.f32 %v5165, 0.0
        %v5171 = vld [vmem:[%s4] sm:$0xf]
        %v5172 = vld [vmem:[%s4 + $0x4] sm:$0xf]
        %v5173 = vld [vmem:[%s4 + $0x8] sm:$0xf]
        %v5174 = vld [vmem:[%s4 + $0xc] sm:$0xf]
        %v5175 = vld [vmem:[%s4 + $0x10] sm:$0xf]
        %v5176 = vld [vmem:[%s4 + $0x14] sm:$0xf]
        %v5177 = vld [vmem:[%s4 + $0x18] sm:$0xf]
        %v5178 = vld [vmem:[%s4 + $0x1c] sm:$0xf]
        %v5179 = vpack.c.bf16 %v5170, %v5170
        %v5180 = vld [vmem:[%s5 + $0x29] sm:$0x1]
        %v5181 = vlaneseq
        %v5182 = vshrl.u32 %v5181, 7
        %v5183 = vsub.s32 0, %v5182
        %v5184 = vrot.slane %v5180, %v5183
        %v5193 = vunpack.c.l.b16 %v5171
        %v5194 = vunpack.c.l.b16 %v5172
        %v5195 = vunpack.c.l.b16 %v5173
        %v5196 = vunpack.c.l.b16 %v5174
        %v5197 = vunpack.c.l.b16 %v5175
        %v5198 = vunpack.c.l.b16 %v5176
        %v5199 = vunpack.c.l.b16 %v5177
        %v5200 = vunpack.c.l.b16 %v5178
        %v5201 = vpack.c.b16 %v5194, %v5193
        %v5202 = vpack.c.b16 %v5196, %v5195
        %v5203 = vpack.c.b16 %v5198, %v5197
        %v5204 = vpack.c.b16 %v5200, %v5199
        %5205 = vrot.lane.b32.xlu0 %v5201, 32
        %v5206 = vpop.permute.xlu0 %5205
        %5207 = vrot.lane.b32.xlu0 %v5202, 32
        %v5208 = vpop.permute.xlu0 %5207
        %5209 = vrot.lane.b32.xlu0 %v5203, 32
        %v5210 = vpop.permute.xlu0 %5209
        %5211 = vrot.lane.b32.xlu0 %v5204, 32
        %v5212 = vpop.permute.xlu0 %5211
        %v5218 = vsel %vm1258, %v5179, 0
        %5220 = vmatprep.subr.bf16.mxu0 0
        %5221 = vmatpush1.bf16.msra.mxu0 %v5206
        %5222 = vmatprep.subr.bf16.mxu0 0
        %5223 = vmatpush1.bf16.msra.mxu0 %v5208
        %5224 = vmatprep.subr.bf16.mxu0 0
        %5225 = vmatpush1.bf16.msra.mxu0 %v5210
        %5226 = vmatprep.subr.bf16.mxu0 0
        %5227 = vmatpush1.bf16.msra.mxu0 %v5212
        %5228 = vmatprep.subr.bf16.mxu0 0
        %5229 = vmatpush1.bf16.msra.mxu0 0
        %5230 = vmatprep.subr.bf16.mxu0 0
        %5231 = vmatpush1.bf16.msra.mxu0 0
        %5232 = vmatprep.subr.bf16.mxu0 0
        %5233 = vmatpush1.bf16.msra.mxu0 0
        %5234 = vmatprep.subr.bf16.mxu0 0
        %5235 = vmatpush1.bf16.msra.mxu0 0
        %5236 = vmatprep.subr.bf16.mxu0 0
        %5237 = vmatpush1.bf16.msra.mxu0 0
        %5238 = vmatprep.subr.bf16.mxu0 0
        %5239 = vmatpush1.bf16.msra.mxu0 0
        %5240 = vmatprep.subr.bf16.mxu0 0
        %5241 = vmatpush1.bf16.msra.mxu0 0
        %5242 = vmatprep.subr.bf16.mxu0 0
        %5243 = vmatpush1.bf16.msra.mxu0 0
        %5244 = vmatprep.subr.bf16.mxu0 0
        %5245 = vmatpush1.bf16.msra.mxu0 0
        %5246 = vmatprep.subr.bf16.mxu0 0
        %5247 = vmatpush1.bf16.msra.mxu0 0
        %5248 = vmatprep.subr.bf16.mxu0 0
        %5249 = vmatpush1.bf16.msra.mxu0 0
        %5250 = vmatprep.subr.bf16.mxu0 0
        %5251 = vmatpush1.bf16.msra.mxu0 0
        %5252 = vmatprep.mubr.bf16.mxu0 0
        %5253 = vmatmul.mubr.bf16.gmra.mrb[0].mxu0 %v5218
        %v5254 = vpop.f32.mrb[0].mxu0
        %v5255 = vadd.f32 %v5184, %v5254
        %v5256 = vpop.f32.mrb[0].mxu0
        %v5257 = vpop.f32.mrb[0].mxu0
        %v5258 = vpop.f32.mrb[0].mxu0
        %5259 = vdwg.mxu0
        %v5260 = vadd.f32 %v5068, %v5255
        %v5261 = vld [vmem:[%s5 + $0x2c] sm:$0x1]
        %v5262 = vld [vmem:[%s5 + $0x2d] sm:$0x1]
        %v5263 = vsel %vm487, %v5260, 0.0
        %5264 = vadd.xlane.f32.xlu0 %v5263
        %v5265 = vpop.xlane.xlu0 %5264
        %v5266 = vmul.f32 %v5265, %v491
        %v5267 = vsub.f32 %v5260, %v5266
        %v5268 = vmul.f32 %v5267, %v5267
        %v5269 = vsel %vm487, %v5268, 0.0
        %5270 = vadd.xlane.f32.xlu0 %v5269
        %v5271 = vpop.xlane.xlu0 %5270
        %v5272 = vmul.f32 %v5271, 0.032258064
        %v5273 = vlaneseq
        %v5274 = vshrl.u32 %v5273, 7
        %v5275 = vsub.s32 0, %v5274
        %v5276 = vrot.slane %v5261, %v5275
        %v5277 = vmul.f32 %v5276, %v5267
        %v5278 = vrsqrt.pop %v5272
        %v5279 = vmul.f32 %v5272, %v5278
        %vm5280 = vcmp.eq.f32.partialorder %v5272, inf
        %v5281 = vsel %vm5280, %v5272, %v5279
        %vm5282 = vcmp.eq.f32.partialorder %v5272, 0.0
        %v5283 = vand.u32 %v5272, 2147483648
        %v5284 = vsel %vm5282, %v5283, %v5281
        %v5285 = vadd.f32 %v5284, 1e-06
        %v5286 = vrcp.pop %v5285
        %v5287 = vmul.f32 %v5277, %v5286
        %v5288 = vlaneseq
        %v5289 = vshrl.u32 %v5288, 7
        %v5290 = vsub.s32 0, %v5289
        %v5291 = vrot.slane %v5262, %v5290
        %v5292 = vadd.f32 %v5287, %v5291
        %5293 = vst.msk [vmem:[%s293] sm:$0xff] %vm487, %v5292
        %s5294 = sand.u32 %s191, 1
        %s5295 = scalar_lea.sflag [#allocation3], %s5294
        %s5296 = sand.u32 %s191, 1
        %s5297 = smul.addr %s5296, 8
        %s5298 = scalar_lea.vmem [#allocation2], %s5297
        // Predicated region
        $region49: #{_lambda_.1} parent=47 // pred_check
          %p5299 = pneg %p201
        $region50: #{_lambda_.1} parent=47 // pred_check_branch
          %5301 = sbr.rel (%p5299) target = $region52
        $region51: #{_lambda_.1} parent=47 // pred_region
          %s5303 = ssub.s32 128, 128
          %5304 = vsyncadd %s5295, %s5303
          %s5305 = smul.addr %s21, 128
          %s5306 = scalar_lea.hbm %s7, %s5305
          %s5308 = sshll.u32 %s5298, 4
          %s5309 = int_to_ptr.vmem [resolvable:$true] %s5308
          %5311 = dma.vmem_to_hbm [thread:$0]  %s5309, 128, %s5306, %s5295
        $region52: #{_lambda_.1} parent=47 // pred_fallthru
          _
      $region48: #{_lambda_.1} parent=5 // pred_fallthru
        _
      %p5312 = scmp.le.s32.totalorder 2, %s16
      // Predicated region
      $region53: #{_lambda_.1} parent=5 // pred_check
        %p5313 = pneg %p5312
      $region54: #{_lambda_.1} parent=5 // pred_check_branch
        %5315 = sbr.rel (%p5313) target = $region56
      $region55: #{_lambda_.1} parent=5 // pred_region
        %s5316 = ssub.s32 %s16, 2
        // Predicated region
        $region57: #{_lambda_.1} parent=55 // pred_check
          %p5317 = pneg %p207
        $region58: #{_lambda_.1} parent=55 // pred_check_branch
          %5319 = sbr.rel (%p5317) target = $region60
        $region59: #{_lambda_.1} parent=55 // pred_region
          %s5320 = sand.u32 %s192, 1
          %s5321 = scalar_lea.sflag [#allocation3], %s5320
          %s5322 = sand.u32 %s192, 1
          %s5323 = smul.addr %s5322, 8
          %s5324 = scalar_lea.vmem [#allocation2], %s5323
          %5325 = dma.done %s5321, 128
        $region60: #{_lambda_.1} parent=55 // pred_fallthru
          _
      $region56: #{_lambda_.1} parent=5 // pred_fallthru
        _
    $region6: #{_lambda_.1} parent=1 // loop_footer
      %s20 = sadd.s32 1, %s16
    $region7: #{_lambda_.1} parent=1 // loop_footer_branch
      %15 = sbr.rel target = $region3
    $region8: #{_lambda_.1} parent=1 // loop_exit
      _
    %5326 = vsyncpa [#allocation3], 1
    %s5327 = scalar_lea.sflag [#allocation3], 1
    %5328 = vsyncpa %s5327, 1

</llo_original>
